<compile_context>
chip_gen: v5e
topology: v5e:2x2
jax: 0.10.0
libtpu: 0.0.40
codegen_flags: <defaults>
</compile_context>

<pallas_src>
import functools
import math

import jax
import jax.numpy as jnp
from jax.experimental import pallas as pl
from jax.experimental.pallas import tpu as pltpu


# conf.WEIGHT_INIT_STDDEV_FACTOR is not defined in the reference snippet.
WEIGHT_INIT_STDDEV_FACTOR = 1.0

_NUM_LAYERS = 20
_C = 64
# Layer channel specs: conv1 (1->64), 18x inner (64->64), conv3 (64->1).
_LAYER_SPECS = [(1, _C)] + [(_C, _C)] * 18 + [(_C, 1)]


def _vdsr_fused_kernel(x_ref, w_ref, b_ref, o_ref, buf_ref, *, H, W, Wp):
    """All 20 VDSR conv layers for one image, activations resident in VMEM.

    x_ref:   (1, H, W, 1)              input image tile
    w_ref:   (20, 9, 64, 64)           taps (dy*3+dx) x Cin x Cout, zero-expanded
    b_ref:   (20, 1, 64)               biases, zero-expanded
    o_ref:   (1, H, W, 1)              output image tile
    buf_ref: (2, H+2, Wp, 64) f32      zero-padded ping-pong activation scratch
    """
    C = _C
    rows = (H + 2) * Wp

    # Re-zero the scratch each grid step: the halo (and the extra Wp-(W+2)
    # columns) must be zero whenever a buffer is used as conv input, and
    # layer-0's channels 1..63 must be zero.
    buf_ref[...] = jnp.zeros_like(buf_ref)
    # Place the 1-channel input image into channel 0 of buffer 0's interior.
    buf_ref[0, 1:H + 1, 1:W + 1, 0:1] = x_ref[0]

    def load_flat(k):
        # (H+2, Wp, C) -> (rows, C): free relayout because Wp % 8 == 0.
        return buf_ref[k].reshape(rows, C)

    def conv3x3(src_flat, layer_idx, relu):
        # 3x3 "same" conv on the flattened zero-padded activation.  Tap (dy,dx)
        # == sublane roll by dy*Wp+dx, then a contiguous matmul on the MXU.
        acc = jnp.zeros((rows, C), jnp.float32)
        for dy in range(3):
            for dx in range(3):
                s = dy * Wp + dx
                shifted = src_flat if s == 0 else pltpu.roll(
                    src_flat, shift=rows - s, axis=0)
                w_tap = w_ref[layer_idx, dy * 3 + dx]          # (C, C)
                acc = acc + jnp.dot(shifted, w_tap,
                                    preferred_element_type=jnp.float32)
        acc = acc + b_ref[layer_idx]                            # (1, C) bcast
        if relu:
            acc = jnp.maximum(acc, 0.0)
        return acc   # (rows, C); only rows h*Wp+w with h<H, w<W are valid.

    def store_interior(k, acc):
        # Write the valid HxW window into the other buffer's interior; the
        # untouched halo stays zero => output is re-padded for the next layer.
        buf_ref[k, 1:H + 1, 1:W + 1, :] = acc.reshape(H + 2, Wp, C)[:H, :W, :]

    # Layer 0: conv1 (1->64, Cin zero-expanded) + ReLU, buf0 -> buf1.
    store_interior(1, conv3x3(load_flat(0), 0, True))

    # Layers 1..18: the 18 inner (64->64)+ReLU layers.  Two layers per
    # iteration so the ping-pong buffer indices stay static; only the
    # weight/bias loads use a dynamic (leading-axis) layer index.
    def body(j, carry):
        store_interior(0, conv3x3(load_flat(1), 1 + 2 * j, True))
        store_interior(1, conv3x3(load_flat(0), 2 + 2 * j, True))
        return carry

    jax.lax.fori_loop(0, 9, body, 0)

    # Layer 19: conv3 (64->1, Cout zero-expanded), no ReLU; keep channel 0.
    acc = conv3x3(load_flat(1), 19, False)
    o_ref[0] = acc.reshape(H + 2, Wp, C)[:H, :W, 0:1]


def vdsr_pallas(x_nchw, w_all, b_all):
    N, cin, H, W = x_nchw.shape
    assert cin == 1, "VDSR.conv1 expects a single input channel"
    Wp = ((W + 2 + 7) // 8) * 8   # pad width so the scratch flattens for free
    x_nhwc = jnp.transpose(x_nchw, (0, 2, 3, 1)).astype(jnp.float32)

    kern = functools.partial(_vdsr_fused_kernel, H=H, W=W, Wp=Wp)
    out_nhwc = pl.pallas_call(
        kern,
        out_shape=jax.ShapeDtypeStruct((N, H, W, 1), jnp.float32),
        grid=(N,),
        in_specs=[
            pl.BlockSpec((1, H, W, 1), lambda n: (n, 0, 0, 0)),
            # Whole weight/bias stacks (~3 MB), constant map => VMEM-resident.
            pl.BlockSpec((_NUM_LAYERS, 9, _C, _C), lambda n: (0, 0, 0, 0)),
            pl.BlockSpec((_NUM_LAYERS, 1, _C), lambda n: (0, 0, 0)),
        ],
        out_specs=pl.BlockSpec((1, H, W, 1), lambda n: (n, 0, 0, 0)),
        scratch_shapes=[pltpu.VMEM((2, H + 2, Wp, _C), jnp.float32)],
        compiler_params=pltpu.CompilerParams(
            dimension_semantics=("parallel",),   # batch across TCs on v7x
            vmem_limit_bytes=48 * 1024 * 1024,   # headroom for larger images
        ),
    )(x_nhwc, w_all, b_all)
    return jnp.transpose(out_nhwc, (0, 3, 1, 2))   # NHWC -> NCHW


vdsr_forward = jax.jit(vdsr_pallas)


# --- parameters (deterministic, mirrors VDSR.__init__ / reg()) ---------------
def init_params(key):
    ws, bs = [], []
    for cin, cout in _LAYER_SPECS:
        key, kw = jax.random.split(key)
        # reg(): weight ~ N(0, sqrt(2 / (k*k*out_channels)) / factor)
        std = math.sqrt(2.0 / (3 * 3 * cout)) / WEIGHT_INIT_STDDEV_FACTOR
        w = std * jax.random.normal(kw, (9, cin, cout), jnp.float32)
        # TODO(synk): PyTorch's default Conv2d bias init is uniform(+-1/sqrt(fan_in));
        # reg() only touches weights, so deterministic zero biases are used here.
        b = jnp.zeros((cout,), jnp.float32)
        ws.append(w)
        bs.append(b)
    return ws, bs


def pack_params(ws, bs):
    """Stack per-layer params into (20,9,64,64)/(20,1,64), zero-expanding ends."""
    w_all = jnp.zeros((_NUM_LAYERS, 9, _C, _C), jnp.float32)
    b_all = jnp.zeros((_NUM_LAYERS, 1, _C), jnp.float32)
    for i, (w, b) in enumerate(zip(ws, bs)):
        cin, cout = w.shape[1], w.shape[2]
        w_all = w_all.at[i, :, :cin, :cout].set(w)
        b_all = b_all.at[i, 0, :cout].set(b)
    return w_all, b_all


# --- pure-JAX reference (lax conv) for correctness checking ------------------
def vdsr_reference(x_nchw, ws, bs):
    h = jnp.transpose(x_nchw, (0, 2, 3, 1))
    for i in range(_NUM_LAYERS):
        cin, cout = ws[i].shape[1], ws[i].shape[2]
        w = ws[i].reshape(3, 3, cin, cout)
        h = jax.lax.conv_general_dilated(
            h, w, (1, 1), 'SAME',
            dimension_numbers=('NHWC', 'HWIO', 'NHWC'),
            preferred_element_type=jnp.float32)
        h = h + bs[i]
        if i < _NUM_LAYERS - 1:
            h = jnp.maximum(h, 0.0)
    return jnp.transpose(h, (0, 3, 1, 2))


if __name__ == "__main__":
    key = jax.random.PRNGKey(0)
    key, kx = jax.random.split(key)
    # NCHW, single input channel as required by VDSR.conv1
    x = jax.random.normal(kx, (2, 1, 16, 16), jnp.float32)

    ws, bs = init_params(key)
    w_all, b_all = pack_params(ws, bs)

    out = vdsr_forward(x, w_all, b_all)
    out = jax.block_until_ready(out)

    ref = vdsr_reference(x, ws, bs)
    if not jnp.allclose(out, ref, atol=2e-3, rtol=2e-3):
        raise AssertionError(
            f"mismatch vs reference, max abs diff = {jnp.max(jnp.abs(out - ref))}")

    print("KERNEL_OK")
</pallas_src>

<mosaic_0001>
module attributes {stable_mosaic.version = 11 : i64} {
  func.func @_vdsr_fused_kernel(%arg0: i32, %arg1: memref<1x16x16x1xf32, #tpu.memory_space<vmem>>, %arg2: memref<20x9x64x64xf32, #tpu.memory_space<vmem>>, %arg3: memref<20x1x64xf32, #tpu.memory_space<vmem>>, %arg4: memref<1x16x16x1xf32, #tpu.memory_space<vmem>>, %arg5: memref<2x18x24x64xf32, #tpu.memory_space<vmem>>) attributes {dimension_semantics = [#tpu.dimension_semantics<parallel>], iteration_bounds = array<i64: 2>, scalar_prefetch = 0 : i64, scratch_operands = 1 : i64, tpu.core_type = #tpu.core_type<tc>, window_params = [{transform_indices = @transform_0, window_bounds = array<i64: 1, 16, 16, 1>}, {pipeline_mode = #tpu.pipeline_mode<synchronous>, transform_indices = @transform_1, window_bounds = array<i64: 20, 9, 64, 64>}, {pipeline_mode = #tpu.pipeline_mode<synchronous>, transform_indices = @transform_2, window_bounds = array<i64: 20, 1, 64>}, {transform_indices = @transform_3, window_bounds = array<i64: 1, 16, 16, 1>}]} {
    %cst = arith.constant 0.000000e+00 : f32
    %0 = vector.broadcast %cst : f32 to vector<2x18x24x64xf32>
    %c0 = arith.constant 0 : index
    %c0_0 = arith.constant 0 : index
    %c0_1 = arith.constant 0 : index
    %c0_2 = arith.constant 0 : index
    %1 = vector.load %arg5[%c0, %c0_0, %c0_1, %c0_2] : memref<2x18x24x64xf32, #tpu.memory_space<vmem>>, vector<2x18x24x64xf32>
    tpu.vector_store %arg5[%c0, %c0_0, %c0_1, %c0_2], %0 {strides = array<i32>} : memref<2x18x24x64xf32, #tpu.memory_space<vmem>>, vector<2x18x24x64xf32>,
    %c0_3 = arith.constant 0 : index
    %c0_4 = arith.constant 0 : index
    %c0_5 = arith.constant 0 : index
    %c0_6 = arith.constant 0 : index
    %2 = vector.load %arg1[%c0_3, %c0_4, %c0_5, %c0_6] : memref<1x16x16x1xf32, #tpu.memory_space<vmem>>, vector<1x16x16x1xf32>
    %3 = vector.shape_cast %2 : vector<1x16x16x1xf32> to vector<16x16x1xf32>
    %c0_7 = arith.constant 0 : index
    %c1 = arith.constant 1 : index
    %c1_8 = arith.constant 1 : index
    %c0_9 = arith.constant 0 : index
    %4 = vector.load %arg5[%c0_7, %c1, %c1_8, %c0_9] : memref<2x18x24x64xf32, #tpu.memory_space<vmem>>, vector<1x16x16x1xf32>
    %5 = vector.shape_cast %4 : vector<1x16x16x1xf32> to vector<16x16x1xf32>
    %6 = vector.shape_cast %3 : vector<16x16x1xf32> to vector<1x16x16x1xf32>
    tpu.vector_store %arg5[%c0_7, %c1, %c1_8, %c0_9], %6 {strides = array<i32>} : memref<2x18x24x64xf32, #tpu.memory_space<vmem>>, vector<1x16x16x1xf32>,
    %c0_10 = arith.constant 0 : index
    %c0_11 = arith.constant 0 : index
    %c0_12 = arith.constant 0 : index
    %c0_13 = arith.constant 0 : index
    %7 = vector.load %arg5[%c0_10, %c0_11, %c0_12, %c0_13] : memref<2x18x24x64xf32, #tpu.memory_space<vmem>>, vector<1x18x24x64xf32>
    %8 = vector.shape_cast %7 : vector<1x18x24x64xf32> to vector<18x24x64xf32>
    %9 = vector.shape_cast %8 : vector<18x24x64xf32> to vector<432x64xf32>
    %cst_14 = arith.constant 0.000000e+00 : f32
    %10 = vector.broadcast %cst_14 : f32 to vector<432x64xf32>
    %c0_15 = arith.constant 0 : index
    %c0_16 = arith.constant 0 : index
    %c0_17 = arith.constant 0 : index
    %c0_18 = arith.constant 0 : index
    %11 = vector.load %arg2[%c0_15, %c0_16, %c0_17, %c0_18] : memref<20x9x64x64xf32, #tpu.memory_space<vmem>>, vector<1x1x64x64xf32>
    %12 = vector.shape_cast %11 : vector<1x1x64x64xf32> to vector<64x64xf32>
    %cst_19 = arith.constant dense<0.000000e+00> : vector<432x64xf32>
    %13 = tpu.matmul %9, %12, %cst_19 {dimension_numbers = #tpu.dot_dimension_numbers<[1], [0], [0], [1], [0, 0, 1, 1], [], []>} : vector<432x64xf32>, vector<64x64xf32>, vector<432x64xf32> -> vector<432x64xf32>
    %14 = arith.addf %10, %13 : vector<432x64xf32>
    %c431_i32 = arith.constant 431 : i32
    %15 = tpu.dynamic_rotate %9 by %c431_i32 dim 0 : vector<432x64xf32>, i32 -> vector<432x64xf32>
    %c0_20 = arith.constant 0 : index
    %c1_21 = arith.constant 1 : index
    %c0_22 = arith.constant 0 : index
    %c0_23 = arith.constant 0 : index
    %16 = vector.load %arg2[%c0_20, %c1_21, %c0_22, %c0_23] : memref<20x9x64x64xf32, #tpu.memory_space<vmem>>, vector<1x1x64x64xf32>
    %17 = vector.shape_cast %16 : vector<1x1x64x64xf32> to vector<64x64xf32>
    %cst_24 = arith.constant dense<0.000000e+00> : vector<432x64xf32>
    %18 = tpu.matmul %15, %17, %cst_24 {dimension_numbers = #tpu.dot_dimension_numbers<[1], [0], [0], [1], [0, 0, 1, 1], [], []>} : vector<432x64xf32>, vector<64x64xf32>, vector<432x64xf32> -> vector<432x64xf32>
    %19 = arith.addf %14, %18 : vector<432x64xf32>
    %c430_i32 = arith.constant 430 : i32
    %20 = tpu.dynamic_rotate %9 by %c430_i32 dim 0 : vector<432x64xf32>, i32 -> vector<432x64xf32>
    %c0_25 = arith.constant 0 : index
    %c2 = arith.constant 2 : index
    %c0_26 = arith.constant 0 : index
    %c0_27 = arith.constant 0 : index
    %21 = vector.load %arg2[%c0_25, %c2, %c0_26, %c0_27] : memref<20x9x64x64xf32, #tpu.memory_space<vmem>>, vector<1x1x64x64xf32>
    %22 = vector.shape_cast %21 : vector<1x1x64x64xf32> to vector<64x64xf32>
    %cst_28 = arith.constant dense<0.000000e+00> : vector<432x64xf32>
    %23 = tpu.matmul %20, %22, %cst_28 {dimension_numbers = #tpu.dot_dimension_numbers<[1], [0], [0], [1], [0, 0, 1, 1], [], []>} : vector<432x64xf32>, vector<64x64xf32>, vector<432x64xf32> -> vector<432x64xf32>
    %24 = arith.addf %19, %23 : vector<432x64xf32>
    %c408_i32 = arith.constant 408 : i32
    %25 = tpu.dynamic_rotate %9 by %c408_i32 dim 0 : vector<432x64xf32>, i32 -> vector<432x64xf32>
    %c0_29 = arith.constant 0 : index
    %c3 = arith.constant 3 : index
    %c0_30 = arith.constant 0 : index
    %c0_31 = arith.constant 0 : index
    %26 = vector.load %arg2[%c0_29, %c3, %c0_30, %c0_31] : memref<20x9x64x64xf32, #tpu.memory_space<vmem>>, vector<1x1x64x64xf32>
    %27 = vector.shape_cast %26 : vector<1x1x64x64xf32> to vector<64x64xf32>
    %cst_32 = arith.constant dense<0.000000e+00> : vector<432x64xf32>
    %28 = tpu.matmul %25, %27, %cst_32 {dimension_numbers = #tpu.dot_dimension_numbers<[1], [0], [0], [1], [0, 0, 1, 1], [], []>} : vector<432x64xf32>, vector<64x64xf32>, vector<432x64xf32> -> vector<432x64xf32>
    %29 = arith.addf %24, %28 : vector<432x64xf32>
    %c407_i32 = arith.constant 407 : i32
    %30 = tpu.dynamic_rotate %9 by %c407_i32 dim 0 : vector<432x64xf32>, i32 -> vector<432x64xf32>
    %c0_33 = arith.constant 0 : index
    %c4 = arith.constant 4 : index
    %c0_34 = arith.constant 0 : index
    %c0_35 = arith.constant 0 : index
    %31 = vector.load %arg2[%c0_33, %c4, %c0_34, %c0_35] : memref<20x9x64x64xf32, #tpu.memory_space<vmem>>, vector<1x1x64x64xf32>
    %32 = vector.shape_cast %31 : vector<1x1x64x64xf32> to vector<64x64xf32>
    %cst_36 = arith.constant dense<0.000000e+00> : vector<432x64xf32>
    %33 = tpu.matmul %30, %32, %cst_36 {dimension_numbers = #tpu.dot_dimension_numbers<[1], [0], [0], [1], [0, 0, 1, 1], [], []>} : vector<432x64xf32>, vector<64x64xf32>, vector<432x64xf32> -> vector<432x64xf32>
    %34 = arith.addf %29, %33 : vector<432x64xf32>
    %c406_i32 = arith.constant 406 : i32
    %35 = tpu.dynamic_rotate %9 by %c406_i32 dim 0 : vector<432x64xf32>, i32 -> vector<432x64xf32>
    %c0_37 = arith.constant 0 : index
    %c5 = arith.constant 5 : index
    %c0_38 = arith.constant 0 : index
    %c0_39 = arith.constant 0 : index
    %36 = vector.load %arg2[%c0_37, %c5, %c0_38, %c0_39] : memref<20x9x64x64xf32, #tpu.memory_space<vmem>>, vector<1x1x64x64xf32>
    %37 = vector.shape_cast %36 : vector<1x1x64x64xf32> to vector<64x64xf32>
    %cst_40 = arith.constant dense<0.000000e+00> : vector<432x64xf32>
    %38 = tpu.matmul %35, %37, %cst_40 {dimension_numbers = #tpu.dot_dimension_numbers<[1], [0], [0], [1], [0, 0, 1, 1], [], []>} : vector<432x64xf32>, vector<64x64xf32>, vector<432x64xf32> -> vector<432x64xf32>
    %39 = arith.addf %34, %38 : vector<432x64xf32>
    %c384_i32 = arith.constant 384 : i32
    %40 = tpu.dynamic_rotate %9 by %c384_i32 dim 0 : vector<432x64xf32>, i32 -> vector<432x64xf32>
    %c0_41 = arith.constant 0 : index
    %c6 = arith.constant 6 : index
    %c0_42 = arith.constant 0 : index
    %c0_43 = arith.constant 0 : index
    %41 = vector.load %arg2[%c0_41, %c6, %c0_42, %c0_43] : memref<20x9x64x64xf32, #tpu.memory_space<vmem>>, vector<1x1x64x64xf32>
    %42 = vector.shape_cast %41 : vector<1x1x64x64xf32> to vector<64x64xf32>
    %cst_44 = arith.constant dense<0.000000e+00> : vector<432x64xf32>
    %43 = tpu.matmul %40, %42, %cst_44 {dimension_numbers = #tpu.dot_dimension_numbers<[1], [0], [0], [1], [0, 0, 1, 1], [], []>} : vector<432x64xf32>, vector<64x64xf32>, vector<432x64xf32> -> vector<432x64xf32>
    %44 = arith.addf %39, %43 : vector<432x64xf32>
    %c383_i32 = arith.constant 383 : i32
    %45 = tpu.dynamic_rotate %9 by %c383_i32 dim 0 : vector<432x64xf32>, i32 -> vector<432x64xf32>
    %c0_45 = arith.constant 0 : index
    %c7 = arith.constant 7 : index
    %c0_46 = arith.constant 0 : index
    %c0_47 = arith.constant 0 : index
    %46 = vector.load %arg2[%c0_45, %c7, %c0_46, %c0_47] : memref<20x9x64x64xf32, #tpu.memory_space<vmem>>, vector<1x1x64x64xf32>
    %47 = vector.shape_cast %46 : vector<1x1x64x64xf32> to vector<64x64xf32>
    %cst_48 = arith.constant dense<0.000000e+00> : vector<432x64xf32>
    %48 = tpu.matmul %45, %47, %cst_48 {dimension_numbers = #tpu.dot_dimension_numbers<[1], [0], [0], [1], [0, 0, 1, 1], [], []>} : vector<432x64xf32>, vector<64x64xf32>, vector<432x64xf32> -> vector<432x64xf32>
    %49 = arith.addf %44, %48 : vector<432x64xf32>
    %c382_i32 = arith.constant 382 : i32
    %50 = tpu.dynamic_rotate %9 by %c382_i32 dim 0 : vector<432x64xf32>, i32 -> vector<432x64xf32>
    %c0_49 = arith.constant 0 : index
    %c8 = arith.constant 8 : index
    %c0_50 = arith.constant 0 : index
    %c0_51 = arith.constant 0 : index
    %51 = vector.load %arg2[%c0_49, %c8, %c0_50, %c0_51] : memref<20x9x64x64xf32, #tpu.memory_space<vmem>>, vector<1x1x64x64xf32>
    %52 = vector.shape_cast %51 : vector<1x1x64x64xf32> to vector<64x64xf32>
    %cst_52 = arith.constant dense<0.000000e+00> : vector<432x64xf32>
    %53 = tpu.matmul %50, %52, %cst_52 {dimension_numbers = #tpu.dot_dimension_numbers<[1], [0], [0], [1], [0, 0, 1, 1], [], []>} : vector<432x64xf32>, vector<64x64xf32>, vector<432x64xf32> -> vector<432x64xf32>
    %54 = arith.addf %49, %53 : vector<432x64xf32>
    %c0_53 = arith.constant 0 : index
    %c0_54 = arith.constant 0 : index
    %c0_55 = arith.constant 0 : index
    %55 = vector.load %arg3[%c0_53, %c0_54, %c0_55] : memref<20x1x64xf32, #tpu.memory_space<vmem>>, vector<1x1x64xf32>
    %56 = vector.shape_cast %55 : vector<1x1x64xf32> to vector<1x64xf32>
    %57 = vector.broadcast %56 : vector<1x64xf32> to vector<432x64xf32>
    %58 = arith.addf %54, %57 : vector<432x64xf32>
    %cst_56 = arith.constant 0.000000e+00 : f32
    %59 = vector.broadcast %cst_56 : f32 to vector<432x64xf32>
    %60 = arith.maximumf %58, %59 : vector<432x64xf32>
    %61 = vector.shape_cast %60 : vector<432x64xf32> to vector<18x24x64xf32>
    %62 = vector.extract_strided_slice %61 {offsets = [0, 0, 0], sizes = [16, 16, 64], strides = [1, 1, 1]} : vector<18x24x64xf32> to vector<16x16x64xf32>
    %c1_57 = arith.constant 1 : index
    %c1_58 = arith.constant 1 : index
    %c1_59 = arith.constant 1 : index
    %c0_60 = arith.constant 0 : index
    %63 = vector.load %arg5[%c1_57, %c1_58, %c1_59, %c0_60] : memref<2x18x24x64xf32, #tpu.memory_space<vmem>>, vector<1x16x16x64xf32>
    %64 = vector.shape_cast %63 : vector<1x16x16x64xf32> to vector<16x16x64xf32>
    %65 = vector.shape_cast %62 : vector<16x16x64xf32> to vector<1x16x16x64xf32>
    tpu.vector_store %arg5[%c1_57, %c1_58, %c1_59, %c0_60], %65 {strides = array<i32>} : memref<2x18x24x64xf32, #tpu.memory_space<vmem>>, vector<1x16x16x64xf32>,
    %c0_i32 = arith.constant 0 : i32
    %c9_i32 = arith.constant 9 : i32
    %66 = arith.addi %c0_i32, %c9_i32 : i32
    %c1_i32 = arith.constant 1 : i32
    scf.for %arg6 = %c0_i32 to %66 step %c1_i32  : i32 {
      %c1_126 = arith.constant 1 : index
      %c0_127 = arith.constant 0 : index
      %c0_128 = arith.constant 0 : index
      %c0_129 = arith.constant 0 : index
      %124 = vector.load %arg5[%c1_126, %c0_127, %c0_128, %c0_129] : memref<2x18x24x64xf32, #tpu.memory_space<vmem>>, vector<1x18x24x64xf32>
      %125 = vector.shape_cast %124 : vector<1x18x24x64xf32> to vector<18x24x64xf32>
      %126 = vector.shape_cast %125 : vector<18x24x64xf32> to vector<432x64xf32>
      %c2_i32 = arith.constant 2 : i32
      %127 = arith.muli %c2_i32, %arg6 : i32
      %c1_i32_130 = arith.constant 1 : i32
      %128 = arith.addi %c1_i32_130, %127 : i32
      %cst_131 = arith.constant 0.000000e+00 : f32
      %129 = vector.broadcast %cst_131 : f32 to vector<432x64xf32>
      %130 = arith.index_cast %128 : i32 to index
      %c0_132 = arith.constant 0 : index
      %c0_133 = arith.constant 0 : index
      %c0_134 = arith.constant 0 : index
      %131 = vector.load %arg2[%130, %c0_132, %c0_133, %c0_134] : memref<20x9x64x64xf32, #tpu.memory_space<vmem>>, vector<1x1x64x64xf32>
      %132 = vector.shape_cast %131 : vector<1x1x64x64xf32> to vector<64x64xf32>
      %cst_135 = arith.constant dense<0.000000e+00> : vector<432x64xf32>
      %133 = tpu.matmul %126, %132, %cst_135 {dimension_numbers = #tpu.dot_dimension_numbers<[1], [0], [0], [1], [0, 0, 1, 1], [], []>} : vector<432x64xf32>, vector<64x64xf32>, vector<432x64xf32> -> vector<432x64xf32>
      %134 = arith.addf %129, %133 : vector<432x64xf32>
      %c431_i32_136 = arith.constant 431 : i32
      %135 = tpu.dynamic_rotate %126 by %c431_i32_136 dim 0 : vector<432x64xf32>, i32 -> vector<432x64xf32>
      %136 = arith.index_cast %128 : i32 to index
      %c1_137 = arith.constant 1 : index
      %c0_138 = arith.constant 0 : index
      %c0_139 = arith.constant 0 : index
      %137 = vector.load %arg2[%136, %c1_137, %c0_138, %c0_139] : memref<20x9x64x64xf32, #tpu.memory_space<vmem>>, vector<1x1x64x64xf32>
      %138 = vector.shape_cast %137 : vector<1x1x64x64xf32> to vector<64x64xf32>
      %cst_140 = arith.constant dense<0.000000e+00> : vector<432x64xf32>
      %139 = tpu.matmul %135, %138, %cst_140 {dimension_numbers = #tpu.dot_dimension_numbers<[1], [0], [0], [1], [0, 0, 1, 1], [], []>} : vector<432x64xf32>, vector<64x64xf32>, vector<432x64xf32> -> vector<432x64xf32>
      %140 = arith.addf %134, %139 : vector<432x64xf32>
      %c430_i32_141 = arith.constant 430 : i32
      %141 = tpu.dynamic_rotate %126 by %c430_i32_141 dim 0 : vector<432x64xf32>, i32 -> vector<432x64xf32>
      %142 = arith.index_cast %128 : i32 to index
      %c2_142 = arith.constant 2 : index
      %c0_143 = arith.constant 0 : index
      %c0_144 = arith.constant 0 : index
      %143 = vector.load %arg2[%142, %c2_142, %c0_143, %c0_144] : memref<20x9x64x64xf32, #tpu.memory_space<vmem>>, vector<1x1x64x64xf32>
      %144 = vector.shape_cast %143 : vector<1x1x64x64xf32> to vector<64x64xf32>
      %cst_145 = arith.constant dense<0.000000e+00> : vector<432x64xf32>
      %145 = tpu.matmul %141, %144, %cst_145 {dimension_numbers = #tpu.dot_dimension_numbers<[1], [0], [0], [1], [0, 0, 1, 1], [], []>} : vector<432x64xf32>, vector<64x64xf32>, vector<432x64xf32> -> vector<432x64xf32>
      %146 = arith.addf %140, %145 : vector<432x64xf32>
      %c408_i32_146 = arith.constant 408 : i32
      %147 = tpu.dynamic_rotate %126 by %c408_i32_146 dim 0 : vector<432x64xf32>, i32 -> vector<432x64xf32>
      %148 = arith.index_cast %128 : i32 to index
      %c3_147 = arith.constant 3 : index
      %c0_148 = arith.constant 0 : index
      %c0_149 = arith.constant 0 : index
      %149 = vector.load %arg2[%148, %c3_147, %c0_148, %c0_149] : memref<20x9x64x64xf32, #tpu.memory_space<vmem>>, vector<1x1x64x64xf32>
      %150 = vector.shape_cast %149 : vector<1x1x64x64xf32> to vector<64x64xf32>
      %cst_150 = arith.constant dense<0.000000e+00> : vector<432x64xf32>
      %151 = tpu.matmul %147, %150, %cst_150 {dimension_numbers = #tpu.dot_dimension_numbers<[1], [0], [0], [1], [0, 0, 1, 1], [], []>} : vector<432x64xf32>, vector<64x64xf32>, vector<432x64xf32> -> vector<432x64xf32>
      %152 = arith.addf %146, %151 : vector<432x64xf32>
      %c407_i32_151 = arith.constant 407 : i32
      %153 = tpu.dynamic_rotate %126 by %c407_i32_151 dim 0 : vector<432x64xf32>, i32 -> vector<432x64xf32>
      %154 = arith.index_cast %128 : i32 to index
      %c4_152 = arith.constant 4 : index
      %c0_153 = arith.constant 0 : index
      %c0_154 = arith.constant 0 : index
      %155 = vector.load %arg2[%154, %c4_152, %c0_153, %c0_154] : memref<20x9x64x64xf32, #tpu.memory_space<vmem>>, vector<1x1x64x64xf32>
      %156 = vector.shape_cast %155 : vector<1x1x64x64xf32> to vector<64x64xf32>
      %cst_155 = arith.constant dense<0.000000e+00> : vector<432x64xf32>
      %157 = tpu.matmul %153, %156, %cst_155 {dimension_numbers = #tpu.dot_dimension_numbers<[1], [0], [0], [1], [0, 0, 1, 1], [], []>} : vector<432x64xf32>, vector<64x64xf32>, vector<432x64xf32> -> vector<432x64xf32>
      %158 = arith.addf %152, %157 : vector<432x64xf32>
      %c406_i32_156 = arith.constant 406 : i32
      %159 = tpu.dynamic_rotate %126 by %c406_i32_156 dim 0 : vector<432x64xf32>, i32 -> vector<432x64xf32>
      %160 = arith.index_cast %128 : i32 to index
      %c5_157 = arith.constant 5 : index
      %c0_158 = arith.constant 0 : index
      %c0_159 = arith.constant 0 : index
      %161 = vector.load %arg2[%160, %c5_157, %c0_158, %c0_159] : memref<20x9x64x64xf32, #tpu.memory_space<vmem>>, vector<1x1x64x64xf32>
      %162 = vector.shape_cast %161 : vector<1x1x64x64xf32> to vector<64x64xf32>
      %cst_160 = arith.constant dense<0.000000e+00> : vector<432x64xf32>
      %163 = tpu.matmul %159, %162, %cst_160 {dimension_numbers = #tpu.dot_dimension_numbers<[1], [0], [0], [1], [0, 0, 1, 1], [], []>} : vector<432x64xf32>, vector<64x64xf32>, vector<432x64xf32> -> vector<432x64xf32>
      %164 = arith.addf %158, %163 : vector<432x64xf32>
      %c384_i32_161 = arith.constant 384 : i32
      %165 = tpu.dynamic_rotate %126 by %c384_i32_161 dim 0 : vector<432x64xf32>, i32 -> vector<432x64xf32>
      %166 = arith.index_cast %128 : i32 to index
      %c6_162 = arith.constant 6 : index
      %c0_163 = arith.constant 0 : index
      %c0_164 = arith.constant 0 : index
      %167 = vector.load %arg2[%166, %c6_162, %c0_163, %c0_164] : memref<20x9x64x64xf32, #tpu.memory_space<vmem>>, vector<1x1x64x64xf32>
      %168 = vector.shape_cast %167 : vector<1x1x64x64xf32> to vector<64x64xf32>
      %cst_165 = arith.constant dense<0.000000e+00> : vector<432x64xf32>
      %169 = tpu.matmul %165, %168, %cst_165 {dimension_numbers = #tpu.dot_dimension_numbers<[1], [0], [0], [1], [0, 0, 1, 1], [], []>} : vector<432x64xf32>, vector<64x64xf32>, vector<432x64xf32> -> vector<432x64xf32>
      %170 = arith.addf %164, %169 : vector<432x64xf32>
      %c383_i32_166 = arith.constant 383 : i32
      %171 = tpu.dynamic_rotate %126 by %c383_i32_166 dim 0 : vector<432x64xf32>, i32 -> vector<432x64xf32>
      %172 = arith.index_cast %128 : i32 to index
      %c7_167 = arith.constant 7 : index
      %c0_168 = arith.constant 0 : index
      %c0_169 = arith.constant 0 : index
      %173 = vector.load %arg2[%172, %c7_167, %c0_168, %c0_169] : memref<20x9x64x64xf32, #tpu.memory_space<vmem>>, vector<1x1x64x64xf32>
      %174 = vector.shape_cast %173 : vector<1x1x64x64xf32> to vector<64x64xf32>
      %cst_170 = arith.constant dense<0.000000e+00> : vector<432x64xf32>
      %175 = tpu.matmul %171, %174, %cst_170 {dimension_numbers = #tpu.dot_dimension_numbers<[1], [0], [0], [1], [0, 0, 1, 1], [], []>} : vector<432x64xf32>, vector<64x64xf32>, vector<432x64xf32> -> vector<432x64xf32>
      %176 = arith.addf %170, %175 : vector<432x64xf32>
      %c382_i32_171 = arith.constant 382 : i32
      %177 = tpu.dynamic_rotate %126 by %c382_i32_171 dim 0 : vector<432x64xf32>, i32 -> vector<432x64xf32>
      %178 = arith.index_cast %128 : i32 to index
      %c8_172 = arith.constant 8 : index
      %c0_173 = arith.constant 0 : index
      %c0_174 = arith.constant 0 : index
      %179 = vector.load %arg2[%178, %c8_172, %c0_173, %c0_174] : memref<20x9x64x64xf32, #tpu.memory_space<vmem>>, vector<1x1x64x64xf32>
      %180 = vector.shape_cast %179 : vector<1x1x64x64xf32> to vector<64x64xf32>
      %cst_175 = arith.constant dense<0.000000e+00> : vector<432x64xf32>
      %181 = tpu.matmul %177, %180, %cst_175 {dimension_numbers = #tpu.dot_dimension_numbers<[1], [0], [0], [1], [0, 0, 1, 1], [], []>} : vector<432x64xf32>, vector<64x64xf32>, vector<432x64xf32> -> vector<432x64xf32>
      %182 = arith.addf %176, %181 : vector<432x64xf32>
      %183 = arith.index_cast %128 : i32 to index
      %c0_176 = arith.constant 0 : index
      %c0_177 = arith.constant 0 : index
      %184 = vector.load %arg3[%183, %c0_176, %c0_177] : memref<20x1x64xf32, #tpu.memory_space<vmem>>, vector<1x1x64xf32>
      %185 = vector.shape_cast %184 : vector<1x1x64xf32> to vector<1x64xf32>
      %186 = vector.broadcast %185 : vector<1x64xf32> to vector<432x64xf32>
      %187 = arith.addf %182, %186 : vector<432x64xf32>
      %cst_178 = arith.constant 0.000000e+00 : f32
      %188 = vector.broadcast %cst_178 : f32 to vector<432x64xf32>
      %189 = arith.maximumf %187, %188 : vector<432x64xf32>
      %190 = vector.shape_cast %189 : vector<432x64xf32> to vector<18x24x64xf32>
      %191 = vector.extract_strided_slice %190 {offsets = [0, 0, 0], sizes = [16, 16, 64], strides = [1, 1, 1]} : vector<18x24x64xf32> to vector<16x16x64xf32>
      %c0_179 = arith.constant 0 : index
      %c1_180 = arith.constant 1 : index
      %c1_181 = arith.constant 1 : index
      %c0_182 = arith.constant 0 : index
      %192 = vector.load %arg5[%c0_179, %c1_180, %c1_181, %c0_182] : memref<2x18x24x64xf32, #tpu.memory_space<vmem>>, vector<1x16x16x64xf32>
      %193 = vector.shape_cast %192 : vector<1x16x16x64xf32> to vector<16x16x64xf32>
      %194 = vector.shape_cast %191 : vector<16x16x64xf32> to vector<1x16x16x64xf32>
      tpu.vector_store %arg5[%c0_179, %c1_180, %c1_181, %c0_182], %194 {strides = array<i32>} : memref<2x18x24x64xf32, #tpu.memory_space<vmem>>, vector<1x16x16x64xf32>,
      %c0_183 = arith.constant 0 : index
      %c0_184 = arith.constant 0 : index
      %c0_185 = arith.constant 0 : index
      %c0_186 = arith.constant 0 : index
      %195 = vector.load %arg5[%c0_183, %c0_184, %c0_185, %c0_186] : memref<2x18x24x64xf32, #tpu.memory_space<vmem>>, vector<1x18x24x64xf32>
      %196 = vector.shape_cast %195 : vector<1x18x24x64xf32> to vector<18x24x64xf32>
      %197 = vector.shape_cast %196 : vector<18x24x64xf32> to vector<432x64xf32>
      %c2_i32_187 = arith.constant 2 : i32
      %198 = arith.muli %c2_i32_187, %arg6 : i32
      %c2_i32_188 = arith.constant 2 : i32
      %199 = arith.addi %c2_i32_188, %198 : i32
      %cst_189 = arith.constant 0.000000e+00 : f32
      %200 = vector.broadcast %cst_189 : f32 to vector<432x64xf32>
      %201 = arith.index_cast %199 : i32 to index
      %c0_190 = arith.constant 0 : index
      %c0_191 = arith.constant 0 : index
      %c0_192 = arith.constant 0 : index
      %202 = vector.load %arg2[%201, %c0_190, %c0_191, %c0_192] : memref<20x9x64x64xf32, #tpu.memory_space<vmem>>, vector<1x1x64x64xf32>
      %203 = vector.shape_cast %202 : vector<1x1x64x64xf32> to vector<64x64xf32>
      %cst_193 = arith.constant dense<0.000000e+00> : vector<432x64xf32>
      %204 = tpu.matmul %197, %203, %cst_193 {dimension_numbers = #tpu.dot_dimension_numbers<[1], [0], [0], [1], [0, 0, 1, 1], [], []>} : vector<432x64xf32>, vector<64x64xf32>, vector<432x64xf32> -> vector<432x64xf32>
      %205 = arith.addf %200, %204 : vector<432x64xf32>
      %c431_i32_194 = arith.constant 431 : i32
      %206 = tpu.dynamic_rotate %197 by %c431_i32_194 dim 0 : vector<432x64xf32>, i32 -> vector<432x64xf32>
      %207 = arith.index_cast %199 : i32 to index
      %c1_195 = arith.constant 1 : index
      %c0_196 = arith.constant 0 : index
      %c0_197 = arith.constant 0 : index
      %208 = vector.load %arg2[%207, %c1_195, %c0_196, %c0_197] : memref<20x9x64x64xf32, #tpu.memory_space<vmem>>, vector<1x1x64x64xf32>
      %209 = vector.shape_cast %208 : vector<1x1x64x64xf32> to vector<64x64xf32>
      %cst_198 = arith.constant dense<0.000000e+00> : vector<432x64xf32>
      %210 = tpu.matmul %206, %209, %cst_198 {dimension_numbers = #tpu.dot_dimension_numbers<[1], [0], [0], [1], [0, 0, 1, 1], [], []>} : vector<432x64xf32>, vector<64x64xf32>, vector<432x64xf32> -> vector<432x64xf32>
      %211 = arith.addf %205, %210 : vector<432x64xf32>
      %c430_i32_199 = arith.constant 430 : i32
      %212 = tpu.dynamic_rotate %197 by %c430_i32_199 dim 0 : vector<432x64xf32>, i32 -> vector<432x64xf32>
      %213 = arith.index_cast %199 : i32 to index
      %c2_200 = arith.constant 2 : index
      %c0_201 = arith.constant 0 : index
      %c0_202 = arith.constant 0 : index
      %214 = vector.load %arg2[%213, %c2_200, %c0_201, %c0_202] : memref<20x9x64x64xf32, #tpu.memory_space<vmem>>, vector<1x1x64x64xf32>
      %215 = vector.shape_cast %214 : vector<1x1x64x64xf32> to vector<64x64xf32>
      %cst_203 = arith.constant dense<0.000000e+00> : vector<432x64xf32>
      %216 = tpu.matmul %212, %215, %cst_203 {dimension_numbers = #tpu.dot_dimension_numbers<[1], [0], [0], [1], [0, 0, 1, 1], [], []>} : vector<432x64xf32>, vector<64x64xf32>, vector<432x64xf32> -> vector<432x64xf32>
      %217 = arith.addf %211, %216 : vector<432x64xf32>
      %c408_i32_204 = arith.constant 408 : i32
      %218 = tpu.dynamic_rotate %197 by %c408_i32_204 dim 0 : vector<432x64xf32>, i32 -> vector<432x64xf32>
      %219 = arith.index_cast %199 : i32 to index
      %c3_205 = arith.constant 3 : index
      %c0_206 = arith.constant 0 : index
      %c0_207 = arith.constant 0 : index
      %220 = vector.load %arg2[%219, %c3_205, %c0_206, %c0_207] : memref<20x9x64x64xf32, #tpu.memory_space<vmem>>, vector<1x1x64x64xf32>
      %221 = vector.shape_cast %220 : vector<1x1x64x64xf32> to vector<64x64xf32>
      %cst_208 = arith.constant dense<0.000000e+00> : vector<432x64xf32>
      %222 = tpu.matmul %218, %221, %cst_208 {dimension_numbers = #tpu.dot_dimension_numbers<[1], [0], [0], [1], [0, 0, 1, 1], [], []>} : vector<432x64xf32>, vector<64x64xf32>, vector<432x64xf32> -> vector<432x64xf32>
      %223 = arith.addf %217, %222 : vector<432x64xf32>
      %c407_i32_209 = arith.constant 407 : i32
      %224 = tpu.dynamic_rotate %197 by %c407_i32_209 dim 0 : vector<432x64xf32>, i32 -> vector<432x64xf32>
      %225 = arith.index_cast %199 : i32 to index
      %c4_210 = arith.constant 4 : index
      %c0_211 = arith.constant 0 : index
      %c0_212 = arith.constant 0 : index
      %226 = vector.load %arg2[%225, %c4_210, %c0_211, %c0_212] : memref<20x9x64x64xf32, #tpu.memory_space<vmem>>, vector<1x1x64x64xf32>
      %227 = vector.shape_cast %226 : vector<1x1x64x64xf32> to vector<64x64xf32>
      %cst_213 = arith.constant dense<0.000000e+00> : vector<432x64xf32>
      %228 = tpu.matmul %224, %227, %cst_213 {dimension_numbers = #tpu.dot_dimension_numbers<[1], [0], [0], [1], [0, 0, 1, 1], [], []>} : vector<432x64xf32>, vector<64x64xf32>, vector<432x64xf32> -> vector<432x64xf32>
      %229 = arith.addf %223, %228 : vector<432x64xf32>
      %c406_i32_214 = arith.constant 406 : i32
      %230 = tpu.dynamic_rotate %197 by %c406_i32_214 dim 0 : vector<432x64xf32>, i32 -> vector<432x64xf32>
      %231 = arith.index_cast %199 : i32 to index
      %c5_215 = arith.constant 5 : index
      %c0_216 = arith.constant 0 : index
      %c0_217 = arith.constant 0 : index
      %232 = vector.load %arg2[%231, %c5_215, %c0_216, %c0_217] : memref<20x9x64x64xf32, #tpu.memory_space<vmem>>, vector<1x1x64x64xf32>
      %233 = vector.shape_cast %232 : vector<1x1x64x64xf32> to vector<64x64xf32>
      %cst_218 = arith.constant dense<0.000000e+00> : vector<432x64xf32>
      %234 = tpu.matmul %230, %233, %cst_218 {dimension_numbers = #tpu.dot_dimension_numbers<[1], [0], [0], [1], [0, 0, 1, 1], [], []>} : vector<432x64xf32>, vector<64x64xf32>, vector<432x64xf32> -> vector<432x64xf32>
      %235 = arith.addf %229, %234 : vector<432x64xf32>
      %c384_i32_219 = arith.constant 384 : i32
      %236 = tpu.dynamic_rotate %197 by %c384_i32_219 dim 0 : vector<432x64xf32>, i32 -> vector<432x64xf32>
      %237 = arith.index_cast %199 : i32 to index
      %c6_220 = arith.constant 6 : index
      %c0_221 = arith.constant 0 : index
      %c0_222 = arith.constant 0 : index
      %238 = vector.load %arg2[%237, %c6_220, %c0_221, %c0_222] : memref<20x9x64x64xf32, #tpu.memory_space<vmem>>, vector<1x1x64x64xf32>
      %239 = vector.shape_cast %238 : vector<1x1x64x64xf32> to vector<64x64xf32>
      %cst_223 = arith.constant dense<0.000000e+00> : vector<432x64xf32>
      %240 = tpu.matmul %236, %239, %cst_223 {dimension_numbers = #tpu.dot_dimension_numbers<[1], [0], [0], [1], [0, 0, 1, 1], [], []>} : vector<432x64xf32>, vector<64x64xf32>, vector<432x64xf32> -> vector<432x64xf32>
      %241 = arith.addf %235, %240 : vector<432x64xf32>
      %c383_i32_224 = arith.constant 383 : i32
      %242 = tpu.dynamic_rotate %197 by %c383_i32_224 dim 0 : vector<432x64xf32>, i32 -> vector<432x64xf32>
      %243 = arith.index_cast %199 : i32 to index
      %c7_225 = arith.constant 7 : index
      %c0_226 = arith.constant 0 : index
      %c0_227 = arith.constant 0 : index
      %244 = vector.load %arg2[%243, %c7_225, %c0_226, %c0_227] : memref<20x9x64x64xf32, #tpu.memory_space<vmem>>, vector<1x1x64x64xf32>
      %245 = vector.shape_cast %244 : vector<1x1x64x64xf32> to vector<64x64xf32>
      %cst_228 = arith.constant dense<0.000000e+00> : vector<432x64xf32>
      %246 = tpu.matmul %242, %245, %cst_228 {dimension_numbers = #tpu.dot_dimension_numbers<[1], [0], [0], [1], [0, 0, 1, 1], [], []>} : vector<432x64xf32>, vector<64x64xf32>, vector<432x64xf32> -> vector<432x64xf32>
      %247 = arith.addf %241, %246 : vector<432x64xf32>
      %c382_i32_229 = arith.constant 382 : i32
      %248 = tpu.dynamic_rotate %197 by %c382_i32_229 dim 0 : vector<432x64xf32>, i32 -> vector<432x64xf32>
      %249 = arith.index_cast %199 : i32 to index
      %c8_230 = arith.constant 8 : index
      %c0_231 = arith.constant 0 : index
      %c0_232 = arith.constant 0 : index
      %250 = vector.load %arg2[%249, %c8_230, %c0_231, %c0_232] : memref<20x9x64x64xf32, #tpu.memory_space<vmem>>, vector<1x1x64x64xf32>
      %251 = vector.shape_cast %250 : vector<1x1x64x64xf32> to vector<64x64xf32>
      %cst_233 = arith.constant dense<0.000000e+00> : vector<432x64xf32>
      %252 = tpu.matmul %248, %251, %cst_233 {dimension_numbers = #tpu.dot_dimension_numbers<[1], [0], [0], [1], [0, 0, 1, 1], [], []>} : vector<432x64xf32>, vector<64x64xf32>, vector<432x64xf32> -> vector<432x64xf32>
      %253 = arith.addf %247, %252 : vector<432x64xf32>
      %254 = arith.index_cast %199 : i32 to index
      %c0_234 = arith.constant 0 : index
      %c0_235 = arith.constant 0 : index
      %255 = vector.load %arg3[%254, %c0_234, %c0_235] : memref<20x1x64xf32, #tpu.memory_space<vmem>>, vector<1x1x64xf32>
      %256 = vector.shape_cast %255 : vector<1x1x64xf32> to vector<1x64xf32>
      %257 = vector.broadcast %256 : vector<1x64xf32> to vector<432x64xf32>
      %258 = arith.addf %253, %257 : vector<432x64xf32>
      %cst_236 = arith.constant 0.000000e+00 : f32
      %259 = vector.broadcast %cst_236 : f32 to vector<432x64xf32>
      %260 = arith.maximumf %258, %259 : vector<432x64xf32>
      %261 = vector.shape_cast %260 : vector<432x64xf32> to vector<18x24x64xf32>
      %262 = vector.extract_strided_slice %261 {offsets = [0, 0, 0], sizes = [16, 16, 64], strides = [1, 1, 1]} : vector<18x24x64xf32> to vector<16x16x64xf32>
      %c1_237 = arith.constant 1 : index
      %c1_238 = arith.constant 1 : index
      %c1_239 = arith.constant 1 : index
      %c0_240 = arith.constant 0 : index
      %263 = vector.load %arg5[%c1_237, %c1_238, %c1_239, %c0_240] : memref<2x18x24x64xf32, #tpu.memory_space<vmem>>, vector<1x16x16x64xf32>
      %264 = vector.shape_cast %263 : vector<1x16x16x64xf32> to vector<16x16x64xf32>
      %265 = vector.shape_cast %262 : vector<16x16x64xf32> to vector<1x16x16x64xf32>
      tpu.vector_store %arg5[%c1_237, %c1_238, %c1_239, %c0_240], %265 {strides = array<i32>} : memref<2x18x24x64xf32, #tpu.memory_space<vmem>>, vector<1x16x16x64xf32>,
    }
    %c9_i32_61 = arith.constant 9 : i32
    %c1_62 = arith.constant 1 : index
    %c0_63 = arith.constant 0 : index
    %c0_64 = arith.constant 0 : index
    %c0_65 = arith.constant 0 : index
    %67 = vector.load %arg5[%c1_62, %c0_63, %c0_64, %c0_65] : memref<2x18x24x64xf32, #tpu.memory_space<vmem>>, vector<1x18x24x64xf32>
    %68 = vector.shape_cast %67 : vector<1x18x24x64xf32> to vector<18x24x64xf32>
    %69 = vector.shape_cast %68 : vector<18x24x64xf32> to vector<432x64xf32>
    %cst_66 = arith.constant 0.000000e+00 : f32
    %70 = vector.broadcast %cst_66 : f32 to vector<432x64xf32>
    %c19 = arith.constant 19 : index
    %c0_67 = arith.constant 0 : index
    %c0_68 = arith.constant 0 : index
    %c0_69 = arith.constant 0 : index
    %71 = vector.load %arg2[%c19, %c0_67, %c0_68, %c0_69] : memref<20x9x64x64xf32, #tpu.memory_space<vmem>>, vector<1x1x64x64xf32>
    %72 = vector.shape_cast %71 : vector<1x1x64x64xf32> to vector<64x64xf32>
    %cst_70 = arith.constant dense<0.000000e+00> : vector<432x64xf32>
    %73 = tpu.matmul %69, %72, %cst_70 {dimension_numbers = #tpu.dot_dimension_numbers<[1], [0], [0], [1], [0, 0, 1, 1], [], []>} : vector<432x64xf32>, vector<64x64xf32>, vector<432x64xf32> -> vector<432x64xf32>
    %74 = arith.addf %70, %73 : vector<432x64xf32>
    %c431_i32_71 = arith.constant 431 : i32
    %75 = tpu.dynamic_rotate %69 by %c431_i32_71 dim 0 : vector<432x64xf32>, i32 -> vector<432x64xf32>
    %c19_72 = arith.constant 19 : index
    %c1_73 = arith.constant 1 : index
    %c0_74 = arith.constant 0 : index
    %c0_75 = arith.constant 0 : index
    %76 = vector.load %arg2[%c19_72, %c1_73, %c0_74, %c0_75] : memref<20x9x64x64xf32, #tpu.memory_space<vmem>>, vector<1x1x64x64xf32>
    %77 = vector.shape_cast %76 : vector<1x1x64x64xf32> to vector<64x64xf32>
    %cst_76 = arith.constant dense<0.000000e+00> : vector<432x64xf32>
    %78 = tpu.matmul %75, %77, %cst_76 {dimension_numbers = #tpu.dot_dimension_numbers<[1], [0], [0], [1], [0, 0, 1, 1], [], []>} : vector<432x64xf32>, vector<64x64xf32>, vector<432x64xf32> -> vector<432x64xf32>
    %79 = arith.addf %74, %78 : vector<432x64xf32>
    %c430_i32_77 = arith.constant 430 : i32
    %80 = tpu.dynamic_rotate %69 by %c430_i32_77 dim 0 : vector<432x64xf32>, i32 -> vector<432x64xf32>
    %c19_78 = arith.constant 19 : index
    %c2_79 = arith.constant 2 : index
    %c0_80 = arith.constant 0 : index
    %c0_81 = arith.constant 0 : index
    %81 = vector.load %arg2[%c19_78, %c2_79, %c0_80, %c0_81] : memref<20x9x64x64xf32, #tpu.memory_space<vmem>>, vector<1x1x64x64xf32>
    %82 = vector.shape_cast %81 : vector<1x1x64x64xf32> to vector<64x64xf32>
    %cst_82 = arith.constant dense<0.000000e+00> : vector<432x64xf32>
    %83 = tpu.matmul %80, %82, %cst_82 {dimension_numbers = #tpu.dot_dimension_numbers<[1], [0], [0], [1], [0, 0, 1, 1], [], []>} : vector<432x64xf32>, vector<64x64xf32>, vector<432x64xf32> -> vector<432x64xf32>
    %84 = arith.addf %79, %83 : vector<432x64xf32>
    %c408_i32_83 = arith.constant 408 : i32
    %85 = tpu.dynamic_rotate %69 by %c408_i32_83 dim 0 : vector<432x64xf32>, i32 -> vector<432x64xf32>
    %c19_84 = arith.constant 19 : index
    %c3_85 = arith.constant 3 : index
    %c0_86 = arith.constant 0 : index
    %c0_87 = arith.constant 0 : index
    %86 = vector.load %arg2[%c19_84, %c3_85, %c0_86, %c0_87] : memref<20x9x64x64xf32, #tpu.memory_space<vmem>>, vector<1x1x64x64xf32>
    %87 = vector.shape_cast %86 : vector<1x1x64x64xf32> to vector<64x64xf32>
    %cst_88 = arith.constant dense<0.000000e+00> : vector<432x64xf32>
    %88 = tpu.matmul %85, %87, %cst_88 {dimension_numbers = #tpu.dot_dimension_numbers<[1], [0], [0], [1], [0, 0, 1, 1], [], []>} : vector<432x64xf32>, vector<64x64xf32>, vector<432x64xf32> -> vector<432x64xf32>
    %89 = arith.addf %84, %88 : vector<432x64xf32>
    %c407_i32_89 = arith.constant 407 : i32
    %90 = tpu.dynamic_rotate %69 by %c407_i32_89 dim 0 : vector<432x64xf32>, i32 -> vector<432x64xf32>
    %c19_90 = arith.constant 19 : index
    %c4_91 = arith.constant 4 : index
    %c0_92 = arith.constant 0 : index
    %c0_93 = arith.constant 0 : index
    %91 = vector.load %arg2[%c19_90, %c4_91, %c0_92, %c0_93] : memref<20x9x64x64xf32, #tpu.memory_space<vmem>>, vector<1x1x64x64xf32>
    %92 = vector.shape_cast %91 : vector<1x1x64x64xf32> to vector<64x64xf32>
    %cst_94 = arith.constant dense<0.000000e+00> : vector<432x64xf32>
    %93 = tpu.matmul %90, %92, %cst_94 {dimension_numbers = #tpu.dot_dimension_numbers<[1], [0], [0], [1], [0, 0, 1, 1], [], []>} : vector<432x64xf32>, vector<64x64xf32>, vector<432x64xf32> -> vector<432x64xf32>
    %94 = arith.addf %89, %93 : vector<432x64xf32>
    %c406_i32_95 = arith.constant 406 : i32
    %95 = tpu.dynamic_rotate %69 by %c406_i32_95 dim 0 : vector<432x64xf32>, i32 -> vector<432x64xf32>
    %c19_96 = arith.constant 19 : index
    %c5_97 = arith.constant 5 : index
    %c0_98 = arith.constant 0 : index
    %c0_99 = arith.constant 0 : index
    %96 = vector.load %arg2[%c19_96, %c5_97, %c0_98, %c0_99] : memref<20x9x64x64xf32, #tpu.memory_space<vmem>>, vector<1x1x64x64xf32>
    %97 = vector.shape_cast %96 : vector<1x1x64x64xf32> to vector<64x64xf32>
    %cst_100 = arith.constant dense<0.000000e+00> : vector<432x64xf32>
    %98 = tpu.matmul %95, %97, %cst_100 {dimension_numbers = #tpu.dot_dimension_numbers<[1], [0], [0], [1], [0, 0, 1, 1], [], []>} : vector<432x64xf32>, vector<64x64xf32>, vector<432x64xf32> -> vector<432x64xf32>
    %99 = arith.addf %94, %98 : vector<432x64xf32>
    %c384_i32_101 = arith.constant 384 : i32
    %100 = tpu.dynamic_rotate %69 by %c384_i32_101 dim 0 : vector<432x64xf32>, i32 -> vector<432x64xf32>
    %c19_102 = arith.constant 19 : index
    %c6_103 = arith.constant 6 : index
    %c0_104 = arith.constant 0 : index
    %c0_105 = arith.constant 0 : index
    %101 = vector.load %arg2[%c19_102, %c6_103, %c0_104, %c0_105] : memref<20x9x64x64xf32, #tpu.memory_space<vmem>>, vector<1x1x64x64xf32>
    %102 = vector.shape_cast %101 : vector<1x1x64x64xf32> to vector<64x64xf32>
    %cst_106 = arith.constant dense<0.000000e+00> : vector<432x64xf32>
    %103 = tpu.matmul %100, %102, %cst_106 {dimension_numbers = #tpu.dot_dimension_numbers<[1], [0], [0], [1], [0, 0, 1, 1], [], []>} : vector<432x64xf32>, vector<64x64xf32>, vector<432x64xf32> -> vector<432x64xf32>
    %104 = arith.addf %99, %103 : vector<432x64xf32>
    %c383_i32_107 = arith.constant 383 : i32
    %105 = tpu.dynamic_rotate %69 by %c383_i32_107 dim 0 : vector<432x64xf32>, i32 -> vector<432x64xf32>
    %c19_108 = arith.constant 19 : index
    %c7_109 = arith.constant 7 : index
    %c0_110 = arith.constant 0 : index
    %c0_111 = arith.constant 0 : index
    %106 = vector.load %arg2[%c19_108, %c7_109, %c0_110, %c0_111] : memref<20x9x64x64xf32, #tpu.memory_space<vmem>>, vector<1x1x64x64xf32>
    %107 = vector.shape_cast %106 : vector<1x1x64x64xf32> to vector<64x64xf32>
    %cst_112 = arith.constant dense<0.000000e+00> : vector<432x64xf32>
    %108 = tpu.matmul %105, %107, %cst_112 {dimension_numbers = #tpu.dot_dimension_numbers<[1], [0], [0], [1], [0, 0, 1, 1], [], []>} : vector<432x64xf32>, vector<64x64xf32>, vector<432x64xf32> -> vector<432x64xf32>
    %109 = arith.addf %104, %108 : vector<432x64xf32>
    %c382_i32_113 = arith.constant 382 : i32
    %110 = tpu.dynamic_rotate %69 by %c382_i32_113 dim 0 : vector<432x64xf32>, i32 -> vector<432x64xf32>
    %c19_114 = arith.constant 19 : index
    %c8_115 = arith.constant 8 : index
    %c0_116 = arith.constant 0 : index
    %c0_117 = arith.constant 0 : index
    %111 = vector.load %arg2[%c19_114, %c8_115, %c0_116, %c0_117] : memref<20x9x64x64xf32, #tpu.memory_space<vmem>>, vector<1x1x64x64xf32>
    %112 = vector.shape_cast %111 : vector<1x1x64x64xf32> to vector<64x64xf32>
    %cst_118 = arith.constant dense<0.000000e+00> : vector<432x64xf32>
    %113 = tpu.matmul %110, %112, %cst_118 {dimension_numbers = #tpu.dot_dimension_numbers<[1], [0], [0], [1], [0, 0, 1, 1], [], []>} : vector<432x64xf32>, vector<64x64xf32>, vector<432x64xf32> -> vector<432x64xf32>
    %114 = arith.addf %109, %113 : vector<432x64xf32>
    %c19_119 = arith.constant 19 : index
    %c0_120 = arith.constant 0 : index
    %c0_121 = arith.constant 0 : index
    %115 = vector.load %arg3[%c19_119, %c0_120, %c0_121] : memref<20x1x64xf32, #tpu.memory_space<vmem>>, vector<1x1x64xf32>
    %116 = vector.shape_cast %115 : vector<1x1x64xf32> to vector<1x64xf32>
    %117 = vector.broadcast %116 : vector<1x64xf32> to vector<432x64xf32>
    %118 = arith.addf %114, %117 : vector<432x64xf32>
    %119 = vector.shape_cast %118 : vector<432x64xf32> to vector<18x24x64xf32>
    %120 = vector.extract_strided_slice %119 {offsets = [0, 0, 0], sizes = [16, 16, 1], strides = [1, 1, 1]} : vector<18x24x64xf32> to vector<16x16x1xf32>
    %c0_122 = arith.constant 0 : index
    %c0_123 = arith.constant 0 : index
    %c0_124 = arith.constant 0 : index
    %c0_125 = arith.constant 0 : index
    %121 = vector.load %arg4[%c0_122, %c0_123, %c0_124, %c0_125] : memref<1x16x16x1xf32, #tpu.memory_space<vmem>>, vector<1x16x16x1xf32>
    %122 = vector.shape_cast %121 : vector<1x16x16x1xf32> to vector<16x16x1xf32>
    %123 = vector.shape_cast %120 : vector<16x16x1xf32> to vector<1x16x16x1xf32>
    tpu.vector_store %arg4[%c0_122, %c0_123, %c0_124, %c0_125], %123 {strides = array<i32>} : memref<1x16x16x1xf32, #tpu.memory_space<vmem>>, vector<1x16x16x1xf32>,
    return
  }
  func.func @transform_0(%arg0: i32) -> (i32, i32, i32, i32) {
    %c0_i32 = arith.constant 0 : i32
    %c0_i32_0 = arith.constant 0 : i32
    %c0_i32_1 = arith.constant 0 : i32
    %c0_i32_2 = arith.constant 0 : i32
    return %arg0, %c0_i32, %c0_i32_0, %c0_i32_1 : i32, i32, i32, i32
  }
  func.func @transform_1(%arg0: i32) -> (i32, i32, i32, i32) {
    %c0_i32 = arith.constant 0 : i32
    %c0_i32_0 = arith.constant 0 : i32
    %c0_i32_1 = arith.constant 0 : i32
    %c0_i32_2 = arith.constant 0 : i32
    %c0_i32_3 = arith.constant 0 : i32
    return %c0_i32, %c0_i32_0, %c0_i32_1, %c0_i32_2 : i32, i32, i32, i32
  }
  func.func @transform_2(%arg0: i32) -> (i32, i32, i32) {
    %c0_i32 = arith.constant 0 : i32
    %c0_i32_0 = arith.constant 0 : i32
    %c0_i32_1 = arith.constant 0 : i32
    %c0_i32_2 = arith.constant 0 : i32
    return %c0_i32, %c0_i32_0, %c0_i32_1 : i32, i32, i32
  }
  func.func @transform_3(%arg0: i32) -> (i32, i32, i32, i32) {
    %c0_i32 = arith.constant 0 : i32
    %c0_i32_0 = arith.constant 0 : i32
    %c0_i32_1 = arith.constant 0 : i32
    %c0_i32_2 = arith.constant 0 : i32
    return %arg0, %c0_i32, %c0_i32_0, %c0_i32_1 : i32, i32, i32, i32
  }
}

</mosaic_0001>

<llo_original>
// kernel: vdsr_pallas.1
$region0: #{vdsr_pallas.1}
  #allocation0 [shape = 'u32[]', space=smem, size = 0x4, offset = 0x4, fixed_abs, tag = 'smem constant byte address 0x4 - core index']
  #allocation1 [shape = 'u32[72,128]{1,0:T(1,128)}', space=vmem, size = 0x9000, scoped, tag = 'internal scratch']
  #allocation2 [shape = 'f32[2,18,24,64]{3,2,1,0:T(8,128)}', space=vmem, size = 0x6c000, scoped, tag = 'scratch operand']
  %s0 = inlined_call_operand.vmem [shape: f32[2,16,16,1], index: 0, kind: input, shape index: {}]
  %s1 = inlined_call_operand.hbm [shape: f32[20,9,64,64], index: 1, kind: input, shape index: {}]
  %s2 = inlined_call_operand.hbm [shape: f32[20,1,64], index: 2, kind: input, shape index: {}]
  %s3 = inlined_call_operand.vmem [shape: f32[2,16,16,1], index: 3, kind: output, shape index: {}]
  %s4 = sld [smem:[#allocation0]]
  $region60: #{vdsr_pallas.1} parent=0
    _
  %s6 = ssub.s32 1, %s4
  %s7 = scalar_select 0, %s6, %s4
  $region1: #{vdsr_pallas.1} parent=0
    #allocation3 [shape = 'u8[5898240]{0}', space=vmem, size = 0x5a0000, scoped, tag = 'input window, operand 1, single buffered']
    #allocation4 [shape = 's32[2]{0}', space=sflag, size = 0x8, scoped, tag = 'scoped memory for vdsr_pallas.1']
    #allocation5 [shape = 'u8[10240]{0}', space=vmem, size = 0x2800, scoped, tag = 'input window, operand 2, single buffered']
    #allocation6 [shape = 's32[1]{0}', space=sflag, size = 0x4, scoped, tag = 'scoped memory for vdsr_pallas.1']
    %8 = vsyncpa [#allocation4], 0
    %9 = vsyncpa [#allocation6], 0
    loop: start=0, step=1, limit=4
    $region2: #{vdsr_pallas.1} parent=1 // loop_pre_header
      _
    $region3: #{vdsr_pallas.1} parent=1 // loop_header
      %s11 = sphi 0, %s15
      %p12 = scmp.ge.s32.totalorder %s11, 4
      %s21 = sphi 0, %s23
      %s24 = sphi 0, %s21
      %s25 = sphi 0, %s24
      %s41 = sphi 0, %s25
      %s45 = sphi 0, %s45
      %s47 = sphi 0, %s45
      %s48 = sphi 0, %s47
      %s62 = sphi 0, %s48
      %s66 = sphi 0, %s66
      %s68 = sphi 0, %s66
      %s69 = sphi 0, %s68
      %s83 = sphi 0, %s69
      %s89 = sphi 0, %s91
      %s92 = sphi 0, %s89
      %s93 = sphi 0, %s92
      %s109 = sphi 0, %s93
    $region4: #{vdsr_pallas.1} parent=1 // loop_header_branch
      %14 = sbr.rel (%p12) target = $region8
    $region5: #{vdsr_pallas.1} parent=1 // loop_body
      %s16 = ssub.s32 %s11, 1
      %s17 = ssub.s32 %s11, 2
      %s18 = sadd.s32 %s11, 1
      %s19 = ssub.s32 %s11, %s18
      %p20 = scmp.eq.s32.totalorder %s19, 0
      %s22 = sadd.s32 %s21, 1
      %s23 = scalar_select %p20, %s21, %s22
      %p26 = pneg %p20
      %p27 = scmp.eq.s32.totalorder %s11, 1
      %p28 = por %p26, %p27
      %p29 = scmp.ne.s32.totalorder %s21, %s24
      %p30 = scmp.eq.s32.totalorder %s11, 0
      %p31 = por %p29, %p30
      %p32 = scmp.ne.s32.totalorder %s21, %s24
      %p33 = scmp.eq.s32.totalorder %s16, 1
      %p34 = por %p32, %p33
      %p35 = scmp.ne.s32.totalorder %s24, %s25
      %p36 = scmp.eq.s32.totalorder %s16, 0
      %p37 = por %p35, %p36
      %p38 = scmp.ne.s32.totalorder %s24, %s25
      %p39 = scmp.eq.s32.totalorder %s17, 1
      %p40 = por %p38, %p39
      %p42 = scmp.ne.s32.totalorder %s25, %s41
      %p43 = scmp.eq.s32.totalorder %s17, 0
      %p44 = por %p42, %p43
      %s46 = sadd.s32 %s45, 1
      %p49 = scmp.eq.s32.totalorder %s11, 1
      %p50 = scmp.ne.s32.totalorder %s45, %s47
      %p51 = scmp.eq.s32.totalorder %s11, 0
      %p52 = por %p50, %p51
      %p53 = scmp.ne.s32.totalorder %s45, %s47
      %p54 = scmp.eq.s32.totalorder %s16, 1
      %p55 = por %p53, %p54
      %p56 = scmp.ne.s32.totalorder %s47, %s48
      %p57 = scmp.eq.s32.totalorder %s16, 0
      %p58 = por %p56, %p57
      %p59 = scmp.ne.s32.totalorder %s47, %s48
      %p60 = scmp.eq.s32.totalorder %s17, 1
      %p61 = por %p59, %p60
      %p63 = scmp.ne.s32.totalorder %s48, %s62
      %p64 = scmp.eq.s32.totalorder %s17, 0
      %p65 = por %p63, %p64
      %s67 = sadd.s32 %s66, 1
      %p70 = scmp.eq.s32.totalorder %s11, 1
      %p71 = scmp.ne.s32.totalorder %s66, %s68
      %p72 = scmp.eq.s32.totalorder %s11, 0
      %p73 = por %p71, %p72
      %p74 = scmp.ne.s32.totalorder %s66, %s68
      %p75 = scmp.eq.s32.totalorder %s16, 1
      %p76 = por %p74, %p75
      %p77 = scmp.ne.s32.totalorder %s68, %s69
      %p78 = scmp.eq.s32.totalorder %s16, 0
      %p79 = por %p77, %p78
      %p80 = scmp.ne.s32.totalorder %s68, %s69
      %p81 = scmp.eq.s32.totalorder %s17, 1
      %p82 = por %p80, %p81
      %p84 = scmp.ne.s32.totalorder %s69, %s83
      %p85 = scmp.eq.s32.totalorder %s17, 0
      %p86 = por %p84, %p85
      %s87 = ssub.s32 %s11, %s18
      %p88 = scmp.eq.s32.totalorder %s87, 0
      %s90 = sadd.s32 %s89, 1
      %s91 = scalar_select %p88, %s89, %s90
      %p94 = pneg %p88
      %p95 = scmp.eq.s32.totalorder %s11, 1
      %p96 = por %p94, %p95
      %p97 = scmp.ne.s32.totalorder %s89, %s92
      %p98 = scmp.eq.s32.totalorder %s11, 0
      %p99 = por %p97, %p98
      %p100 = scmp.ne.s32.totalorder %s89, %s92
      %p101 = scmp.eq.s32.totalorder %s16, 1
      %p102 = por %p100, %p101
      %p103 = scmp.ne.s32.totalorder %s92, %s93
      %p104 = scmp.eq.s32.totalorder %s16, 0
      %p105 = por %p103, %p104
      %p106 = scmp.ne.s32.totalorder %s92, %s93
      %p107 = scmp.eq.s32.totalorder %s17, 1
      %p108 = por %p106, %p107
      %p110 = scmp.ne.s32.totalorder %s93, %s109
      %p111 = scmp.eq.s32.totalorder %s17, 0
      %p112 = por %p110, %p111
      %p113 = scmp.le.s32.totalorder 1, %s11
      %p114 = scmp.lt.s32.totalorder %s11, 3
      %p115 = pnand %p113, %p114
      %p116 = pneg %p115
      // Predicated region
      $region9: #{vdsr_pallas.1} parent=5 // pred_check
        _
      $region10: #{vdsr_pallas.1} parent=5 // pred_check_branch
        %118 = sbr.rel (%p115) target = $region12
      $region11: #{vdsr_pallas.1} parent=5 // pred_region
        %s119 = ssub.s32 %s11, 1
        // Predicated region
        $region13: #{vdsr_pallas.1} parent=11 // pred_check
          %p120 = pneg %p58
        $region14: #{vdsr_pallas.1} parent=11 // pred_check_branch
          %122 = sbr.rel (%p120) target = $region16
        $region15: #{vdsr_pallas.1} parent=11 // pred_region
          %124 = vsyncadd [#allocation4], 0
          %s125 = sshll.u32 %s1, 4
          %s126 = int_to_ptr.hbm [resolvable:$true] %s125
          %s127 = sshll.u32 [#allocation3], 4
          %s128 = int_to_ptr.vmem [resolvable:$true] %s127
          %133 = dma.hbm_to_vmem [thread:$0]  %s126, 184320, %s128, [#allocation4], 128, 128, 8
        $region16: #{vdsr_pallas.1} parent=11 // pred_fallthru
          _
        // Predicated region
        $region17: #{vdsr_pallas.1} parent=11 // pred_check
          %p134 = pneg %p79
        $region18: #{vdsr_pallas.1} parent=11 // pred_check_branch
          %136 = sbr.rel (%p134) target = $region20
        $region19: #{vdsr_pallas.1} parent=11 // pred_region
          %138 = vsyncadd [#allocation6], 0
          %s139 = sshll.u32 %s2, 4
          %s140 = int_to_ptr.hbm [resolvable:$true] %s139
          %s141 = sshll.u32 [#allocation5], 4
          %s142 = int_to_ptr.vmem [resolvable:$true] %s141
          %147 = dma.hbm_to_vmem [thread:$0]  %s140, 320, %s142, [#allocation6], 16, 16, 1
        $region20: #{vdsr_pallas.1} parent=11 // pred_fallthru
          _
      $region12: #{vdsr_pallas.1} parent=5 // pred_fallthru
        _
      %p148 = scmp.lt.s32.totalorder %s11, 2
      // Predicated region
      $region21: #{vdsr_pallas.1} parent=5 // pred_check
        %p149 = pneg %p148
      $region22: #{vdsr_pallas.1} parent=5 // pred_check_branch
        %151 = sbr.rel (%p149) target = $region24
      $region23: #{vdsr_pallas.1} parent=5 // pred_region
        // Predicated region
        $region25: #{vdsr_pallas.1} parent=23 // pred_check
          %p152 = pneg %p31
        $region26: #{vdsr_pallas.1} parent=23 // pred_check_branch
          %154 = sbr.rel (%p152) target = $region28
        $region27: #{vdsr_pallas.1} parent=23 // pred_region
          %p155 = scmp.lt.s32.totalorder %s11, 1
          %s156 = scalar_select %p155, %s11, 1
          %s157 = smul.addr %s156, 32
          %s158 = smul.addr %s157, 8
          %s159 = scalar_lea.vmem %s0, %s158
        $region28: #{vdsr_pallas.1} parent=23 // pred_fallthru
          _
      $region24: #{vdsr_pallas.1} parent=5 // pred_fallthru
        _
      %p160 = scmp.le.s32.totalorder 1, %s11
      %p161 = scmp.lt.s32.totalorder %s11, 3
      %p162 = pnand %p160, %p161
      %p163 = pneg %p162
      // Predicated region
      $region29: #{vdsr_pallas.1} parent=5 // pred_check
        _
      $region30: #{vdsr_pallas.1} parent=5 // pred_check_branch
        %165 = sbr.rel (%p162) target = $region32
      $region31: #{vdsr_pallas.1} parent=5 // pred_region
        %s166 = ssub.s32 %s11, 1
        // Predicated region
        $region33: #{vdsr_pallas.1} parent=31 // pred_check
          %p167 = pneg %p58
        $region34: #{vdsr_pallas.1} parent=31 // pred_check_branch
          %169 = sbr.rel (%p167) target = $region36
        $region35: #{vdsr_pallas.1} parent=31 // pred_region
          %171 = dma.done [#allocation4], 184320
        $region36: #{vdsr_pallas.1} parent=31 // pred_fallthru
          _
        // Predicated region
        $region37: #{vdsr_pallas.1} parent=31 // pred_check
          %p172 = pneg %p79
        $region38: #{vdsr_pallas.1} parent=31 // pred_check_branch
          %174 = sbr.rel (%p172) target = $region40
        $region39: #{vdsr_pallas.1} parent=31 // pred_region
          %176 = dma.done [#allocation6], 320
        $region40: #{vdsr_pallas.1} parent=31 // pred_fallthru
          _
        %p177 = scmp.lt.s32.totalorder %s16, 1
        %s178 = scalar_select %p177, %s16, 1
        %s179 = smul.addr %s178, 32
        %s180 = smul.addr %s179, 8
        %s181 = scalar_lea.vmem %s0, %s180
        %p182 = pneg %p37
        %p183 = pneg %p34
        %p184 = pneg %p58
        %p185 = pneg %p55
        %p186 = pneg %p79
        %p187 = pneg %p76
        %p188 = pneg %p105
        %p189 = pneg %p102
        %p190 = scmp.lt.s32.totalorder %s16, 1
        %s191 = scalar_select %p190, %s16, 1
        %s192 = smul.addr %s191, 32
        %s193 = smul.addr %s192, 8
        %s194 = scalar_lea.vmem %s3, %s193
        %p195 = scmp.lt.s32.totalorder %s16, 1
        %s196 = scalar_select %p195, %s16, 1
        %s197 = smul.addr %s196, 32
        %s198 = smul.addr %s197, 8
        %s199 = scalar_lea.vmem %s0, %s198
        %p200 = scmp.lt.s32.totalorder %s16, 1
        %s201 = scalar_select %p200, %s16, 1
        %s202 = smul.addr %s201, 32
        %s203 = smul.addr %s202, 8
        %s204 = scalar_lea.vmem %s3, %s203
        %vm205 = vcmask 523264
        %206 = vst.msk [vmem:[#allocation2] sm:$0xff] %vm205, 0.0
        %207 = vst.msk [vmem:[#allocation2 + $0x8] sm:$0xff] %vm205, 0.0
        %208 = vst.msk [vmem:[#allocation2 + $0x10] sm:$0xff] %vm205, 0.0
        %209 = vst.msk [vmem:[#allocation2 + $0x18] sm:$0xff] %vm205, 0.0
        %210 = vst.msk [vmem:[#allocation2 + $0x20] sm:$0xff] %vm205, 0.0
        %211 = vst.msk [vmem:[#allocation2 + $0x28] sm:$0xff] %vm205, 0.0
        %212 = vst.msk [vmem:[#allocation2 + $0x30] sm:$0xff] %vm205, 0.0
        %213 = vst.msk [vmem:[#allocation2 + $0x38] sm:$0xff] %vm205, 0.0
        %214 = vst.msk [vmem:[#allocation2 + $0x40] sm:$0xff] %vm205, 0.0
        %215 = vst.msk [vmem:[#allocation2 + $0x48] sm:$0xff] %vm205, 0.0
        %216 = vst.msk [vmem:[#allocation2 + $0x50] sm:$0xff] %vm205, 0.0
        %217 = vst.msk [vmem:[#allocation2 + $0x58] sm:$0xff] %vm205, 0.0
        %218 = vst.msk [vmem:[#allocation2 + $0x60] sm:$0xff] %vm205, 0.0
        %219 = vst.msk [vmem:[#allocation2 + $0x68] sm:$0xff] %vm205, 0.0
        %220 = vst.msk [vmem:[#allocation2 + $0x70] sm:$0xff] %vm205, 0.0
        %221 = vst.msk [vmem:[#allocation2 + $0x78] sm:$0xff] %vm205, 0.0
        %222 = vst.msk [vmem:[#allocation2 + $0x80] sm:$0xff] %vm205, 0.0
        %223 = vst.msk [vmem:[#allocation2 + $0x88] sm:$0xff] %vm205, 0.0
        %224 = vst.msk [vmem:[#allocation2 + $0x90] sm:$0xff] %vm205, 0.0
        %225 = vst.msk [vmem:[#allocation2 + $0x98] sm:$0xff] %vm205, 0.0
        %226 = vst.msk [vmem:[#allocation2 + $0xa0] sm:$0xff] %vm205, 0.0
        %227 = vst.msk [vmem:[#allocation2 + $0xa8] sm:$0xff] %vm205, 0.0
        %228 = vst.msk [vmem:[#allocation2 + $0xb0] sm:$0xff] %vm205, 0.0
        %229 = vst.msk [vmem:[#allocation2 + $0xb8] sm:$0xff] %vm205, 0.0
        %230 = vst.msk [vmem:[#allocation2 + $0xc0] sm:$0xff] %vm205, 0.0
        %231 = vst.msk [vmem:[#allocation2 + $0xc8] sm:$0xff] %vm205, 0.0
        %232 = vst.msk [vmem:[#allocation2 + $0xd0] sm:$0xff] %vm205, 0.0
        %233 = vst.msk [vmem:[#allocation2 + $0xd8] sm:$0xff] %vm205, 0.0
        %234 = vst.msk [vmem:[#allocation2 + $0xe0] sm:$0xff] %vm205, 0.0
        %235 = vst.msk [vmem:[#allocation2 + $0xe8] sm:$0xff] %vm205, 0.0
        %236 = vst.msk [vmem:[#allocation2 + $0xf0] sm:$0xff] %vm205, 0.0
        %237 = vst.msk [vmem:[#allocation2 + $0xf8] sm:$0xff] %vm205, 0.0
        %238 = vst.msk [vmem:[#allocation2 + $0x100] sm:$0xff] %vm205, 0.0
        %239 = vst.msk [vmem:[#allocation2 + $0x108] sm:$0xff] %vm205, 0.0
        %240 = vst.msk [vmem:[#allocation2 + $0x110] sm:$0xff] %vm205, 0.0
        %241 = vst.msk [vmem:[#allocation2 + $0x118] sm:$0xff] %vm205, 0.0
        %242 = vst.msk [vmem:[#allocation2 + $0x120] sm:$0xff] %vm205, 0.0
        %243 = vst.msk [vmem:[#allocation2 + $0x128] sm:$0xff] %vm205, 0.0
        %244 = vst.msk [vmem:[#allocation2 + $0x130] sm:$0xff] %vm205, 0.0
        %245 = vst.msk [vmem:[#allocation2 + $0x138] sm:$0xff] %vm205, 0.0
        %246 = vst.msk [vmem:[#allocation2 + $0x140] sm:$0xff] %vm205, 0.0
        %247 = vst.msk [vmem:[#allocation2 + $0x148] sm:$0xff] %vm205, 0.0
        %248 = vst.msk [vmem:[#allocation2 + $0x150] sm:$0xff] %vm205, 0.0
        %249 = vst.msk [vmem:[#allocation2 + $0x158] sm:$0xff] %vm205, 0.0
        %250 = vst.msk [vmem:[#allocation2 + $0x160] sm:$0xff] %vm205, 0.0
        %251 = vst.msk [vmem:[#allocation2 + $0x168] sm:$0xff] %vm205, 0.0
        %252 = vst.msk [vmem:[#allocation2 + $0x170] sm:$0xff] %vm205, 0.0
        %253 = vst.msk [vmem:[#allocation2 + $0x178] sm:$0xff] %vm205, 0.0
        %254 = vst.msk [vmem:[#allocation2 + $0x180] sm:$0xff] %vm205, 0.0
        %255 = vst.msk [vmem:[#allocation2 + $0x188] sm:$0xff] %vm205, 0.0
        %256 = vst.msk [vmem:[#allocation2 + $0x190] sm:$0xff] %vm205, 0.0
        %257 = vst.msk [vmem:[#allocation2 + $0x198] sm:$0xff] %vm205, 0.0
        %258 = vst.msk [vmem:[#allocation2 + $0x1a0] sm:$0xff] %vm205, 0.0
        %259 = vst.msk [vmem:[#allocation2 + $0x1a8] sm:$0xff] %vm205, 0.0
        %260 = vst.msk [vmem:[#allocation2 + $0x1b0] sm:$0xff] %vm205, 0.0
        %261 = vst.msk [vmem:[#allocation2 + $0x1b8] sm:$0xff] %vm205, 0.0
        %262 = vst.msk [vmem:[#allocation2 + $0x1c0] sm:$0xff] %vm205, 0.0
        %263 = vst.msk [vmem:[#allocation2 + $0x1c8] sm:$0xff] %vm205, 0.0
        %264 = vst.msk [vmem:[#allocation2 + $0x1d0] sm:$0xff] %vm205, 0.0
        %265 = vst.msk [vmem:[#allocation2 + $0x1d8] sm:$0xff] %vm205, 0.0
        %266 = vst.msk [vmem:[#allocation2 + $0x1e0] sm:$0xff] %vm205, 0.0
        %267 = vst.msk [vmem:[#allocation2 + $0x1e8] sm:$0xff] %vm205, 0.0
        %268 = vst.msk [vmem:[#allocation2 + $0x1f0] sm:$0xff] %vm205, 0.0
        %269 = vst.msk [vmem:[#allocation2 + $0x1f8] sm:$0xff] %vm205, 0.0
        %270 = vst.msk [vmem:[#allocation2 + $0x200] sm:$0xff] %vm205, 0.0
        %271 = vst.msk [vmem:[#allocation2 + $0x208] sm:$0xff] %vm205, 0.0
        %272 = vst.msk [vmem:[#allocation2 + $0x210] sm:$0xff] %vm205, 0.0
        %273 = vst.msk [vmem:[#allocation2 + $0x218] sm:$0xff] %vm205, 0.0
        %274 = vst.msk [vmem:[#allocation2 + $0x220] sm:$0xff] %vm205, 0.0
        %275 = vst.msk [vmem:[#allocation2 + $0x228] sm:$0xff] %vm205, 0.0
        %276 = vst.msk [vmem:[#allocation2 + $0x230] sm:$0xff] %vm205, 0.0
        %277 = vst.msk [vmem:[#allocation2 + $0x238] sm:$0xff] %vm205, 0.0
        %278 = vst.msk [vmem:[#allocation2 + $0x240] sm:$0xff] %vm205, 0.0
        %279 = vst.msk [vmem:[#allocation2 + $0x248] sm:$0xff] %vm205, 0.0
        %280 = vst.msk [vmem:[#allocation2 + $0x250] sm:$0xff] %vm205, 0.0
        %281 = vst.msk [vmem:[#allocation2 + $0x258] sm:$0xff] %vm205, 0.0
        %282 = vst.msk [vmem:[#allocation2 + $0x260] sm:$0xff] %vm205, 0.0
        %283 = vst.msk [vmem:[#allocation2 + $0x268] sm:$0xff] %vm205, 0.0
        %284 = vst.msk [vmem:[#allocation2 + $0x270] sm:$0xff] %vm205, 0.0
        %285 = vst.msk [vmem:[#allocation2 + $0x278] sm:$0xff] %vm205, 0.0
        %286 = vst.msk [vmem:[#allocation2 + $0x280] sm:$0xff] %vm205, 0.0
        %287 = vst.msk [vmem:[#allocation2 + $0x288] sm:$0xff] %vm205, 0.0
        %288 = vst.msk [vmem:[#allocation2 + $0x290] sm:$0xff] %vm205, 0.0
        %289 = vst.msk [vmem:[#allocation2 + $0x298] sm:$0xff] %vm205, 0.0
        %290 = vst.msk [vmem:[#allocation2 + $0x2a0] sm:$0xff] %vm205, 0.0
        %291 = vst.msk [vmem:[#allocation2 + $0x2a8] sm:$0xff] %vm205, 0.0
        %292 = vst.msk [vmem:[#allocation2 + $0x2b0] sm:$0xff] %vm205, 0.0
        %293 = vst.msk [vmem:[#allocation2 + $0x2b8] sm:$0xff] %vm205, 0.0
        %294 = vst.msk [vmem:[#allocation2 + $0x2c0] sm:$0xff] %vm205, 0.0
        %295 = vst.msk [vmem:[#allocation2 + $0x2c8] sm:$0xff] %vm205, 0.0
        %296 = vst.msk [vmem:[#allocation2 + $0x2d0] sm:$0xff] %vm205, 0.0
        %297 = vst.msk [vmem:[#allocation2 + $0x2d8] sm:$0xff] %vm205, 0.0
        %298 = vst.msk [vmem:[#allocation2 + $0x2e0] sm:$0xff] %vm205, 0.0
        %299 = vst.msk [vmem:[#allocation2 + $0x2e8] sm:$0xff] %vm205, 0.0
        %300 = vst.msk [vmem:[#allocation2 + $0x2f0] sm:$0xff] %vm205, 0.0
        %301 = vst.msk [vmem:[#allocation2 + $0x2f8] sm:$0xff] %vm205, 0.0
        %302 = vst.msk [vmem:[#allocation2 + $0x300] sm:$0xff] %vm205, 0.0
        %303 = vst.msk [vmem:[#allocation2 + $0x308] sm:$0xff] %vm205, 0.0
        %304 = vst.msk [vmem:[#allocation2 + $0x310] sm:$0xff] %vm205, 0.0
        %305 = vst.msk [vmem:[#allocation2 + $0x318] sm:$0xff] %vm205, 0.0
        %306 = vst.msk [vmem:[#allocation2 + $0x320] sm:$0xff] %vm205, 0.0
        %307 = vst.msk [vmem:[#allocation2 + $0x328] sm:$0xff] %vm205, 0.0
        %308 = vst.msk [vmem:[#allocation2 + $0x330] sm:$0xff] %vm205, 0.0
        %309 = vst.msk [vmem:[#allocation2 + $0x338] sm:$0xff] %vm205, 0.0
        %310 = vst.msk [vmem:[#allocation2 + $0x340] sm:$0xff] %vm205, 0.0
        %311 = vst.msk [vmem:[#allocation2 + $0x348] sm:$0xff] %vm205, 0.0
        %312 = vst.msk [vmem:[#allocation2 + $0x350] sm:$0xff] %vm205, 0.0
        %313 = vst.msk [vmem:[#allocation2 + $0x358] sm:$0xff] %vm205, 0.0
        %v314 = vld [vmem:[%s199] sm:$0xff]
        %v315 = vld [vmem:[%s199 + $0x8] sm:$0xff]
        %v316 = vld [vmem:[%s199 + $0x10] sm:$0xff]
        %v317 = vld [vmem:[%s199 + $0x18] sm:$0xff]
        %v318 = vld [vmem:[%s199 + $0x20] sm:$0xff]
        %v319 = vld [vmem:[%s199 + $0x28] sm:$0xff]
        %v320 = vld [vmem:[%s199 + $0x30] sm:$0xff]
        %v321 = vld [vmem:[%s199 + $0x38] sm:$0xff]
        %v322 = vld [vmem:[%s199 + $0x40] sm:$0xff]
        %v323 = vld [vmem:[%s199 + $0x48] sm:$0xff]
        %v324 = vld [vmem:[%s199 + $0x50] sm:$0xff]
        %v325 = vld [vmem:[%s199 + $0x58] sm:$0xff]
        %v326 = vld [vmem:[%s199 + $0x60] sm:$0xff]
        %v327 = vld [vmem:[%s199 + $0x68] sm:$0xff]
        %v328 = vld [vmem:[%s199 + $0x70] sm:$0xff]
        %v329 = vld [vmem:[%s199 + $0x78] sm:$0xff]
        %v330 = vld [vmem:[%s199 + $0x80] sm:$0xff]
        %v331 = vld [vmem:[%s199 + $0x88] sm:$0xff]
        %v332 = vld [vmem:[%s199 + $0x90] sm:$0xff]
        %v333 = vld [vmem:[%s199 + $0x98] sm:$0xff]
        %v334 = vld [vmem:[%s199 + $0xa0] sm:$0xff]
        %v335 = vld [vmem:[%s199 + $0xa8] sm:$0xff]
        %v336 = vld [vmem:[%s199 + $0xb0] sm:$0xff]
        %v337 = vld [vmem:[%s199 + $0xb8] sm:$0xff]
        %v338 = vld [vmem:[%s199 + $0xc0] sm:$0xff]
        %v339 = vld [vmem:[%s199 + $0xc8] sm:$0xff]
        %v340 = vld [vmem:[%s199 + $0xd0] sm:$0xff]
        %v341 = vld [vmem:[%s199 + $0xd8] sm:$0xff]
        %v342 = vld [vmem:[%s199 + $0xe0] sm:$0xff]
        %v343 = vld [vmem:[%s199 + $0xe8] sm:$0xff]
        %v344 = vld [vmem:[%s199 + $0xf0] sm:$0xff]
        %v345 = vld [vmem:[%s199 + $0xf8] sm:$0xff]
        %s346 = scalar_lea.vmem [#allocation2], 24
        %vm347 = vcmask 7168
        %348 = vst.msk [vmem:[%s346 + $0x1] sm:$0xff] %vm347, %v314
        %349 = vst.msk [vmem:[%s346 + $0x9] sm:$0xff] %vm347, %v315
        %350 = vst.msk [vmem:[%s346 + $0x19] sm:$0xff] %vm347, %v316
        %351 = vst.msk [vmem:[%s346 + $0x21] sm:$0xff] %vm347, %v317
        %352 = vst.msk [vmem:[%s346 + $0x31] sm:$0xff] %vm347, %v318
        %353 = vst.msk [vmem:[%s346 + $0x39] sm:$0xff] %vm347, %v319
        %354 = vst.msk [vmem:[%s346 + $0x49] sm:$0xff] %vm347, %v320
        %355 = vst.msk [vmem:[%s346 + $0x51] sm:$0xff] %vm347, %v321
        %356 = vst.msk [vmem:[%s346 + $0x61] sm:$0xff] %vm347, %v322
        %357 = vst.msk [vmem:[%s346 + $0x69] sm:$0xff] %vm347, %v323
        %358 = vst.msk [vmem:[%s346 + $0x79] sm:$0xff] %vm347, %v324
        %359 = vst.msk [vmem:[%s346 + $0x81] sm:$0xff] %vm347, %v325
        %360 = vst.msk [vmem:[%s346 + $0x91] sm:$0xff] %vm347, %v326
        %361 = vst.msk [vmem:[%s346 + $0x99] sm:$0xff] %vm347, %v327
        %362 = vst.msk [vmem:[%s346 + $0xa9] sm:$0xff] %vm347, %v328
        %363 = vst.msk [vmem:[%s346 + $0xb1] sm:$0xff] %vm347, %v329
        %364 = vst.msk [vmem:[%s346 + $0xc1] sm:$0xff] %vm347, %v330
        %365 = vst.msk [vmem:[%s346 + $0xc9] sm:$0xff] %vm347, %v331
        %366 = vst.msk [vmem:[%s346 + $0xd9] sm:$0xff] %vm347, %v332
        %367 = vst.msk [vmem:[%s346 + $0xe1] sm:$0xff] %vm347, %v333
        %368 = vst.msk [vmem:[%s346 + $0xf1] sm:$0xff] %vm347, %v334
        %369 = vst.msk [vmem:[%s346 + $0xf9] sm:$0xff] %vm347, %v335
        %370 = vst.msk [vmem:[%s346 + $0x109] sm:$0xff] %vm347, %v336
        %371 = vst.msk [vmem:[%s346 + $0x111] sm:$0xff] %vm347, %v337
        %372 = vst.msk [vmem:[%s346 + $0x121] sm:$0xff] %vm347, %v338
        %373 = vst.msk [vmem:[%s346 + $0x129] sm:$0xff] %vm347, %v339
        %374 = vst.msk [vmem:[%s346 + $0x139] sm:$0xff] %vm347, %v340
        %375 = vst.msk [vmem:[%s346 + $0x141] sm:$0xff] %vm347, %v341
        %376 = vst.msk [vmem:[%s346 + $0x151] sm:$0xff] %vm347, %v342
        %377 = vst.msk [vmem:[%s346 + $0x159] sm:$0xff] %vm347, %v343
        %378 = vst.msk [vmem:[%s346 + $0x169] sm:$0xff] %vm347, %v344
        %379 = vst.msk [vmem:[%s346 + $0x171] sm:$0xff] %vm347, %v345
        %v380 = vld [vmem:[#allocation2] sm:$0xff]
        %v381 = vld [vmem:[#allocation2 + $0x8] sm:$0xff]
        %v382 = vld [vmem:[#allocation2 + $0x10] sm:$0xff]
        %v383 = vld [vmem:[#allocation2 + $0x18] sm:$0xff]
        %v384 = vld [vmem:[#allocation2 + $0x20] sm:$0xff]
        %v385 = vld [vmem:[#allocation2 + $0x28] sm:$0xff]
        %v386 = vld [vmem:[#allocation2 + $0x30] sm:$0xff]
        %v387 = vld [vmem:[#allocation2 + $0x38] sm:$0xff]
        %v388 = vld [vmem:[#allocation2 + $0x40] sm:$0xff]
        %v389 = vld [vmem:[#allocation2 + $0x48] sm:$0xff]
        %v390 = vld [vmem:[#allocation2 + $0x50] sm:$0xff]
        %v391 = vld [vmem:[#allocation2 + $0x58] sm:$0xff]
        %v392 = vld [vmem:[#allocation2 + $0x60] sm:$0xff]
        %v393 = vld [vmem:[#allocation2 + $0x68] sm:$0xff]
        %v394 = vld [vmem:[#allocation2 + $0x70] sm:$0xff]
        %v395 = vld [vmem:[#allocation2 + $0x78] sm:$0xff]
        %v396 = vld [vmem:[#allocation2 + $0x80] sm:$0xff]
        %v397 = vld [vmem:[#allocation2 + $0x88] sm:$0xff]
        %v398 = vld [vmem:[#allocation2 + $0x90] sm:$0xff]
        %v399 = vld [vmem:[#allocation2 + $0x98] sm:$0xff]
        %v400 = vld [vmem:[#allocation2 + $0xa0] sm:$0xff]
        %v401 = vld [vmem:[#allocation2 + $0xa8] sm:$0xff]
        %v402 = vld [vmem:[#allocation2 + $0xb0] sm:$0xff]
        %v403 = vld [vmem:[#allocation2 + $0xb8] sm:$0xff]
        %v404 = vld [vmem:[#allocation2 + $0xc0] sm:$0xff]
        %v405 = vld [vmem:[#allocation2 + $0xc8] sm:$0xff]
        %v406 = vld [vmem:[#allocation2 + $0xd0] sm:$0xff]
        %v407 = vld [vmem:[#allocation2 + $0xd8] sm:$0xff]
        %v408 = vld [vmem:[#allocation2 + $0xe0] sm:$0xff]
        %v409 = vld [vmem:[#allocation2 + $0xe8] sm:$0xff]
        %v410 = vld [vmem:[#allocation2 + $0xf0] sm:$0xff]
        %v411 = vld [vmem:[#allocation2 + $0xf8] sm:$0xff]
        %v412 = vld [vmem:[#allocation2 + $0x100] sm:$0xff]
        %v413 = vld [vmem:[#allocation2 + $0x108] sm:$0xff]
        %v414 = vld [vmem:[#allocation2 + $0x110] sm:$0xff]
        %v415 = vld [vmem:[#allocation2 + $0x118] sm:$0xff]
        %v416 = vld [vmem:[#allocation2 + $0x120] sm:$0xff]
        %v417 = vld [vmem:[#allocation2 + $0x128] sm:$0xff]
        %v418 = vld [vmem:[#allocation2 + $0x130] sm:$0xff]
        %v419 = vld [vmem:[#allocation2 + $0x138] sm:$0xff]
        %v420 = vld [vmem:[#allocation2 + $0x140] sm:$0xff]
        %v421 = vld [vmem:[#allocation2 + $0x148] sm:$0xff]
        %v422 = vld [vmem:[#allocation2 + $0x150] sm:$0xff]
        %v423 = vld [vmem:[#allocation2 + $0x158] sm:$0xff]
        %v424 = vld [vmem:[#allocation2 + $0x160] sm:$0xff]
        %v425 = vld [vmem:[#allocation2 + $0x168] sm:$0xff]
        %v426 = vld [vmem:[#allocation2 + $0x170] sm:$0xff]
        %v427 = vld [vmem:[#allocation2 + $0x178] sm:$0xff]
        %v428 = vld [vmem:[#allocation2 + $0x180] sm:$0xff]
        %v429 = vld [vmem:[#allocation2 + $0x188] sm:$0xff]
        %v430 = vld [vmem:[#allocation2 + $0x190] sm:$0xff]
        %v431 = vld [vmem:[#allocation2 + $0x198] sm:$0xff]
        %v432 = vld [vmem:[#allocation2 + $0x1a0] sm:$0xff]
        %v433 = vld [vmem:[#allocation2 + $0x1a8] sm:$0xff]
        %v434 = vld [vmem:[#allocation3] sm:$0xff]
        %v435 = vld [vmem:[#allocation3 + $0x8] sm:$0xff]
        %v436 = vld [vmem:[#allocation3 + $0x10] sm:$0xff]
        %v437 = vld [vmem:[#allocation3 + $0x18] sm:$0xff]
        %v438 = vld [vmem:[#allocation3 + $0x20] sm:$0xff]
        %v439 = vld [vmem:[#allocation3 + $0x28] sm:$0xff]
        %v440 = vld [vmem:[#allocation3 + $0x30] sm:$0xff]
        %v441 = vld [vmem:[#allocation3 + $0x38] sm:$0xff]
        %v442 = vrot.slane %v380, 1
        %v443 = vrot.slane %v381, 1
        %v444 = vrot.slane %v382, 1
        %v445 = vrot.slane %v383, 1
        %v446 = vrot.slane %v384, 1
        %v447 = vrot.slane %v385, 1
        %v448 = vrot.slane %v386, 1
        %v449 = vrot.slane %v387, 1
        %v450 = vrot.slane %v388, 1
        %v451 = vrot.slane %v389, 1
        %v452 = vrot.slane %v390, 1
        %v453 = vrot.slane %v391, 1
        %v454 = vrot.slane %v392, 1
        %v455 = vrot.slane %v393, 1
        %v456 = vrot.slane %v394, 1
        %v457 = vrot.slane %v395, 1
        %v458 = vrot.slane %v396, 1
        %v459 = vrot.slane %v397, 1
        %v460 = vrot.slane %v398, 1
        %v461 = vrot.slane %v399, 1
        %v462 = vrot.slane %v400, 1
        %v463 = vrot.slane %v401, 1
        %v464 = vrot.slane %v402, 1
        %v465 = vrot.slane %v403, 1
        %v466 = vrot.slane %v404, 1
        %v467 = vrot.slane %v405, 1
        %v468 = vrot.slane %v406, 1
        %v469 = vrot.slane %v407, 1
        %v470 = vrot.slane %v408, 1
        %v471 = vrot.slane %v409, 1
        %v472 = vrot.slane %v410, 1
        %v473 = vrot.slane %v411, 1
        %v474 = vrot.slane %v412, 1
        %v475 = vrot.slane %v413, 1
        %v476 = vrot.slane %v414, 1
        %v477 = vrot.slane %v415, 1
        %v478 = vrot.slane %v416, 1
        %v479 = vrot.slane %v417, 1
        %v480 = vrot.slane %v418, 1
        %v481 = vrot.slane %v419, 1
        %v482 = vrot.slane %v420, 1
        %v483 = vrot.slane %v421, 1
        %v484 = vrot.slane %v422, 1
        %v485 = vrot.slane %v423, 1
        %v486 = vrot.slane %v424, 1
        %v487 = vrot.slane %v425, 1
        %v488 = vrot.slane %v426, 1
        %v489 = vrot.slane %v427, 1
        %v490 = vrot.slane %v428, 1
        %v491 = vrot.slane %v429, 1
        %v492 = vrot.slane %v430, 1
        %v493 = vrot.slane %v431, 1
        %v494 = vrot.slane %v432, 1
        %v495 = vrot.slane %v433, 1
        %v496 = vlaneseq
        %v497 = vshrl.u32 %v496, 7
        %vm498 = vcmp.lt.s32.totalorder %v497, 7
        %v499 = vsel %vm498, %v494, %v495
        %v500 = vsel %vm498, %v493, %v494
        %v501 = vsel %vm498, %v492, %v493
        %v502 = vsel %vm498, %v491, %v492
        %v503 = vsel %vm498, %v490, %v491
        %v504 = vsel %vm498, %v489, %v490
        %v505 = vsel %vm498, %v488, %v489
        %v506 = vsel %vm498, %v487, %v488
        %v507 = vsel %vm498, %v486, %v487
        %v508 = vsel %vm498, %v485, %v486
        %v509 = vsel %vm498, %v484, %v485
        %v510 = vsel %vm498, %v483, %v484
        %v511 = vsel %vm498, %v482, %v483
        %v512 = vsel %vm498, %v481, %v482
        %v513 = vsel %vm498, %v480, %v481
        %v514 = vsel %vm498, %v479, %v480
        %v515 = vsel %vm498, %v478, %v479
        %v516 = vsel %vm498, %v477, %v478
        %v517 = vsel %vm498, %v476, %v477
        %v518 = vsel %vm498, %v475, %v476
        %v519 = vsel %vm498, %v474, %v475
        %v520 = vsel %vm498, %v473, %v474
        %v521 = vsel %vm498, %v472, %v473
        %v522 = vsel %vm498, %v471, %v472
        %v523 = vsel %vm498, %v470, %v471
        %v524 = vsel %vm498, %v469, %v470
        %v525 = vsel %vm498, %v468, %v469
        %v526 = vsel %vm498, %v467, %v468
        %v527 = vsel %vm498, %v466, %v467
        %v528 = vsel %vm498, %v465, %v466
        %v529 = vsel %vm498, %v464, %v465
        %v530 = vsel %vm498, %v463, %v464
        %v531 = vsel %vm498, %v462, %v463
        %v532 = vsel %vm498, %v461, %v462
        %v533 = vsel %vm498, %v460, %v461
        %v534 = vsel %vm498, %v459, %v460
        %v535 = vsel %vm498, %v458, %v459
        %v536 = vsel %vm498, %v457, %v458
        %v537 = vsel %vm498, %v456, %v457
        %v538 = vsel %vm498, %v455, %v456
        %v539 = vsel %vm498, %v454, %v455
        %v540 = vsel %vm498, %v453, %v454
        %v541 = vsel %vm498, %v452, %v453
        %v542 = vsel %vm498, %v451, %v452
        %v543 = vsel %vm498, %v450, %v451
        %v544 = vsel %vm498, %v449, %v450
        %v545 = vsel %vm498, %v448, %v449
        %v546 = vsel %vm498, %v447, %v448
        %v547 = vsel %vm498, %v446, %v447
        %v548 = vsel %vm498, %v445, %v446
        %v549 = vsel %vm498, %v444, %v445
        %v550 = vsel %vm498, %v443, %v444
        %v551 = vsel %vm498, %v442, %v443
        %v552 = vsel %vm498, %v495, %v442
        %s553 = scalar_lea.vmem [#allocation3], 64
        %v554 = vld [vmem:[%s553] sm:$0xff]
        %v555 = vld [vmem:[%s553 + $0x8] sm:$0xff]
        %v556 = vld [vmem:[%s553 + $0x10] sm:$0xff]
        %v557 = vld [vmem:[%s553 + $0x18] sm:$0xff]
        %v558 = vld [vmem:[%s553 + $0x20] sm:$0xff]
        %v559 = vld [vmem:[%s553 + $0x28] sm:$0xff]
        %v560 = vld [vmem:[%s553 + $0x30] sm:$0xff]
        %v561 = vld [vmem:[%s553 + $0x38] sm:$0xff]
        %v563 = vsel %vm205, %v551, 0
        %v566 = vsel %vm205, %v550, 0
        %v569 = vsel %vm205, %v549, 0
        %v572 = vsel %vm205, %v548, 0
        %v575 = vsel %vm205, %v547, 0
        %v578 = vsel %vm205, %v546, 0
        %v581 = vsel %vm205, %v545, 0
        %v584 = vsel %vm205, %v544, 0
        %v587 = vsel %vm205, %v543, 0
        %v590 = vsel %vm205, %v542, 0
        %v593 = vsel %vm205, %v541, 0
        %v596 = vsel %vm205, %v540, 0
        %v599 = vsel %vm205, %v539, 0
        %v602 = vsel %vm205, %v538, 0
        %v605 = vsel %vm205, %v537, 0
        %v608 = vsel %vm205, %v536, 0
        %v611 = vsel %vm205, %v535, 0
        %v614 = vsel %vm205, %v534, 0
        %v617 = vsel %vm205, %v533, 0
        %v620 = vsel %vm205, %v532, 0
        %v623 = vsel %vm205, %v531, 0
        %v626 = vsel %vm205, %v530, 0
        %v629 = vsel %vm205, %v529, 0
        %v632 = vsel %vm205, %v528, 0
        %v635 = vsel %vm205, %v527, 0
        %v638 = vsel %vm205, %v526, 0
        %v641 = vsel %vm205, %v525, 0
        %v644 = vsel %vm205, %v524, 0
        %v647 = vsel %vm205, %v523, 0
        %v650 = vsel %vm205, %v522, 0
        %v653 = vsel %vm205, %v521, 0
        %v656 = vsel %vm205, %v520, 0
        %v659 = vsel %vm205, %v519, 0
        %v662 = vsel %vm205, %v518, 0
        %v665 = vsel %vm205, %v517, 0
        %v668 = vsel %vm205, %v516, 0
        %v671 = vsel %vm205, %v515, 0
        %v674 = vsel %vm205, %v514, 0
        %v677 = vsel %vm205, %v513, 0
        %v680 = vsel %vm205, %v512, 0
        %v683 = vsel %vm205, %v511, 0
        %v686 = vsel %vm205, %v510, 0
        %v689 = vsel %vm205, %v509, 0
        %v692 = vsel %vm205, %v508, 0
        %v695 = vsel %vm205, %v507, 0
        %v698 = vsel %vm205, %v506, 0
        %v701 = vsel %vm205, %v505, 0
        %v704 = vsel %vm205, %v504, 0
        %v707 = vsel %vm205, %v503, 0
        %v710 = vsel %vm205, %v502, 0
        %v713 = vsel %vm205, %v501, 0
        %v716 = vsel %vm205, %v500, 0
        %v719 = vsel %vm205, %v499, 0
        %v722 = vsel %vm205, %v552, 0
        %724 = vmatpush.msra.mxu0 0.0
        %725 = vmatpush.msra.mxu0 0.0
        %726 = vmatpush.msra.mxu0 0.0
        %727 = vmatpush.msra.mxu0 0.0
        %728 = vmatpush.msra.mxu0 0.0
        %729 = vmatpush.msra.mxu0 0.0
        %730 = vmatpush.msra.mxu0 0.0
        %731 = vmatpush.msra.mxu0 0.0
        %732 = vmatpush.msra.mxu0 %v561
        %733 = vmatpush.msra.mxu0 %v560
        %734 = vmatpush.msra.mxu0 %v559
        %735 = vmatpush.msra.mxu0 %v558
        %736 = vmatpush.msra.mxu0 %v557
        %737 = vmatpush.msra.mxu0 %v556
        %738 = vmatpush.msra.mxu0 %v555
        %739 = vmatpush.msra.mxu0 %v554
        %740 = vmatmul.f32.gmra.mxu0 %v563
        %v741 = vpop.f32.mrf.mxu0
        %v742 = vadd.f32 0.0, %v741
        %743 = vmatmul.f32.gmra.mxu0 %v566
        %v744 = vpop.f32.mrf.mxu0
        %v745 = vadd.f32 0.0, %v744
        %746 = vmatmul.f32.gmra.mxu0 %v569
        %v747 = vpop.f32.mrf.mxu0
        %748 = vmatmul.f32.gmra.mxu0 %v572
        %v749 = vpop.f32.mrf.mxu0
        %v750 = vadd.f32 0.0, %v749
        %751 = vmatmul.f32.gmra.mxu0 %v575
        %v752 = vpop.f32.mrf.mxu0
        %v753 = vadd.f32 0.0, %v752
        %754 = vmatmul.f32.gmra.mxu0 %v578
        %v755 = vpop.f32.mrf.mxu0
        %756 = vmatmul.f32.gmra.mxu0 %v581
        %v757 = vpop.f32.mrf.mxu0
        %v758 = vadd.f32 0.0, %v757
        %759 = vmatmul.f32.gmra.mxu0 %v584
        %v760 = vpop.f32.mrf.mxu0
        %v761 = vadd.f32 0.0, %v760
        %762 = vmatmul.f32.gmra.mxu0 %v587
        %v763 = vpop.f32.mrf.mxu0
        %764 = vmatmul.f32.gmra.mxu0 %v590
        %v765 = vpop.f32.mrf.mxu0
        %v766 = vadd.f32 0.0, %v765
        %767 = vmatmul.f32.gmra.mxu0 %v593
        %v768 = vpop.f32.mrf.mxu0
        %v769 = vadd.f32 0.0, %v768
        %770 = vmatmul.f32.gmra.mxu0 %v596
        %v771 = vpop.f32.mrf.mxu0
        %772 = vmatmul.f32.gmra.mxu0 %v599
        %v773 = vpop.f32.mrf.mxu0
        %v774 = vadd.f32 0.0, %v773
        %775 = vmatmul.f32.gmra.mxu0 %v602
        %v776 = vpop.f32.mrf.mxu0
        %v777 = vadd.f32 0.0, %v776
        %778 = vmatmul.f32.gmra.mxu0 %v605
        %v779 = vpop.f32.mrf.mxu0
        %780 = vmatmul.f32.gmra.mxu0 %v608
        %v781 = vpop.f32.mrf.mxu0
        %v782 = vadd.f32 0.0, %v781
        %783 = vmatmul.f32.gmra.mxu0 %v611
        %v784 = vpop.f32.mrf.mxu0
        %v785 = vadd.f32 0.0, %v784
        %786 = vmatmul.f32.gmra.mxu0 %v614
        %v787 = vpop.f32.mrf.mxu0
        %788 = vmatmul.f32.gmra.mxu0 %v617
        %v789 = vpop.f32.mrf.mxu0
        %v790 = vadd.f32 0.0, %v789
        %791 = vmatmul.f32.gmra.mxu0 %v620
        %v792 = vpop.f32.mrf.mxu0
        %v793 = vadd.f32 0.0, %v792
        %794 = vmatmul.f32.gmra.mxu0 %v623
        %v795 = vpop.f32.mrf.mxu0
        %796 = vmatmul.f32.gmra.mxu0 %v626
        %v797 = vpop.f32.mrf.mxu0
        %v798 = vadd.f32 0.0, %v797
        %799 = vmatmul.f32.gmra.mxu0 %v629
        %v800 = vpop.f32.mrf.mxu0
        %v801 = vadd.f32 0.0, %v800
        %802 = vmatmul.f32.gmra.mxu0 %v632
        %v803 = vpop.f32.mrf.mxu0
        %804 = vmatmul.f32.gmra.mxu0 %v635
        %v805 = vpop.f32.mrf.mxu0
        %v806 = vadd.f32 0.0, %v805
        %807 = vmatmul.f32.gmra.mxu0 %v638
        %v808 = vpop.f32.mrf.mxu0
        %v809 = vadd.f32 0.0, %v808
        %810 = vmatmul.f32.gmra.mxu0 %v641
        %v811 = vpop.f32.mrf.mxu0
        %812 = vmatmul.f32.gmra.mxu0 %v644
        %v813 = vpop.f32.mrf.mxu0
        %v814 = vadd.f32 0.0, %v813
        %815 = vmatmul.f32.gmra.mxu0 %v647
        %v816 = vpop.f32.mrf.mxu0
        %v817 = vadd.f32 0.0, %v816
        %818 = vmatmul.f32.gmra.mxu0 %v650
        %v819 = vpop.f32.mrf.mxu0
        %820 = vmatmul.f32.gmra.mxu0 %v653
        %v821 = vpop.f32.mrf.mxu0
        %v822 = vadd.f32 0.0, %v821
        %823 = vmatmul.f32.gmra.mxu0 %v656
        %v824 = vpop.f32.mrf.mxu0
        %v825 = vadd.f32 0.0, %v824
        %826 = vmatmul.f32.gmra.mxu0 %v659
        %v827 = vpop.f32.mrf.mxu0
        %828 = vmatmul.f32.gmra.mxu0 %v662
        %v829 = vpop.f32.mrf.mxu0
        %v830 = vadd.f32 0.0, %v829
        %831 = vmatmul.f32.gmra.mxu0 %v665
        %v832 = vpop.f32.mrf.mxu0
        %v833 = vadd.f32 0.0, %v832
        %834 = vmatmul.f32.gmra.mxu0 %v668
        %v835 = vpop.f32.mrf.mxu0
        %836 = vmatmul.f32.gmra.mxu0 %v671
        %v837 = vpop.f32.mrf.mxu0
        %v838 = vadd.f32 0.0, %v837
        %839 = vmatmul.f32.gmra.mxu0 %v674
        %v840 = vpop.f32.mrf.mxu0
        %v841 = vadd.f32 0.0, %v840
        %842 = vmatmul.f32.gmra.mxu0 %v677
        %v843 = vpop.f32.mrf.mxu0
        %844 = vmatmul.f32.gmra.mxu0 %v680
        %v845 = vpop.f32.mrf.mxu0
        %v846 = vadd.f32 0.0, %v845
        %847 = vmatmul.f32.gmra.mxu0 %v683
        %v848 = vpop.f32.mrf.mxu0
        %v849 = vadd.f32 0.0, %v848
        %850 = vmatmul.f32.gmra.mxu0 %v686
        %v851 = vpop.f32.mrf.mxu0
        %852 = vmatmul.f32.gmra.mxu0 %v689
        %v853 = vpop.f32.mrf.mxu0
        %v854 = vadd.f32 0.0, %v853
        %855 = vmatmul.f32.gmra.mxu0 %v692
        %v856 = vpop.f32.mrf.mxu0
        %v857 = vadd.f32 0.0, %v856
        %858 = vmatmul.f32.gmra.mxu0 %v695
        %v859 = vpop.f32.mrf.mxu0
        %860 = vmatmul.f32.gmra.mxu0 %v698
        %v861 = vpop.f32.mrf.mxu0
        %v862 = vadd.f32 0.0, %v861
        %863 = vmatmul.f32.gmra.mxu0 %v701
        %v864 = vpop.f32.mrf.mxu0
        %v865 = vadd.f32 0.0, %v864
        %866 = vmatmul.f32.gmra.mxu0 %v704
        %v867 = vpop.f32.mrf.mxu0
        %868 = vmatmul.f32.gmra.mxu0 %v707
        %v869 = vpop.f32.mrf.mxu0
        %870 = vmatmul.f32.gmra.mxu0 %v710
        %v871 = vpop.f32.mrf.mxu0
        %872 = vmatmul.f32.gmra.mxu0 %v713
        %v873 = vpop.f32.mrf.mxu0
        %874 = vmatmul.f32.gmra.mxu0 %v716
        %v875 = vpop.f32.mrf.mxu0
        %876 = vmatmul.f32.gmra.mxu0 %v719
        %v877 = vpop.f32.mrf.mxu0
        %878 = vmatmul.f32.gmra.mxu0 %v722
        %v879 = vpop.f32.mrf.mxu0
        %880 = vdwg.mxu0
        %v882 = vsel %vm205, %v380, 0
        %v885 = vsel %vm205, %v381, 0
        %v888 = vsel %vm205, %v382, 0
        %v891 = vsel %vm205, %v383, 0
        %v894 = vsel %vm205, %v384, 0
        %v897 = vsel %vm205, %v385, 0
        %v900 = vsel %vm205, %v386, 0
        %v903 = vsel %vm205, %v387, 0
        %v906 = vsel %vm205, %v388, 0
        %v909 = vsel %vm205, %v389, 0
        %v912 = vsel %vm205, %v390, 0
        %v915 = vsel %vm205, %v391, 0
        %v918 = vsel %vm205, %v392, 0
        %v921 = vsel %vm205, %v393, 0
        %v924 = vsel %vm205, %v394, 0
        %v927 = vsel %vm205, %v395, 0
        %v930 = vsel %vm205, %v396, 0
        %v933 = vsel %vm205, %v397, 0
        %v936 = vsel %vm205, %v398, 0
        %v939 = vsel %vm205, %v399, 0
        %v942 = vsel %vm205, %v400, 0
        %v945 = vsel %vm205, %v401, 0
        %v948 = vsel %vm205, %v402, 0
        %v951 = vsel %vm205, %v403, 0
        %v954 = vsel %vm205, %v404, 0
        %v957 = vsel %vm205, %v405, 0
        %v960 = vsel %vm205, %v406, 0
        %v963 = vsel %vm205, %v407, 0
        %v966 = vsel %vm205, %v408, 0
        %v969 = vsel %vm205, %v409, 0
        %v972 = vsel %vm205, %v410, 0
        %v975 = vsel %vm205, %v411, 0
        %v978 = vsel %vm205, %v412, 0
        %v981 = vsel %vm205, %v413, 0
        %v984 = vsel %vm205, %v414, 0
        %v987 = vsel %vm205, %v415, 0
        %v990 = vsel %vm205, %v416, 0
        %v993 = vsel %vm205, %v417, 0
        %v996 = vsel %vm205, %v418, 0
        %v999 = vsel %vm205, %v419, 0
        %v1002 = vsel %vm205, %v420, 0
        %v1005 = vsel %vm205, %v421, 0
        %v1008 = vsel %vm205, %v422, 0
        %v1011 = vsel %vm205, %v423, 0
        %v1014 = vsel %vm205, %v424, 0
        %v1017 = vsel %vm205, %v425, 0
        %v1020 = vsel %vm205, %v426, 0
        %v1023 = vsel %vm205, %v427, 0
        %v1026 = vsel %vm205, %v428, 0
        %v1029 = vsel %vm205, %v429, 0
        %v1032 = vsel %vm205, %v430, 0
        %v1035 = vsel %vm205, %v431, 0
        %v1038 = vsel %vm205, %v432, 0
        %v1041 = vsel %vm205, %v433, 0
        %1043 = vmatpush.msra.mxu0 0.0
        %1044 = vmatpush.msra.mxu0 0.0
        %1045 = vmatpush.msra.mxu0 0.0
        %1046 = vmatpush.msra.mxu0 0.0
        %1047 = vmatpush.msra.mxu0 0.0
        %1048 = vmatpush.msra.mxu0 0.0
        %1049 = vmatpush.msra.mxu0 0.0
        %1050 = vmatpush.msra.mxu0 0.0
        %1051 = vmatpush.msra.mxu0 %v441
        %1052 = vmatpush.msra.mxu0 %v440
        %1053 = vmatpush.msra.mxu0 %v439
        %1054 = vmatpush.msra.mxu0 %v438
        %1055 = vmatpush.msra.mxu0 %v437
        %1056 = vmatpush.msra.mxu0 %v436
        %1057 = vmatpush.msra.mxu0 %v435
        %1058 = vmatpush.msra.mxu0 %v434
        %1059 = vmatmul.f32.gmra.mxu0 %v882
        %v1060 = vpop.f32.mrf.mxu0
        %v1061 = vadd.f32 %v742, %v1060
        %1062 = vmatmul.f32.gmra.mxu0 %v885
        %v1063 = vpop.f32.mrf.mxu0
        %v1064 = vadd.f32 %v745, %v1063
        %1065 = vmatmul.f32.gmra.mxu0 %v888
        %v1066 = vpop.f32.mrf.mxu0
        %1067 = vmatmul.f32.gmra.mxu0 %v891
        %v1068 = vpop.f32.mrf.mxu0
        %v1069 = vadd.f32 %v750, %v1068
        %1070 = vmatmul.f32.gmra.mxu0 %v894
        %v1071 = vpop.f32.mrf.mxu0
        %v1072 = vadd.f32 %v753, %v1071
        %1073 = vmatmul.f32.gmra.mxu0 %v897
        %v1074 = vpop.f32.mrf.mxu0
        %1075 = vmatmul.f32.gmra.mxu0 %v900
        %v1076 = vpop.f32.mrf.mxu0
        %v1077 = vadd.f32 %v758, %v1076
        %1078 = vmatmul.f32.gmra.mxu0 %v903
        %v1079 = vpop.f32.mrf.mxu0
        %v1080 = vadd.f32 %v761, %v1079
        %1081 = vmatmul.f32.gmra.mxu0 %v906
        %v1082 = vpop.f32.mrf.mxu0
        %1083 = vmatmul.f32.gmra.mxu0 %v909
        %v1084 = vpop.f32.mrf.mxu0
        %v1085 = vadd.f32 %v766, %v1084
        %1086 = vmatmul.f32.gmra.mxu0 %v912
        %v1087 = vpop.f32.mrf.mxu0
        %v1088 = vadd.f32 %v769, %v1087
        %1089 = vmatmul.f32.gmra.mxu0 %v915
        %v1090 = vpop.f32.mrf.mxu0
        %1091 = vmatmul.f32.gmra.mxu0 %v918
        %v1092 = vpop.f32.mrf.mxu0
        %v1093 = vadd.f32 %v774, %v1092
        %1094 = vmatmul.f32.gmra.mxu0 %v921
        %v1095 = vpop.f32.mrf.mxu0
        %v1096 = vadd.f32 %v777, %v1095
        %1097 = vmatmul.f32.gmra.mxu0 %v924
        %v1098 = vpop.f32.mrf.mxu0
        %1099 = vmatmul.f32.gmra.mxu0 %v927
        %v1100 = vpop.f32.mrf.mxu0
        %v1101 = vadd.f32 %v782, %v1100
        %1102 = vmatmul.f32.gmra.mxu0 %v930
        %v1103 = vpop.f32.mrf.mxu0
        %v1104 = vadd.f32 %v785, %v1103
        %1105 = vmatmul.f32.gmra.mxu0 %v933
        %v1106 = vpop.f32.mrf.mxu0
        %1107 = vmatmul.f32.gmra.mxu0 %v936
        %v1108 = vpop.f32.mrf.mxu0
        %v1109 = vadd.f32 %v790, %v1108
        %1110 = vmatmul.f32.gmra.mxu0 %v939
        %v1111 = vpop.f32.mrf.mxu0
        %v1112 = vadd.f32 %v793, %v1111
        %1113 = vmatmul.f32.gmra.mxu0 %v942
        %v1114 = vpop.f32.mrf.mxu0
        %1115 = vmatmul.f32.gmra.mxu0 %v945
        %v1116 = vpop.f32.mrf.mxu0
        %v1117 = vadd.f32 %v798, %v1116
        %1118 = vmatmul.f32.gmra.mxu0 %v948
        %v1119 = vpop.f32.mrf.mxu0
        %v1120 = vadd.f32 %v801, %v1119
        %1121 = vmatmul.f32.gmra.mxu0 %v951
        %v1122 = vpop.f32.mrf.mxu0
        %1123 = vmatmul.f32.gmra.mxu0 %v954
        %v1124 = vpop.f32.mrf.mxu0
        %v1125 = vadd.f32 %v806, %v1124
        %1126 = vmatmul.f32.gmra.mxu0 %v957
        %v1127 = vpop.f32.mrf.mxu0
        %v1128 = vadd.f32 %v809, %v1127
        %1129 = vmatmul.f32.gmra.mxu0 %v960
        %v1130 = vpop.f32.mrf.mxu0
        %1131 = vmatmul.f32.gmra.mxu0 %v963
        %v1132 = vpop.f32.mrf.mxu0
        %v1133 = vadd.f32 %v814, %v1132
        %1134 = vmatmul.f32.gmra.mxu0 %v966
        %v1135 = vpop.f32.mrf.mxu0
        %v1136 = vadd.f32 %v817, %v1135
        %1137 = vmatmul.f32.gmra.mxu0 %v969
        %v1138 = vpop.f32.mrf.mxu0
        %1139 = vmatmul.f32.gmra.mxu0 %v972
        %v1140 = vpop.f32.mrf.mxu0
        %v1141 = vadd.f32 %v822, %v1140
        %1142 = vmatmul.f32.gmra.mxu0 %v975
        %v1143 = vpop.f32.mrf.mxu0
        %v1144 = vadd.f32 %v825, %v1143
        %1145 = vmatmul.f32.gmra.mxu0 %v978
        %v1146 = vpop.f32.mrf.mxu0
        %1147 = vmatmul.f32.gmra.mxu0 %v981
        %v1148 = vpop.f32.mrf.mxu0
        %v1149 = vadd.f32 %v830, %v1148
        %1150 = vmatmul.f32.gmra.mxu0 %v984
        %v1151 = vpop.f32.mrf.mxu0
        %v1152 = vadd.f32 %v833, %v1151
        %1153 = vmatmul.f32.gmra.mxu0 %v987
        %v1154 = vpop.f32.mrf.mxu0
        %1155 = vmatmul.f32.gmra.mxu0 %v990
        %v1156 = vpop.f32.mrf.mxu0
        %v1157 = vadd.f32 %v838, %v1156
        %1158 = vmatmul.f32.gmra.mxu0 %v993
        %v1159 = vpop.f32.mrf.mxu0
        %v1160 = vadd.f32 %v841, %v1159
        %1161 = vmatmul.f32.gmra.mxu0 %v996
        %v1162 = vpop.f32.mrf.mxu0
        %1163 = vmatmul.f32.gmra.mxu0 %v999
        %v1164 = vpop.f32.mrf.mxu0
        %v1165 = vadd.f32 %v846, %v1164
        %1166 = vmatmul.f32.gmra.mxu0 %v1002
        %v1167 = vpop.f32.mrf.mxu0
        %v1168 = vadd.f32 %v849, %v1167
        %1169 = vmatmul.f32.gmra.mxu0 %v1005
        %v1170 = vpop.f32.mrf.mxu0
        %1171 = vmatmul.f32.gmra.mxu0 %v1008
        %v1172 = vpop.f32.mrf.mxu0
        %v1173 = vadd.f32 %v854, %v1172
        %1174 = vmatmul.f32.gmra.mxu0 %v1011
        %v1175 = vpop.f32.mrf.mxu0
        %v1176 = vadd.f32 %v857, %v1175
        %1177 = vmatmul.f32.gmra.mxu0 %v1014
        %v1178 = vpop.f32.mrf.mxu0
        %1179 = vmatmul.f32.gmra.mxu0 %v1017
        %v1180 = vpop.f32.mrf.mxu0
        %v1181 = vadd.f32 %v862, %v1180
        %1182 = vmatmul.f32.gmra.mxu0 %v1020
        %v1183 = vpop.f32.mrf.mxu0
        %v1184 = vadd.f32 %v865, %v1183
        %1185 = vmatmul.f32.gmra.mxu0 %v1023
        %v1186 = vpop.f32.mrf.mxu0
        %1187 = vmatmul.f32.gmra.mxu0 %v1026
        %v1188 = vpop.f32.mrf.mxu0
        %1189 = vmatmul.f32.gmra.mxu0 %v1029
        %v1190 = vpop.f32.mrf.mxu0
        %1191 = vmatmul.f32.gmra.mxu0 %v1032
        %v1192 = vpop.f32.mrf.mxu0
        %1193 = vmatmul.f32.gmra.mxu0 %v1035
        %v1194 = vpop.f32.mrf.mxu0
        %1195 = vmatmul.f32.gmra.mxu0 %v1038
        %v1196 = vpop.f32.mrf.mxu0
        %1197 = vmatmul.f32.gmra.mxu0 %v1041
        %v1198 = vpop.f32.mrf.mxu0
        %1199 = vdwg.mxu0
        %v1200 = vrot.slane %v380, 2
        %v1201 = vrot.slane %v381, 2
        %v1202 = vrot.slane %v382, 2
        %v1203 = vrot.slane %v383, 2
        %v1204 = vrot.slane %v384, 2
        %v1205 = vrot.slane %v385, 2
        %v1206 = vrot.slane %v386, 2
        %v1207 = vrot.slane %v387, 2
        %v1208 = vrot.slane %v388, 2
        %v1209 = vrot.slane %v389, 2
        %v1210 = vrot.slane %v390, 2
        %v1211 = vrot.slane %v391, 2
        %v1212 = vrot.slane %v392, 2
        %v1213 = vrot.slane %v393, 2
        %v1214 = vrot.slane %v394, 2
        %v1215 = vrot.slane %v395, 2
        %v1216 = vrot.slane %v396, 2
        %v1217 = vrot.slane %v397, 2
        %v1218 = vrot.slane %v398, 2
        %v1219 = vrot.slane %v399, 2
        %v1220 = vrot.slane %v400, 2
        %v1221 = vrot.slane %v401, 2
        %v1222 = vrot.slane %v402, 2
        %v1223 = vrot.slane %v403, 2
        %v1224 = vrot.slane %v404, 2
        %v1225 = vrot.slane %v405, 2
        %v1226 = vrot.slane %v406, 2
        %v1227 = vrot.slane %v407, 2
        %v1228 = vrot.slane %v408, 2
        %v1229 = vrot.slane %v409, 2
        %v1230 = vrot.slane %v410, 2
        %v1231 = vrot.slane %v411, 2
        %v1232 = vrot.slane %v412, 2
        %v1233 = vrot.slane %v413, 2
        %v1234 = vrot.slane %v414, 2
        %v1235 = vrot.slane %v415, 2
        %v1236 = vrot.slane %v416, 2
        %v1237 = vrot.slane %v417, 2
        %v1238 = vrot.slane %v418, 2
        %v1239 = vrot.slane %v419, 2
        %v1240 = vrot.slane %v420, 2
        %v1241 = vrot.slane %v421, 2
        %v1242 = vrot.slane %v422, 2
        %v1243 = vrot.slane %v423, 2
        %v1244 = vrot.slane %v424, 2
        %v1245 = vrot.slane %v425, 2
        %v1246 = vrot.slane %v426, 2
        %v1247 = vrot.slane %v427, 2
        %v1248 = vrot.slane %v428, 2
        %v1249 = vrot.slane %v429, 2
        %v1250 = vrot.slane %v430, 2
        %v1251 = vrot.slane %v431, 2
        %v1252 = vrot.slane %v432, 2
        %v1253 = vrot.slane %v433, 2
        %vm1254 = vcmp.lt.s32.totalorder %v497, 6
        %v1255 = vsel %vm1254, %v1252, %v1253
        %v1256 = vsel %vm1254, %v1251, %v1252
        %v1257 = vsel %vm1254, %v1250, %v1251
        %v1258 = vsel %vm1254, %v1249, %v1250
        %v1259 = vsel %vm1254, %v1248, %v1249
        %v1260 = vsel %vm1254, %v1247, %v1248
        %v1261 = vsel %vm1254, %v1246, %v1247
        %v1262 = vsel %vm1254, %v1245, %v1246
        %v1263 = vsel %vm1254, %v1244, %v1245
        %v1264 = vsel %vm1254, %v1243, %v1244
        %v1265 = vsel %vm1254, %v1242, %v1243
        %v1266 = vsel %vm1254, %v1241, %v1242
        %v1267 = vsel %vm1254, %v1240, %v1241
        %v1268 = vsel %vm1254, %v1239, %v1240
        %v1269 = vsel %vm1254, %v1238, %v1239
        %v1270 = vsel %vm1254, %v1237, %v1238
        %v1271 = vsel %vm1254, %v1236, %v1237
        %v1272 = vsel %vm1254, %v1235, %v1236
        %v1273 = vsel %vm1254, %v1234, %v1235
        %v1274 = vsel %vm1254, %v1233, %v1234
        %v1275 = vsel %vm1254, %v1232, %v1233
        %v1276 = vsel %vm1254, %v1231, %v1232
        %v1277 = vsel %vm1254, %v1230, %v1231
        %v1278 = vsel %vm1254, %v1229, %v1230
        %v1279 = vsel %vm1254, %v1228, %v1229
        %v1280 = vsel %vm1254, %v1227, %v1228
        %v1281 = vsel %vm1254, %v1226, %v1227
        %v1282 = vsel %vm1254, %v1225, %v1226
        %v1283 = vsel %vm1254, %v1224, %v1225
        %v1284 = vsel %vm1254, %v1223, %v1224
        %v1285 = vsel %vm1254, %v1222, %v1223
        %v1286 = vsel %vm1254, %v1221, %v1222
        %v1287 = vsel %vm1254, %v1220, %v1221
        %v1288 = vsel %vm1254, %v1219, %v1220
        %v1289 = vsel %vm1254, %v1218, %v1219
        %v1290 = vsel %vm1254, %v1217, %v1218
        %v1291 = vsel %vm1254, %v1216, %v1217
        %v1292 = vsel %vm1254, %v1215, %v1216
        %v1293 = vsel %vm1254, %v1214, %v1215
        %v1294 = vsel %vm1254, %v1213, %v1214
        %v1295 = vsel %vm1254, %v1212, %v1213
        %v1296 = vsel %vm1254, %v1211, %v1212
        %v1297 = vsel %vm1254, %v1210, %v1211
        %v1298 = vsel %vm1254, %v1209, %v1210
        %v1299 = vsel %vm1254, %v1208, %v1209
        %v1300 = vsel %vm1254, %v1207, %v1208
        %v1301 = vsel %vm1254, %v1206, %v1207
        %v1302 = vsel %vm1254, %v1205, %v1206
        %v1303 = vsel %vm1254, %v1204, %v1205
        %v1304 = vsel %vm1254, %v1203, %v1204
        %v1305 = vsel %vm1254, %v1202, %v1203
        %v1306 = vsel %vm1254, %v1201, %v1202
        %v1307 = vsel %vm1254, %v1200, %v1201
        %v1308 = vsel %vm1254, %v1253, %v1200
        %s1309 = scalar_lea.vmem [#allocation3], 128
        %v1310 = vld [vmem:[%s1309] sm:$0xff]
        %v1311 = vld [vmem:[%s1309 + $0x8] sm:$0xff]
        %v1312 = vld [vmem:[%s1309 + $0x10] sm:$0xff]
        %v1313 = vld [vmem:[%s1309 + $0x18] sm:$0xff]
        %v1314 = vld [vmem:[%s1309 + $0x20] sm:$0xff]
        %v1315 = vld [vmem:[%s1309 + $0x28] sm:$0xff]
        %v1316 = vld [vmem:[%s1309 + $0x30] sm:$0xff]
        %v1317 = vld [vmem:[%s1309 + $0x38] sm:$0xff]
        %v1319 = vsel %vm205, %v1307, 0
        %v1322 = vsel %vm205, %v1306, 0
        %v1325 = vsel %vm205, %v1305, 0
        %v1328 = vsel %vm205, %v1304, 0
        %v1331 = vsel %vm205, %v1303, 0
        %v1334 = vsel %vm205, %v1302, 0
        %v1337 = vsel %vm205, %v1301, 0
        %v1340 = vsel %vm205, %v1300, 0
        %v1343 = vsel %vm205, %v1299, 0
        %v1346 = vsel %vm205, %v1298, 0
        %v1349 = vsel %vm205, %v1297, 0
        %v1352 = vsel %vm205, %v1296, 0
        %v1355 = vsel %vm205, %v1295, 0
        %v1358 = vsel %vm205, %v1294, 0
        %v1361 = vsel %vm205, %v1293, 0
        %v1364 = vsel %vm205, %v1292, 0
        %v1367 = vsel %vm205, %v1291, 0
        %v1370 = vsel %vm205, %v1290, 0
        %v1373 = vsel %vm205, %v1289, 0
        %v1376 = vsel %vm205, %v1288, 0
        %v1379 = vsel %vm205, %v1287, 0
        %v1382 = vsel %vm205, %v1286, 0
        %v1385 = vsel %vm205, %v1285, 0
        %v1388 = vsel %vm205, %v1284, 0
        %v1391 = vsel %vm205, %v1283, 0
        %v1394 = vsel %vm205, %v1282, 0
        %v1397 = vsel %vm205, %v1281, 0
        %v1400 = vsel %vm205, %v1280, 0
        %v1403 = vsel %vm205, %v1279, 0
        %v1406 = vsel %vm205, %v1278, 0
        %v1409 = vsel %vm205, %v1277, 0
        %v1412 = vsel %vm205, %v1276, 0
        %v1415 = vsel %vm205, %v1275, 0
        %v1418 = vsel %vm205, %v1274, 0
        %v1421 = vsel %vm205, %v1273, 0
        %v1424 = vsel %vm205, %v1272, 0
        %v1427 = vsel %vm205, %v1271, 0
        %v1430 = vsel %vm205, %v1270, 0
        %v1433 = vsel %vm205, %v1269, 0
        %v1436 = vsel %vm205, %v1268, 0
        %v1439 = vsel %vm205, %v1267, 0
        %v1442 = vsel %vm205, %v1266, 0
        %v1445 = vsel %vm205, %v1265, 0
        %v1448 = vsel %vm205, %v1264, 0
        %v1451 = vsel %vm205, %v1263, 0
        %v1454 = vsel %vm205, %v1262, 0
        %v1457 = vsel %vm205, %v1261, 0
        %v1460 = vsel %vm205, %v1260, 0
        %v1463 = vsel %vm205, %v1259, 0
        %v1466 = vsel %vm205, %v1258, 0
        %v1469 = vsel %vm205, %v1257, 0
        %v1472 = vsel %vm205, %v1256, 0
        %v1475 = vsel %vm205, %v1255, 0
        %v1478 = vsel %vm205, %v1308, 0
        %1480 = vmatpush.msra.mxu0 0.0
        %1481 = vmatpush.msra.mxu0 0.0
        %1482 = vmatpush.msra.mxu0 0.0
        %1483 = vmatpush.msra.mxu0 0.0
        %1484 = vmatpush.msra.mxu0 0.0
        %1485 = vmatpush.msra.mxu0 0.0
        %1486 = vmatpush.msra.mxu0 0.0
        %1487 = vmatpush.msra.mxu0 0.0
        %1488 = vmatpush.msra.mxu0 %v1317
        %1489 = vmatpush.msra.mxu0 %v1316
        %1490 = vmatpush.msra.mxu0 %v1315
        %1491 = vmatpush.msra.mxu0 %v1314
        %1492 = vmatpush.msra.mxu0 %v1313
        %1493 = vmatpush.msra.mxu0 %v1312
        %1494 = vmatpush.msra.mxu0 %v1311
        %1495 = vmatpush.msra.mxu0 %v1310
        %1496 = vmatmul.f32.gmra.mxu0 %v1319
        %v1497 = vpop.f32.mrf.mxu0
        %v1498 = vadd.f32 0.0, %v1497
        %1499 = vmatmul.f32.gmra.mxu0 %v1322
        %v1500 = vpop.f32.mrf.mxu0
        %v1501 = vadd.f32 0.0, %v1500
        %1502 = vmatmul.f32.gmra.mxu0 %v1325
        %v1503 = vpop.f32.mrf.mxu0
        %1504 = vmatmul.f32.gmra.mxu0 %v1328
        %v1505 = vpop.f32.mrf.mxu0
        %v1506 = vadd.f32 0.0, %v1505
        %1507 = vmatmul.f32.gmra.mxu0 %v1331
        %v1508 = vpop.f32.mrf.mxu0
        %v1509 = vadd.f32 0.0, %v1508
        %1510 = vmatmul.f32.gmra.mxu0 %v1334
        %v1511 = vpop.f32.mrf.mxu0
        %1512 = vmatmul.f32.gmra.mxu0 %v1337
        %v1513 = vpop.f32.mrf.mxu0
        %v1514 = vadd.f32 0.0, %v1513
        %1515 = vmatmul.f32.gmra.mxu0 %v1340
        %v1516 = vpop.f32.mrf.mxu0
        %v1517 = vadd.f32 0.0, %v1516
        %1518 = vmatmul.f32.gmra.mxu0 %v1343
        %v1519 = vpop.f32.mrf.mxu0
        %1520 = vmatmul.f32.gmra.mxu0 %v1346
        %v1521 = vpop.f32.mrf.mxu0
        %v1522 = vadd.f32 0.0, %v1521
        %1523 = vmatmul.f32.gmra.mxu0 %v1349
        %v1524 = vpop.f32.mrf.mxu0
        %v1525 = vadd.f32 0.0, %v1524
        %1526 = vmatmul.f32.gmra.mxu0 %v1352
        %v1527 = vpop.f32.mrf.mxu0
        %1528 = vmatmul.f32.gmra.mxu0 %v1355
        %v1529 = vpop.f32.mrf.mxu0
        %v1530 = vadd.f32 0.0, %v1529
        %1531 = vmatmul.f32.gmra.mxu0 %v1358
        %v1532 = vpop.f32.mrf.mxu0
        %v1533 = vadd.f32 0.0, %v1532
        %1534 = vmatmul.f32.gmra.mxu0 %v1361
        %v1535 = vpop.f32.mrf.mxu0
        %1536 = vmatmul.f32.gmra.mxu0 %v1364
        %v1537 = vpop.f32.mrf.mxu0
        %v1538 = vadd.f32 0.0, %v1537
        %1539 = vmatmul.f32.gmra.mxu0 %v1367
        %v1540 = vpop.f32.mrf.mxu0
        %v1541 = vadd.f32 0.0, %v1540
        %1542 = vmatmul.f32.gmra.mxu0 %v1370
        %v1543 = vpop.f32.mrf.mxu0
        %1544 = vmatmul.f32.gmra.mxu0 %v1373
        %v1545 = vpop.f32.mrf.mxu0
        %v1546 = vadd.f32 0.0, %v1545
        %1547 = vmatmul.f32.gmra.mxu0 %v1376
        %v1548 = vpop.f32.mrf.mxu0
        %v1549 = vadd.f32 0.0, %v1548
        %1550 = vmatmul.f32.gmra.mxu0 %v1379
        %v1551 = vpop.f32.mrf.mxu0
        %1552 = vmatmul.f32.gmra.mxu0 %v1382
        %v1553 = vpop.f32.mrf.mxu0
        %v1554 = vadd.f32 0.0, %v1553
        %1555 = vmatmul.f32.gmra.mxu0 %v1385
        %v1556 = vpop.f32.mrf.mxu0
        %v1557 = vadd.f32 0.0, %v1556
        %1558 = vmatmul.f32.gmra.mxu0 %v1388
        %v1559 = vpop.f32.mrf.mxu0
        %1560 = vmatmul.f32.gmra.mxu0 %v1391
        %v1561 = vpop.f32.mrf.mxu0
        %v1562 = vadd.f32 0.0, %v1561
        %1563 = vmatmul.f32.gmra.mxu0 %v1394
        %v1564 = vpop.f32.mrf.mxu0
        %v1565 = vadd.f32 0.0, %v1564
        %1566 = vmatmul.f32.gmra.mxu0 %v1397
        %v1567 = vpop.f32.mrf.mxu0
        %1568 = vmatmul.f32.gmra.mxu0 %v1400
        %v1569 = vpop.f32.mrf.mxu0
        %v1570 = vadd.f32 0.0, %v1569
        %1571 = vmatmul.f32.gmra.mxu0 %v1403
        %v1572 = vpop.f32.mrf.mxu0
        %v1573 = vadd.f32 0.0, %v1572
        %1574 = vmatmul.f32.gmra.mxu0 %v1406
        %v1575 = vpop.f32.mrf.mxu0
        %1576 = vmatmul.f32.gmra.mxu0 %v1409
        %v1577 = vpop.f32.mrf.mxu0
        %v1578 = vadd.f32 0.0, %v1577
        %1579 = vmatmul.f32.gmra.mxu0 %v1412
        %v1580 = vpop.f32.mrf.mxu0
        %v1581 = vadd.f32 0.0, %v1580
        %1582 = vmatmul.f32.gmra.mxu0 %v1415
        %v1583 = vpop.f32.mrf.mxu0
        %1584 = vmatmul.f32.gmra.mxu0 %v1418
        %v1585 = vpop.f32.mrf.mxu0
        %v1586 = vadd.f32 0.0, %v1585
        %1587 = vmatmul.f32.gmra.mxu0 %v1421
        %v1588 = vpop.f32.mrf.mxu0
        %v1589 = vadd.f32 0.0, %v1588
        %1590 = vmatmul.f32.gmra.mxu0 %v1424
        %v1591 = vpop.f32.mrf.mxu0
        %1592 = vmatmul.f32.gmra.mxu0 %v1427
        %v1593 = vpop.f32.mrf.mxu0
        %v1594 = vadd.f32 0.0, %v1593
        %1595 = vmatmul.f32.gmra.mxu0 %v1430
        %v1596 = vpop.f32.mrf.mxu0
        %v1597 = vadd.f32 0.0, %v1596
        %1598 = vmatmul.f32.gmra.mxu0 %v1433
        %v1599 = vpop.f32.mrf.mxu0
        %1600 = vmatmul.f32.gmra.mxu0 %v1436
        %v1601 = vpop.f32.mrf.mxu0
        %v1602 = vadd.f32 0.0, %v1601
        %1603 = vmatmul.f32.gmra.mxu0 %v1439
        %v1604 = vpop.f32.mrf.mxu0
        %v1605 = vadd.f32 0.0, %v1604
        %1606 = vmatmul.f32.gmra.mxu0 %v1442
        %v1607 = vpop.f32.mrf.mxu0
        %1608 = vmatmul.f32.gmra.mxu0 %v1445
        %v1609 = vpop.f32.mrf.mxu0
        %v1610 = vadd.f32 0.0, %v1609
        %1611 = vmatmul.f32.gmra.mxu0 %v1448
        %v1612 = vpop.f32.mrf.mxu0
        %v1613 = vadd.f32 0.0, %v1612
        %1614 = vmatmul.f32.gmra.mxu0 %v1451
        %v1615 = vpop.f32.mrf.mxu0
        %1616 = vmatmul.f32.gmra.mxu0 %v1454
        %v1617 = vpop.f32.mrf.mxu0
        %v1618 = vadd.f32 0.0, %v1617
        %1619 = vmatmul.f32.gmra.mxu0 %v1457
        %v1620 = vpop.f32.mrf.mxu0
        %v1621 = vadd.f32 0.0, %v1620
        %1622 = vmatmul.f32.gmra.mxu0 %v1460
        %v1623 = vpop.f32.mrf.mxu0
        %1624 = vmatmul.f32.gmra.mxu0 %v1463
        %v1625 = vpop.f32.mrf.mxu0
        %1626 = vmatmul.f32.gmra.mxu0 %v1466
        %v1627 = vpop.f32.mrf.mxu0
        %1628 = vmatmul.f32.gmra.mxu0 %v1469
        %v1629 = vpop.f32.mrf.mxu0
        %1630 = vmatmul.f32.gmra.mxu0 %v1472
        %v1631 = vpop.f32.mrf.mxu0
        %1632 = vmatmul.f32.gmra.mxu0 %v1475
        %v1633 = vpop.f32.mrf.mxu0
        %1634 = vmatmul.f32.gmra.mxu0 %v1478
        %v1635 = vpop.f32.mrf.mxu0
        %1636 = vdwg.mxu0
        %v1637 = vadd.f32 %v1061, %v1498
        %v1638 = vadd.f32 %v1064, %v1501
        %v1639 = vadd.f32 %v1069, %v1506
        %v1640 = vadd.f32 %v1072, %v1509
        %v1641 = vadd.f32 %v1077, %v1514
        %v1642 = vadd.f32 %v1080, %v1517
        %v1643 = vadd.f32 %v1085, %v1522
        %v1644 = vadd.f32 %v1088, %v1525
        %v1645 = vadd.f32 %v1093, %v1530
        %v1646 = vadd.f32 %v1096, %v1533
        %v1647 = vadd.f32 %v1101, %v1538
        %v1648 = vadd.f32 %v1104, %v1541
        %v1649 = vadd.f32 %v1109, %v1546
        %v1650 = vadd.f32 %v1112, %v1549
        %v1651 = vadd.f32 %v1117, %v1554
        %v1652 = vadd.f32 %v1120, %v1557
        %v1653 = vadd.f32 %v1125, %v1562
        %v1654 = vadd.f32 %v1128, %v1565
        %v1655 = vadd.f32 %v1133, %v1570
        %v1656 = vadd.f32 %v1136, %v1573
        %v1657 = vadd.f32 %v1141, %v1578
        %v1658 = vadd.f32 %v1144, %v1581
        %v1659 = vadd.f32 %v1149, %v1586
        %v1660 = vadd.f32 %v1152, %v1589
        %v1661 = vadd.f32 %v1157, %v1594
        %v1662 = vadd.f32 %v1160, %v1597
        %v1663 = vadd.f32 %v1165, %v1602
        %v1664 = vadd.f32 %v1168, %v1605
        %v1665 = vadd.f32 %v1173, %v1610
        %v1666 = vadd.f32 %v1176, %v1613
        %v1667 = vadd.f32 %v1181, %v1618
        %v1668 = vadd.f32 %v1184, %v1621
        %s1669 = scalar_lea.vmem [#allocation3], 192
        %v1670 = vld [vmem:[%s1669] sm:$0xff]
        %v1671 = vld [vmem:[%s1669 + $0x8] sm:$0xff]
        %v1672 = vld [vmem:[%s1669 + $0x10] sm:$0xff]
        %v1673 = vld [vmem:[%s1669 + $0x18] sm:$0xff]
        %v1674 = vld [vmem:[%s1669 + $0x20] sm:$0xff]
        %v1675 = vld [vmem:[%s1669 + $0x28] sm:$0xff]
        %v1676 = vld [vmem:[%s1669 + $0x30] sm:$0xff]
        %v1677 = vld [vmem:[%s1669 + $0x38] sm:$0xff]
        %1678 = vmatpush.msra.mxu0 0.0
        %1679 = vmatpush.msra.mxu0 0.0
        %1680 = vmatpush.msra.mxu0 0.0
        %1681 = vmatpush.msra.mxu0 0.0
        %1682 = vmatpush.msra.mxu0 0.0
        %1683 = vmatpush.msra.mxu0 0.0
        %1684 = vmatpush.msra.mxu0 0.0
        %1685 = vmatpush.msra.mxu0 0.0
        %1686 = vmatpush.msra.mxu0 %v1677
        %1687 = vmatpush.msra.mxu0 %v1676
        %1688 = vmatpush.msra.mxu0 %v1675
        %1689 = vmatpush.msra.mxu0 %v1674
        %1690 = vmatpush.msra.mxu0 %v1673
        %1691 = vmatpush.msra.mxu0 %v1672
        %1692 = vmatpush.msra.mxu0 %v1671
        %1693 = vmatpush.msra.mxu0 %v1670
        %1694 = vmatmul.f32.gmra.mxu0 %v891
        %v1695 = vpop.f32.mrf.mxu0
        %v1696 = vadd.f32 0.0, %v1695
        %1697 = vmatmul.f32.gmra.mxu0 %v894
        %v1698 = vpop.f32.mrf.mxu0
        %v1699 = vadd.f32 0.0, %v1698
        %1700 = vmatmul.f32.gmra.mxu0 %v897
        %v1701 = vpop.f32.mrf.mxu0
        %1702 = vmatmul.f32.gmra.mxu0 %v900
        %v1703 = vpop.f32.mrf.mxu0
        %v1704 = vadd.f32 0.0, %v1703
        %1705 = vmatmul.f32.gmra.mxu0 %v903
        %v1706 = vpop.f32.mrf.mxu0
        %v1707 = vadd.f32 0.0, %v1706
        %1708 = vmatmul.f32.gmra.mxu0 %v906
        %v1709 = vpop.f32.mrf.mxu0
        %1710 = vmatmul.f32.gmra.mxu0 %v909
        %v1711 = vpop.f32.mrf.mxu0
        %v1712 = vadd.f32 0.0, %v1711
        %1713 = vmatmul.f32.gmra.mxu0 %v912
        %v1714 = vpop.f32.mrf.mxu0
        %v1715 = vadd.f32 0.0, %v1714
        %1716 = vmatmul.f32.gmra.mxu0 %v915
        %v1717 = vpop.f32.mrf.mxu0
        %1718 = vmatmul.f32.gmra.mxu0 %v918
        %v1719 = vpop.f32.mrf.mxu0
        %v1720 = vadd.f32 0.0, %v1719
        %1721 = vmatmul.f32.gmra.mxu0 %v921
        %v1722 = vpop.f32.mrf.mxu0
        %v1723 = vadd.f32 0.0, %v1722
        %1724 = vmatmul.f32.gmra.mxu0 %v924
        %v1725 = vpop.f32.mrf.mxu0
        %1726 = vmatmul.f32.gmra.mxu0 %v927
        %v1727 = vpop.f32.mrf.mxu0
        %v1728 = vadd.f32 0.0, %v1727
        %1729 = vmatmul.f32.gmra.mxu0 %v930
        %v1730 = vpop.f32.mrf.mxu0
        %v1731 = vadd.f32 0.0, %v1730
        %1732 = vmatmul.f32.gmra.mxu0 %v933
        %v1733 = vpop.f32.mrf.mxu0
        %1734 = vmatmul.f32.gmra.mxu0 %v936
        %v1735 = vpop.f32.mrf.mxu0
        %v1736 = vadd.f32 0.0, %v1735
        %1737 = vmatmul.f32.gmra.mxu0 %v939
        %v1738 = vpop.f32.mrf.mxu0
        %v1739 = vadd.f32 0.0, %v1738
        %1740 = vmatmul.f32.gmra.mxu0 %v942
        %v1741 = vpop.f32.mrf.mxu0
        %1742 = vmatmul.f32.gmra.mxu0 %v945
        %v1743 = vpop.f32.mrf.mxu0
        %v1744 = vadd.f32 0.0, %v1743
        %1745 = vmatmul.f32.gmra.mxu0 %v948
        %v1746 = vpop.f32.mrf.mxu0
        %v1747 = vadd.f32 0.0, %v1746
        %1748 = vmatmul.f32.gmra.mxu0 %v951
        %v1749 = vpop.f32.mrf.mxu0
        %1750 = vmatmul.f32.gmra.mxu0 %v954
        %v1751 = vpop.f32.mrf.mxu0
        %v1752 = vadd.f32 0.0, %v1751
        %1753 = vmatmul.f32.gmra.mxu0 %v957
        %v1754 = vpop.f32.mrf.mxu0
        %v1755 = vadd.f32 0.0, %v1754
        %1756 = vmatmul.f32.gmra.mxu0 %v960
        %v1757 = vpop.f32.mrf.mxu0
        %1758 = vmatmul.f32.gmra.mxu0 %v963
        %v1759 = vpop.f32.mrf.mxu0
        %v1760 = vadd.f32 0.0, %v1759
        %1761 = vmatmul.f32.gmra.mxu0 %v966
        %v1762 = vpop.f32.mrf.mxu0
        %v1763 = vadd.f32 0.0, %v1762
        %1764 = vmatmul.f32.gmra.mxu0 %v969
        %v1765 = vpop.f32.mrf.mxu0
        %1766 = vmatmul.f32.gmra.mxu0 %v972
        %v1767 = vpop.f32.mrf.mxu0
        %v1768 = vadd.f32 0.0, %v1767
        %1769 = vmatmul.f32.gmra.mxu0 %v975
        %v1770 = vpop.f32.mrf.mxu0
        %v1771 = vadd.f32 0.0, %v1770
        %1772 = vmatmul.f32.gmra.mxu0 %v978
        %v1773 = vpop.f32.mrf.mxu0
        %1774 = vmatmul.f32.gmra.mxu0 %v981
        %v1775 = vpop.f32.mrf.mxu0
        %v1776 = vadd.f32 0.0, %v1775
        %1777 = vmatmul.f32.gmra.mxu0 %v984
        %v1778 = vpop.f32.mrf.mxu0
        %v1779 = vadd.f32 0.0, %v1778
        %1780 = vmatmul.f32.gmra.mxu0 %v987
        %v1781 = vpop.f32.mrf.mxu0
        %1782 = vmatmul.f32.gmra.mxu0 %v990
        %v1783 = vpop.f32.mrf.mxu0
        %v1784 = vadd.f32 0.0, %v1783
        %1785 = vmatmul.f32.gmra.mxu0 %v993
        %v1786 = vpop.f32.mrf.mxu0
        %v1787 = vadd.f32 0.0, %v1786
        %1788 = vmatmul.f32.gmra.mxu0 %v996
        %v1789 = vpop.f32.mrf.mxu0
        %1790 = vmatmul.f32.gmra.mxu0 %v999
        %v1791 = vpop.f32.mrf.mxu0
        %v1792 = vadd.f32 0.0, %v1791
        %1793 = vmatmul.f32.gmra.mxu0 %v1002
        %v1794 = vpop.f32.mrf.mxu0
        %v1795 = vadd.f32 0.0, %v1794
        %1796 = vmatmul.f32.gmra.mxu0 %v1005
        %v1797 = vpop.f32.mrf.mxu0
        %1798 = vmatmul.f32.gmra.mxu0 %v1008
        %v1799 = vpop.f32.mrf.mxu0
        %v1800 = vadd.f32 0.0, %v1799
        %1801 = vmatmul.f32.gmra.mxu0 %v1011
        %v1802 = vpop.f32.mrf.mxu0
        %v1803 = vadd.f32 0.0, %v1802
        %1804 = vmatmul.f32.gmra.mxu0 %v1014
        %v1805 = vpop.f32.mrf.mxu0
        %1806 = vmatmul.f32.gmra.mxu0 %v1017
        %v1807 = vpop.f32.mrf.mxu0
        %v1808 = vadd.f32 0.0, %v1807
        %1809 = vmatmul.f32.gmra.mxu0 %v1020
        %v1810 = vpop.f32.mrf.mxu0
        %v1811 = vadd.f32 0.0, %v1810
        %1812 = vmatmul.f32.gmra.mxu0 %v1023
        %v1813 = vpop.f32.mrf.mxu0
        %1814 = vmatmul.f32.gmra.mxu0 %v1026
        %v1815 = vpop.f32.mrf.mxu0
        %v1816 = vadd.f32 0.0, %v1815
        %1817 = vmatmul.f32.gmra.mxu0 %v1029
        %v1818 = vpop.f32.mrf.mxu0
        %v1819 = vadd.f32 0.0, %v1818
        %1820 = vmatmul.f32.gmra.mxu0 %v1032
        %v1821 = vpop.f32.mrf.mxu0
        %1822 = vmatmul.f32.gmra.mxu0 %v1035
        %v1823 = vpop.f32.mrf.mxu0
        %1824 = vmatmul.f32.gmra.mxu0 %v1038
        %v1825 = vpop.f32.mrf.mxu0
        %1826 = vmatmul.f32.gmra.mxu0 %v1041
        %v1827 = vpop.f32.mrf.mxu0
        %1828 = vmatmul.f32.gmra.mxu0 %v882
        %v1829 = vpop.f32.mrf.mxu0
        %1830 = vmatmul.f32.gmra.mxu0 %v885
        %v1831 = vpop.f32.mrf.mxu0
        %1832 = vmatmul.f32.gmra.mxu0 %v888
        %v1833 = vpop.f32.mrf.mxu0
        %1834 = vdwg.mxu0
        %v1835 = vadd.f32 %v1637, %v1696
        %v1836 = vadd.f32 %v1638, %v1699
        %v1837 = vadd.f32 %v1639, %v1704
        %v1838 = vadd.f32 %v1640, %v1707
        %v1839 = vadd.f32 %v1641, %v1712
        %v1840 = vadd.f32 %v1642, %v1715
        %v1841 = vadd.f32 %v1643, %v1720
        %v1842 = vadd.f32 %v1644, %v1723
        %v1843 = vadd.f32 %v1645, %v1728
        %v1844 = vadd.f32 %v1646, %v1731
        %v1845 = vadd.f32 %v1647, %v1736
        %v1846 = vadd.f32 %v1648, %v1739
        %v1847 = vadd.f32 %v1649, %v1744
        %v1848 = vadd.f32 %v1650, %v1747
        %v1849 = vadd.f32 %v1651, %v1752
        %v1850 = vadd.f32 %v1652, %v1755
        %v1851 = vadd.f32 %v1653, %v1760
        %v1852 = vadd.f32 %v1654, %v1763
        %v1853 = vadd.f32 %v1655, %v1768
        %v1854 = vadd.f32 %v1656, %v1771
        %v1855 = vadd.f32 %v1657, %v1776
        %v1856 = vadd.f32 %v1658, %v1779
        %v1857 = vadd.f32 %v1659, %v1784
        %v1858 = vadd.f32 %v1660, %v1787
        %v1859 = vadd.f32 %v1661, %v1792
        %v1860 = vadd.f32 %v1662, %v1795
        %v1861 = vadd.f32 %v1663, %v1800
        %v1862 = vadd.f32 %v1664, %v1803
        %v1863 = vadd.f32 %v1665, %v1808
        %v1864 = vadd.f32 %v1666, %v1811
        %v1865 = vadd.f32 %v1667, %v1816
        %v1866 = vadd.f32 %v1668, %v1819
        %s1867 = scalar_lea.vmem [#allocation3], 256
        %v1868 = vld [vmem:[%s1867] sm:$0xff]
        %v1869 = vld [vmem:[%s1867 + $0x8] sm:$0xff]
        %v1870 = vld [vmem:[%s1867 + $0x10] sm:$0xff]
        %v1871 = vld [vmem:[%s1867 + $0x18] sm:$0xff]
        %v1872 = vld [vmem:[%s1867 + $0x20] sm:$0xff]
        %v1873 = vld [vmem:[%s1867 + $0x28] sm:$0xff]
        %v1874 = vld [vmem:[%s1867 + $0x30] sm:$0xff]
        %v1875 = vld [vmem:[%s1867 + $0x38] sm:$0xff]
        %1876 = vmatpush.msra.mxu0 0.0
        %1877 = vmatpush.msra.mxu0 0.0
        %1878 = vmatpush.msra.mxu0 0.0
        %1879 = vmatpush.msra.mxu0 0.0
        %1880 = vmatpush.msra.mxu0 0.0
        %1881 = vmatpush.msra.mxu0 0.0
        %1882 = vmatpush.msra.mxu0 0.0
        %1883 = vmatpush.msra.mxu0 0.0
        %1884 = vmatpush.msra.mxu0 %v1875
        %1885 = vmatpush.msra.mxu0 %v1874
        %1886 = vmatpush.msra.mxu0 %v1873
        %1887 = vmatpush.msra.mxu0 %v1872
        %1888 = vmatpush.msra.mxu0 %v1871
        %1889 = vmatpush.msra.mxu0 %v1870
        %1890 = vmatpush.msra.mxu0 %v1869
        %1891 = vmatpush.msra.mxu0 %v1868
        %1892 = vmatmul.f32.gmra.mxu0 %v572
        %v1893 = vpop.f32.mrf.mxu0
        %v1894 = vadd.f32 0.0, %v1893
        %1895 = vmatmul.f32.gmra.mxu0 %v575
        %v1896 = vpop.f32.mrf.mxu0
        %v1897 = vadd.f32 0.0, %v1896
        %1898 = vmatmul.f32.gmra.mxu0 %v578
        %v1899 = vpop.f32.mrf.mxu0
        %1900 = vmatmul.f32.gmra.mxu0 %v581
        %v1901 = vpop.f32.mrf.mxu0
        %v1902 = vadd.f32 0.0, %v1901
        %1903 = vmatmul.f32.gmra.mxu0 %v584
        %v1904 = vpop.f32.mrf.mxu0
        %v1905 = vadd.f32 0.0, %v1904
        %1906 = vmatmul.f32.gmra.mxu0 %v587
        %v1907 = vpop.f32.mrf.mxu0
        %1908 = vmatmul.f32.gmra.mxu0 %v590
        %v1909 = vpop.f32.mrf.mxu0
        %v1910 = vadd.f32 0.0, %v1909
        %1911 = vmatmul.f32.gmra.mxu0 %v593
        %v1912 = vpop.f32.mrf.mxu0
        %v1913 = vadd.f32 0.0, %v1912
        %1914 = vmatmul.f32.gmra.mxu0 %v596
        %v1915 = vpop.f32.mrf.mxu0
        %1916 = vmatmul.f32.gmra.mxu0 %v599
        %v1917 = vpop.f32.mrf.mxu0
        %v1918 = vadd.f32 0.0, %v1917
        %1919 = vmatmul.f32.gmra.mxu0 %v602
        %v1920 = vpop.f32.mrf.mxu0
        %v1921 = vadd.f32 0.0, %v1920
        %1922 = vmatmul.f32.gmra.mxu0 %v605
        %v1923 = vpop.f32.mrf.mxu0
        %1924 = vmatmul.f32.gmra.mxu0 %v608
        %v1925 = vpop.f32.mrf.mxu0
        %v1926 = vadd.f32 0.0, %v1925
        %1927 = vmatmul.f32.gmra.mxu0 %v611
        %v1928 = vpop.f32.mrf.mxu0
        %v1929 = vadd.f32 0.0, %v1928
        %1930 = vmatmul.f32.gmra.mxu0 %v614
        %v1931 = vpop.f32.mrf.mxu0
        %1932 = vmatmul.f32.gmra.mxu0 %v617
        %v1933 = vpop.f32.mrf.mxu0
        %v1934 = vadd.f32 0.0, %v1933
        %1935 = vmatmul.f32.gmra.mxu0 %v620
        %v1936 = vpop.f32.mrf.mxu0
        %v1937 = vadd.f32 0.0, %v1936
        %1938 = vmatmul.f32.gmra.mxu0 %v623
        %v1939 = vpop.f32.mrf.mxu0
        %1940 = vmatmul.f32.gmra.mxu0 %v626
        %v1941 = vpop.f32.mrf.mxu0
        %v1942 = vadd.f32 0.0, %v1941
        %1943 = vmatmul.f32.gmra.mxu0 %v629
        %v1944 = vpop.f32.mrf.mxu0
        %v1945 = vadd.f32 0.0, %v1944
        %1946 = vmatmul.f32.gmra.mxu0 %v632
        %v1947 = vpop.f32.mrf.mxu0
        %1948 = vmatmul.f32.gmra.mxu0 %v635
        %v1949 = vpop.f32.mrf.mxu0
        %v1950 = vadd.f32 0.0, %v1949
        %1951 = vmatmul.f32.gmra.mxu0 %v638
        %v1952 = vpop.f32.mrf.mxu0
        %v1953 = vadd.f32 0.0, %v1952
        %1954 = vmatmul.f32.gmra.mxu0 %v641
        %v1955 = vpop.f32.mrf.mxu0
        %1956 = vmatmul.f32.gmra.mxu0 %v644
        %v1957 = vpop.f32.mrf.mxu0
        %v1958 = vadd.f32 0.0, %v1957
        %1959 = vmatmul.f32.gmra.mxu0 %v647
        %v1960 = vpop.f32.mrf.mxu0
        %v1961 = vadd.f32 0.0, %v1960
        %1962 = vmatmul.f32.gmra.mxu0 %v650
        %v1963 = vpop.f32.mrf.mxu0
        %1964 = vmatmul.f32.gmra.mxu0 %v653
        %v1965 = vpop.f32.mrf.mxu0
        %v1966 = vadd.f32 0.0, %v1965
        %1967 = vmatmul.f32.gmra.mxu0 %v656
        %v1968 = vpop.f32.mrf.mxu0
        %v1969 = vadd.f32 0.0, %v1968
        %1970 = vmatmul.f32.gmra.mxu0 %v659
        %v1971 = vpop.f32.mrf.mxu0
        %1972 = vmatmul.f32.gmra.mxu0 %v662
        %v1973 = vpop.f32.mrf.mxu0
        %v1974 = vadd.f32 0.0, %v1973
        %1975 = vmatmul.f32.gmra.mxu0 %v665
        %v1976 = vpop.f32.mrf.mxu0
        %v1977 = vadd.f32 0.0, %v1976
        %1978 = vmatmul.f32.gmra.mxu0 %v668
        %v1979 = vpop.f32.mrf.mxu0
        %1980 = vmatmul.f32.gmra.mxu0 %v671
        %v1981 = vpop.f32.mrf.mxu0
        %v1982 = vadd.f32 0.0, %v1981
        %1983 = vmatmul.f32.gmra.mxu0 %v674
        %v1984 = vpop.f32.mrf.mxu0
        %v1985 = vadd.f32 0.0, %v1984
        %1986 = vmatmul.f32.gmra.mxu0 %v677
        %v1987 = vpop.f32.mrf.mxu0
        %1988 = vmatmul.f32.gmra.mxu0 %v680
        %v1989 = vpop.f32.mrf.mxu0
        %v1990 = vadd.f32 0.0, %v1989
        %1991 = vmatmul.f32.gmra.mxu0 %v683
        %v1992 = vpop.f32.mrf.mxu0
        %v1993 = vadd.f32 0.0, %v1992
        %1994 = vmatmul.f32.gmra.mxu0 %v686
        %v1995 = vpop.f32.mrf.mxu0
        %1996 = vmatmul.f32.gmra.mxu0 %v689
        %v1997 = vpop.f32.mrf.mxu0
        %v1998 = vadd.f32 0.0, %v1997
        %1999 = vmatmul.f32.gmra.mxu0 %v692
        %v2000 = vpop.f32.mrf.mxu0
        %v2001 = vadd.f32 0.0, %v2000
        %2002 = vmatmul.f32.gmra.mxu0 %v695
        %v2003 = vpop.f32.mrf.mxu0
        %2004 = vmatmul.f32.gmra.mxu0 %v698
        %v2005 = vpop.f32.mrf.mxu0
        %v2006 = vadd.f32 0.0, %v2005
        %2007 = vmatmul.f32.gmra.mxu0 %v701
        %v2008 = vpop.f32.mrf.mxu0
        %v2009 = vadd.f32 0.0, %v2008
        %2010 = vmatmul.f32.gmra.mxu0 %v704
        %v2011 = vpop.f32.mrf.mxu0
        %2012 = vmatmul.f32.gmra.mxu0 %v707
        %v2013 = vpop.f32.mrf.mxu0
        %v2014 = vadd.f32 0.0, %v2013
        %2015 = vmatmul.f32.gmra.mxu0 %v710
        %v2016 = vpop.f32.mrf.mxu0
        %v2017 = vadd.f32 0.0, %v2016
        %2018 = vmatmul.f32.gmra.mxu0 %v713
        %v2019 = vpop.f32.mrf.mxu0
        %2020 = vmatmul.f32.gmra.mxu0 %v716
        %v2021 = vpop.f32.mrf.mxu0
        %2022 = vmatmul.f32.gmra.mxu0 %v719
        %v2023 = vpop.f32.mrf.mxu0
        %2024 = vmatmul.f32.gmra.mxu0 %v722
        %v2025 = vpop.f32.mrf.mxu0
        %2026 = vmatmul.f32.gmra.mxu0 %v563
        %v2027 = vpop.f32.mrf.mxu0
        %2028 = vmatmul.f32.gmra.mxu0 %v566
        %v2029 = vpop.f32.mrf.mxu0
        %2030 = vmatmul.f32.gmra.mxu0 %v569
        %v2031 = vpop.f32.mrf.mxu0
        %2032 = vdwg.mxu0
        %v2033 = vadd.f32 %v1835, %v1894
        %v2034 = vadd.f32 %v1836, %v1897
        %v2035 = vadd.f32 %v1837, %v1902
        %v2036 = vadd.f32 %v1838, %v1905
        %v2037 = vadd.f32 %v1839, %v1910
        %v2038 = vadd.f32 %v1840, %v1913
        %v2039 = vadd.f32 %v1841, %v1918
        %v2040 = vadd.f32 %v1842, %v1921
        %v2041 = vadd.f32 %v1843, %v1926
        %v2042 = vadd.f32 %v1844, %v1929
        %v2043 = vadd.f32 %v1845, %v1934
        %v2044 = vadd.f32 %v1846, %v1937
        %v2045 = vadd.f32 %v1847, %v1942
        %v2046 = vadd.f32 %v1848, %v1945
        %v2047 = vadd.f32 %v1849, %v1950
        %v2048 = vadd.f32 %v1850, %v1953
        %v2049 = vadd.f32 %v1851, %v1958
        %v2050 = vadd.f32 %v1852, %v1961
        %v2051 = vadd.f32 %v1853, %v1966
        %v2052 = vadd.f32 %v1854, %v1969
        %v2053 = vadd.f32 %v1855, %v1974
        %v2054 = vadd.f32 %v1856, %v1977
        %v2055 = vadd.f32 %v1857, %v1982
        %v2056 = vadd.f32 %v1858, %v1985
        %v2057 = vadd.f32 %v1859, %v1990
        %v2058 = vadd.f32 %v1860, %v1993
        %v2059 = vadd.f32 %v1861, %v1998
        %v2060 = vadd.f32 %v1862, %v2001
        %v2061 = vadd.f32 %v1863, %v2006
        %v2062 = vadd.f32 %v1864, %v2009
        %v2063 = vadd.f32 %v1865, %v2014
        %v2064 = vadd.f32 %v1866, %v2017
        %s2065 = scalar_lea.vmem [#allocation3], 320
        %v2066 = vld [vmem:[%s2065] sm:$0xff]
        %v2067 = vld [vmem:[%s2065 + $0x8] sm:$0xff]
        %v2068 = vld [vmem:[%s2065 + $0x10] sm:$0xff]
        %v2069 = vld [vmem:[%s2065 + $0x18] sm:$0xff]
        %v2070 = vld [vmem:[%s2065 + $0x20] sm:$0xff]
        %v2071 = vld [vmem:[%s2065 + $0x28] sm:$0xff]
        %v2072 = vld [vmem:[%s2065 + $0x30] sm:$0xff]
        %v2073 = vld [vmem:[%s2065 + $0x38] sm:$0xff]
        %2074 = vmatpush.msra.mxu0 0.0
        %2075 = vmatpush.msra.mxu0 0.0
        %2076 = vmatpush.msra.mxu0 0.0
        %2077 = vmatpush.msra.mxu0 0.0
        %2078 = vmatpush.msra.mxu0 0.0
        %2079 = vmatpush.msra.mxu0 0.0
        %2080 = vmatpush.msra.mxu0 0.0
        %2081 = vmatpush.msra.mxu0 0.0
        %2082 = vmatpush.msra.mxu0 %v2073
        %2083 = vmatpush.msra.mxu0 %v2072
        %2084 = vmatpush.msra.mxu0 %v2071
        %2085 = vmatpush.msra.mxu0 %v2070
        %2086 = vmatpush.msra.mxu0 %v2069
        %2087 = vmatpush.msra.mxu0 %v2068
        %2088 = vmatpush.msra.mxu0 %v2067
        %2089 = vmatpush.msra.mxu0 %v2066
        %2090 = vmatmul.f32.gmra.mxu0 %v1328
        %v2091 = vpop.f32.mrf.mxu0
        %v2092 = vadd.f32 0.0, %v2091
        %2093 = vmatmul.f32.gmra.mxu0 %v1331
        %v2094 = vpop.f32.mrf.mxu0
        %v2095 = vadd.f32 0.0, %v2094
        %2096 = vmatmul.f32.gmra.mxu0 %v1334
        %v2097 = vpop.f32.mrf.mxu0
        %2098 = vmatmul.f32.gmra.mxu0 %v1337
        %v2099 = vpop.f32.mrf.mxu0
        %v2100 = vadd.f32 0.0, %v2099
        %2101 = vmatmul.f32.gmra.mxu0 %v1340
        %v2102 = vpop.f32.mrf.mxu0
        %v2103 = vadd.f32 0.0, %v2102
        %2104 = vmatmul.f32.gmra.mxu0 %v1343
        %v2105 = vpop.f32.mrf.mxu0
        %2106 = vmatmul.f32.gmra.mxu0 %v1346
        %v2107 = vpop.f32.mrf.mxu0
        %v2108 = vadd.f32 0.0, %v2107
        %2109 = vmatmul.f32.gmra.mxu0 %v1349
        %v2110 = vpop.f32.mrf.mxu0
        %v2111 = vadd.f32 0.0, %v2110
        %2112 = vmatmul.f32.gmra.mxu0 %v1352
        %v2113 = vpop.f32.mrf.mxu0
        %2114 = vmatmul.f32.gmra.mxu0 %v1355
        %v2115 = vpop.f32.mrf.mxu0
        %v2116 = vadd.f32 0.0, %v2115
        %2117 = vmatmul.f32.gmra.mxu0 %v1358
        %v2118 = vpop.f32.mrf.mxu0
        %v2119 = vadd.f32 0.0, %v2118
        %2120 = vmatmul.f32.gmra.mxu0 %v1361
        %v2121 = vpop.f32.mrf.mxu0
        %2122 = vmatmul.f32.gmra.mxu0 %v1364
        %v2123 = vpop.f32.mrf.mxu0
        %v2124 = vadd.f32 0.0, %v2123
        %2125 = vmatmul.f32.gmra.mxu0 %v1367
        %v2126 = vpop.f32.mrf.mxu0
        %v2127 = vadd.f32 0.0, %v2126
        %2128 = vmatmul.f32.gmra.mxu0 %v1370
        %v2129 = vpop.f32.mrf.mxu0
        %2130 = vmatmul.f32.gmra.mxu0 %v1373
        %v2131 = vpop.f32.mrf.mxu0
        %v2132 = vadd.f32 0.0, %v2131
        %2133 = vmatmul.f32.gmra.mxu0 %v1376
        %v2134 = vpop.f32.mrf.mxu0
        %v2135 = vadd.f32 0.0, %v2134
        %2136 = vmatmul.f32.gmra.mxu0 %v1379
        %v2137 = vpop.f32.mrf.mxu0
        %2138 = vmatmul.f32.gmra.mxu0 %v1382
        %v2139 = vpop.f32.mrf.mxu0
        %v2140 = vadd.f32 0.0, %v2139
        %2141 = vmatmul.f32.gmra.mxu0 %v1385
        %v2142 = vpop.f32.mrf.mxu0
        %v2143 = vadd.f32 0.0, %v2142
        %2144 = vmatmul.f32.gmra.mxu0 %v1388
        %v2145 = vpop.f32.mrf.mxu0
        %2146 = vmatmul.f32.gmra.mxu0 %v1391
        %v2147 = vpop.f32.mrf.mxu0
        %v2148 = vadd.f32 0.0, %v2147
        %2149 = vmatmul.f32.gmra.mxu0 %v1394
        %v2150 = vpop.f32.mrf.mxu0
        %v2151 = vadd.f32 0.0, %v2150
        %2152 = vmatmul.f32.gmra.mxu0 %v1397
        %v2153 = vpop.f32.mrf.mxu0
        %2154 = vmatmul.f32.gmra.mxu0 %v1400
        %v2155 = vpop.f32.mrf.mxu0
        %v2156 = vadd.f32 0.0, %v2155
        %2157 = vmatmul.f32.gmra.mxu0 %v1403
        %v2158 = vpop.f32.mrf.mxu0
        %v2159 = vadd.f32 0.0, %v2158
        %2160 = vmatmul.f32.gmra.mxu0 %v1406
        %v2161 = vpop.f32.mrf.mxu0
        %2162 = vmatmul.f32.gmra.mxu0 %v1409
        %v2163 = vpop.f32.mrf.mxu0
        %v2164 = vadd.f32 0.0, %v2163
        %2165 = vmatmul.f32.gmra.mxu0 %v1412
        %v2166 = vpop.f32.mrf.mxu0
        %v2167 = vadd.f32 0.0, %v2166
        %2168 = vmatmul.f32.gmra.mxu0 %v1415
        %v2169 = vpop.f32.mrf.mxu0
        %2170 = vmatmul.f32.gmra.mxu0 %v1418
        %v2171 = vpop.f32.mrf.mxu0
        %v2172 = vadd.f32 0.0, %v2171
        %2173 = vmatmul.f32.gmra.mxu0 %v1421
        %v2174 = vpop.f32.mrf.mxu0
        %v2175 = vadd.f32 0.0, %v2174
        %2176 = vmatmul.f32.gmra.mxu0 %v1424
        %v2177 = vpop.f32.mrf.mxu0
        %2178 = vmatmul.f32.gmra.mxu0 %v1427
        %v2179 = vpop.f32.mrf.mxu0
        %v2180 = vadd.f32 0.0, %v2179
        %2181 = vmatmul.f32.gmra.mxu0 %v1430
        %v2182 = vpop.f32.mrf.mxu0
        %v2183 = vadd.f32 0.0, %v2182
        %2184 = vmatmul.f32.gmra.mxu0 %v1433
        %v2185 = vpop.f32.mrf.mxu0
        %2186 = vmatmul.f32.gmra.mxu0 %v1436
        %v2187 = vpop.f32.mrf.mxu0
        %v2188 = vadd.f32 0.0, %v2187
        %2189 = vmatmul.f32.gmra.mxu0 %v1439
        %v2190 = vpop.f32.mrf.mxu0
        %v2191 = vadd.f32 0.0, %v2190
        %2192 = vmatmul.f32.gmra.mxu0 %v1442
        %v2193 = vpop.f32.mrf.mxu0
        %2194 = vmatmul.f32.gmra.mxu0 %v1445
        %v2195 = vpop.f32.mrf.mxu0
        %v2196 = vadd.f32 0.0, %v2195
        %2197 = vmatmul.f32.gmra.mxu0 %v1448
        %v2198 = vpop.f32.mrf.mxu0
        %v2199 = vadd.f32 0.0, %v2198
        %2200 = vmatmul.f32.gmra.mxu0 %v1451
        %v2201 = vpop.f32.mrf.mxu0
        %2202 = vmatmul.f32.gmra.mxu0 %v1454
        %v2203 = vpop.f32.mrf.mxu0
        %v2204 = vadd.f32 0.0, %v2203
        %2205 = vmatmul.f32.gmra.mxu0 %v1457
        %v2206 = vpop.f32.mrf.mxu0
        %v2207 = vadd.f32 0.0, %v2206
        %2208 = vmatmul.f32.gmra.mxu0 %v1460
        %v2209 = vpop.f32.mrf.mxu0
        %2210 = vmatmul.f32.gmra.mxu0 %v1463
        %v2211 = vpop.f32.mrf.mxu0
        %v2212 = vadd.f32 0.0, %v2211
        %2213 = vmatmul.f32.gmra.mxu0 %v1466
        %v2214 = vpop.f32.mrf.mxu0
        %v2215 = vadd.f32 0.0, %v2214
        %2216 = vmatmul.f32.gmra.mxu0 %v1469
        %v2217 = vpop.f32.mrf.mxu0
        %2218 = vmatmul.f32.gmra.mxu0 %v1472
        %v2219 = vpop.f32.mrf.mxu0
        %2220 = vmatmul.f32.gmra.mxu0 %v1475
        %v2221 = vpop.f32.mrf.mxu0
        %2222 = vmatmul.f32.gmra.mxu0 %v1478
        %v2223 = vpop.f32.mrf.mxu0
        %2224 = vmatmul.f32.gmra.mxu0 %v1319
        %v2225 = vpop.f32.mrf.mxu0
        %2226 = vmatmul.f32.gmra.mxu0 %v1322
        %v2227 = vpop.f32.mrf.mxu0
        %2228 = vmatmul.f32.gmra.mxu0 %v1325
        %v2229 = vpop.f32.mrf.mxu0
        %2230 = vdwg.mxu0
        %v2231 = vadd.f32 %v2033, %v2092
        %v2232 = vadd.f32 %v2034, %v2095
        %v2233 = vadd.f32 %v2035, %v2100
        %v2234 = vadd.f32 %v2036, %v2103
        %v2235 = vadd.f32 %v2037, %v2108
        %v2236 = vadd.f32 %v2038, %v2111
        %v2237 = vadd.f32 %v2039, %v2116
        %v2238 = vadd.f32 %v2040, %v2119
        %v2239 = vadd.f32 %v2041, %v2124
        %v2240 = vadd.f32 %v2042, %v2127
        %v2241 = vadd.f32 %v2043, %v2132
        %v2242 = vadd.f32 %v2044, %v2135
        %v2243 = vadd.f32 %v2045, %v2140
        %v2244 = vadd.f32 %v2046, %v2143
        %v2245 = vadd.f32 %v2047, %v2148
        %v2246 = vadd.f32 %v2048, %v2151
        %v2247 = vadd.f32 %v2049, %v2156
        %v2248 = vadd.f32 %v2050, %v2159
        %v2249 = vadd.f32 %v2051, %v2164
        %v2250 = vadd.f32 %v2052, %v2167
        %v2251 = vadd.f32 %v2053, %v2172
        %v2252 = vadd.f32 %v2054, %v2175
        %v2253 = vadd.f32 %v2055, %v2180
        %v2254 = vadd.f32 %v2056, %v2183
        %v2255 = vadd.f32 %v2057, %v2188
        %v2256 = vadd.f32 %v2058, %v2191
        %v2257 = vadd.f32 %v2059, %v2196
        %v2258 = vadd.f32 %v2060, %v2199
        %v2259 = vadd.f32 %v2061, %v2204
        %v2260 = vadd.f32 %v2062, %v2207
        %v2261 = vadd.f32 %v2063, %v2212
        %v2262 = vadd.f32 %v2064, %v2215
        %s2263 = scalar_lea.vmem [#allocation3], 384
        %v2264 = vld [vmem:[%s2263] sm:$0xff]
        %v2265 = vld [vmem:[%s2263 + $0x8] sm:$0xff]
        %v2266 = vld [vmem:[%s2263 + $0x10] sm:$0xff]
        %v2267 = vld [vmem:[%s2263 + $0x18] sm:$0xff]
        %v2268 = vld [vmem:[%s2263 + $0x20] sm:$0xff]
        %v2269 = vld [vmem:[%s2263 + $0x28] sm:$0xff]
        %v2270 = vld [vmem:[%s2263 + $0x30] sm:$0xff]
        %v2271 = vld [vmem:[%s2263 + $0x38] sm:$0xff]
        %2272 = vmatpush.msra.mxu0 0.0
        %2273 = vmatpush.msra.mxu0 0.0
        %2274 = vmatpush.msra.mxu0 0.0
        %2275 = vmatpush.msra.mxu0 0.0
        %2276 = vmatpush.msra.mxu0 0.0
        %2277 = vmatpush.msra.mxu0 0.0
        %2278 = vmatpush.msra.mxu0 0.0
        %2279 = vmatpush.msra.mxu0 0.0
        %2280 = vmatpush.msra.mxu0 %v2271
        %2281 = vmatpush.msra.mxu0 %v2270
        %2282 = vmatpush.msra.mxu0 %v2269
        %2283 = vmatpush.msra.mxu0 %v2268
        %2284 = vmatpush.msra.mxu0 %v2267
        %2285 = vmatpush.msra.mxu0 %v2266
        %2286 = vmatpush.msra.mxu0 %v2265
        %2287 = vmatpush.msra.mxu0 %v2264
        %2288 = vmatmul.f32.gmra.mxu0 %v900
        %v2289 = vpop.f32.mrf.mxu0
        %v2290 = vadd.f32 0.0, %v2289
        %2291 = vmatmul.f32.gmra.mxu0 %v903
        %v2292 = vpop.f32.mrf.mxu0
        %v2293 = vadd.f32 0.0, %v2292
        %2294 = vmatmul.f32.gmra.mxu0 %v906
        %v2295 = vpop.f32.mrf.mxu0
        %2296 = vmatmul.f32.gmra.mxu0 %v909
        %v2297 = vpop.f32.mrf.mxu0
        %v2298 = vadd.f32 0.0, %v2297
        %2299 = vmatmul.f32.gmra.mxu0 %v912
        %v2300 = vpop.f32.mrf.mxu0
        %v2301 = vadd.f32 0.0, %v2300
        %2302 = vmatmul.f32.gmra.mxu0 %v915
        %v2303 = vpop.f32.mrf.mxu0
        %2304 = vmatmul.f32.gmra.mxu0 %v918
        %v2305 = vpop.f32.mrf.mxu0
        %v2306 = vadd.f32 0.0, %v2305
        %2307 = vmatmul.f32.gmra.mxu0 %v921
        %v2308 = vpop.f32.mrf.mxu0
        %v2309 = vadd.f32 0.0, %v2308
        %2310 = vmatmul.f32.gmra.mxu0 %v924
        %v2311 = vpop.f32.mrf.mxu0
        %2312 = vmatmul.f32.gmra.mxu0 %v927
        %v2313 = vpop.f32.mrf.mxu0
        %v2314 = vadd.f32 0.0, %v2313
        %2315 = vmatmul.f32.gmra.mxu0 %v930
        %v2316 = vpop.f32.mrf.mxu0
        %v2317 = vadd.f32 0.0, %v2316
        %2318 = vmatmul.f32.gmra.mxu0 %v933
        %v2319 = vpop.f32.mrf.mxu0
        %2320 = vmatmul.f32.gmra.mxu0 %v936
        %v2321 = vpop.f32.mrf.mxu0
        %v2322 = vadd.f32 0.0, %v2321
        %2323 = vmatmul.f32.gmra.mxu0 %v939
        %v2324 = vpop.f32.mrf.mxu0
        %v2325 = vadd.f32 0.0, %v2324
        %2326 = vmatmul.f32.gmra.mxu0 %v942
        %v2327 = vpop.f32.mrf.mxu0
        %2328 = vmatmul.f32.gmra.mxu0 %v945
        %v2329 = vpop.f32.mrf.mxu0
        %v2330 = vadd.f32 0.0, %v2329
        %2331 = vmatmul.f32.gmra.mxu0 %v948
        %v2332 = vpop.f32.mrf.mxu0
        %v2333 = vadd.f32 0.0, %v2332
        %2334 = vmatmul.f32.gmra.mxu0 %v951
        %v2335 = vpop.f32.mrf.mxu0
        %2336 = vmatmul.f32.gmra.mxu0 %v954
        %v2337 = vpop.f32.mrf.mxu0
        %v2338 = vadd.f32 0.0, %v2337
        %2339 = vmatmul.f32.gmra.mxu0 %v957
        %v2340 = vpop.f32.mrf.mxu0
        %v2341 = vadd.f32 0.0, %v2340
        %2342 = vmatmul.f32.gmra.mxu0 %v960
        %v2343 = vpop.f32.mrf.mxu0
        %2344 = vmatmul.f32.gmra.mxu0 %v963
        %v2345 = vpop.f32.mrf.mxu0
        %v2346 = vadd.f32 0.0, %v2345
        %2347 = vmatmul.f32.gmra.mxu0 %v966
        %v2348 = vpop.f32.mrf.mxu0
        %v2349 = vadd.f32 0.0, %v2348
        %2350 = vmatmul.f32.gmra.mxu0 %v969
        %v2351 = vpop.f32.mrf.mxu0
        %2352 = vmatmul.f32.gmra.mxu0 %v972
        %v2353 = vpop.f32.mrf.mxu0
        %v2354 = vadd.f32 0.0, %v2353
        %2355 = vmatmul.f32.gmra.mxu0 %v975
        %v2356 = vpop.f32.mrf.mxu0
        %v2357 = vadd.f32 0.0, %v2356
        %2358 = vmatmul.f32.gmra.mxu0 %v978
        %v2359 = vpop.f32.mrf.mxu0
        %2360 = vmatmul.f32.gmra.mxu0 %v981
        %v2361 = vpop.f32.mrf.mxu0
        %v2362 = vadd.f32 0.0, %v2361
        %2363 = vmatmul.f32.gmra.mxu0 %v984
        %v2364 = vpop.f32.mrf.mxu0
        %v2365 = vadd.f32 0.0, %v2364
        %2366 = vmatmul.f32.gmra.mxu0 %v987
        %v2367 = vpop.f32.mrf.mxu0
        %2368 = vmatmul.f32.gmra.mxu0 %v990
        %v2369 = vpop.f32.mrf.mxu0
        %v2370 = vadd.f32 0.0, %v2369
        %2371 = vmatmul.f32.gmra.mxu0 %v993
        %v2372 = vpop.f32.mrf.mxu0
        %v2373 = vadd.f32 0.0, %v2372
        %2374 = vmatmul.f32.gmra.mxu0 %v996
        %v2375 = vpop.f32.mrf.mxu0
        %2376 = vmatmul.f32.gmra.mxu0 %v999
        %v2377 = vpop.f32.mrf.mxu0
        %v2378 = vadd.f32 0.0, %v2377
        %2379 = vmatmul.f32.gmra.mxu0 %v1002
        %v2380 = vpop.f32.mrf.mxu0
        %v2381 = vadd.f32 0.0, %v2380
        %2382 = vmatmul.f32.gmra.mxu0 %v1005
        %v2383 = vpop.f32.mrf.mxu0
        %2384 = vmatmul.f32.gmra.mxu0 %v1008
        %v2385 = vpop.f32.mrf.mxu0
        %v2386 = vadd.f32 0.0, %v2385
        %2387 = vmatmul.f32.gmra.mxu0 %v1011
        %v2388 = vpop.f32.mrf.mxu0
        %v2389 = vadd.f32 0.0, %v2388
        %2390 = vmatmul.f32.gmra.mxu0 %v1014
        %v2391 = vpop.f32.mrf.mxu0
        %2392 = vmatmul.f32.gmra.mxu0 %v1017
        %v2393 = vpop.f32.mrf.mxu0
        %v2394 = vadd.f32 0.0, %v2393
        %2395 = vmatmul.f32.gmra.mxu0 %v1020
        %v2396 = vpop.f32.mrf.mxu0
        %v2397 = vadd.f32 0.0, %v2396
        %2398 = vmatmul.f32.gmra.mxu0 %v1023
        %v2399 = vpop.f32.mrf.mxu0
        %2400 = vmatmul.f32.gmra.mxu0 %v1026
        %v2401 = vpop.f32.mrf.mxu0
        %v2402 = vadd.f32 0.0, %v2401
        %2403 = vmatmul.f32.gmra.mxu0 %v1029
        %v2404 = vpop.f32.mrf.mxu0
        %v2405 = vadd.f32 0.0, %v2404
        %2406 = vmatmul.f32.gmra.mxu0 %v1032
        %v2407 = vpop.f32.mrf.mxu0
        %2408 = vmatmul.f32.gmra.mxu0 %v1035
        %v2409 = vpop.f32.mrf.mxu0
        %v2410 = vadd.f32 0.0, %v2409
        %2411 = vmatmul.f32.gmra.mxu0 %v1038
        %v2412 = vpop.f32.mrf.mxu0
        %v2413 = vadd.f32 0.0, %v2412
        %2414 = vmatmul.f32.gmra.mxu0 %v1041
        %v2415 = vpop.f32.mrf.mxu0
        %2416 = vmatmul.f32.gmra.mxu0 %v882
        %v2417 = vpop.f32.mrf.mxu0
        %2418 = vmatmul.f32.gmra.mxu0 %v885
        %v2419 = vpop.f32.mrf.mxu0
        %2420 = vmatmul.f32.gmra.mxu0 %v888
        %v2421 = vpop.f32.mrf.mxu0
        %2422 = vmatmul.f32.gmra.mxu0 %v891
        %v2423 = vpop.f32.mrf.mxu0
        %2424 = vmatmul.f32.gmra.mxu0 %v894
        %v2425 = vpop.f32.mrf.mxu0
        %2426 = vmatmul.f32.gmra.mxu0 %v897
        %v2427 = vpop.f32.mrf.mxu0
        %2428 = vdwg.mxu0
        %v2429 = vadd.f32 %v2231, %v2290
        %v2430 = vadd.f32 %v2232, %v2293
        %v2431 = vadd.f32 %v2233, %v2298
        %v2432 = vadd.f32 %v2234, %v2301
        %v2433 = vadd.f32 %v2235, %v2306
        %v2434 = vadd.f32 %v2236, %v2309
        %v2435 = vadd.f32 %v2237, %v2314
        %v2436 = vadd.f32 %v2238, %v2317
        %v2437 = vadd.f32 %v2239, %v2322
        %v2438 = vadd.f32 %v2240, %v2325
        %v2439 = vadd.f32 %v2241, %v2330
        %v2440 = vadd.f32 %v2242, %v2333
        %v2441 = vadd.f32 %v2243, %v2338
        %v2442 = vadd.f32 %v2244, %v2341
        %v2443 = vadd.f32 %v2245, %v2346
        %v2444 = vadd.f32 %v2246, %v2349
        %v2445 = vadd.f32 %v2247, %v2354
        %v2446 = vadd.f32 %v2248, %v2357
        %v2447 = vadd.f32 %v2249, %v2362
        %v2448 = vadd.f32 %v2250, %v2365
        %v2449 = vadd.f32 %v2251, %v2370
        %v2450 = vadd.f32 %v2252, %v2373
        %v2451 = vadd.f32 %v2253, %v2378
        %v2452 = vadd.f32 %v2254, %v2381
        %v2453 = vadd.f32 %v2255, %v2386
        %v2454 = vadd.f32 %v2256, %v2389
        %v2455 = vadd.f32 %v2257, %v2394
        %v2456 = vadd.f32 %v2258, %v2397
        %v2457 = vadd.f32 %v2259, %v2402
        %v2458 = vadd.f32 %v2260, %v2405
        %v2459 = vadd.f32 %v2261, %v2410
        %v2460 = vadd.f32 %v2262, %v2413
        %s2461 = scalar_lea.vmem [#allocation3], 448
        %v2462 = vld [vmem:[%s2461] sm:$0xff]
        %v2463 = vld [vmem:[%s2461 + $0x8] sm:$0xff]
        %v2464 = vld [vmem:[%s2461 + $0x10] sm:$0xff]
        %v2465 = vld [vmem:[%s2461 + $0x18] sm:$0xff]
        %v2466 = vld [vmem:[%s2461 + $0x20] sm:$0xff]
        %v2467 = vld [vmem:[%s2461 + $0x28] sm:$0xff]
        %v2468 = vld [vmem:[%s2461 + $0x30] sm:$0xff]
        %v2469 = vld [vmem:[%s2461 + $0x38] sm:$0xff]
        %2470 = vmatpush.msra.mxu0 0.0
        %2471 = vmatpush.msra.mxu0 0.0
        %2472 = vmatpush.msra.mxu0 0.0
        %2473 = vmatpush.msra.mxu0 0.0
        %2474 = vmatpush.msra.mxu0 0.0
        %2475 = vmatpush.msra.mxu0 0.0
        %2476 = vmatpush.msra.mxu0 0.0
        %2477 = vmatpush.msra.mxu0 0.0
        %2478 = vmatpush.msra.mxu0 %v2469
        %2479 = vmatpush.msra.mxu0 %v2468
        %2480 = vmatpush.msra.mxu0 %v2467
        %2481 = vmatpush.msra.mxu0 %v2466
        %2482 = vmatpush.msra.mxu0 %v2465
        %2483 = vmatpush.msra.mxu0 %v2464
        %2484 = vmatpush.msra.mxu0 %v2463
        %2485 = vmatpush.msra.mxu0 %v2462
        %2486 = vmatmul.f32.gmra.mxu0 %v581
        %v2487 = vpop.f32.mrf.mxu0
        %v2488 = vadd.f32 0.0, %v2487
        %2489 = vmatmul.f32.gmra.mxu0 %v584
        %v2490 = vpop.f32.mrf.mxu0
        %v2491 = vadd.f32 0.0, %v2490
        %2492 = vmatmul.f32.gmra.mxu0 %v587
        %v2493 = vpop.f32.mrf.mxu0
        %2494 = vmatmul.f32.gmra.mxu0 %v590
        %v2495 = vpop.f32.mrf.mxu0
        %v2496 = vadd.f32 0.0, %v2495
        %2497 = vmatmul.f32.gmra.mxu0 %v593
        %v2498 = vpop.f32.mrf.mxu0
        %v2499 = vadd.f32 0.0, %v2498
        %2500 = vmatmul.f32.gmra.mxu0 %v596
        %v2501 = vpop.f32.mrf.mxu0
        %2502 = vmatmul.f32.gmra.mxu0 %v599
        %v2503 = vpop.f32.mrf.mxu0
        %v2504 = vadd.f32 0.0, %v2503
        %2505 = vmatmul.f32.gmra.mxu0 %v602
        %v2506 = vpop.f32.mrf.mxu0
        %v2507 = vadd.f32 0.0, %v2506
        %2508 = vmatmul.f32.gmra.mxu0 %v605
        %v2509 = vpop.f32.mrf.mxu0
        %2510 = vmatmul.f32.gmra.mxu0 %v608
        %v2511 = vpop.f32.mrf.mxu0
        %v2512 = vadd.f32 0.0, %v2511
        %2513 = vmatmul.f32.gmra.mxu0 %v611
        %v2514 = vpop.f32.mrf.mxu0
        %v2515 = vadd.f32 0.0, %v2514
        %2516 = vmatmul.f32.gmra.mxu0 %v614
        %v2517 = vpop.f32.mrf.mxu0
        %2518 = vmatmul.f32.gmra.mxu0 %v617
        %v2519 = vpop.f32.mrf.mxu0
        %v2520 = vadd.f32 0.0, %v2519
        %2521 = vmatmul.f32.gmra.mxu0 %v620
        %v2522 = vpop.f32.mrf.mxu0
        %v2523 = vadd.f32 0.0, %v2522
        %2524 = vmatmul.f32.gmra.mxu0 %v623
        %v2525 = vpop.f32.mrf.mxu0
        %2526 = vmatmul.f32.gmra.mxu0 %v626
        %v2527 = vpop.f32.mrf.mxu0
        %v2528 = vadd.f32 0.0, %v2527
        %2529 = vmatmul.f32.gmra.mxu0 %v629
        %v2530 = vpop.f32.mrf.mxu0
        %v2531 = vadd.f32 0.0, %v2530
        %2532 = vmatmul.f32.gmra.mxu0 %v632
        %v2533 = vpop.f32.mrf.mxu0
        %2534 = vmatmul.f32.gmra.mxu0 %v635
        %v2535 = vpop.f32.mrf.mxu0
        %v2536 = vadd.f32 0.0, %v2535
        %2537 = vmatmul.f32.gmra.mxu0 %v638
        %v2538 = vpop.f32.mrf.mxu0
        %v2539 = vadd.f32 0.0, %v2538
        %2540 = vmatmul.f32.gmra.mxu0 %v641
        %v2541 = vpop.f32.mrf.mxu0
        %2542 = vmatmul.f32.gmra.mxu0 %v644
        %v2543 = vpop.f32.mrf.mxu0
        %v2544 = vadd.f32 0.0, %v2543
        %2545 = vmatmul.f32.gmra.mxu0 %v647
        %v2546 = vpop.f32.mrf.mxu0
        %v2547 = vadd.f32 0.0, %v2546
        %2548 = vmatmul.f32.gmra.mxu0 %v650
        %v2549 = vpop.f32.mrf.mxu0
        %2550 = vmatmul.f32.gmra.mxu0 %v653
        %v2551 = vpop.f32.mrf.mxu0
        %v2552 = vadd.f32 0.0, %v2551
        %2553 = vmatmul.f32.gmra.mxu0 %v656
        %v2554 = vpop.f32.mrf.mxu0
        %v2555 = vadd.f32 0.0, %v2554
        %2556 = vmatmul.f32.gmra.mxu0 %v659
        %v2557 = vpop.f32.mrf.mxu0
        %2558 = vmatmul.f32.gmra.mxu0 %v662
        %v2559 = vpop.f32.mrf.mxu0
        %v2560 = vadd.f32 0.0, %v2559
        %2561 = vmatmul.f32.gmra.mxu0 %v665
        %v2562 = vpop.f32.mrf.mxu0
        %v2563 = vadd.f32 0.0, %v2562
        %2564 = vmatmul.f32.gmra.mxu0 %v668
        %v2565 = vpop.f32.mrf.mxu0
        %2566 = vmatmul.f32.gmra.mxu0 %v671
        %v2567 = vpop.f32.mrf.mxu0
        %v2568 = vadd.f32 0.0, %v2567
        %2569 = vmatmul.f32.gmra.mxu0 %v674
        %v2570 = vpop.f32.mrf.mxu0
        %v2571 = vadd.f32 0.0, %v2570
        %2572 = vmatmul.f32.gmra.mxu0 %v677
        %v2573 = vpop.f32.mrf.mxu0
        %2574 = vmatmul.f32.gmra.mxu0 %v680
        %v2575 = vpop.f32.mrf.mxu0
        %v2576 = vadd.f32 0.0, %v2575
        %2577 = vmatmul.f32.gmra.mxu0 %v683
        %v2578 = vpop.f32.mrf.mxu0
        %v2579 = vadd.f32 0.0, %v2578
        %2580 = vmatmul.f32.gmra.mxu0 %v686
        %v2581 = vpop.f32.mrf.mxu0
        %2582 = vmatmul.f32.gmra.mxu0 %v689
        %v2583 = vpop.f32.mrf.mxu0
        %v2584 = vadd.f32 0.0, %v2583
        %2585 = vmatmul.f32.gmra.mxu0 %v692
        %v2586 = vpop.f32.mrf.mxu0
        %v2587 = vadd.f32 0.0, %v2586
        %2588 = vmatmul.f32.gmra.mxu0 %v695
        %v2589 = vpop.f32.mrf.mxu0
        %2590 = vmatmul.f32.gmra.mxu0 %v698
        %v2591 = vpop.f32.mrf.mxu0
        %v2592 = vadd.f32 0.0, %v2591
        %2593 = vmatmul.f32.gmra.mxu0 %v701
        %v2594 = vpop.f32.mrf.mxu0
        %v2595 = vadd.f32 0.0, %v2594
        %2596 = vmatmul.f32.gmra.mxu0 %v704
        %v2597 = vpop.f32.mrf.mxu0
        %2598 = vmatmul.f32.gmra.mxu0 %v707
        %v2599 = vpop.f32.mrf.mxu0
        %v2600 = vadd.f32 0.0, %v2599
        %2601 = vmatmul.f32.gmra.mxu0 %v710
        %v2602 = vpop.f32.mrf.mxu0
        %v2603 = vadd.f32 0.0, %v2602
        %2604 = vmatmul.f32.gmra.mxu0 %v713
        %v2605 = vpop.f32.mrf.mxu0
        %2606 = vmatmul.f32.gmra.mxu0 %v716
        %v2607 = vpop.f32.mrf.mxu0
        %v2608 = vadd.f32 0.0, %v2607
        %2609 = vmatmul.f32.gmra.mxu0 %v719
        %v2610 = vpop.f32.mrf.mxu0
        %v2611 = vadd.f32 0.0, %v2610
        %2612 = vmatmul.f32.gmra.mxu0 %v722
        %v2613 = vpop.f32.mrf.mxu0
        %2614 = vmatmul.f32.gmra.mxu0 %v563
        %v2615 = vpop.f32.mrf.mxu0
        %2616 = vmatmul.f32.gmra.mxu0 %v566
        %v2617 = vpop.f32.mrf.mxu0
        %2618 = vmatmul.f32.gmra.mxu0 %v569
        %v2619 = vpop.f32.mrf.mxu0
        %2620 = vmatmul.f32.gmra.mxu0 %v572
        %v2621 = vpop.f32.mrf.mxu0
        %2622 = vmatmul.f32.gmra.mxu0 %v575
        %v2623 = vpop.f32.mrf.mxu0
        %2624 = vmatmul.f32.gmra.mxu0 %v578
        %v2625 = vpop.f32.mrf.mxu0
        %2626 = vdwg.mxu0
        %v2627 = vadd.f32 %v2429, %v2488
        %v2628 = vadd.f32 %v2430, %v2491
        %v2629 = vadd.f32 %v2431, %v2496
        %v2630 = vadd.f32 %v2432, %v2499
        %v2631 = vadd.f32 %v2433, %v2504
        %v2632 = vadd.f32 %v2434, %v2507
        %v2633 = vadd.f32 %v2435, %v2512
        %v2634 = vadd.f32 %v2436, %v2515
        %v2635 = vadd.f32 %v2437, %v2520
        %v2636 = vadd.f32 %v2438, %v2523
        %v2637 = vadd.f32 %v2439, %v2528
        %v2638 = vadd.f32 %v2440, %v2531
        %v2639 = vadd.f32 %v2441, %v2536
        %v2640 = vadd.f32 %v2442, %v2539
        %v2641 = vadd.f32 %v2443, %v2544
        %v2642 = vadd.f32 %v2444, %v2547
        %v2643 = vadd.f32 %v2445, %v2552
        %v2644 = vadd.f32 %v2446, %v2555
        %v2645 = vadd.f32 %v2447, %v2560
        %v2646 = vadd.f32 %v2448, %v2563
        %v2647 = vadd.f32 %v2449, %v2568
        %v2648 = vadd.f32 %v2450, %v2571
        %v2649 = vadd.f32 %v2451, %v2576
        %v2650 = vadd.f32 %v2452, %v2579
        %v2651 = vadd.f32 %v2453, %v2584
        %v2652 = vadd.f32 %v2454, %v2587
        %v2653 = vadd.f32 %v2455, %v2592
        %v2654 = vadd.f32 %v2456, %v2595
        %v2655 = vadd.f32 %v2457, %v2600
        %v2656 = vadd.f32 %v2458, %v2603
        %v2657 = vadd.f32 %v2459, %v2608
        %v2658 = vadd.f32 %v2460, %v2611
        %s2659 = scalar_lea.vmem [#allocation3], 512
        %v2660 = vld [vmem:[%s2659] sm:$0xff]
        %v2661 = vld [vmem:[%s2659 + $0x8] sm:$0xff]
        %v2662 = vld [vmem:[%s2659 + $0x10] sm:$0xff]
        %v2663 = vld [vmem:[%s2659 + $0x18] sm:$0xff]
        %v2664 = vld [vmem:[%s2659 + $0x20] sm:$0xff]
        %v2665 = vld [vmem:[%s2659 + $0x28] sm:$0xff]
        %v2666 = vld [vmem:[%s2659 + $0x30] sm:$0xff]
        %v2667 = vld [vmem:[%s2659 + $0x38] sm:$0xff]
        %2668 = vmatpush.msra.mxu0 0.0
        %2669 = vmatpush.msra.mxu0 0.0
        %2670 = vmatpush.msra.mxu0 0.0
        %2671 = vmatpush.msra.mxu0 0.0
        %2672 = vmatpush.msra.mxu0 0.0
        %2673 = vmatpush.msra.mxu0 0.0
        %2674 = vmatpush.msra.mxu0 0.0
        %2675 = vmatpush.msra.mxu0 0.0
        %2676 = vmatpush.msra.mxu0 %v2667
        %2677 = vmatpush.msra.mxu0 %v2666
        %2678 = vmatpush.msra.mxu0 %v2665
        %2679 = vmatpush.msra.mxu0 %v2664
        %2680 = vmatpush.msra.mxu0 %v2663
        %2681 = vmatpush.msra.mxu0 %v2662
        %2682 = vmatpush.msra.mxu0 %v2661
        %2683 = vmatpush.msra.mxu0 %v2660
        %2684 = vmatmul.f32.gmra.mxu0 %v1337
        %v2685 = vpop.f32.mrf.mxu0
        %v2686 = vadd.f32 0.0, %v2685
        %2687 = vmatmul.f32.gmra.mxu0 %v1340
        %v2688 = vpop.f32.mrf.mxu0
        %v2689 = vadd.f32 0.0, %v2688
        %2690 = vmatmul.f32.gmra.mxu0 %v1343
        %v2691 = vpop.f32.mrf.mxu0
        %2692 = vmatmul.f32.gmra.mxu0 %v1346
        %v2693 = vpop.f32.mrf.mxu0
        %v2694 = vadd.f32 0.0, %v2693
        %2695 = vmatmul.f32.gmra.mxu0 %v1349
        %v2696 = vpop.f32.mrf.mxu0
        %v2697 = vadd.f32 0.0, %v2696
        %2698 = vmatmul.f32.gmra.mxu0 %v1352
        %v2699 = vpop.f32.mrf.mxu0
        %2700 = vmatmul.f32.gmra.mxu0 %v1355
        %v2701 = vpop.f32.mrf.mxu0
        %v2702 = vadd.f32 0.0, %v2701
        %2703 = vmatmul.f32.gmra.mxu0 %v1358
        %v2704 = vpop.f32.mrf.mxu0
        %v2705 = vadd.f32 0.0, %v2704
        %2706 = vmatmul.f32.gmra.mxu0 %v1361
        %v2707 = vpop.f32.mrf.mxu0
        %2708 = vmatmul.f32.gmra.mxu0 %v1364
        %v2709 = vpop.f32.mrf.mxu0
        %v2710 = vadd.f32 0.0, %v2709
        %2711 = vmatmul.f32.gmra.mxu0 %v1367
        %v2712 = vpop.f32.mrf.mxu0
        %v2713 = vadd.f32 0.0, %v2712
        %2714 = vmatmul.f32.gmra.mxu0 %v1370
        %v2715 = vpop.f32.mrf.mxu0
        %2716 = vmatmul.f32.gmra.mxu0 %v1373
        %v2717 = vpop.f32.mrf.mxu0
        %v2718 = vadd.f32 0.0, %v2717
        %2719 = vmatmul.f32.gmra.mxu0 %v1376
        %v2720 = vpop.f32.mrf.mxu0
        %v2721 = vadd.f32 0.0, %v2720
        %2722 = vmatmul.f32.gmra.mxu0 %v1379
        %v2723 = vpop.f32.mrf.mxu0
        %2724 = vmatmul.f32.gmra.mxu0 %v1382
        %v2725 = vpop.f32.mrf.mxu0
        %v2726 = vadd.f32 0.0, %v2725
        %2727 = vmatmul.f32.gmra.mxu0 %v1385
        %v2728 = vpop.f32.mrf.mxu0
        %v2729 = vadd.f32 0.0, %v2728
        %2730 = vmatmul.f32.gmra.mxu0 %v1388
        %v2731 = vpop.f32.mrf.mxu0
        %2732 = vmatmul.f32.gmra.mxu0 %v1391
        %v2733 = vpop.f32.mrf.mxu0
        %v2734 = vadd.f32 0.0, %v2733
        %2735 = vmatmul.f32.gmra.mxu0 %v1394
        %v2736 = vpop.f32.mrf.mxu0
        %v2737 = vadd.f32 0.0, %v2736
        %2738 = vmatmul.f32.gmra.mxu0 %v1397
        %v2739 = vpop.f32.mrf.mxu0
        %2740 = vmatmul.f32.gmra.mxu0 %v1400
        %v2741 = vpop.f32.mrf.mxu0
        %v2742 = vadd.f32 0.0, %v2741
        %2743 = vmatmul.f32.gmra.mxu0 %v1403
        %v2744 = vpop.f32.mrf.mxu0
        %v2745 = vadd.f32 0.0, %v2744
        %2746 = vmatmul.f32.gmra.mxu0 %v1406
        %v2747 = vpop.f32.mrf.mxu0
        %2748 = vmatmul.f32.gmra.mxu0 %v1409
        %v2749 = vpop.f32.mrf.mxu0
        %v2750 = vadd.f32 0.0, %v2749
        %2751 = vmatmul.f32.gmra.mxu0 %v1412
        %v2752 = vpop.f32.mrf.mxu0
        %v2753 = vadd.f32 0.0, %v2752
        %2754 = vmatmul.f32.gmra.mxu0 %v1415
        %v2755 = vpop.f32.mrf.mxu0
        %2756 = vmatmul.f32.gmra.mxu0 %v1418
        %v2757 = vpop.f32.mrf.mxu0
        %v2758 = vadd.f32 0.0, %v2757
        %2759 = vmatmul.f32.gmra.mxu0 %v1421
        %v2760 = vpop.f32.mrf.mxu0
        %v2761 = vadd.f32 0.0, %v2760
        %2762 = vmatmul.f32.gmra.mxu0 %v1424
        %v2763 = vpop.f32.mrf.mxu0
        %2764 = vmatmul.f32.gmra.mxu0 %v1427
        %v2765 = vpop.f32.mrf.mxu0
        %v2766 = vadd.f32 0.0, %v2765
        %2767 = vmatmul.f32.gmra.mxu0 %v1430
        %v2768 = vpop.f32.mrf.mxu0
        %v2769 = vadd.f32 0.0, %v2768
        %2770 = vmatmul.f32.gmra.mxu0 %v1433
        %v2771 = vpop.f32.mrf.mxu0
        %2772 = vmatmul.f32.gmra.mxu0 %v1436
        %v2773 = vpop.f32.mrf.mxu0
        %v2774 = vadd.f32 0.0, %v2773
        %2775 = vmatmul.f32.gmra.mxu0 %v1439
        %v2776 = vpop.f32.mrf.mxu0
        %v2777 = vadd.f32 0.0, %v2776
        %2778 = vmatmul.f32.gmra.mxu0 %v1442
        %v2779 = vpop.f32.mrf.mxu0
        %2780 = vmatmul.f32.gmra.mxu0 %v1445
        %v2781 = vpop.f32.mrf.mxu0
        %v2782 = vadd.f32 0.0, %v2781
        %2783 = vmatmul.f32.gmra.mxu0 %v1448
        %v2784 = vpop.f32.mrf.mxu0
        %v2785 = vadd.f32 0.0, %v2784
        %2786 = vmatmul.f32.gmra.mxu0 %v1451
        %v2787 = vpop.f32.mrf.mxu0
        %2788 = vmatmul.f32.gmra.mxu0 %v1454
        %v2789 = vpop.f32.mrf.mxu0
        %v2790 = vadd.f32 0.0, %v2789
        %2791 = vmatmul.f32.gmra.mxu0 %v1457
        %v2792 = vpop.f32.mrf.mxu0
        %v2793 = vadd.f32 0.0, %v2792
        %2794 = vmatmul.f32.gmra.mxu0 %v1460
        %v2795 = vpop.f32.mrf.mxu0
        %2796 = vmatmul.f32.gmra.mxu0 %v1463
        %v2797 = vpop.f32.mrf.mxu0
        %v2798 = vadd.f32 0.0, %v2797
        %2799 = vmatmul.f32.gmra.mxu0 %v1466
        %v2800 = vpop.f32.mrf.mxu0
        %v2801 = vadd.f32 0.0, %v2800
        %2802 = vmatmul.f32.gmra.mxu0 %v1469
        %v2803 = vpop.f32.mrf.mxu0
        %2804 = vmatmul.f32.gmra.mxu0 %v1472
        %v2805 = vpop.f32.mrf.mxu0
        %v2806 = vadd.f32 0.0, %v2805
        %2807 = vmatmul.f32.gmra.mxu0 %v1475
        %v2808 = vpop.f32.mrf.mxu0
        %v2809 = vadd.f32 0.0, %v2808
        %2810 = vmatmul.f32.gmra.mxu0 %v1478
        %v2811 = vpop.f32.mrf.mxu0
        %2812 = vmatmul.f32.gmra.mxu0 %v1319
        %v2813 = vpop.f32.mrf.mxu0
        %2814 = vmatmul.f32.gmra.mxu0 %v1322
        %v2815 = vpop.f32.mrf.mxu0
        %2816 = vmatmul.f32.gmra.mxu0 %v1325
        %v2817 = vpop.f32.mrf.mxu0
        %2818 = vmatmul.f32.gmra.mxu0 %v1328
        %v2819 = vpop.f32.mrf.mxu0
        %2820 = vmatmul.f32.gmra.mxu0 %v1331
        %v2821 = vpop.f32.mrf.mxu0
        %2822 = vmatmul.f32.gmra.mxu0 %v1334
        %v2823 = vpop.f32.mrf.mxu0
        %2824 = vdwg.mxu0
        %v2825 = vadd.f32 %v2627, %v2686
        %v2826 = vadd.f32 %v2628, %v2689
        %v2827 = vadd.f32 %v2629, %v2694
        %v2828 = vadd.f32 %v2630, %v2697
        %v2829 = vadd.f32 %v2631, %v2702
        %v2830 = vadd.f32 %v2632, %v2705
        %v2831 = vadd.f32 %v2633, %v2710
        %v2832 = vadd.f32 %v2634, %v2713
        %v2833 = vadd.f32 %v2635, %v2718
        %v2834 = vadd.f32 %v2636, %v2721
        %v2835 = vadd.f32 %v2637, %v2726
        %v2836 = vadd.f32 %v2638, %v2729
        %v2837 = vadd.f32 %v2639, %v2734
        %v2838 = vadd.f32 %v2640, %v2737
        %v2839 = vadd.f32 %v2641, %v2742
        %v2840 = vadd.f32 %v2642, %v2745
        %v2841 = vadd.f32 %v2643, %v2750
        %v2842 = vadd.f32 %v2644, %v2753
        %v2843 = vadd.f32 %v2645, %v2758
        %v2844 = vadd.f32 %v2646, %v2761
        %v2845 = vadd.f32 %v2647, %v2766
        %v2846 = vadd.f32 %v2648, %v2769
        %v2847 = vadd.f32 %v2649, %v2774
        %v2848 = vadd.f32 %v2650, %v2777
        %v2849 = vadd.f32 %v2651, %v2782
        %v2850 = vadd.f32 %v2652, %v2785
        %v2851 = vadd.f32 %v2653, %v2790
        %v2852 = vadd.f32 %v2654, %v2793
        %v2853 = vadd.f32 %v2655, %v2798
        %v2854 = vadd.f32 %v2656, %v2801
        %v2855 = vadd.f32 %v2657, %v2806
        %v2856 = vadd.f32 %v2658, %v2809
        %v2857 = vld [vmem:[#allocation5] sm:$0x1]
        %v2859 = vperm.slane %v2857, 0
        %v2861 = vadd.f32 %v2825, %v2859
        %v2862 = vadd.f32 %v2826, %v2859
        %v2863 = vadd.f32 %v2827, %v2859
        %v2864 = vadd.f32 %v2828, %v2859
        %v2865 = vadd.f32 %v2829, %v2859
        %v2866 = vadd.f32 %v2830, %v2859
        %v2867 = vadd.f32 %v2831, %v2859
        %v2868 = vadd.f32 %v2832, %v2859
        %v2869 = vadd.f32 %v2833, %v2859
        %v2870 = vadd.f32 %v2834, %v2859
        %v2871 = vadd.f32 %v2835, %v2859
        %v2872 = vadd.f32 %v2836, %v2859
        %v2873 = vadd.f32 %v2837, %v2859
        %v2874 = vadd.f32 %v2838, %v2859
        %v2875 = vadd.f32 %v2839, %v2859
        %v2876 = vadd.f32 %v2840, %v2859
        %v2877 = vadd.f32 %v2841, %v2859
        %v2878 = vadd.f32 %v2842, %v2859
        %v2879 = vadd.f32 %v2843, %v2859
        %v2880 = vadd.f32 %v2844, %v2859
        %v2881 = vadd.f32 %v2845, %v2859
        %v2882 = vadd.f32 %v2846, %v2859
        %v2883 = vadd.f32 %v2847, %v2859
        %v2884 = vadd.f32 %v2848, %v2859
        %v2885 = vadd.f32 %v2849, %v2859
        %v2886 = vadd.f32 %v2850, %v2859
        %v2887 = vadd.f32 %v2851, %v2859
        %v2888 = vadd.f32 %v2852, %v2859
        %v2889 = vadd.f32 %v2853, %v2859
        %v2890 = vadd.f32 %v2854, %v2859
        %v2891 = vadd.f32 %v2855, %v2859
        %v2892 = vadd.f32 %v2856, %v2859
        %v2893 = vmax.f32 %v2861, 0.0
        %v2894 = vmax.f32 %v2862, 0.0
        %v2895 = vmax.f32 %v2863, 0.0
        %v2896 = vmax.f32 %v2864, 0.0
        %v2897 = vmax.f32 %v2865, 0.0
        %v2898 = vmax.f32 %v2866, 0.0
        %v2899 = vmax.f32 %v2867, 0.0
        %v2900 = vmax.f32 %v2868, 0.0
        %v2901 = vmax.f32 %v2869, 0.0
        %v2902 = vmax.f32 %v2870, 0.0
        %v2903 = vmax.f32 %v2871, 0.0
        %v2904 = vmax.f32 %v2872, 0.0
        %v2905 = vmax.f32 %v2873, 0.0
        %v2906 = vmax.f32 %v2874, 0.0
        %v2907 = vmax.f32 %v2875, 0.0
        %v2908 = vmax.f32 %v2876, 0.0
        %v2909 = vmax.f32 %v2877, 0.0
        %v2910 = vmax.f32 %v2878, 0.0
        %v2911 = vmax.f32 %v2879, 0.0
        %v2912 = vmax.f32 %v2880, 0.0
        %v2913 = vmax.f32 %v2881, 0.0
        %v2914 = vmax.f32 %v2882, 0.0
        %v2915 = vmax.f32 %v2883, 0.0
        %v2916 = vmax.f32 %v2884, 0.0
        %v2917 = vmax.f32 %v2885, 0.0
        %v2918 = vmax.f32 %v2886, 0.0
        %v2919 = vmax.f32 %v2887, 0.0
        %v2920 = vmax.f32 %v2888, 0.0
        %v2921 = vmax.f32 %v2889, 0.0
        %v2922 = vmax.f32 %v2890, 0.0
        %v2923 = vmax.f32 %v2891, 0.0
        %v2924 = vmax.f32 %v2892, 0.0
        %s2925 = scalar_lea.vmem [#allocation2], 456
        %2926 = vst.msk [vmem:[%s2925 + $0x1] sm:$0xff] %vm205, %v2893
        %2927 = vst.msk [vmem:[%s2925 + $0x9] sm:$0xff] %vm205, %v2894
        %2928 = vst.msk [vmem:[%s2925 + $0x19] sm:$0xff] %vm205, %v2895
        %2929 = vst.msk [vmem:[%s2925 + $0x21] sm:$0xff] %vm205, %v2896
        %2930 = vst.msk [vmem:[%s2925 + $0x31] sm:$0xff] %vm205, %v2897
        %2931 = vst.msk [vmem:[%s2925 + $0x39] sm:$0xff] %vm205, %v2898
        %2932 = vst.msk [vmem:[%s2925 + $0x49] sm:$0xff] %vm205, %v2899
        %2933 = vst.msk [vmem:[%s2925 + $0x51] sm:$0xff] %vm205, %v2900
        %2934 = vst.msk [vmem:[%s2925 + $0x61] sm:$0xff] %vm205, %v2901
        %2935 = vst.msk [vmem:[%s2925 + $0x69] sm:$0xff] %vm205, %v2902
        %2936 = vst.msk [vmem:[%s2925 + $0x79] sm:$0xff] %vm205, %v2903
        %2937 = vst.msk [vmem:[%s2925 + $0x81] sm:$0xff] %vm205, %v2904
        %2938 = vst.msk [vmem:[%s2925 + $0x91] sm:$0xff] %vm205, %v2905
        %2939 = vst.msk [vmem:[%s2925 + $0x99] sm:$0xff] %vm205, %v2906
        %2940 = vst.msk [vmem:[%s2925 + $0xa9] sm:$0xff] %vm205, %v2907
        %2941 = vst.msk [vmem:[%s2925 + $0xb1] sm:$0xff] %vm205, %v2908
        %2942 = vst.msk [vmem:[%s2925 + $0xc1] sm:$0xff] %vm205, %v2909
        %2943 = vst.msk [vmem:[%s2925 + $0xc9] sm:$0xff] %vm205, %v2910
        %2944 = vst.msk [vmem:[%s2925 + $0xd9] sm:$0xff] %vm205, %v2911
        %2945 = vst.msk [vmem:[%s2925 + $0xe1] sm:$0xff] %vm205, %v2912
        %2946 = vst.msk [vmem:[%s2925 + $0xf1] sm:$0xff] %vm205, %v2913
        %2947 = vst.msk [vmem:[%s2925 + $0xf9] sm:$0xff] %vm205, %v2914
        %2948 = vst.msk [vmem:[%s2925 + $0x109] sm:$0xff] %vm205, %v2915
        %2949 = vst.msk [vmem:[%s2925 + $0x111] sm:$0xff] %vm205, %v2916
        %2950 = vst.msk [vmem:[%s2925 + $0x121] sm:$0xff] %vm205, %v2917
        %2951 = vst.msk [vmem:[%s2925 + $0x129] sm:$0xff] %vm205, %v2918
        %2952 = vst.msk [vmem:[%s2925 + $0x139] sm:$0xff] %vm205, %v2919
        %2953 = vst.msk [vmem:[%s2925 + $0x141] sm:$0xff] %vm205, %v2920
        %2954 = vst.msk [vmem:[%s2925 + $0x151] sm:$0xff] %vm205, %v2921
        %2955 = vst.msk [vmem:[%s2925 + $0x159] sm:$0xff] %vm205, %v2922
        %2956 = vst.msk [vmem:[%s2925 + $0x169] sm:$0xff] %vm205, %v2923
        %2957 = vst.msk [vmem:[%s2925 + $0x171] sm:$0xff] %vm205, %v2924
        loop: start=0, step=1, limit=9
        $region41: #{vdsr_pallas.1} parent=31 // loop_pre_header
          _
        $region42: #{vdsr_pallas.1} parent=31 // loop_header
          %s2959 = sphi 0, %s2963
          %p2960 = scmp.ge.s32.totalorder %s2959, 9
        $region43: #{vdsr_pallas.1} parent=31 // loop_header_branch
          %2962 = sbr.rel (%p2960) target = $region47
        $region44: #{vdsr_pallas.1} parent=31 // loop_body
          %s2964 = scalar_lea.vmem [#allocation2], 432
          %v2965 = vld [vmem:[%s2964] sm:$0xff]
          %v2966 = vld [vmem:[%s2964 + $0x8] sm:$0xff]
          %v2967 = vld [vmem:[%s2964 + $0x10] sm:$0xff]
          %v2968 = vld [vmem:[%s2964 + $0x18] sm:$0xff]
          %v2969 = vld [vmem:[%s2964 + $0x20] sm:$0xff]
          %v2970 = vld [vmem:[%s2964 + $0x28] sm:$0xff]
          %v2971 = vld [vmem:[%s2964 + $0x30] sm:$0xff]
          %v2972 = vld [vmem:[%s2964 + $0x38] sm:$0xff]
          %v2973 = vld [vmem:[%s2964 + $0x40] sm:$0xff]
          %v2974 = vld [vmem:[%s2964 + $0x48] sm:$0xff]
          %v2975 = vld [vmem:[%s2964 + $0x50] sm:$0xff]
          %v2976 = vld [vmem:[%s2964 + $0x58] sm:$0xff]
          %v2977 = vld [vmem:[%s2964 + $0x60] sm:$0xff]
          %v2978 = vld [vmem:[%s2964 + $0x68] sm:$0xff]
          %v2979 = vld [vmem:[%s2964 + $0x70] sm:$0xff]
          %v2980 = vld [vmem:[%s2964 + $0x78] sm:$0xff]
          %v2981 = vld [vmem:[%s2964 + $0x80] sm:$0xff]
          %v2982 = vld [vmem:[%s2964 + $0x88] sm:$0xff]
          %v2983 = vld [vmem:[%s2964 + $0x90] sm:$0xff]
          %v2984 = vld [vmem:[%s2964 + $0x98] sm:$0xff]
          %v2985 = vld [vmem:[%s2964 + $0xa0] sm:$0xff]
          %v2986 = vld [vmem:[%s2964 + $0xa8] sm:$0xff]
          %v2987 = vld [vmem:[%s2964 + $0xb0] sm:$0xff]
          %v2988 = vld [vmem:[%s2964 + $0xb8] sm:$0xff]
          %v2989 = vld [vmem:[%s2964 + $0xc0] sm:$0xff]
          %v2990 = vld [vmem:[%s2964 + $0xc8] sm:$0xff]
          %v2991 = vld [vmem:[%s2964 + $0xd0] sm:$0xff]
          %v2992 = vld [vmem:[%s2964 + $0xd8] sm:$0xff]
          %v2993 = vld [vmem:[%s2964 + $0xe0] sm:$0xff]
          %v2994 = vld [vmem:[%s2964 + $0xe8] sm:$0xff]
          %v2995 = vld [vmem:[%s2964 + $0xf0] sm:$0xff]
          %v2996 = vld [vmem:[%s2964 + $0xf8] sm:$0xff]
          %v2997 = vld [vmem:[%s2964 + $0x100] sm:$0xff]
          %v2998 = vld [vmem:[%s2964 + $0x108] sm:$0xff]
          %v2999 = vld [vmem:[%s2964 + $0x110] sm:$0xff]
          %v3000 = vld [vmem:[%s2964 + $0x118] sm:$0xff]
          %v3001 = vld [vmem:[%s2964 + $0x120] sm:$0xff]
          %v3002 = vld [vmem:[%s2964 + $0x128] sm:$0xff]
          %v3003 = vld [vmem:[%s2964 + $0x130] sm:$0xff]
          %v3004 = vld [vmem:[%s2964 + $0x138] sm:$0xff]
          %v3005 = vld [vmem:[%s2964 + $0x140] sm:$0xff]
          %v3006 = vld [vmem:[%s2964 + $0x148] sm:$0xff]
          %v3007 = vld [vmem:[%s2964 + $0x150] sm:$0xff]
          %v3008 = vld [vmem:[%s2964 + $0x158] sm:$0xff]
          %v3009 = vld [vmem:[%s2964 + $0x160] sm:$0xff]
          %v3010 = vld [vmem:[%s2964 + $0x168] sm:$0xff]
          %v3011 = vld [vmem:[%s2964 + $0x170] sm:$0xff]
          %v3012 = vld [vmem:[%s2964 + $0x178] sm:$0xff]
          %v3013 = vld [vmem:[%s2964 + $0x180] sm:$0xff]
          %v3014 = vld [vmem:[%s2964 + $0x188] sm:$0xff]
          %v3015 = vld [vmem:[%s2964 + $0x190] sm:$0xff]
          %v3016 = vld [vmem:[%s2964 + $0x198] sm:$0xff]
          %v3017 = vld [vmem:[%s2964 + $0x1a0] sm:$0xff]
          %v3018 = vld [vmem:[%s2964 + $0x1a8] sm:$0xff]
          %s3019 = smul.u32 %s2959, 2
          %s3020 = sadd.s32 %s3019, 1
          %s3021 = smul.u32 %s3020, 576
          %s3022 = scalar_lea.vmem [#allocation3], %s3021
          %v3023 = vld [vmem:[%s3022] sm:$0xff]
          %v3024 = vld [vmem:[%s3022 + $0x8] sm:$0xff]
          %v3025 = vld [vmem:[%s3022 + $0x10] sm:$0xff]
          %v3026 = vld [vmem:[%s3022 + $0x18] sm:$0xff]
          %v3027 = vld [vmem:[%s3022 + $0x20] sm:$0xff]
          %v3028 = vld [vmem:[%s3022 + $0x28] sm:$0xff]
          %v3029 = vld [vmem:[%s3022 + $0x30] sm:$0xff]
          %v3030 = vld [vmem:[%s3022 + $0x38] sm:$0xff]
          %v3031 = vrot.slane %v2965, 1
          %v3032 = vrot.slane %v2966, 1
          %v3033 = vrot.slane %v2967, 1
          %v3034 = vrot.slane %v2968, 1
          %v3035 = vrot.slane %v2969, 1
          %v3036 = vrot.slane %v2970, 1
          %v3037 = vrot.slane %v2971, 1
          %v3038 = vrot.slane %v2972, 1
          %v3039 = vrot.slane %v2973, 1
          %v3040 = vrot.slane %v2974, 1
          %v3041 = vrot.slane %v2975, 1
          %v3042 = vrot.slane %v2976, 1
          %v3043 = vrot.slane %v2977, 1
          %v3044 = vrot.slane %v2978, 1
          %v3045 = vrot.slane %v2979, 1
          %v3046 = vrot.slane %v2980, 1
          %v3047 = vrot.slane %v2981, 1
          %v3048 = vrot.slane %v2982, 1
          %v3049 = vrot.slane %v2983, 1
          %v3050 = vrot.slane %v2984, 1
          %v3051 = vrot.slane %v2985, 1
          %v3052 = vrot.slane %v2986, 1
          %v3053 = vrot.slane %v2987, 1
          %v3054 = vrot.slane %v2988, 1
          %v3055 = vrot.slane %v2989, 1
          %v3056 = vrot.slane %v2990, 1
          %v3057 = vrot.slane %v2991, 1
          %v3058 = vrot.slane %v2992, 1
          %v3059 = vrot.slane %v2993, 1
          %v3060 = vrot.slane %v2994, 1
          %v3061 = vrot.slane %v2995, 1
          %v3062 = vrot.slane %v2996, 1
          %v3063 = vrot.slane %v2997, 1
          %v3064 = vrot.slane %v2998, 1
          %v3065 = vrot.slane %v2999, 1
          %v3066 = vrot.slane %v3000, 1
          %v3067 = vrot.slane %v3001, 1
          %v3068 = vrot.slane %v3002, 1
          %v3069 = vrot.slane %v3003, 1
          %v3070 = vrot.slane %v3004, 1
          %v3071 = vrot.slane %v3005, 1
          %v3072 = vrot.slane %v3006, 1
          %v3073 = vrot.slane %v3007, 1
          %v3074 = vrot.slane %v3008, 1
          %v3075 = vrot.slane %v3009, 1
          %v3076 = vrot.slane %v3010, 1
          %v3077 = vrot.slane %v3011, 1
          %v3078 = vrot.slane %v3012, 1
          %v3079 = vrot.slane %v3013, 1
          %v3080 = vrot.slane %v3014, 1
          %v3081 = vrot.slane %v3015, 1
          %v3082 = vrot.slane %v3016, 1
          %v3083 = vrot.slane %v3017, 1
          %v3084 = vrot.slane %v3018, 1
          %v3085 = vsel %vm498, %v3083, %v3084
          %v3086 = vsel %vm498, %v3082, %v3083
          %v3087 = vsel %vm498, %v3081, %v3082
          %v3088 = vsel %vm498, %v3080, %v3081
          %v3089 = vsel %vm498, %v3079, %v3080
          %v3090 = vsel %vm498, %v3078, %v3079
          %v3091 = vsel %vm498, %v3077, %v3078
          %v3092 = vsel %vm498, %v3076, %v3077
          %v3093 = vsel %vm498, %v3075, %v3076
          %v3094 = vsel %vm498, %v3074, %v3075
          %v3095 = vsel %vm498, %v3073, %v3074
          %v3096 = vsel %vm498, %v3072, %v3073
          %v3097 = vsel %vm498, %v3071, %v3072
          %v3098 = vsel %vm498, %v3070, %v3071
          %v3099 = vsel %vm498, %v3069, %v3070
          %v3100 = vsel %vm498, %v3068, %v3069
          %v3101 = vsel %vm498, %v3067, %v3068
          %v3102 = vsel %vm498, %v3066, %v3067
          %v3103 = vsel %vm498, %v3065, %v3066
          %v3104 = vsel %vm498, %v3064, %v3065
          %v3105 = vsel %vm498, %v3063, %v3064
          %v3106 = vsel %vm498, %v3062, %v3063
          %v3107 = vsel %vm498, %v3061, %v3062
          %v3108 = vsel %vm498, %v3060, %v3061
          %v3109 = vsel %vm498, %v3059, %v3060
          %v3110 = vsel %vm498, %v3058, %v3059
          %v3111 = vsel %vm498, %v3057, %v3058
          %v3112 = vsel %vm498, %v3056, %v3057
          %v3113 = vsel %vm498, %v3055, %v3056
          %v3114 = vsel %vm498, %v3054, %v3055
          %v3115 = vsel %vm498, %v3053, %v3054
          %v3116 = vsel %vm498, %v3052, %v3053
          %v3117 = vsel %vm498, %v3051, %v3052
          %v3118 = vsel %vm498, %v3050, %v3051
          %v3119 = vsel %vm498, %v3049, %v3050
          %v3120 = vsel %vm498, %v3048, %v3049
          %v3121 = vsel %vm498, %v3047, %v3048
          %v3122 = vsel %vm498, %v3046, %v3047
          %v3123 = vsel %vm498, %v3045, %v3046
          %v3124 = vsel %vm498, %v3044, %v3045
          %v3125 = vsel %vm498, %v3043, %v3044
          %v3126 = vsel %vm498, %v3042, %v3043
          %v3127 = vsel %vm498, %v3041, %v3042
          %v3128 = vsel %vm498, %v3040, %v3041
          %v3129 = vsel %vm498, %v3039, %v3040
          %v3130 = vsel %vm498, %v3038, %v3039
          %v3131 = vsel %vm498, %v3037, %v3038
          %v3132 = vsel %vm498, %v3036, %v3037
          %v3133 = vsel %vm498, %v3035, %v3036
          %v3134 = vsel %vm498, %v3034, %v3035
          %v3135 = vsel %vm498, %v3033, %v3034
          %v3136 = vsel %vm498, %v3032, %v3033
          %v3137 = vsel %vm498, %v3031, %v3032
          %v3138 = vsel %vm498, %v3084, %v3031
          %s3139 = sadd.s32 64, %s3021
          %s3140 = scalar_lea.vmem [#allocation3], %s3139
          %v3141 = vld [vmem:[%s3140] sm:$0xff]
          %v3142 = vld [vmem:[%s3140 + $0x8] sm:$0xff]
          %v3143 = vld [vmem:[%s3140 + $0x10] sm:$0xff]
          %v3144 = vld [vmem:[%s3140 + $0x18] sm:$0xff]
          %v3145 = vld [vmem:[%s3140 + $0x20] sm:$0xff]
          %v3146 = vld [vmem:[%s3140 + $0x28] sm:$0xff]
          %v3147 = vld [vmem:[%s3140 + $0x30] sm:$0xff]
          %v3148 = vld [vmem:[%s3140 + $0x38] sm:$0xff]
          %v3150 = vsel %vm205, %v3137, 0
          %v3153 = vsel %vm205, %v3136, 0
          %v3156 = vsel %vm205, %v3135, 0
          %v3159 = vsel %vm205, %v3134, 0
          %v3162 = vsel %vm205, %v3133, 0
          %v3165 = vsel %vm205, %v3132, 0
          %v3168 = vsel %vm205, %v3131, 0
          %v3171 = vsel %vm205, %v3130, 0
          %v3174 = vsel %vm205, %v3129, 0
          %v3177 = vsel %vm205, %v3128, 0
          %v3180 = vsel %vm205, %v3127, 0
          %v3183 = vsel %vm205, %v3126, 0
          %v3186 = vsel %vm205, %v3125, 0
          %v3189 = vsel %vm205, %v3124, 0
          %v3192 = vsel %vm205, %v3123, 0
          %v3195 = vsel %vm205, %v3122, 0
          %v3198 = vsel %vm205, %v3121, 0
          %v3201 = vsel %vm205, %v3120, 0
          %v3204 = vsel %vm205, %v3119, 0
          %v3207 = vsel %vm205, %v3118, 0
          %v3210 = vsel %vm205, %v3117, 0
          %v3213 = vsel %vm205, %v3116, 0
          %v3216 = vsel %vm205, %v3115, 0
          %v3219 = vsel %vm205, %v3114, 0
          %v3222 = vsel %vm205, %v3113, 0
          %v3225 = vsel %vm205, %v3112, 0
          %v3228 = vsel %vm205, %v3111, 0
          %v3231 = vsel %vm205, %v3110, 0
          %v3234 = vsel %vm205, %v3109, 0
          %v3237 = vsel %vm205, %v3108, 0
          %v3240 = vsel %vm205, %v3107, 0
          %v3243 = vsel %vm205, %v3106, 0
          %v3246 = vsel %vm205, %v3105, 0
          %v3249 = vsel %vm205, %v3104, 0
          %v3252 = vsel %vm205, %v3103, 0
          %v3255 = vsel %vm205, %v3102, 0
          %v3258 = vsel %vm205, %v3101, 0
          %v3261 = vsel %vm205, %v3100, 0
          %v3264 = vsel %vm205, %v3099, 0
          %v3267 = vsel %vm205, %v3098, 0
          %v3270 = vsel %vm205, %v3097, 0
          %v3273 = vsel %vm205, %v3096, 0
          %v3276 = vsel %vm205, %v3095, 0
          %v3279 = vsel %vm205, %v3094, 0
          %v3282 = vsel %vm205, %v3093, 0
          %v3285 = vsel %vm205, %v3092, 0
          %v3288 = vsel %vm205, %v3091, 0
          %v3291 = vsel %vm205, %v3090, 0
          %v3294 = vsel %vm205, %v3089, 0
          %v3297 = vsel %vm205, %v3088, 0
          %v3300 = vsel %vm205, %v3087, 0
          %v3303 = vsel %vm205, %v3086, 0
          %v3306 = vsel %vm205, %v3085, 0
          %v3309 = vsel %vm205, %v3138, 0
          %3311 = vmatpush.msra.mxu0 0.0
          %3312 = vmatpush.msra.mxu0 0.0
          %3313 = vmatpush.msra.mxu0 0.0
          %3314 = vmatpush.msra.mxu0 0.0
          %3315 = vmatpush.msra.mxu0 0.0
          %3316 = vmatpush.msra.mxu0 0.0
          %3317 = vmatpush.msra.mxu0 0.0
          %3318 = vmatpush.msra.mxu0 0.0
          %3319 = vmatpush.msra.mxu0 %v3148
          %3320 = vmatpush.msra.mxu0 %v3147
          %3321 = vmatpush.msra.mxu0 %v3146
          %3322 = vmatpush.msra.mxu0 %v3145
          %3323 = vmatpush.msra.mxu0 %v3144
          %3324 = vmatpush.msra.mxu0 %v3143
          %3325 = vmatpush.msra.mxu0 %v3142
          %3326 = vmatpush.msra.mxu0 %v3141
          %3327 = vmatmul.f32.gmra.mxu0 %v3150
          %v3328 = vpop.f32.mrf.mxu0
          %v3329 = vadd.f32 0.0, %v3328
          %3330 = vmatmul.f32.gmra.mxu0 %v3153
          %v3331 = vpop.f32.mrf.mxu0
          %v3332 = vadd.f32 0.0, %v3331
          %3333 = vmatmul.f32.gmra.mxu0 %v3156
          %v3334 = vpop.f32.mrf.mxu0
          %3335 = vmatmul.f32.gmra.mxu0 %v3159
          %v3336 = vpop.f32.mrf.mxu0
          %v3337 = vadd.f32 0.0, %v3336
          %3338 = vmatmul.f32.gmra.mxu0 %v3162
          %v3339 = vpop.f32.mrf.mxu0
          %v3340 = vadd.f32 0.0, %v3339
          %3341 = vmatmul.f32.gmra.mxu0 %v3165
          %v3342 = vpop.f32.mrf.mxu0
          %3343 = vmatmul.f32.gmra.mxu0 %v3168
          %v3344 = vpop.f32.mrf.mxu0
          %v3345 = vadd.f32 0.0, %v3344
          %3346 = vmatmul.f32.gmra.mxu0 %v3171
          %v3347 = vpop.f32.mrf.mxu0
          %v3348 = vadd.f32 0.0, %v3347
          %3349 = vmatmul.f32.gmra.mxu0 %v3174
          %v3350 = vpop.f32.mrf.mxu0
          %3351 = vmatmul.f32.gmra.mxu0 %v3177
          %v3352 = vpop.f32.mrf.mxu0
          %v3353 = vadd.f32 0.0, %v3352
          %3354 = vmatmul.f32.gmra.mxu0 %v3180
          %v3355 = vpop.f32.mrf.mxu0
          %v3356 = vadd.f32 0.0, %v3355
          %3357 = vmatmul.f32.gmra.mxu0 %v3183
          %v3358 = vpop.f32.mrf.mxu0
          %3359 = vmatmul.f32.gmra.mxu0 %v3186
          %v3360 = vpop.f32.mrf.mxu0
          %v3361 = vadd.f32 0.0, %v3360
          %3362 = vmatmul.f32.gmra.mxu0 %v3189
          %v3363 = vpop.f32.mrf.mxu0
          %v3364 = vadd.f32 0.0, %v3363
          %3365 = vmatmul.f32.gmra.mxu0 %v3192
          %v3366 = vpop.f32.mrf.mxu0
          %3367 = vmatmul.f32.gmra.mxu0 %v3195
          %v3368 = vpop.f32.mrf.mxu0
          %v3369 = vadd.f32 0.0, %v3368
          %3370 = vmatmul.f32.gmra.mxu0 %v3198
          %v3371 = vpop.f32.mrf.mxu0
          %v3372 = vadd.f32 0.0, %v3371
          %3373 = vmatmul.f32.gmra.mxu0 %v3201
          %v3374 = vpop.f32.mrf.mxu0
          %3375 = vmatmul.f32.gmra.mxu0 %v3204
          %v3376 = vpop.f32.mrf.mxu0
          %v3377 = vadd.f32 0.0, %v3376
          %3378 = vmatmul.f32.gmra.mxu0 %v3207
          %v3379 = vpop.f32.mrf.mxu0
          %v3380 = vadd.f32 0.0, %v3379
          %3381 = vmatmul.f32.gmra.mxu0 %v3210
          %v3382 = vpop.f32.mrf.mxu0
          %3383 = vmatmul.f32.gmra.mxu0 %v3213
          %v3384 = vpop.f32.mrf.mxu0
          %v3385 = vadd.f32 0.0, %v3384
          %3386 = vmatmul.f32.gmra.mxu0 %v3216
          %v3387 = vpop.f32.mrf.mxu0
          %v3388 = vadd.f32 0.0, %v3387
          %3389 = vmatmul.f32.gmra.mxu0 %v3219
          %v3390 = vpop.f32.mrf.mxu0
          %3391 = vmatmul.f32.gmra.mxu0 %v3222
          %v3392 = vpop.f32.mrf.mxu0
          %v3393 = vadd.f32 0.0, %v3392
          %3394 = vmatmul.f32.gmra.mxu0 %v3225
          %v3395 = vpop.f32.mrf.mxu0
          %v3396 = vadd.f32 0.0, %v3395
          %3397 = vmatmul.f32.gmra.mxu0 %v3228
          %v3398 = vpop.f32.mrf.mxu0
          %3399 = vmatmul.f32.gmra.mxu0 %v3231
          %v3400 = vpop.f32.mrf.mxu0
          %v3401 = vadd.f32 0.0, %v3400
          %3402 = vmatmul.f32.gmra.mxu0 %v3234
          %v3403 = vpop.f32.mrf.mxu0
          %v3404 = vadd.f32 0.0, %v3403
          %3405 = vmatmul.f32.gmra.mxu0 %v3237
          %v3406 = vpop.f32.mrf.mxu0
          %3407 = vmatmul.f32.gmra.mxu0 %v3240
          %v3408 = vpop.f32.mrf.mxu0
          %v3409 = vadd.f32 0.0, %v3408
          %3410 = vmatmul.f32.gmra.mxu0 %v3243
          %v3411 = vpop.f32.mrf.mxu0
          %v3412 = vadd.f32 0.0, %v3411
          %3413 = vmatmul.f32.gmra.mxu0 %v3246
          %v3414 = vpop.f32.mrf.mxu0
          %3415 = vmatmul.f32.gmra.mxu0 %v3249
          %v3416 = vpop.f32.mrf.mxu0
          %v3417 = vadd.f32 0.0, %v3416
          %3418 = vmatmul.f32.gmra.mxu0 %v3252
          %v3419 = vpop.f32.mrf.mxu0
          %v3420 = vadd.f32 0.0, %v3419
          %3421 = vmatmul.f32.gmra.mxu0 %v3255
          %v3422 = vpop.f32.mrf.mxu0
          %3423 = vmatmul.f32.gmra.mxu0 %v3258
          %v3424 = vpop.f32.mrf.mxu0
          %v3425 = vadd.f32 0.0, %v3424
          %3426 = vmatmul.f32.gmra.mxu0 %v3261
          %v3427 = vpop.f32.mrf.mxu0
          %v3428 = vadd.f32 0.0, %v3427
          %3429 = vmatmul.f32.gmra.mxu0 %v3264
          %v3430 = vpop.f32.mrf.mxu0
          %3431 = vmatmul.f32.gmra.mxu0 %v3267
          %v3432 = vpop.f32.mrf.mxu0
          %v3433 = vadd.f32 0.0, %v3432
          %3434 = vmatmul.f32.gmra.mxu0 %v3270
          %v3435 = vpop.f32.mrf.mxu0
          %v3436 = vadd.f32 0.0, %v3435
          %3437 = vmatmul.f32.gmra.mxu0 %v3273
          %v3438 = vpop.f32.mrf.mxu0
          %3439 = vmatmul.f32.gmra.mxu0 %v3276
          %v3440 = vpop.f32.mrf.mxu0
          %v3441 = vadd.f32 0.0, %v3440
          %3442 = vmatmul.f32.gmra.mxu0 %v3279
          %v3443 = vpop.f32.mrf.mxu0
          %v3444 = vadd.f32 0.0, %v3443
          %3445 = vmatmul.f32.gmra.mxu0 %v3282
          %v3446 = vpop.f32.mrf.mxu0
          %3447 = vmatmul.f32.gmra.mxu0 %v3285
          %v3448 = vpop.f32.mrf.mxu0
          %v3449 = vadd.f32 0.0, %v3448
          %3450 = vmatmul.f32.gmra.mxu0 %v3288
          %v3451 = vpop.f32.mrf.mxu0
          %v3452 = vadd.f32 0.0, %v3451
          %3453 = vmatmul.f32.gmra.mxu0 %v3291
          %v3454 = vpop.f32.mrf.mxu0
          %3455 = vmatmul.f32.gmra.mxu0 %v3294
          %v3456 = vpop.f32.mrf.mxu0
          %3457 = vmatmul.f32.gmra.mxu0 %v3297
          %v3458 = vpop.f32.mrf.mxu0
          %3459 = vmatmul.f32.gmra.mxu0 %v3300
          %v3460 = vpop.f32.mrf.mxu0
          %3461 = vmatmul.f32.gmra.mxu0 %v3303
          %v3462 = vpop.f32.mrf.mxu0
          %3463 = vmatmul.f32.gmra.mxu0 %v3306
          %v3464 = vpop.f32.mrf.mxu0
          %3465 = vmatmul.f32.gmra.mxu0 %v3309
          %v3466 = vpop.f32.mrf.mxu0
          %3467 = vdwg.mxu0
          %v3469 = vsel %vm205, %v2965, 0
          %v3472 = vsel %vm205, %v2966, 0
          %v3475 = vsel %vm205, %v2967, 0
          %v3478 = vsel %vm205, %v2968, 0
          %v3481 = vsel %vm205, %v2969, 0
          %v3484 = vsel %vm205, %v2970, 0
          %v3487 = vsel %vm205, %v2971, 0
          %v3490 = vsel %vm205, %v2972, 0
          %v3493 = vsel %vm205, %v2973, 0
          %v3496 = vsel %vm205, %v2974, 0
          %v3499 = vsel %vm205, %v2975, 0
          %v3502 = vsel %vm205, %v2976, 0
          %v3505 = vsel %vm205, %v2977, 0
          %v3508 = vsel %vm205, %v2978, 0
          %v3511 = vsel %vm205, %v2979, 0
          %v3514 = vsel %vm205, %v2980, 0
          %v3517 = vsel %vm205, %v2981, 0
          %v3520 = vsel %vm205, %v2982, 0
          %v3523 = vsel %vm205, %v2983, 0
          %v3526 = vsel %vm205, %v2984, 0
          %v3529 = vsel %vm205, %v2985, 0
          %v3532 = vsel %vm205, %v2986, 0
          %v3535 = vsel %vm205, %v2987, 0
          %v3538 = vsel %vm205, %v2988, 0
          %v3541 = vsel %vm205, %v2989, 0
          %v3544 = vsel %vm205, %v2990, 0
          %v3547 = vsel %vm205, %v2991, 0
          %v3550 = vsel %vm205, %v2992, 0
          %v3553 = vsel %vm205, %v2993, 0
          %v3556 = vsel %vm205, %v2994, 0
          %v3559 = vsel %vm205, %v2995, 0
          %v3562 = vsel %vm205, %v2996, 0
          %v3565 = vsel %vm205, %v2997, 0
          %v3568 = vsel %vm205, %v2998, 0
          %v3571 = vsel %vm205, %v2999, 0
          %v3574 = vsel %vm205, %v3000, 0
          %v3577 = vsel %vm205, %v3001, 0
          %v3580 = vsel %vm205, %v3002, 0
          %v3583 = vsel %vm205, %v3003, 0
          %v3586 = vsel %vm205, %v3004, 0
          %v3589 = vsel %vm205, %v3005, 0
          %v3592 = vsel %vm205, %v3006, 0
          %v3595 = vsel %vm205, %v3007, 0
          %v3598 = vsel %vm205, %v3008, 0
          %v3601 = vsel %vm205, %v3009, 0
          %v3604 = vsel %vm205, %v3010, 0
          %v3607 = vsel %vm205, %v3011, 0
          %v3610 = vsel %vm205, %v3012, 0
          %v3613 = vsel %vm205, %v3013, 0
          %v3616 = vsel %vm205, %v3014, 0
          %v3619 = vsel %vm205, %v3015, 0
          %v3622 = vsel %vm205, %v3016, 0
          %v3625 = vsel %vm205, %v3017, 0
          %v3628 = vsel %vm205, %v3018, 0
          %3630 = vmatpush.msra.mxu0 0.0
          %3631 = vmatpush.msra.mxu0 0.0
          %3632 = vmatpush.msra.mxu0 0.0
          %3633 = vmatpush.msra.mxu0 0.0
          %3634 = vmatpush.msra.mxu0 0.0
          %3635 = vmatpush.msra.mxu0 0.0
          %3636 = vmatpush.msra.mxu0 0.0
          %3637 = vmatpush.msra.mxu0 0.0
          %3638 = vmatpush.msra.mxu0 %v3030
          %3639 = vmatpush.msra.mxu0 %v3029
          %3640 = vmatpush.msra.mxu0 %v3028
          %3641 = vmatpush.msra.mxu0 %v3027
          %3642 = vmatpush.msra.mxu0 %v3026
          %3643 = vmatpush.msra.mxu0 %v3025
          %3644 = vmatpush.msra.mxu0 %v3024
          %3645 = vmatpush.msra.mxu0 %v3023
          %3646 = vmatmul.f32.gmra.mxu0 %v3469
          %v3647 = vpop.f32.mrf.mxu0
          %v3648 = vadd.f32 %v3329, %v3647
          %3649 = vmatmul.f32.gmra.mxu0 %v3472
          %v3650 = vpop.f32.mrf.mxu0
          %v3651 = vadd.f32 %v3332, %v3650
          %3652 = vmatmul.f32.gmra.mxu0 %v3475
          %v3653 = vpop.f32.mrf.mxu0
          %3654 = vmatmul.f32.gmra.mxu0 %v3478
          %v3655 = vpop.f32.mrf.mxu0
          %v3656 = vadd.f32 %v3337, %v3655
          %3657 = vmatmul.f32.gmra.mxu0 %v3481
          %v3658 = vpop.f32.mrf.mxu0
          %v3659 = vadd.f32 %v3340, %v3658
          %3660 = vmatmul.f32.gmra.mxu0 %v3484
          %v3661 = vpop.f32.mrf.mxu0
          %3662 = vmatmul.f32.gmra.mxu0 %v3487
          %v3663 = vpop.f32.mrf.mxu0
          %v3664 = vadd.f32 %v3345, %v3663
          %3665 = vmatmul.f32.gmra.mxu0 %v3490
          %v3666 = vpop.f32.mrf.mxu0
          %v3667 = vadd.f32 %v3348, %v3666
          %3668 = vmatmul.f32.gmra.mxu0 %v3493
          %v3669 = vpop.f32.mrf.mxu0
          %3670 = vmatmul.f32.gmra.mxu0 %v3496
          %v3671 = vpop.f32.mrf.mxu0
          %v3672 = vadd.f32 %v3353, %v3671
          %3673 = vmatmul.f32.gmra.mxu0 %v3499
          %v3674 = vpop.f32.mrf.mxu0
          %v3675 = vadd.f32 %v3356, %v3674
          %3676 = vmatmul.f32.gmra.mxu0 %v3502
          %v3677 = vpop.f32.mrf.mxu0
          %3678 = vmatmul.f32.gmra.mxu0 %v3505
          %v3679 = vpop.f32.mrf.mxu0
          %v3680 = vadd.f32 %v3361, %v3679
          %3681 = vmatmul.f32.gmra.mxu0 %v3508
          %v3682 = vpop.f32.mrf.mxu0
          %v3683 = vadd.f32 %v3364, %v3682
          %3684 = vmatmul.f32.gmra.mxu0 %v3511
          %v3685 = vpop.f32.mrf.mxu0
          %3686 = vmatmul.f32.gmra.mxu0 %v3514
          %v3687 = vpop.f32.mrf.mxu0
          %v3688 = vadd.f32 %v3369, %v3687
          %3689 = vmatmul.f32.gmra.mxu0 %v3517
          %v3690 = vpop.f32.mrf.mxu0
          %v3691 = vadd.f32 %v3372, %v3690
          %3692 = vmatmul.f32.gmra.mxu0 %v3520
          %v3693 = vpop.f32.mrf.mxu0
          %3694 = vmatmul.f32.gmra.mxu0 %v3523
          %v3695 = vpop.f32.mrf.mxu0
          %v3696 = vadd.f32 %v3377, %v3695
          %3697 = vmatmul.f32.gmra.mxu0 %v3526
          %v3698 = vpop.f32.mrf.mxu0
          %v3699 = vadd.f32 %v3380, %v3698
          %3700 = vmatmul.f32.gmra.mxu0 %v3529
          %v3701 = vpop.f32.mrf.mxu0
          %3702 = vmatmul.f32.gmra.mxu0 %v3532
          %v3703 = vpop.f32.mrf.mxu0
          %v3704 = vadd.f32 %v3385, %v3703
          %3705 = vmatmul.f32.gmra.mxu0 %v3535
          %v3706 = vpop.f32.mrf.mxu0
          %v3707 = vadd.f32 %v3388, %v3706
          %3708 = vmatmul.f32.gmra.mxu0 %v3538
          %v3709 = vpop.f32.mrf.mxu0
          %3710 = vmatmul.f32.gmra.mxu0 %v3541
          %v3711 = vpop.f32.mrf.mxu0
          %v3712 = vadd.f32 %v3393, %v3711
          %3713 = vmatmul.f32.gmra.mxu0 %v3544
          %v3714 = vpop.f32.mrf.mxu0
          %v3715 = vadd.f32 %v3396, %v3714
          %3716 = vmatmul.f32.gmra.mxu0 %v3547
          %v3717 = vpop.f32.mrf.mxu0
          %3718 = vmatmul.f32.gmra.mxu0 %v3550
          %v3719 = vpop.f32.mrf.mxu0
          %v3720 = vadd.f32 %v3401, %v3719
          %3721 = vmatmul.f32.gmra.mxu0 %v3553
          %v3722 = vpop.f32.mrf.mxu0
          %v3723 = vadd.f32 %v3404, %v3722
          %3724 = vmatmul.f32.gmra.mxu0 %v3556
          %v3725 = vpop.f32.mrf.mxu0
          %3726 = vmatmul.f32.gmra.mxu0 %v3559
          %v3727 = vpop.f32.mrf.mxu0
          %v3728 = vadd.f32 %v3409, %v3727
          %3729 = vmatmul.f32.gmra.mxu0 %v3562
          %v3730 = vpop.f32.mrf.mxu0
          %v3731 = vadd.f32 %v3412, %v3730
          %3732 = vmatmul.f32.gmra.mxu0 %v3565
          %v3733 = vpop.f32.mrf.mxu0
          %3734 = vmatmul.f32.gmra.mxu0 %v3568
          %v3735 = vpop.f32.mrf.mxu0
          %v3736 = vadd.f32 %v3417, %v3735
          %3737 = vmatmul.f32.gmra.mxu0 %v3571
          %v3738 = vpop.f32.mrf.mxu0
          %v3739 = vadd.f32 %v3420, %v3738
          %3740 = vmatmul.f32.gmra.mxu0 %v3574
          %v3741 = vpop.f32.mrf.mxu0
          %3742 = vmatmul.f32.gmra.mxu0 %v3577
          %v3743 = vpop.f32.mrf.mxu0
          %v3744 = vadd.f32 %v3425, %v3743
          %3745 = vmatmul.f32.gmra.mxu0 %v3580
          %v3746 = vpop.f32.mrf.mxu0
          %v3747 = vadd.f32 %v3428, %v3746
          %3748 = vmatmul.f32.gmra.mxu0 %v3583
          %v3749 = vpop.f32.mrf.mxu0
          %3750 = vmatmul.f32.gmra.mxu0 %v3586
          %v3751 = vpop.f32.mrf.mxu0
          %v3752 = vadd.f32 %v3433, %v3751
          %3753 = vmatmul.f32.gmra.mxu0 %v3589
          %v3754 = vpop.f32.mrf.mxu0
          %v3755 = vadd.f32 %v3436, %v3754
          %3756 = vmatmul.f32.gmra.mxu0 %v3592
          %v3757 = vpop.f32.mrf.mxu0
          %3758 = vmatmul.f32.gmra.mxu0 %v3595
          %v3759 = vpop.f32.mrf.mxu0
          %v3760 = vadd.f32 %v3441, %v3759
          %3761 = vmatmul.f32.gmra.mxu0 %v3598
          %v3762 = vpop.f32.mrf.mxu0
          %v3763 = vadd.f32 %v3444, %v3762
          %3764 = vmatmul.f32.gmra.mxu0 %v3601
          %v3765 = vpop.f32.mrf.mxu0
          %3766 = vmatmul.f32.gmra.mxu0 %v3604
          %v3767 = vpop.f32.mrf.mxu0
          %v3768 = vadd.f32 %v3449, %v3767
          %3769 = vmatmul.f32.gmra.mxu0 %v3607
          %v3770 = vpop.f32.mrf.mxu0
          %v3771 = vadd.f32 %v3452, %v3770
          %3772 = vmatmul.f32.gmra.mxu0 %v3610
          %v3773 = vpop.f32.mrf.mxu0
          %3774 = vmatmul.f32.gmra.mxu0 %v3613
          %v3775 = vpop.f32.mrf.mxu0
          %3776 = vmatmul.f32.gmra.mxu0 %v3616
          %v3777 = vpop.f32.mrf.mxu0
          %3778 = vmatmul.f32.gmra.mxu0 %v3619
          %v3779 = vpop.f32.mrf.mxu0
          %3780 = vmatmul.f32.gmra.mxu0 %v3622
          %v3781 = vpop.f32.mrf.mxu0
          %3782 = vmatmul.f32.gmra.mxu0 %v3625
          %v3783 = vpop.f32.mrf.mxu0
          %3784 = vmatmul.f32.gmra.mxu0 %v3628
          %v3785 = vpop.f32.mrf.mxu0
          %3786 = vdwg.mxu0
          %v3787 = vrot.slane %v2965, 2
          %v3788 = vrot.slane %v2966, 2
          %v3789 = vrot.slane %v2967, 2
          %v3790 = vrot.slane %v2968, 2
          %v3791 = vrot.slane %v2969, 2
          %v3792 = vrot.slane %v2970, 2
          %v3793 = vrot.slane %v2971, 2
          %v3794 = vrot.slane %v2972, 2
          %v3795 = vrot.slane %v2973, 2
          %v3796 = vrot.slane %v2974, 2
          %v3797 = vrot.slane %v2975, 2
          %v3798 = vrot.slane %v2976, 2
          %v3799 = vrot.slane %v2977, 2
          %v3800 = vrot.slane %v2978, 2
          %v3801 = vrot.slane %v2979, 2
          %v3802 = vrot.slane %v2980, 2
          %v3803 = vrot.slane %v2981, 2
          %v3804 = vrot.slane %v2982, 2
          %v3805 = vrot.slane %v2983, 2
          %v3806 = vrot.slane %v2984, 2
          %v3807 = vrot.slane %v2985, 2
          %v3808 = vrot.slane %v2986, 2
          %v3809 = vrot.slane %v2987, 2
          %v3810 = vrot.slane %v2988, 2
          %v3811 = vrot.slane %v2989, 2
          %v3812 = vrot.slane %v2990, 2
          %v3813 = vrot.slane %v2991, 2
          %v3814 = vrot.slane %v2992, 2
          %v3815 = vrot.slane %v2993, 2
          %v3816 = vrot.slane %v2994, 2
          %v3817 = vrot.slane %v2995, 2
          %v3818 = vrot.slane %v2996, 2
          %v3819 = vrot.slane %v2997, 2
          %v3820 = vrot.slane %v2998, 2
          %v3821 = vrot.slane %v2999, 2
          %v3822 = vrot.slane %v3000, 2
          %v3823 = vrot.slane %v3001, 2
          %v3824 = vrot.slane %v3002, 2
          %v3825 = vrot.slane %v3003, 2
          %v3826 = vrot.slane %v3004, 2
          %v3827 = vrot.slane %v3005, 2
          %v3828 = vrot.slane %v3006, 2
          %v3829 = vrot.slane %v3007, 2
          %v3830 = vrot.slane %v3008, 2
          %v3831 = vrot.slane %v3009, 2
          %v3832 = vrot.slane %v3010, 2
          %v3833 = vrot.slane %v3011, 2
          %v3834 = vrot.slane %v3012, 2
          %v3835 = vrot.slane %v3013, 2
          %v3836 = vrot.slane %v3014, 2
          %v3837 = vrot.slane %v3015, 2
          %v3838 = vrot.slane %v3016, 2
          %v3839 = vrot.slane %v3017, 2
          %v3840 = vrot.slane %v3018, 2
          %v3841 = vsel %vm1254, %v3839, %v3840
          %v3842 = vsel %vm1254, %v3838, %v3839
          %v3843 = vsel %vm1254, %v3837, %v3838
          %v3844 = vsel %vm1254, %v3836, %v3837
          %v3845 = vsel %vm1254, %v3835, %v3836
          %v3846 = vsel %vm1254, %v3834, %v3835
          %v3847 = vsel %vm1254, %v3833, %v3834
          %v3848 = vsel %vm1254, %v3832, %v3833
          %v3849 = vsel %vm1254, %v3831, %v3832
          %v3850 = vsel %vm1254, %v3830, %v3831
          %v3851 = vsel %vm1254, %v3829, %v3830
          %v3852 = vsel %vm1254, %v3828, %v3829
          %v3853 = vsel %vm1254, %v3827, %v3828
          %v3854 = vsel %vm1254, %v3826, %v3827
          %v3855 = vsel %vm1254, %v3825, %v3826
          %v3856 = vsel %vm1254, %v3824, %v3825
          %v3857 = vsel %vm1254, %v3823, %v3824
          %v3858 = vsel %vm1254, %v3822, %v3823
          %v3859 = vsel %vm1254, %v3821, %v3822
          %v3860 = vsel %vm1254, %v3820, %v3821
          %v3861 = vsel %vm1254, %v3819, %v3820
          %v3862 = vsel %vm1254, %v3818, %v3819
          %v3863 = vsel %vm1254, %v3817, %v3818
          %v3864 = vsel %vm1254, %v3816, %v3817
          %v3865 = vsel %vm1254, %v3815, %v3816
          %v3866 = vsel %vm1254, %v3814, %v3815
          %v3867 = vsel %vm1254, %v3813, %v3814
          %v3868 = vsel %vm1254, %v3812, %v3813
          %v3869 = vsel %vm1254, %v3811, %v3812
          %v3870 = vsel %vm1254, %v3810, %v3811
          %v3871 = vsel %vm1254, %v3809, %v3810
          %v3872 = vsel %vm1254, %v3808, %v3809
          %v3873 = vsel %vm1254, %v3807, %v3808
          %v3874 = vsel %vm1254, %v3806, %v3807
          %v3875 = vsel %vm1254, %v3805, %v3806
          %v3876 = vsel %vm1254, %v3804, %v3805
          %v3877 = vsel %vm1254, %v3803, %v3804
          %v3878 = vsel %vm1254, %v3802, %v3803
          %v3879 = vsel %vm1254, %v3801, %v3802
          %v3880 = vsel %vm1254, %v3800, %v3801
          %v3881 = vsel %vm1254, %v3799, %v3800
          %v3882 = vsel %vm1254, %v3798, %v3799
          %v3883 = vsel %vm1254, %v3797, %v3798
          %v3884 = vsel %vm1254, %v3796, %v3797
          %v3885 = vsel %vm1254, %v3795, %v3796
          %v3886 = vsel %vm1254, %v3794, %v3795
          %v3887 = vsel %vm1254, %v3793, %v3794
          %v3888 = vsel %vm1254, %v3792, %v3793
          %v3889 = vsel %vm1254, %v3791, %v3792
          %v3890 = vsel %vm1254, %v3790, %v3791
          %v3891 = vsel %vm1254, %v3789, %v3790
          %v3892 = vsel %vm1254, %v3788, %v3789
          %v3893 = vsel %vm1254, %v3787, %v3788
          %v3894 = vsel %vm1254, %v3840, %v3787
          %s3895 = sadd.s32 128, %s3021
          %s3896 = scalar_lea.vmem [#allocation3], %s3895
          %v3897 = vld [vmem:[%s3896] sm:$0xff]
          %v3898 = vld [vmem:[%s3896 + $0x8] sm:$0xff]
          %v3899 = vld [vmem:[%s3896 + $0x10] sm:$0xff]
          %v3900 = vld [vmem:[%s3896 + $0x18] sm:$0xff]
          %v3901 = vld [vmem:[%s3896 + $0x20] sm:$0xff]
          %v3902 = vld [vmem:[%s3896 + $0x28] sm:$0xff]
          %v3903 = vld [vmem:[%s3896 + $0x30] sm:$0xff]
          %v3904 = vld [vmem:[%s3896 + $0x38] sm:$0xff]
          %v3906 = vsel %vm205, %v3893, 0
          %v3909 = vsel %vm205, %v3892, 0
          %v3912 = vsel %vm205, %v3891, 0
          %v3915 = vsel %vm205, %v3890, 0
          %v3918 = vsel %vm205, %v3889, 0
          %v3921 = vsel %vm205, %v3888, 0
          %v3924 = vsel %vm205, %v3887, 0
          %v3927 = vsel %vm205, %v3886, 0
          %v3930 = vsel %vm205, %v3885, 0
          %v3933 = vsel %vm205, %v3884, 0
          %v3936 = vsel %vm205, %v3883, 0
          %v3939 = vsel %vm205, %v3882, 0
          %v3942 = vsel %vm205, %v3881, 0
          %v3945 = vsel %vm205, %v3880, 0
          %v3948 = vsel %vm205, %v3879, 0
          %v3951 = vsel %vm205, %v3878, 0
          %v3954 = vsel %vm205, %v3877, 0
          %v3957 = vsel %vm205, %v3876, 0
          %v3960 = vsel %vm205, %v3875, 0
          %v3963 = vsel %vm205, %v3874, 0
          %v3966 = vsel %vm205, %v3873, 0
          %v3969 = vsel %vm205, %v3872, 0
          %v3972 = vsel %vm205, %v3871, 0
          %v3975 = vsel %vm205, %v3870, 0
          %v3978 = vsel %vm205, %v3869, 0
          %v3981 = vsel %vm205, %v3868, 0
          %v3984 = vsel %vm205, %v3867, 0
          %v3987 = vsel %vm205, %v3866, 0
          %v3990 = vsel %vm205, %v3865, 0
          %v3993 = vsel %vm205, %v3864, 0
          %v3996 = vsel %vm205, %v3863, 0
          %v3999 = vsel %vm205, %v3862, 0
          %v4002 = vsel %vm205, %v3861, 0
          %v4005 = vsel %vm205, %v3860, 0
          %v4008 = vsel %vm205, %v3859, 0
          %v4011 = vsel %vm205, %v3858, 0
          %v4014 = vsel %vm205, %v3857, 0
          %v4017 = vsel %vm205, %v3856, 0
          %v4020 = vsel %vm205, %v3855, 0
          %v4023 = vsel %vm205, %v3854, 0
          %v4026 = vsel %vm205, %v3853, 0
          %v4029 = vsel %vm205, %v3852, 0
          %v4032 = vsel %vm205, %v3851, 0
          %v4035 = vsel %vm205, %v3850, 0
          %v4038 = vsel %vm205, %v3849, 0
          %v4041 = vsel %vm205, %v3848, 0
          %v4044 = vsel %vm205, %v3847, 0
          %v4047 = vsel %vm205, %v3846, 0
          %v4050 = vsel %vm205, %v3845, 0
          %v4053 = vsel %vm205, %v3844, 0
          %v4056 = vsel %vm205, %v3843, 0
          %v4059 = vsel %vm205, %v3842, 0
          %v4062 = vsel %vm205, %v3841, 0
          %v4065 = vsel %vm205, %v3894, 0
          %4067 = vmatpush.msra.mxu0 0.0
          %4068 = vmatpush.msra.mxu0 0.0
          %4069 = vmatpush.msra.mxu0 0.0
          %4070 = vmatpush.msra.mxu0 0.0
          %4071 = vmatpush.msra.mxu0 0.0
          %4072 = vmatpush.msra.mxu0 0.0
          %4073 = vmatpush.msra.mxu0 0.0
          %4074 = vmatpush.msra.mxu0 0.0
          %4075 = vmatpush.msra.mxu0 %v3904
          %4076 = vmatpush.msra.mxu0 %v3903
          %4077 = vmatpush.msra.mxu0 %v3902
          %4078 = vmatpush.msra.mxu0 %v3901
          %4079 = vmatpush.msra.mxu0 %v3900
          %4080 = vmatpush.msra.mxu0 %v3899
          %4081 = vmatpush.msra.mxu0 %v3898
          %4082 = vmatpush.msra.mxu0 %v3897
          %4083 = vmatmul.f32.gmra.mxu0 %v3906
          %v4084 = vpop.f32.mrf.mxu0
          %v4085 = vadd.f32 0.0, %v4084
          %4086 = vmatmul.f32.gmra.mxu0 %v3909
          %v4087 = vpop.f32.mrf.mxu0
          %v4088 = vadd.f32 0.0, %v4087
          %4089 = vmatmul.f32.gmra.mxu0 %v3912
          %v4090 = vpop.f32.mrf.mxu0
          %4091 = vmatmul.f32.gmra.mxu0 %v3915
          %v4092 = vpop.f32.mrf.mxu0
          %v4093 = vadd.f32 0.0, %v4092
          %4094 = vmatmul.f32.gmra.mxu0 %v3918
          %v4095 = vpop.f32.mrf.mxu0
          %v4096 = vadd.f32 0.0, %v4095
          %4097 = vmatmul.f32.gmra.mxu0 %v3921
          %v4098 = vpop.f32.mrf.mxu0
          %4099 = vmatmul.f32.gmra.mxu0 %v3924
          %v4100 = vpop.f32.mrf.mxu0
          %v4101 = vadd.f32 0.0, %v4100
          %4102 = vmatmul.f32.gmra.mxu0 %v3927
          %v4103 = vpop.f32.mrf.mxu0
          %v4104 = vadd.f32 0.0, %v4103
          %4105 = vmatmul.f32.gmra.mxu0 %v3930
          %v4106 = vpop.f32.mrf.mxu0
          %4107 = vmatmul.f32.gmra.mxu0 %v3933
          %v4108 = vpop.f32.mrf.mxu0
          %v4109 = vadd.f32 0.0, %v4108
          %4110 = vmatmul.f32.gmra.mxu0 %v3936
          %v4111 = vpop.f32.mrf.mxu0
          %v4112 = vadd.f32 0.0, %v4111
          %4113 = vmatmul.f32.gmra.mxu0 %v3939
          %v4114 = vpop.f32.mrf.mxu0
          %4115 = vmatmul.f32.gmra.mxu0 %v3942
          %v4116 = vpop.f32.mrf.mxu0
          %v4117 = vadd.f32 0.0, %v4116
          %4118 = vmatmul.f32.gmra.mxu0 %v3945
          %v4119 = vpop.f32.mrf.mxu0
          %v4120 = vadd.f32 0.0, %v4119
          %4121 = vmatmul.f32.gmra.mxu0 %v3948
          %v4122 = vpop.f32.mrf.mxu0
          %4123 = vmatmul.f32.gmra.mxu0 %v3951
          %v4124 = vpop.f32.mrf.mxu0
          %v4125 = vadd.f32 0.0, %v4124
          %4126 = vmatmul.f32.gmra.mxu0 %v3954
          %v4127 = vpop.f32.mrf.mxu0
          %v4128 = vadd.f32 0.0, %v4127
          %4129 = vmatmul.f32.gmra.mxu0 %v3957
          %v4130 = vpop.f32.mrf.mxu0
          %4131 = vmatmul.f32.gmra.mxu0 %v3960
          %v4132 = vpop.f32.mrf.mxu0
          %v4133 = vadd.f32 0.0, %v4132
          %4134 = vmatmul.f32.gmra.mxu0 %v3963
          %v4135 = vpop.f32.mrf.mxu0
          %v4136 = vadd.f32 0.0, %v4135
          %4137 = vmatmul.f32.gmra.mxu0 %v3966
          %v4138 = vpop.f32.mrf.mxu0
          %4139 = vmatmul.f32.gmra.mxu0 %v3969
          %v4140 = vpop.f32.mrf.mxu0
          %v4141 = vadd.f32 0.0, %v4140
          %4142 = vmatmul.f32.gmra.mxu0 %v3972
          %v4143 = vpop.f32.mrf.mxu0
          %v4144 = vadd.f32 0.0, %v4143
          %4145 = vmatmul.f32.gmra.mxu0 %v3975
          %v4146 = vpop.f32.mrf.mxu0
          %4147 = vmatmul.f32.gmra.mxu0 %v3978
          %v4148 = vpop.f32.mrf.mxu0
          %v4149 = vadd.f32 0.0, %v4148
          %4150 = vmatmul.f32.gmra.mxu0 %v3981
          %v4151 = vpop.f32.mrf.mxu0
          %v4152 = vadd.f32 0.0, %v4151
          %4153 = vmatmul.f32.gmra.mxu0 %v3984
          %v4154 = vpop.f32.mrf.mxu0
          %4155 = vmatmul.f32.gmra.mxu0 %v3987
          %v4156 = vpop.f32.mrf.mxu0
          %v4157 = vadd.f32 0.0, %v4156
          %4158 = vmatmul.f32.gmra.mxu0 %v3990
          %v4159 = vpop.f32.mrf.mxu0
          %v4160 = vadd.f32 0.0, %v4159
          %4161 = vmatmul.f32.gmra.mxu0 %v3993
          %v4162 = vpop.f32.mrf.mxu0
          %4163 = vmatmul.f32.gmra.mxu0 %v3996
          %v4164 = vpop.f32.mrf.mxu0
          %v4165 = vadd.f32 0.0, %v4164
          %4166 = vmatmul.f32.gmra.mxu0 %v3999
          %v4167 = vpop.f32.mrf.mxu0
          %v4168 = vadd.f32 0.0, %v4167
          %4169 = vmatmul.f32.gmra.mxu0 %v4002
          %v4170 = vpop.f32.mrf.mxu0
          %4171 = vmatmul.f32.gmra.mxu0 %v4005
          %v4172 = vpop.f32.mrf.mxu0
          %v4173 = vadd.f32 0.0, %v4172
          %4174 = vmatmul.f32.gmra.mxu0 %v4008
          %v4175 = vpop.f32.mrf.mxu0
          %v4176 = vadd.f32 0.0, %v4175
          %4177 = vmatmul.f32.gmra.mxu0 %v4011
          %v4178 = vpop.f32.mrf.mxu0
          %4179 = vmatmul.f32.gmra.mxu0 %v4014
          %v4180 = vpop.f32.mrf.mxu0
          %v4181 = vadd.f32 0.0, %v4180
          %4182 = vmatmul.f32.gmra.mxu0 %v4017
          %v4183 = vpop.f32.mrf.mxu0
          %v4184 = vadd.f32 0.0, %v4183
          %4185 = vmatmul.f32.gmra.mxu0 %v4020
          %v4186 = vpop.f32.mrf.mxu0
          %4187 = vmatmul.f32.gmra.mxu0 %v4023
          %v4188 = vpop.f32.mrf.mxu0
          %v4189 = vadd.f32 0.0, %v4188
          %4190 = vmatmul.f32.gmra.mxu0 %v4026
          %v4191 = vpop.f32.mrf.mxu0
          %v4192 = vadd.f32 0.0, %v4191
          %4193 = vmatmul.f32.gmra.mxu0 %v4029
          %v4194 = vpop.f32.mrf.mxu0
          %4195 = vmatmul.f32.gmra.mxu0 %v4032
          %v4196 = vpop.f32.mrf.mxu0
          %v4197 = vadd.f32 0.0, %v4196
          %4198 = vmatmul.f32.gmra.mxu0 %v4035
          %v4199 = vpop.f32.mrf.mxu0
          %v4200 = vadd.f32 0.0, %v4199
          %4201 = vmatmul.f32.gmra.mxu0 %v4038
          %v4202 = vpop.f32.mrf.mxu0
          %4203 = vmatmul.f32.gmra.mxu0 %v4041
          %v4204 = vpop.f32.mrf.mxu0
          %v4205 = vadd.f32 0.0, %v4204
          %4206 = vmatmul.f32.gmra.mxu0 %v4044
          %v4207 = vpop.f32.mrf.mxu0
          %v4208 = vadd.f32 0.0, %v4207
          %4209 = vmatmul.f32.gmra.mxu0 %v4047
          %v4210 = vpop.f32.mrf.mxu0
          %4211 = vmatmul.f32.gmra.mxu0 %v4050
          %v4212 = vpop.f32.mrf.mxu0
          %4213 = vmatmul.f32.gmra.mxu0 %v4053
          %v4214 = vpop.f32.mrf.mxu0
          %4215 = vmatmul.f32.gmra.mxu0 %v4056
          %v4216 = vpop.f32.mrf.mxu0
          %4217 = vmatmul.f32.gmra.mxu0 %v4059
          %v4218 = vpop.f32.mrf.mxu0
          %4219 = vmatmul.f32.gmra.mxu0 %v4062
          %v4220 = vpop.f32.mrf.mxu0
          %4221 = vmatmul.f32.gmra.mxu0 %v4065
          %v4222 = vpop.f32.mrf.mxu0
          %4223 = vdwg.mxu0
          %v4224 = vadd.f32 %v3648, %v4085
          %v4225 = vadd.f32 %v3651, %v4088
          %v4226 = vadd.f32 %v3656, %v4093
          %v4227 = vadd.f32 %v3659, %v4096
          %v4228 = vadd.f32 %v3664, %v4101
          %v4229 = vadd.f32 %v3667, %v4104
          %v4230 = vadd.f32 %v3672, %v4109
          %v4231 = vadd.f32 %v3675, %v4112
          %v4232 = vadd.f32 %v3680, %v4117
          %v4233 = vadd.f32 %v3683, %v4120
          %v4234 = vadd.f32 %v3688, %v4125
          %v4235 = vadd.f32 %v3691, %v4128
          %v4236 = vadd.f32 %v3696, %v4133
          %v4237 = vadd.f32 %v3699, %v4136
          %v4238 = vadd.f32 %v3704, %v4141
          %v4239 = vadd.f32 %v3707, %v4144
          %v4240 = vadd.f32 %v3712, %v4149
          %v4241 = vadd.f32 %v3715, %v4152
          %v4242 = vadd.f32 %v3720, %v4157
          %v4243 = vadd.f32 %v3723, %v4160
          %v4244 = vadd.f32 %v3728, %v4165
          %v4245 = vadd.f32 %v3731, %v4168
          %v4246 = vadd.f32 %v3736, %v4173
          %v4247 = vadd.f32 %v3739, %v4176
          %v4248 = vadd.f32 %v3744, %v4181
          %v4249 = vadd.f32 %v3747, %v4184
          %v4250 = vadd.f32 %v3752, %v4189
          %v4251 = vadd.f32 %v3755, %v4192
          %v4252 = vadd.f32 %v3760, %v4197
          %v4253 = vadd.f32 %v3763, %v4200
          %v4254 = vadd.f32 %v3768, %v4205
          %v4255 = vadd.f32 %v3771, %v4208
          %s4256 = sadd.s32 192, %s3021
          %s4257 = scalar_lea.vmem [#allocation3], %s4256
          %v4258 = vld [vmem:[%s4257] sm:$0xff]
          %v4259 = vld [vmem:[%s4257 + $0x8] sm:$0xff]
          %v4260 = vld [vmem:[%s4257 + $0x10] sm:$0xff]
          %v4261 = vld [vmem:[%s4257 + $0x18] sm:$0xff]
          %v4262 = vld [vmem:[%s4257 + $0x20] sm:$0xff]
          %v4263 = vld [vmem:[%s4257 + $0x28] sm:$0xff]
          %v4264 = vld [vmem:[%s4257 + $0x30] sm:$0xff]
          %v4265 = vld [vmem:[%s4257 + $0x38] sm:$0xff]
          %4266 = vmatpush.msra.mxu0 0.0
          %4267 = vmatpush.msra.mxu0 0.0
          %4268 = vmatpush.msra.mxu0 0.0
          %4269 = vmatpush.msra.mxu0 0.0
          %4270 = vmatpush.msra.mxu0 0.0
          %4271 = vmatpush.msra.mxu0 0.0
          %4272 = vmatpush.msra.mxu0 0.0
          %4273 = vmatpush.msra.mxu0 0.0
          %4274 = vmatpush.msra.mxu0 %v4265
          %4275 = vmatpush.msra.mxu0 %v4264
          %4276 = vmatpush.msra.mxu0 %v4263
          %4277 = vmatpush.msra.mxu0 %v4262
          %4278 = vmatpush.msra.mxu0 %v4261
          %4279 = vmatpush.msra.mxu0 %v4260
          %4280 = vmatpush.msra.mxu0 %v4259
          %4281 = vmatpush.msra.mxu0 %v4258
          %4282 = vmatmul.f32.gmra.mxu0 %v3478
          %v4283 = vpop.f32.mrf.mxu0
          %v4284 = vadd.f32 0.0, %v4283
          %4285 = vmatmul.f32.gmra.mxu0 %v3481
          %v4286 = vpop.f32.mrf.mxu0
          %v4287 = vadd.f32 0.0, %v4286
          %4288 = vmatmul.f32.gmra.mxu0 %v3484
          %v4289 = vpop.f32.mrf.mxu0
          %4290 = vmatmul.f32.gmra.mxu0 %v3487
          %v4291 = vpop.f32.mrf.mxu0
          %v4292 = vadd.f32 0.0, %v4291
          %4293 = vmatmul.f32.gmra.mxu0 %v3490
          %v4294 = vpop.f32.mrf.mxu0
          %v4295 = vadd.f32 0.0, %v4294
          %4296 = vmatmul.f32.gmra.mxu0 %v3493
          %v4297 = vpop.f32.mrf.mxu0
          %4298 = vmatmul.f32.gmra.mxu0 %v3496
          %v4299 = vpop.f32.mrf.mxu0
          %v4300 = vadd.f32 0.0, %v4299
          %4301 = vmatmul.f32.gmra.mxu0 %v3499
          %v4302 = vpop.f32.mrf.mxu0
          %v4303 = vadd.f32 0.0, %v4302
          %4304 = vmatmul.f32.gmra.mxu0 %v3502
          %v4305 = vpop.f32.mrf.mxu0
          %4306 = vmatmul.f32.gmra.mxu0 %v3505
          %v4307 = vpop.f32.mrf.mxu0
          %v4308 = vadd.f32 0.0, %v4307
          %4309 = vmatmul.f32.gmra.mxu0 %v3508
          %v4310 = vpop.f32.mrf.mxu0
          %v4311 = vadd.f32 0.0, %v4310
          %4312 = vmatmul.f32.gmra.mxu0 %v3511
          %v4313 = vpop.f32.mrf.mxu0
          %4314 = vmatmul.f32.gmra.mxu0 %v3514
          %v4315 = vpop.f32.mrf.mxu0
          %v4316 = vadd.f32 0.0, %v4315
          %4317 = vmatmul.f32.gmra.mxu0 %v3517
          %v4318 = vpop.f32.mrf.mxu0
          %v4319 = vadd.f32 0.0, %v4318
          %4320 = vmatmul.f32.gmra.mxu0 %v3520
          %v4321 = vpop.f32.mrf.mxu0
          %4322 = vmatmul.f32.gmra.mxu0 %v3523
          %v4323 = vpop.f32.mrf.mxu0
          %v4324 = vadd.f32 0.0, %v4323
          %4325 = vmatmul.f32.gmra.mxu0 %v3526
          %v4326 = vpop.f32.mrf.mxu0
          %v4327 = vadd.f32 0.0, %v4326
          %4328 = vmatmul.f32.gmra.mxu0 %v3529
          %v4329 = vpop.f32.mrf.mxu0
          %4330 = vmatmul.f32.gmra.mxu0 %v3532
          %v4331 = vpop.f32.mrf.mxu0
          %v4332 = vadd.f32 0.0, %v4331
          %4333 = vmatmul.f32.gmra.mxu0 %v3535
          %v4334 = vpop.f32.mrf.mxu0
          %v4335 = vadd.f32 0.0, %v4334
          %4336 = vmatmul.f32.gmra.mxu0 %v3538
          %v4337 = vpop.f32.mrf.mxu0
          %4338 = vmatmul.f32.gmra.mxu0 %v3541
          %v4339 = vpop.f32.mrf.mxu0
          %v4340 = vadd.f32 0.0, %v4339
          %4341 = vmatmul.f32.gmra.mxu0 %v3544
          %v4342 = vpop.f32.mrf.mxu0
          %v4343 = vadd.f32 0.0, %v4342
          %4344 = vmatmul.f32.gmra.mxu0 %v3547
          %v4345 = vpop.f32.mrf.mxu0
          %4346 = vmatmul.f32.gmra.mxu0 %v3550
          %v4347 = vpop.f32.mrf.mxu0
          %v4348 = vadd.f32 0.0, %v4347
          %4349 = vmatmul.f32.gmra.mxu0 %v3553
          %v4350 = vpop.f32.mrf.mxu0
          %v4351 = vadd.f32 0.0, %v4350
          %4352 = vmatmul.f32.gmra.mxu0 %v3556
          %v4353 = vpop.f32.mrf.mxu0
          %4354 = vmatmul.f32.gmra.mxu0 %v3559
          %v4355 = vpop.f32.mrf.mxu0
          %v4356 = vadd.f32 0.0, %v4355
          %4357 = vmatmul.f32.gmra.mxu0 %v3562
          %v4358 = vpop.f32.mrf.mxu0
          %v4359 = vadd.f32 0.0, %v4358
          %4360 = vmatmul.f32.gmra.mxu0 %v3565
          %v4361 = vpop.f32.mrf.mxu0
          %4362 = vmatmul.f32.gmra.mxu0 %v3568
          %v4363 = vpop.f32.mrf.mxu0
          %v4364 = vadd.f32 0.0, %v4363
          %4365 = vmatmul.f32.gmra.mxu0 %v3571
          %v4366 = vpop.f32.mrf.mxu0
          %v4367 = vadd.f32 0.0, %v4366
          %4368 = vmatmul.f32.gmra.mxu0 %v3574
          %v4369 = vpop.f32.mrf.mxu0
          %4370 = vmatmul.f32.gmra.mxu0 %v3577
          %v4371 = vpop.f32.mrf.mxu0
          %v4372 = vadd.f32 0.0, %v4371
          %4373 = vmatmul.f32.gmra.mxu0 %v3580
          %v4374 = vpop.f32.mrf.mxu0
          %v4375 = vadd.f32 0.0, %v4374
          %4376 = vmatmul.f32.gmra.mxu0 %v3583
          %v4377 = vpop.f32.mrf.mxu0
          %4378 = vmatmul.f32.gmra.mxu0 %v3586
          %v4379 = vpop.f32.mrf.mxu0
          %v4380 = vadd.f32 0.0, %v4379
          %4381 = vmatmul.f32.gmra.mxu0 %v3589
          %v4382 = vpop.f32.mrf.mxu0
          %v4383 = vadd.f32 0.0, %v4382
          %4384 = vmatmul.f32.gmra.mxu0 %v3592
          %v4385 = vpop.f32.mrf.mxu0
          %4386 = vmatmul.f32.gmra.mxu0 %v3595
          %v4387 = vpop.f32.mrf.mxu0
          %v4388 = vadd.f32 0.0, %v4387
          %4389 = vmatmul.f32.gmra.mxu0 %v3598
          %v4390 = vpop.f32.mrf.mxu0
          %v4391 = vadd.f32 0.0, %v4390
          %4392 = vmatmul.f32.gmra.mxu0 %v3601
          %v4393 = vpop.f32.mrf.mxu0
          %4394 = vmatmul.f32.gmra.mxu0 %v3604
          %v4395 = vpop.f32.mrf.mxu0
          %v4396 = vadd.f32 0.0, %v4395
          %4397 = vmatmul.f32.gmra.mxu0 %v3607
          %v4398 = vpop.f32.mrf.mxu0
          %v4399 = vadd.f32 0.0, %v4398
          %4400 = vmatmul.f32.gmra.mxu0 %v3610
          %v4401 = vpop.f32.mrf.mxu0
          %4402 = vmatmul.f32.gmra.mxu0 %v3613
          %v4403 = vpop.f32.mrf.mxu0
          %v4404 = vadd.f32 0.0, %v4403
          %4405 = vmatmul.f32.gmra.mxu0 %v3616
          %v4406 = vpop.f32.mrf.mxu0
          %v4407 = vadd.f32 0.0, %v4406
          %4408 = vmatmul.f32.gmra.mxu0 %v3619
          %v4409 = vpop.f32.mrf.mxu0
          %4410 = vmatmul.f32.gmra.mxu0 %v3622
          %v4411 = vpop.f32.mrf.mxu0
          %4412 = vmatmul.f32.gmra.mxu0 %v3625
          %v4413 = vpop.f32.mrf.mxu0
          %4414 = vmatmul.f32.gmra.mxu0 %v3628
          %v4415 = vpop.f32.mrf.mxu0
          %4416 = vmatmul.f32.gmra.mxu0 %v3469
          %v4417 = vpop.f32.mrf.mxu0
          %4418 = vmatmul.f32.gmra.mxu0 %v3472
          %v4419 = vpop.f32.mrf.mxu0
          %4420 = vmatmul.f32.gmra.mxu0 %v3475
          %v4421 = vpop.f32.mrf.mxu0
          %4422 = vdwg.mxu0
          %v4423 = vadd.f32 %v4224, %v4284
          %v4424 = vadd.f32 %v4225, %v4287
          %v4425 = vadd.f32 %v4226, %v4292
          %v4426 = vadd.f32 %v4227, %v4295
          %v4427 = vadd.f32 %v4228, %v4300
          %v4428 = vadd.f32 %v4229, %v4303
          %v4429 = vadd.f32 %v4230, %v4308
          %v4430 = vadd.f32 %v4231, %v4311
          %v4431 = vadd.f32 %v4232, %v4316
          %v4432 = vadd.f32 %v4233, %v4319
          %v4433 = vadd.f32 %v4234, %v4324
          %v4434 = vadd.f32 %v4235, %v4327
          %v4435 = vadd.f32 %v4236, %v4332
          %v4436 = vadd.f32 %v4237, %v4335
          %v4437 = vadd.f32 %v4238, %v4340
          %v4438 = vadd.f32 %v4239, %v4343
          %v4439 = vadd.f32 %v4240, %v4348
          %v4440 = vadd.f32 %v4241, %v4351
          %v4441 = vadd.f32 %v4242, %v4356
          %v4442 = vadd.f32 %v4243, %v4359
          %v4443 = vadd.f32 %v4244, %v4364
          %v4444 = vadd.f32 %v4245, %v4367
          %v4445 = vadd.f32 %v4246, %v4372
          %v4446 = vadd.f32 %v4247, %v4375
          %v4447 = vadd.f32 %v4248, %v4380
          %v4448 = vadd.f32 %v4249, %v4383
          %v4449 = vadd.f32 %v4250, %v4388
          %v4450 = vadd.f32 %v4251, %v4391
          %v4451 = vadd.f32 %v4252, %v4396
          %v4452 = vadd.f32 %v4253, %v4399
          %v4453 = vadd.f32 %v4254, %v4404
          %v4454 = vadd.f32 %v4255, %v4407
          %s4455 = sadd.s32 256, %s3021
          %s4456 = scalar_lea.vmem [#allocation3], %s4455
          %v4457 = vld [vmem:[%s4456] sm:$0xff]
          %v4458 = vld [vmem:[%s4456 + $0x8] sm:$0xff]
          %v4459 = vld [vmem:[%s4456 + $0x10] sm:$0xff]
          %v4460 = vld [vmem:[%s4456 + $0x18] sm:$0xff]
          %v4461 = vld [vmem:[%s4456 + $0x20] sm:$0xff]
          %v4462 = vld [vmem:[%s4456 + $0x28] sm:$0xff]
          %v4463 = vld [vmem:[%s4456 + $0x30] sm:$0xff]
          %v4464 = vld [vmem:[%s4456 + $0x38] sm:$0xff]
          %4465 = vmatpush.msra.mxu0 0.0
          %4466 = vmatpush.msra.mxu0 0.0
          %4467 = vmatpush.msra.mxu0 0.0
          %4468 = vmatpush.msra.mxu0 0.0
          %4469 = vmatpush.msra.mxu0 0.0
          %4470 = vmatpush.msra.mxu0 0.0
          %4471 = vmatpush.msra.mxu0 0.0
          %4472 = vmatpush.msra.mxu0 0.0
          %4473 = vmatpush.msra.mxu0 %v4464
          %4474 = vmatpush.msra.mxu0 %v4463
          %4475 = vmatpush.msra.mxu0 %v4462
          %4476 = vmatpush.msra.mxu0 %v4461
          %4477 = vmatpush.msra.mxu0 %v4460
          %4478 = vmatpush.msra.mxu0 %v4459
          %4479 = vmatpush.msra.mxu0 %v4458
          %4480 = vmatpush.msra.mxu0 %v4457
          %4481 = vmatmul.f32.gmra.mxu0 %v3159
          %v4482 = vpop.f32.mrf.mxu0
          %v4483 = vadd.f32 0.0, %v4482
          %4484 = vmatmul.f32.gmra.mxu0 %v3162
          %v4485 = vpop.f32.mrf.mxu0
          %v4486 = vadd.f32 0.0, %v4485
          %4487 = vmatmul.f32.gmra.mxu0 %v3165
          %v4488 = vpop.f32.mrf.mxu0
          %4489 = vmatmul.f32.gmra.mxu0 %v3168
          %v4490 = vpop.f32.mrf.mxu0
          %v4491 = vadd.f32 0.0, %v4490
          %4492 = vmatmul.f32.gmra.mxu0 %v3171
          %v4493 = vpop.f32.mrf.mxu0
          %v4494 = vadd.f32 0.0, %v4493
          %4495 = vmatmul.f32.gmra.mxu0 %v3174
          %v4496 = vpop.f32.mrf.mxu0
          %4497 = vmatmul.f32.gmra.mxu0 %v3177
          %v4498 = vpop.f32.mrf.mxu0
          %v4499 = vadd.f32 0.0, %v4498
          %4500 = vmatmul.f32.gmra.mxu0 %v3180
          %v4501 = vpop.f32.mrf.mxu0
          %v4502 = vadd.f32 0.0, %v4501
          %4503 = vmatmul.f32.gmra.mxu0 %v3183
          %v4504 = vpop.f32.mrf.mxu0
          %4505 = vmatmul.f32.gmra.mxu0 %v3186
          %v4506 = vpop.f32.mrf.mxu0
          %v4507 = vadd.f32 0.0, %v4506
          %4508 = vmatmul.f32.gmra.mxu0 %v3189
          %v4509 = vpop.f32.mrf.mxu0
          %v4510 = vadd.f32 0.0, %v4509
          %4511 = vmatmul.f32.gmra.mxu0 %v3192
          %v4512 = vpop.f32.mrf.mxu0
          %4513 = vmatmul.f32.gmra.mxu0 %v3195
          %v4514 = vpop.f32.mrf.mxu0
          %v4515 = vadd.f32 0.0, %v4514
          %4516 = vmatmul.f32.gmra.mxu0 %v3198
          %v4517 = vpop.f32.mrf.mxu0
          %v4518 = vadd.f32 0.0, %v4517
          %4519 = vmatmul.f32.gmra.mxu0 %v3201
          %v4520 = vpop.f32.mrf.mxu0
          %4521 = vmatmul.f32.gmra.mxu0 %v3204
          %v4522 = vpop.f32.mrf.mxu0
          %v4523 = vadd.f32 0.0, %v4522
          %4524 = vmatmul.f32.gmra.mxu0 %v3207
          %v4525 = vpop.f32.mrf.mxu0
          %v4526 = vadd.f32 0.0, %v4525
          %4527 = vmatmul.f32.gmra.mxu0 %v3210
          %v4528 = vpop.f32.mrf.mxu0
          %4529 = vmatmul.f32.gmra.mxu0 %v3213
          %v4530 = vpop.f32.mrf.mxu0
          %v4531 = vadd.f32 0.0, %v4530
          %4532 = vmatmul.f32.gmra.mxu0 %v3216
          %v4533 = vpop.f32.mrf.mxu0
          %v4534 = vadd.f32 0.0, %v4533
          %4535 = vmatmul.f32.gmra.mxu0 %v3219
          %v4536 = vpop.f32.mrf.mxu0
          %4537 = vmatmul.f32.gmra.mxu0 %v3222
          %v4538 = vpop.f32.mrf.mxu0
          %v4539 = vadd.f32 0.0, %v4538
          %4540 = vmatmul.f32.gmra.mxu0 %v3225
          %v4541 = vpop.f32.mrf.mxu0
          %v4542 = vadd.f32 0.0, %v4541
          %4543 = vmatmul.f32.gmra.mxu0 %v3228
          %v4544 = vpop.f32.mrf.mxu0
          %4545 = vmatmul.f32.gmra.mxu0 %v3231
          %v4546 = vpop.f32.mrf.mxu0
          %v4547 = vadd.f32 0.0, %v4546
          %4548 = vmatmul.f32.gmra.mxu0 %v3234
          %v4549 = vpop.f32.mrf.mxu0
          %v4550 = vadd.f32 0.0, %v4549
          %4551 = vmatmul.f32.gmra.mxu0 %v3237
          %v4552 = vpop.f32.mrf.mxu0
          %4553 = vmatmul.f32.gmra.mxu0 %v3240
          %v4554 = vpop.f32.mrf.mxu0
          %v4555 = vadd.f32 0.0, %v4554
          %4556 = vmatmul.f32.gmra.mxu0 %v3243
          %v4557 = vpop.f32.mrf.mxu0
          %v4558 = vadd.f32 0.0, %v4557
          %4559 = vmatmul.f32.gmra.mxu0 %v3246
          %v4560 = vpop.f32.mrf.mxu0
          %4561 = vmatmul.f32.gmra.mxu0 %v3249
          %v4562 = vpop.f32.mrf.mxu0
          %v4563 = vadd.f32 0.0, %v4562
          %4564 = vmatmul.f32.gmra.mxu0 %v3252
          %v4565 = vpop.f32.mrf.mxu0
          %v4566 = vadd.f32 0.0, %v4565
          %4567 = vmatmul.f32.gmra.mxu0 %v3255
          %v4568 = vpop.f32.mrf.mxu0
          %4569 = vmatmul.f32.gmra.mxu0 %v3258
          %v4570 = vpop.f32.mrf.mxu0
          %v4571 = vadd.f32 0.0, %v4570
          %4572 = vmatmul.f32.gmra.mxu0 %v3261
          %v4573 = vpop.f32.mrf.mxu0
          %v4574 = vadd.f32 0.0, %v4573
          %4575 = vmatmul.f32.gmra.mxu0 %v3264
          %v4576 = vpop.f32.mrf.mxu0
          %4577 = vmatmul.f32.gmra.mxu0 %v3267
          %v4578 = vpop.f32.mrf.mxu0
          %v4579 = vadd.f32 0.0, %v4578
          %4580 = vmatmul.f32.gmra.mxu0 %v3270
          %v4581 = vpop.f32.mrf.mxu0
          %v4582 = vadd.f32 0.0, %v4581
          %4583 = vmatmul.f32.gmra.mxu0 %v3273
          %v4584 = vpop.f32.mrf.mxu0
          %4585 = vmatmul.f32.gmra.mxu0 %v3276
          %v4586 = vpop.f32.mrf.mxu0
          %v4587 = vadd.f32 0.0, %v4586
          %4588 = vmatmul.f32.gmra.mxu0 %v3279
          %v4589 = vpop.f32.mrf.mxu0
          %v4590 = vadd.f32 0.0, %v4589
          %4591 = vmatmul.f32.gmra.mxu0 %v3282
          %v4592 = vpop.f32.mrf.mxu0
          %4593 = vmatmul.f32.gmra.mxu0 %v3285
          %v4594 = vpop.f32.mrf.mxu0
          %v4595 = vadd.f32 0.0, %v4594
          %4596 = vmatmul.f32.gmra.mxu0 %v3288
          %v4597 = vpop.f32.mrf.mxu0
          %v4598 = vadd.f32 0.0, %v4597
          %4599 = vmatmul.f32.gmra.mxu0 %v3291
          %v4600 = vpop.f32.mrf.mxu0
          %4601 = vmatmul.f32.gmra.mxu0 %v3294
          %v4602 = vpop.f32.mrf.mxu0
          %v4603 = vadd.f32 0.0, %v4602
          %4604 = vmatmul.f32.gmra.mxu0 %v3297
          %v4605 = vpop.f32.mrf.mxu0
          %v4606 = vadd.f32 0.0, %v4605
          %4607 = vmatmul.f32.gmra.mxu0 %v3300
          %v4608 = vpop.f32.mrf.mxu0
          %4609 = vmatmul.f32.gmra.mxu0 %v3303
          %v4610 = vpop.f32.mrf.mxu0
          %4611 = vmatmul.f32.gmra.mxu0 %v3306
          %v4612 = vpop.f32.mrf.mxu0
          %4613 = vmatmul.f32.gmra.mxu0 %v3309
          %v4614 = vpop.f32.mrf.mxu0
          %4615 = vmatmul.f32.gmra.mxu0 %v3150
          %v4616 = vpop.f32.mrf.mxu0
          %4617 = vmatmul.f32.gmra.mxu0 %v3153
          %v4618 = vpop.f32.mrf.mxu0
          %4619 = vmatmul.f32.gmra.mxu0 %v3156
          %v4620 = vpop.f32.mrf.mxu0
          %4621 = vdwg.mxu0
          %v4622 = vadd.f32 %v4423, %v4483
          %v4623 = vadd.f32 %v4424, %v4486
          %v4624 = vadd.f32 %v4425, %v4491
          %v4625 = vadd.f32 %v4426, %v4494
          %v4626 = vadd.f32 %v4427, %v4499
          %v4627 = vadd.f32 %v4428, %v4502
          %v4628 = vadd.f32 %v4429, %v4507
          %v4629 = vadd.f32 %v4430, %v4510
          %v4630 = vadd.f32 %v4431, %v4515
          %v4631 = vadd.f32 %v4432, %v4518
          %v4632 = vadd.f32 %v4433, %v4523
          %v4633 = vadd.f32 %v4434, %v4526
          %v4634 = vadd.f32 %v4435, %v4531
          %v4635 = vadd.f32 %v4436, %v4534
          %v4636 = vadd.f32 %v4437, %v4539
          %v4637 = vadd.f32 %v4438, %v4542
          %v4638 = vadd.f32 %v4439, %v4547
          %v4639 = vadd.f32 %v4440, %v4550
          %v4640 = vadd.f32 %v4441, %v4555
          %v4641 = vadd.f32 %v4442, %v4558
          %v4642 = vadd.f32 %v4443, %v4563
          %v4643 = vadd.f32 %v4444, %v4566
          %v4644 = vadd.f32 %v4445, %v4571
          %v4645 = vadd.f32 %v4446, %v4574
          %v4646 = vadd.f32 %v4447, %v4579
          %v4647 = vadd.f32 %v4448, %v4582
          %v4648 = vadd.f32 %v4449, %v4587
          %v4649 = vadd.f32 %v4450, %v4590
          %v4650 = vadd.f32 %v4451, %v4595
          %v4651 = vadd.f32 %v4452, %v4598
          %v4652 = vadd.f32 %v4453, %v4603
          %v4653 = vadd.f32 %v4454, %v4606
          %s4654 = sadd.s32 320, %s3021
          %s4655 = scalar_lea.vmem [#allocation3], %s4654
          %v4656 = vld [vmem:[%s4655] sm:$0xff]
          %v4657 = vld [vmem:[%s4655 + $0x8] sm:$0xff]
          %v4658 = vld [vmem:[%s4655 + $0x10] sm:$0xff]
          %v4659 = vld [vmem:[%s4655 + $0x18] sm:$0xff]
          %v4660 = vld [vmem:[%s4655 + $0x20] sm:$0xff]
          %v4661 = vld [vmem:[%s4655 + $0x28] sm:$0xff]
          %v4662 = vld [vmem:[%s4655 + $0x30] sm:$0xff]
          %v4663 = vld [vmem:[%s4655 + $0x38] sm:$0xff]
          %4664 = vmatpush.msra.mxu0 0.0
          %4665 = vmatpush.msra.mxu0 0.0
          %4666 = vmatpush.msra.mxu0 0.0
          %4667 = vmatpush.msra.mxu0 0.0
          %4668 = vmatpush.msra.mxu0 0.0
          %4669 = vmatpush.msra.mxu0 0.0
          %4670 = vmatpush.msra.mxu0 0.0
          %4671 = vmatpush.msra.mxu0 0.0
          %4672 = vmatpush.msra.mxu0 %v4663
          %4673 = vmatpush.msra.mxu0 %v4662
          %4674 = vmatpush.msra.mxu0 %v4661
          %4675 = vmatpush.msra.mxu0 %v4660
          %4676 = vmatpush.msra.mxu0 %v4659
          %4677 = vmatpush.msra.mxu0 %v4658
          %4678 = vmatpush.msra.mxu0 %v4657
          %4679 = vmatpush.msra.mxu0 %v4656
          %4680 = vmatmul.f32.gmra.mxu0 %v3915
          %v4681 = vpop.f32.mrf.mxu0
          %v4682 = vadd.f32 0.0, %v4681
          %4683 = vmatmul.f32.gmra.mxu0 %v3918
          %v4684 = vpop.f32.mrf.mxu0
          %v4685 = vadd.f32 0.0, %v4684
          %4686 = vmatmul.f32.gmra.mxu0 %v3921
          %v4687 = vpop.f32.mrf.mxu0
          %4688 = vmatmul.f32.gmra.mxu0 %v3924
          %v4689 = vpop.f32.mrf.mxu0
          %v4690 = vadd.f32 0.0, %v4689
          %4691 = vmatmul.f32.gmra.mxu0 %v3927
          %v4692 = vpop.f32.mrf.mxu0
          %v4693 = vadd.f32 0.0, %v4692
          %4694 = vmatmul.f32.gmra.mxu0 %v3930
          %v4695 = vpop.f32.mrf.mxu0
          %4696 = vmatmul.f32.gmra.mxu0 %v3933
          %v4697 = vpop.f32.mrf.mxu0
          %v4698 = vadd.f32 0.0, %v4697
          %4699 = vmatmul.f32.gmra.mxu0 %v3936
          %v4700 = vpop.f32.mrf.mxu0
          %v4701 = vadd.f32 0.0, %v4700
          %4702 = vmatmul.f32.gmra.mxu0 %v3939
          %v4703 = vpop.f32.mrf.mxu0
          %4704 = vmatmul.f32.gmra.mxu0 %v3942
          %v4705 = vpop.f32.mrf.mxu0
          %v4706 = vadd.f32 0.0, %v4705
          %4707 = vmatmul.f32.gmra.mxu0 %v3945
          %v4708 = vpop.f32.mrf.mxu0
          %v4709 = vadd.f32 0.0, %v4708
          %4710 = vmatmul.f32.gmra.mxu0 %v3948
          %v4711 = vpop.f32.mrf.mxu0
          %4712 = vmatmul.f32.gmra.mxu0 %v3951
          %v4713 = vpop.f32.mrf.mxu0
          %v4714 = vadd.f32 0.0, %v4713
          %4715 = vmatmul.f32.gmra.mxu0 %v3954
          %v4716 = vpop.f32.mrf.mxu0
          %v4717 = vadd.f32 0.0, %v4716
          %4718 = vmatmul.f32.gmra.mxu0 %v3957
          %v4719 = vpop.f32.mrf.mxu0
          %4720 = vmatmul.f32.gmra.mxu0 %v3960
          %v4721 = vpop.f32.mrf.mxu0
          %v4722 = vadd.f32 0.0, %v4721
          %4723 = vmatmul.f32.gmra.mxu0 %v3963
          %v4724 = vpop.f32.mrf.mxu0
          %v4725 = vadd.f32 0.0, %v4724
          %4726 = vmatmul.f32.gmra.mxu0 %v3966
          %v4727 = vpop.f32.mrf.mxu0
          %4728 = vmatmul.f32.gmra.mxu0 %v3969
          %v4729 = vpop.f32.mrf.mxu0
          %v4730 = vadd.f32 0.0, %v4729
          %4731 = vmatmul.f32.gmra.mxu0 %v3972
          %v4732 = vpop.f32.mrf.mxu0
          %v4733 = vadd.f32 0.0, %v4732
          %4734 = vmatmul.f32.gmra.mxu0 %v3975
          %v4735 = vpop.f32.mrf.mxu0
          %4736 = vmatmul.f32.gmra.mxu0 %v3978
          %v4737 = vpop.f32.mrf.mxu0
          %v4738 = vadd.f32 0.0, %v4737
          %4739 = vmatmul.f32.gmra.mxu0 %v3981
          %v4740 = vpop.f32.mrf.mxu0
          %v4741 = vadd.f32 0.0, %v4740
          %4742 = vmatmul.f32.gmra.mxu0 %v3984
          %v4743 = vpop.f32.mrf.mxu0
          %4744 = vmatmul.f32.gmra.mxu0 %v3987
          %v4745 = vpop.f32.mrf.mxu0
          %v4746 = vadd.f32 0.0, %v4745
          %4747 = vmatmul.f32.gmra.mxu0 %v3990
          %v4748 = vpop.f32.mrf.mxu0
          %v4749 = vadd.f32 0.0, %v4748
          %4750 = vmatmul.f32.gmra.mxu0 %v3993
          %v4751 = vpop.f32.mrf.mxu0
          %4752 = vmatmul.f32.gmra.mxu0 %v3996
          %v4753 = vpop.f32.mrf.mxu0
          %v4754 = vadd.f32 0.0, %v4753
          %4755 = vmatmul.f32.gmra.mxu0 %v3999
          %v4756 = vpop.f32.mrf.mxu0
          %v4757 = vadd.f32 0.0, %v4756
          %4758 = vmatmul.f32.gmra.mxu0 %v4002
          %v4759 = vpop.f32.mrf.mxu0
          %4760 = vmatmul.f32.gmra.mxu0 %v4005
          %v4761 = vpop.f32.mrf.mxu0
          %v4762 = vadd.f32 0.0, %v4761
          %4763 = vmatmul.f32.gmra.mxu0 %v4008
          %v4764 = vpop.f32.mrf.mxu0
          %v4765 = vadd.f32 0.0, %v4764
          %4766 = vmatmul.f32.gmra.mxu0 %v4011
          %v4767 = vpop.f32.mrf.mxu0
          %4768 = vmatmul.f32.gmra.mxu0 %v4014
          %v4769 = vpop.f32.mrf.mxu0
          %v4770 = vadd.f32 0.0, %v4769
          %4771 = vmatmul.f32.gmra.mxu0 %v4017
          %v4772 = vpop.f32.mrf.mxu0
          %v4773 = vadd.f32 0.0, %v4772
          %4774 = vmatmul.f32.gmra.mxu0 %v4020
          %v4775 = vpop.f32.mrf.mxu0
          %4776 = vmatmul.f32.gmra.mxu0 %v4023
          %v4777 = vpop.f32.mrf.mxu0
          %v4778 = vadd.f32 0.0, %v4777
          %4779 = vmatmul.f32.gmra.mxu0 %v4026
          %v4780 = vpop.f32.mrf.mxu0
          %v4781 = vadd.f32 0.0, %v4780
          %4782 = vmatmul.f32.gmra.mxu0 %v4029
          %v4783 = vpop.f32.mrf.mxu0
          %4784 = vmatmul.f32.gmra.mxu0 %v4032
          %v4785 = vpop.f32.mrf.mxu0
          %v4786 = vadd.f32 0.0, %v4785
          %4787 = vmatmul.f32.gmra.mxu0 %v4035
          %v4788 = vpop.f32.mrf.mxu0
          %v4789 = vadd.f32 0.0, %v4788
          %4790 = vmatmul.f32.gmra.mxu0 %v4038
          %v4791 = vpop.f32.mrf.mxu0
          %4792 = vmatmul.f32.gmra.mxu0 %v4041
          %v4793 = vpop.f32.mrf.mxu0
          %v4794 = vadd.f32 0.0, %v4793
          %4795 = vmatmul.f32.gmra.mxu0 %v4044
          %v4796 = vpop.f32.mrf.mxu0
          %v4797 = vadd.f32 0.0, %v4796
          %4798 = vmatmul.f32.gmra.mxu0 %v4047
          %v4799 = vpop.f32.mrf.mxu0
          %4800 = vmatmul.f32.gmra.mxu0 %v4050
          %v4801 = vpop.f32.mrf.mxu0
          %v4802 = vadd.f32 0.0, %v4801
          %4803 = vmatmul.f32.gmra.mxu0 %v4053
          %v4804 = vpop.f32.mrf.mxu0
          %v4805 = vadd.f32 0.0, %v4804
          %4806 = vmatmul.f32.gmra.mxu0 %v4056
          %v4807 = vpop.f32.mrf.mxu0
          %4808 = vmatmul.f32.gmra.mxu0 %v4059
          %v4809 = vpop.f32.mrf.mxu0
          %4810 = vmatmul.f32.gmra.mxu0 %v4062
          %v4811 = vpop.f32.mrf.mxu0
          %4812 = vmatmul.f32.gmra.mxu0 %v4065
          %v4813 = vpop.f32.mrf.mxu0
          %4814 = vmatmul.f32.gmra.mxu0 %v3906
          %v4815 = vpop.f32.mrf.mxu0
          %4816 = vmatmul.f32.gmra.mxu0 %v3909
          %v4817 = vpop.f32.mrf.mxu0
          %4818 = vmatmul.f32.gmra.mxu0 %v3912
          %v4819 = vpop.f32.mrf.mxu0
          %4820 = vdwg.mxu0
          %v4821 = vadd.f32 %v4622, %v4682
          %v4822 = vadd.f32 %v4623, %v4685
          %v4823 = vadd.f32 %v4624, %v4690
          %v4824 = vadd.f32 %v4625, %v4693
          %v4825 = vadd.f32 %v4626, %v4698
          %v4826 = vadd.f32 %v4627, %v4701
          %v4827 = vadd.f32 %v4628, %v4706
          %v4828 = vadd.f32 %v4629, %v4709
          %v4829 = vadd.f32 %v4630, %v4714
          %v4830 = vadd.f32 %v4631, %v4717
          %v4831 = vadd.f32 %v4632, %v4722
          %v4832 = vadd.f32 %v4633, %v4725
          %v4833 = vadd.f32 %v4634, %v4730
          %v4834 = vadd.f32 %v4635, %v4733
          %v4835 = vadd.f32 %v4636, %v4738
          %v4836 = vadd.f32 %v4637, %v4741
          %v4837 = vadd.f32 %v4638, %v4746
          %v4838 = vadd.f32 %v4639, %v4749
          %v4839 = vadd.f32 %v4640, %v4754
          %v4840 = vadd.f32 %v4641, %v4757
          %v4841 = vadd.f32 %v4642, %v4762
          %v4842 = vadd.f32 %v4643, %v4765
          %v4843 = vadd.f32 %v4644, %v4770
          %v4844 = vadd.f32 %v4645, %v4773
          %v4845 = vadd.f32 %v4646, %v4778
          %v4846 = vadd.f32 %v4647, %v4781
          %v4847 = vadd.f32 %v4648, %v4786
          %v4848 = vadd.f32 %v4649, %v4789
          %v4849 = vadd.f32 %v4650, %v4794
          %v4850 = vadd.f32 %v4651, %v4797
          %v4851 = vadd.f32 %v4652, %v4802
          %v4852 = vadd.f32 %v4653, %v4805
          %s4853 = sadd.s32 384, %s3021
          %s4854 = scalar_lea.vmem [#allocation3], %s4853
          %v4855 = vld [vmem:[%s4854] sm:$0xff]
          %v4856 = vld [vmem:[%s4854 + $0x8] sm:$0xff]
          %v4857 = vld [vmem:[%s4854 + $0x10] sm:$0xff]
          %v4858 = vld [vmem:[%s4854 + $0x18] sm:$0xff]
          %v4859 = vld [vmem:[%s4854 + $0x20] sm:$0xff]
          %v4860 = vld [vmem:[%s4854 + $0x28] sm:$0xff]
          %v4861 = vld [vmem:[%s4854 + $0x30] sm:$0xff]
          %v4862 = vld [vmem:[%s4854 + $0x38] sm:$0xff]
          %4863 = vmatpush.msra.mxu0 0.0
          %4864 = vmatpush.msra.mxu0 0.0
          %4865 = vmatpush.msra.mxu0 0.0
          %4866 = vmatpush.msra.mxu0 0.0
          %4867 = vmatpush.msra.mxu0 0.0
          %4868 = vmatpush.msra.mxu0 0.0
          %4869 = vmatpush.msra.mxu0 0.0
          %4870 = vmatpush.msra.mxu0 0.0
          %4871 = vmatpush.msra.mxu0 %v4862
          %4872 = vmatpush.msra.mxu0 %v4861
          %4873 = vmatpush.msra.mxu0 %v4860
          %4874 = vmatpush.msra.mxu0 %v4859
          %4875 = vmatpush.msra.mxu0 %v4858
          %4876 = vmatpush.msra.mxu0 %v4857
          %4877 = vmatpush.msra.mxu0 %v4856
          %4878 = vmatpush.msra.mxu0 %v4855
          %4879 = vmatmul.f32.gmra.mxu0 %v3487
          %v4880 = vpop.f32.mrf.mxu0
          %v4881 = vadd.f32 0.0, %v4880
          %4882 = vmatmul.f32.gmra.mxu0 %v3490
          %v4883 = vpop.f32.mrf.mxu0
          %v4884 = vadd.f32 0.0, %v4883
          %4885 = vmatmul.f32.gmra.mxu0 %v3493
          %v4886 = vpop.f32.mrf.mxu0
          %4887 = vmatmul.f32.gmra.mxu0 %v3496
          %v4888 = vpop.f32.mrf.mxu0
          %v4889 = vadd.f32 0.0, %v4888
          %4890 = vmatmul.f32.gmra.mxu0 %v3499
          %v4891 = vpop.f32.mrf.mxu0
          %v4892 = vadd.f32 0.0, %v4891
          %4893 = vmatmul.f32.gmra.mxu0 %v3502
          %v4894 = vpop.f32.mrf.mxu0
          %4895 = vmatmul.f32.gmra.mxu0 %v3505
          %v4896 = vpop.f32.mrf.mxu0
          %v4897 = vadd.f32 0.0, %v4896
          %4898 = vmatmul.f32.gmra.mxu0 %v3508
          %v4899 = vpop.f32.mrf.mxu0
          %v4900 = vadd.f32 0.0, %v4899
          %4901 = vmatmul.f32.gmra.mxu0 %v3511
          %v4902 = vpop.f32.mrf.mxu0
          %4903 = vmatmul.f32.gmra.mxu0 %v3514
          %v4904 = vpop.f32.mrf.mxu0
          %v4905 = vadd.f32 0.0, %v4904
          %4906 = vmatmul.f32.gmra.mxu0 %v3517
          %v4907 = vpop.f32.mrf.mxu0
          %v4908 = vadd.f32 0.0, %v4907
          %4909 = vmatmul.f32.gmra.mxu0 %v3520
          %v4910 = vpop.f32.mrf.mxu0
          %4911 = vmatmul.f32.gmra.mxu0 %v3523
          %v4912 = vpop.f32.mrf.mxu0
          %v4913 = vadd.f32 0.0, %v4912
          %4914 = vmatmul.f32.gmra.mxu0 %v3526
          %v4915 = vpop.f32.mrf.mxu0
          %v4916 = vadd.f32 0.0, %v4915
          %4917 = vmatmul.f32.gmra.mxu0 %v3529
          %v4918 = vpop.f32.mrf.mxu0
          %4919 = vmatmul.f32.gmra.mxu0 %v3532
          %v4920 = vpop.f32.mrf.mxu0
          %v4921 = vadd.f32 0.0, %v4920
          %4922 = vmatmul.f32.gmra.mxu0 %v3535
          %v4923 = vpop.f32.mrf.mxu0
          %v4924 = vadd.f32 0.0, %v4923
          %4925 = vmatmul.f32.gmra.mxu0 %v3538
          %v4926 = vpop.f32.mrf.mxu0
          %4927 = vmatmul.f32.gmra.mxu0 %v3541
          %v4928 = vpop.f32.mrf.mxu0
          %v4929 = vadd.f32 0.0, %v4928
          %4930 = vmatmul.f32.gmra.mxu0 %v3544
          %v4931 = vpop.f32.mrf.mxu0
          %v4932 = vadd.f32 0.0, %v4931
          %4933 = vmatmul.f32.gmra.mxu0 %v3547
          %v4934 = vpop.f32.mrf.mxu0
          %4935 = vmatmul.f32.gmra.mxu0 %v3550
          %v4936 = vpop.f32.mrf.mxu0
          %v4937 = vadd.f32 0.0, %v4936
          %4938 = vmatmul.f32.gmra.mxu0 %v3553
          %v4939 = vpop.f32.mrf.mxu0
          %v4940 = vadd.f32 0.0, %v4939
          %4941 = vmatmul.f32.gmra.mxu0 %v3556
          %v4942 = vpop.f32.mrf.mxu0
          %4943 = vmatmul.f32.gmra.mxu0 %v3559
          %v4944 = vpop.f32.mrf.mxu0
          %v4945 = vadd.f32 0.0, %v4944
          %4946 = vmatmul.f32.gmra.mxu0 %v3562
          %v4947 = vpop.f32.mrf.mxu0
          %v4948 = vadd.f32 0.0, %v4947
          %4949 = vmatmul.f32.gmra.mxu0 %v3565
          %v4950 = vpop.f32.mrf.mxu0
          %4951 = vmatmul.f32.gmra.mxu0 %v3568
          %v4952 = vpop.f32.mrf.mxu0
          %v4953 = vadd.f32 0.0, %v4952
          %4954 = vmatmul.f32.gmra.mxu0 %v3571
          %v4955 = vpop.f32.mrf.mxu0
          %v4956 = vadd.f32 0.0, %v4955
          %4957 = vmatmul.f32.gmra.mxu0 %v3574
          %v4958 = vpop.f32.mrf.mxu0
          %4959 = vmatmul.f32.gmra.mxu0 %v3577
          %v4960 = vpop.f32.mrf.mxu0
          %v4961 = vadd.f32 0.0, %v4960
          %4962 = vmatmul.f32.gmra.mxu0 %v3580
          %v4963 = vpop.f32.mrf.mxu0
          %v4964 = vadd.f32 0.0, %v4963
          %4965 = vmatmul.f32.gmra.mxu0 %v3583
          %v4966 = vpop.f32.mrf.mxu0
          %4967 = vmatmul.f32.gmra.mxu0 %v3586
          %v4968 = vpop.f32.mrf.mxu0
          %v4969 = vadd.f32 0.0, %v4968
          %4970 = vmatmul.f32.gmra.mxu0 %v3589
          %v4971 = vpop.f32.mrf.mxu0
          %v4972 = vadd.f32 0.0, %v4971
          %4973 = vmatmul.f32.gmra.mxu0 %v3592
          %v4974 = vpop.f32.mrf.mxu0
          %4975 = vmatmul.f32.gmra.mxu0 %v3595
          %v4976 = vpop.f32.mrf.mxu0
          %v4977 = vadd.f32 0.0, %v4976
          %4978 = vmatmul.f32.gmra.mxu0 %v3598
          %v4979 = vpop.f32.mrf.mxu0
          %v4980 = vadd.f32 0.0, %v4979
          %4981 = vmatmul.f32.gmra.mxu0 %v3601
          %v4982 = vpop.f32.mrf.mxu0
          %4983 = vmatmul.f32.gmra.mxu0 %v3604
          %v4984 = vpop.f32.mrf.mxu0
          %v4985 = vadd.f32 0.0, %v4984
          %4986 = vmatmul.f32.gmra.mxu0 %v3607
          %v4987 = vpop.f32.mrf.mxu0
          %v4988 = vadd.f32 0.0, %v4987
          %4989 = vmatmul.f32.gmra.mxu0 %v3610
          %v4990 = vpop.f32.mrf.mxu0
          %4991 = vmatmul.f32.gmra.mxu0 %v3613
          %v4992 = vpop.f32.mrf.mxu0
          %v4993 = vadd.f32 0.0, %v4992
          %4994 = vmatmul.f32.gmra.mxu0 %v3616
          %v4995 = vpop.f32.mrf.mxu0
          %v4996 = vadd.f32 0.0, %v4995
          %4997 = vmatmul.f32.gmra.mxu0 %v3619
          %v4998 = vpop.f32.mrf.mxu0
          %4999 = vmatmul.f32.gmra.mxu0 %v3622
          %v5000 = vpop.f32.mrf.mxu0
          %v5001 = vadd.f32 0.0, %v5000
          %5002 = vmatmul.f32.gmra.mxu0 %v3625
          %v5003 = vpop.f32.mrf.mxu0
          %v5004 = vadd.f32 0.0, %v5003
          %5005 = vmatmul.f32.gmra.mxu0 %v3628
          %v5006 = vpop.f32.mrf.mxu0
          %5007 = vmatmul.f32.gmra.mxu0 %v3469
          %v5008 = vpop.f32.mrf.mxu0
          %5009 = vmatmul.f32.gmra.mxu0 %v3472
          %v5010 = vpop.f32.mrf.mxu0
          %5011 = vmatmul.f32.gmra.mxu0 %v3475
          %v5012 = vpop.f32.mrf.mxu0
          %5013 = vmatmul.f32.gmra.mxu0 %v3478
          %v5014 = vpop.f32.mrf.mxu0
          %5015 = vmatmul.f32.gmra.mxu0 %v3481
          %v5016 = vpop.f32.mrf.mxu0
          %5017 = vmatmul.f32.gmra.mxu0 %v3484
          %v5018 = vpop.f32.mrf.mxu0
          %5019 = vdwg.mxu0
          %v5020 = vadd.f32 %v4821, %v4881
          %v5021 = vadd.f32 %v4822, %v4884
          %v5022 = vadd.f32 %v4823, %v4889
          %v5023 = vadd.f32 %v4824, %v4892
          %v5024 = vadd.f32 %v4825, %v4897
          %v5025 = vadd.f32 %v4826, %v4900
          %v5026 = vadd.f32 %v4827, %v4905
          %v5027 = vadd.f32 %v4828, %v4908
          %v5028 = vadd.f32 %v4829, %v4913
          %v5029 = vadd.f32 %v4830, %v4916
          %v5030 = vadd.f32 %v4831, %v4921
          %v5031 = vadd.f32 %v4832, %v4924
          %v5032 = vadd.f32 %v4833, %v4929
          %v5033 = vadd.f32 %v4834, %v4932
          %v5034 = vadd.f32 %v4835, %v4937
          %v5035 = vadd.f32 %v4836, %v4940
          %v5036 = vadd.f32 %v4837, %v4945
          %v5037 = vadd.f32 %v4838, %v4948
          %v5038 = vadd.f32 %v4839, %v4953
          %v5039 = vadd.f32 %v4840, %v4956
          %v5040 = vadd.f32 %v4841, %v4961
          %v5041 = vadd.f32 %v4842, %v4964
          %v5042 = vadd.f32 %v4843, %v4969
          %v5043 = vadd.f32 %v4844, %v4972
          %v5044 = vadd.f32 %v4845, %v4977
          %v5045 = vadd.f32 %v4846, %v4980
          %v5046 = vadd.f32 %v4847, %v4985
          %v5047 = vadd.f32 %v4848, %v4988
          %v5048 = vadd.f32 %v4849, %v4993
          %v5049 = vadd.f32 %v4850, %v4996
          %v5050 = vadd.f32 %v4851, %v5001
          %v5051 = vadd.f32 %v4852, %v5004
          %s5052 = sadd.s32 448, %s3021
          %s5053 = scalar_lea.vmem [#allocation3], %s5052
          %v5054 = vld [vmem:[%s5053] sm:$0xff]
          %v5055 = vld [vmem:[%s5053 + $0x8] sm:$0xff]
          %v5056 = vld [vmem:[%s5053 + $0x10] sm:$0xff]
          %v5057 = vld [vmem:[%s5053 + $0x18] sm:$0xff]
          %v5058 = vld [vmem:[%s5053 + $0x20] sm:$0xff]
          %v5059 = vld [vmem:[%s5053 + $0x28] sm:$0xff]
          %v5060 = vld [vmem:[%s5053 + $0x30] sm:$0xff]
          %v5061 = vld [vmem:[%s5053 + $0x38] sm:$0xff]
          %5062 = vmatpush.msra.mxu0 0.0
          %5063 = vmatpush.msra.mxu0 0.0
          %5064 = vmatpush.msra.mxu0 0.0
          %5065 = vmatpush.msra.mxu0 0.0
          %5066 = vmatpush.msra.mxu0 0.0
          %5067 = vmatpush.msra.mxu0 0.0
          %5068 = vmatpush.msra.mxu0 0.0
          %5069 = vmatpush.msra.mxu0 0.0
          %5070 = vmatpush.msra.mxu0 %v5061
          %5071 = vmatpush.msra.mxu0 %v5060
          %5072 = vmatpush.msra.mxu0 %v5059
          %5073 = vmatpush.msra.mxu0 %v5058
          %5074 = vmatpush.msra.mxu0 %v5057
          %5075 = vmatpush.msra.mxu0 %v5056
          %5076 = vmatpush.msra.mxu0 %v5055
          %5077 = vmatpush.msra.mxu0 %v5054
          %5078 = vmatmul.f32.gmra.mxu0 %v3168
          %v5079 = vpop.f32.mrf.mxu0
          %v5080 = vadd.f32 0.0, %v5079
          %5081 = vmatmul.f32.gmra.mxu0 %v3171
          %v5082 = vpop.f32.mrf.mxu0
          %v5083 = vadd.f32 0.0, %v5082
          %5084 = vmatmul.f32.gmra.mxu0 %v3174
          %v5085 = vpop.f32.mrf.mxu0
          %5086 = vmatmul.f32.gmra.mxu0 %v3177
          %v5087 = vpop.f32.mrf.mxu0
          %v5088 = vadd.f32 0.0, %v5087
          %5089 = vmatmul.f32.gmra.mxu0 %v3180
          %v5090 = vpop.f32.mrf.mxu0
          %v5091 = vadd.f32 0.0, %v5090
          %5092 = vmatmul.f32.gmra.mxu0 %v3183
          %v5093 = vpop.f32.mrf.mxu0
          %5094 = vmatmul.f32.gmra.mxu0 %v3186
          %v5095 = vpop.f32.mrf.mxu0
          %v5096 = vadd.f32 0.0, %v5095
          %5097 = vmatmul.f32.gmra.mxu0 %v3189
          %v5098 = vpop.f32.mrf.mxu0
          %v5099 = vadd.f32 0.0, %v5098
          %5100 = vmatmul.f32.gmra.mxu0 %v3192
          %v5101 = vpop.f32.mrf.mxu0
          %5102 = vmatmul.f32.gmra.mxu0 %v3195
          %v5103 = vpop.f32.mrf.mxu0
          %v5104 = vadd.f32 0.0, %v5103
          %5105 = vmatmul.f32.gmra.mxu0 %v3198
          %v5106 = vpop.f32.mrf.mxu0
          %v5107 = vadd.f32 0.0, %v5106
          %5108 = vmatmul.f32.gmra.mxu0 %v3201
          %v5109 = vpop.f32.mrf.mxu0
          %5110 = vmatmul.f32.gmra.mxu0 %v3204
          %v5111 = vpop.f32.mrf.mxu0
          %v5112 = vadd.f32 0.0, %v5111
          %5113 = vmatmul.f32.gmra.mxu0 %v3207
          %v5114 = vpop.f32.mrf.mxu0
          %v5115 = vadd.f32 0.0, %v5114
          %5116 = vmatmul.f32.gmra.mxu0 %v3210
          %v5117 = vpop.f32.mrf.mxu0
          %5118 = vmatmul.f32.gmra.mxu0 %v3213
          %v5119 = vpop.f32.mrf.mxu0
          %v5120 = vadd.f32 0.0, %v5119
          %5121 = vmatmul.f32.gmra.mxu0 %v3216
          %v5122 = vpop.f32.mrf.mxu0
          %v5123 = vadd.f32 0.0, %v5122
          %5124 = vmatmul.f32.gmra.mxu0 %v3219
          %v5125 = vpop.f32.mrf.mxu0
          %5126 = vmatmul.f32.gmra.mxu0 %v3222
          %v5127 = vpop.f32.mrf.mxu0
          %v5128 = vadd.f32 0.0, %v5127
          %5129 = vmatmul.f32.gmra.mxu0 %v3225
          %v5130 = vpop.f32.mrf.mxu0
          %v5131 = vadd.f32 0.0, %v5130
          %5132 = vmatmul.f32.gmra.mxu0 %v3228
          %v5133 = vpop.f32.mrf.mxu0
          %5134 = vmatmul.f32.gmra.mxu0 %v3231
          %v5135 = vpop.f32.mrf.mxu0
          %v5136 = vadd.f32 0.0, %v5135
          %5137 = vmatmul.f32.gmra.mxu0 %v3234
          %v5138 = vpop.f32.mrf.mxu0
          %v5139 = vadd.f32 0.0, %v5138
          %5140 = vmatmul.f32.gmra.mxu0 %v3237
          %v5141 = vpop.f32.mrf.mxu0
          %5142 = vmatmul.f32.gmra.mxu0 %v3240
          %v5143 = vpop.f32.mrf.mxu0
          %v5144 = vadd.f32 0.0, %v5143
          %5145 = vmatmul.f32.gmra.mxu0 %v3243
          %v5146 = vpop.f32.mrf.mxu0
          %v5147 = vadd.f32 0.0, %v5146
          %5148 = vmatmul.f32.gmra.mxu0 %v3246
          %v5149 = vpop.f32.mrf.mxu0
          %5150 = vmatmul.f32.gmra.mxu0 %v3249
          %v5151 = vpop.f32.mrf.mxu0
          %v5152 = vadd.f32 0.0, %v5151
          %5153 = vmatmul.f32.gmra.mxu0 %v3252
          %v5154 = vpop.f32.mrf.mxu0
          %v5155 = vadd.f32 0.0, %v5154
          %5156 = vmatmul.f32.gmra.mxu0 %v3255
          %v5157 = vpop.f32.mrf.mxu0
          %5158 = vmatmul.f32.gmra.mxu0 %v3258
          %v5159 = vpop.f32.mrf.mxu0
          %v5160 = vadd.f32 0.0, %v5159
          %5161 = vmatmul.f32.gmra.mxu0 %v3261
          %v5162 = vpop.f32.mrf.mxu0
          %v5163 = vadd.f32 0.0, %v5162
          %5164 = vmatmul.f32.gmra.mxu0 %v3264
          %v5165 = vpop.f32.mrf.mxu0
          %5166 = vmatmul.f32.gmra.mxu0 %v3267
          %v5167 = vpop.f32.mrf.mxu0
          %v5168 = vadd.f32 0.0, %v5167
          %5169 = vmatmul.f32.gmra.mxu0 %v3270
          %v5170 = vpop.f32.mrf.mxu0
          %v5171 = vadd.f32 0.0, %v5170
          %5172 = vmatmul.f32.gmra.mxu0 %v3273
          %v5173 = vpop.f32.mrf.mxu0
          %5174 = vmatmul.f32.gmra.mxu0 %v3276
          %v5175 = vpop.f32.mrf.mxu0
          %v5176 = vadd.f32 0.0, %v5175
          %5177 = vmatmul.f32.gmra.mxu0 %v3279
          %v5178 = vpop.f32.mrf.mxu0
          %v5179 = vadd.f32 0.0, %v5178
          %5180 = vmatmul.f32.gmra.mxu0 %v3282
          %v5181 = vpop.f32.mrf.mxu0
          %5182 = vmatmul.f32.gmra.mxu0 %v3285
          %v5183 = vpop.f32.mrf.mxu0
          %v5184 = vadd.f32 0.0, %v5183
          %5185 = vmatmul.f32.gmra.mxu0 %v3288
          %v5186 = vpop.f32.mrf.mxu0
          %v5187 = vadd.f32 0.0, %v5186
          %5188 = vmatmul.f32.gmra.mxu0 %v3291
          %v5189 = vpop.f32.mrf.mxu0
          %5190 = vmatmul.f32.gmra.mxu0 %v3294
          %v5191 = vpop.f32.mrf.mxu0
          %v5192 = vadd.f32 0.0, %v5191
          %5193 = vmatmul.f32.gmra.mxu0 %v3297
          %v5194 = vpop.f32.mrf.mxu0
          %v5195 = vadd.f32 0.0, %v5194
          %5196 = vmatmul.f32.gmra.mxu0 %v3300
          %v5197 = vpop.f32.mrf.mxu0
          %5198 = vmatmul.f32.gmra.mxu0 %v3303
          %v5199 = vpop.f32.mrf.mxu0
          %v5200 = vadd.f32 0.0, %v5199
          %5201 = vmatmul.f32.gmra.mxu0 %v3306
          %v5202 = vpop.f32.mrf.mxu0
          %v5203 = vadd.f32 0.0, %v5202
          %5204 = vmatmul.f32.gmra.mxu0 %v3309
          %v5205 = vpop.f32.mrf.mxu0
          %5206 = vmatmul.f32.gmra.mxu0 %v3150
          %v5207 = vpop.f32.mrf.mxu0
          %5208 = vmatmul.f32.gmra.mxu0 %v3153
          %v5209 = vpop.f32.mrf.mxu0
          %5210 = vmatmul.f32.gmra.mxu0 %v3156
          %v5211 = vpop.f32.mrf.mxu0
          %5212 = vmatmul.f32.gmra.mxu0 %v3159
          %v5213 = vpop.f32.mrf.mxu0
          %5214 = vmatmul.f32.gmra.mxu0 %v3162
          %v5215 = vpop.f32.mrf.mxu0
          %5216 = vmatmul.f32.gmra.mxu0 %v3165
          %v5217 = vpop.f32.mrf.mxu0
          %5218 = vdwg.mxu0
          %v5219 = vadd.f32 %v5020, %v5080
          %v5220 = vadd.f32 %v5021, %v5083
          %v5221 = vadd.f32 %v5022, %v5088
          %v5222 = vadd.f32 %v5023, %v5091
          %v5223 = vadd.f32 %v5024, %v5096
          %v5224 = vadd.f32 %v5025, %v5099
          %v5225 = vadd.f32 %v5026, %v5104
          %v5226 = vadd.f32 %v5027, %v5107
          %v5227 = vadd.f32 %v5028, %v5112
          %v5228 = vadd.f32 %v5029, %v5115
          %v5229 = vadd.f32 %v5030, %v5120
          %v5230 = vadd.f32 %v5031, %v5123
          %v5231 = vadd.f32 %v5032, %v5128
          %v5232 = vadd.f32 %v5033, %v5131
          %v5233 = vadd.f32 %v5034, %v5136
          %v5234 = vadd.f32 %v5035, %v5139
          %v5235 = vadd.f32 %v5036, %v5144
          %v5236 = vadd.f32 %v5037, %v5147
          %v5237 = vadd.f32 %v5038, %v5152
          %v5238 = vadd.f32 %v5039, %v5155
          %v5239 = vadd.f32 %v5040, %v5160
          %v5240 = vadd.f32 %v5041, %v5163
          %v5241 = vadd.f32 %v5042, %v5168
          %v5242 = vadd.f32 %v5043, %v5171
          %v5243 = vadd.f32 %v5044, %v5176
          %v5244 = vadd.f32 %v5045, %v5179
          %v5245 = vadd.f32 %v5046, %v5184
          %v5246 = vadd.f32 %v5047, %v5187
          %v5247 = vadd.f32 %v5048, %v5192
          %v5248 = vadd.f32 %v5049, %v5195
          %v5249 = vadd.f32 %v5050, %v5200
          %v5250 = vadd.f32 %v5051, %v5203
          %s5251 = sadd.s32 512, %s3021
          %s5252 = scalar_lea.vmem [#allocation3], %s5251
          %v5253 = vld [vmem:[%s5252] sm:$0xff]
          %v5254 = vld [vmem:[%s5252 + $0x8] sm:$0xff]
          %v5255 = vld [vmem:[%s5252 + $0x10] sm:$0xff]
          %v5256 = vld [vmem:[%s5252 + $0x18] sm:$0xff]
          %v5257 = vld [vmem:[%s5252 + $0x20] sm:$0xff]
          %v5258 = vld [vmem:[%s5252 + $0x28] sm:$0xff]
          %v5259 = vld [vmem:[%s5252 + $0x30] sm:$0xff]
          %v5260 = vld [vmem:[%s5252 + $0x38] sm:$0xff]
          %5261 = vmatpush.msra.mxu0 0.0
          %5262 = vmatpush.msra.mxu0 0.0
          %5263 = vmatpush.msra.mxu0 0.0
          %5264 = vmatpush.msra.mxu0 0.0
          %5265 = vmatpush.msra.mxu0 0.0
          %5266 = vmatpush.msra.mxu0 0.0
          %5267 = vmatpush.msra.mxu0 0.0
          %5268 = vmatpush.msra.mxu0 0.0
          %5269 = vmatpush.msra.mxu0 %v5260
          %5270 = vmatpush.msra.mxu0 %v5259
          %5271 = vmatpush.msra.mxu0 %v5258
          %5272 = vmatpush.msra.mxu0 %v5257
          %5273 = vmatpush.msra.mxu0 %v5256
          %5274 = vmatpush.msra.mxu0 %v5255
          %5275 = vmatpush.msra.mxu0 %v5254
          %5276 = vmatpush.msra.mxu0 %v5253
          %5277 = vmatmul.f32.gmra.mxu0 %v3924
          %v5278 = vpop.f32.mrf.mxu0
          %v5279 = vadd.f32 0.0, %v5278
          %5280 = vmatmul.f32.gmra.mxu0 %v3927
          %v5281 = vpop.f32.mrf.mxu0
          %v5282 = vadd.f32 0.0, %v5281
          %5283 = vmatmul.f32.gmra.mxu0 %v3930
          %v5284 = vpop.f32.mrf.mxu0
          %5285 = vmatmul.f32.gmra.mxu0 %v3933
          %v5286 = vpop.f32.mrf.mxu0
          %v5287 = vadd.f32 0.0, %v5286
          %5288 = vmatmul.f32.gmra.mxu0 %v3936
          %v5289 = vpop.f32.mrf.mxu0
          %v5290 = vadd.f32 0.0, %v5289
          %5291 = vmatmul.f32.gmra.mxu0 %v3939
          %v5292 = vpop.f32.mrf.mxu0
          %5293 = vmatmul.f32.gmra.mxu0 %v3942
          %v5294 = vpop.f32.mrf.mxu0
          %v5295 = vadd.f32 0.0, %v5294
          %5296 = vmatmul.f32.gmra.mxu0 %v3945
          %v5297 = vpop.f32.mrf.mxu0
          %v5298 = vadd.f32 0.0, %v5297
          %5299 = vmatmul.f32.gmra.mxu0 %v3948
          %v5300 = vpop.f32.mrf.mxu0
          %5301 = vmatmul.f32.gmra.mxu0 %v3951
          %v5302 = vpop.f32.mrf.mxu0
          %v5303 = vadd.f32 0.0, %v5302
          %5304 = vmatmul.f32.gmra.mxu0 %v3954
          %v5305 = vpop.f32.mrf.mxu0
          %v5306 = vadd.f32 0.0, %v5305
          %5307 = vmatmul.f32.gmra.mxu0 %v3957
          %v5308 = vpop.f32.mrf.mxu0
          %5309 = vmatmul.f32.gmra.mxu0 %v3960
          %v5310 = vpop.f32.mrf.mxu0
          %v5311 = vadd.f32 0.0, %v5310
          %5312 = vmatmul.f32.gmra.mxu0 %v3963
          %v5313 = vpop.f32.mrf.mxu0
          %v5314 = vadd.f32 0.0, %v5313
          %5315 = vmatmul.f32.gmra.mxu0 %v3966
          %v5316 = vpop.f32.mrf.mxu0
          %5317 = vmatmul.f32.gmra.mxu0 %v3969
          %v5318 = vpop.f32.mrf.mxu0
          %v5319 = vadd.f32 0.0, %v5318
          %5320 = vmatmul.f32.gmra.mxu0 %v3972
          %v5321 = vpop.f32.mrf.mxu0
          %v5322 = vadd.f32 0.0, %v5321
          %5323 = vmatmul.f32.gmra.mxu0 %v3975
          %v5324 = vpop.f32.mrf.mxu0
          %5325 = vmatmul.f32.gmra.mxu0 %v3978
          %v5326 = vpop.f32.mrf.mxu0
          %v5327 = vadd.f32 0.0, %v5326
          %5328 = vmatmul.f32.gmra.mxu0 %v3981
          %v5329 = vpop.f32.mrf.mxu0
          %v5330 = vadd.f32 0.0, %v5329
          %5331 = vmatmul.f32.gmra.mxu0 %v3984
          %v5332 = vpop.f32.mrf.mxu0
          %5333 = vmatmul.f32.gmra.mxu0 %v3987
          %v5334 = vpop.f32.mrf.mxu0
          %v5335 = vadd.f32 0.0, %v5334
          %5336 = vmatmul.f32.gmra.mxu0 %v3990
          %v5337 = vpop.f32.mrf.mxu0
          %v5338 = vadd.f32 0.0, %v5337
          %5339 = vmatmul.f32.gmra.mxu0 %v3993
          %v5340 = vpop.f32.mrf.mxu0
          %5341 = vmatmul.f32.gmra.mxu0 %v3996
          %v5342 = vpop.f32.mrf.mxu0
          %v5343 = vadd.f32 0.0, %v5342
          %5344 = vmatmul.f32.gmra.mxu0 %v3999
          %v5345 = vpop.f32.mrf.mxu0
          %v5346 = vadd.f32 0.0, %v5345
          %5347 = vmatmul.f32.gmra.mxu0 %v4002
          %v5348 = vpop.f32.mrf.mxu0
          %5349 = vmatmul.f32.gmra.mxu0 %v4005
          %v5350 = vpop.f32.mrf.mxu0
          %v5351 = vadd.f32 0.0, %v5350
          %5352 = vmatmul.f32.gmra.mxu0 %v4008
          %v5353 = vpop.f32.mrf.mxu0
          %v5354 = vadd.f32 0.0, %v5353
          %5355 = vmatmul.f32.gmra.mxu0 %v4011
          %v5356 = vpop.f32.mrf.mxu0
          %5357 = vmatmul.f32.gmra.mxu0 %v4014
          %v5358 = vpop.f32.mrf.mxu0
          %v5359 = vadd.f32 0.0, %v5358
          %5360 = vmatmul.f32.gmra.mxu0 %v4017
          %v5361 = vpop.f32.mrf.mxu0
          %v5362 = vadd.f32 0.0, %v5361
          %5363 = vmatmul.f32.gmra.mxu0 %v4020
          %v5364 = vpop.f32.mrf.mxu0
          %5365 = vmatmul.f32.gmra.mxu0 %v4023
          %v5366 = vpop.f32.mrf.mxu0
          %v5367 = vadd.f32 0.0, %v5366
          %5368 = vmatmul.f32.gmra.mxu0 %v4026
          %v5369 = vpop.f32.mrf.mxu0
          %v5370 = vadd.f32 0.0, %v5369
          %5371 = vmatmul.f32.gmra.mxu0 %v4029
          %v5372 = vpop.f32.mrf.mxu0
          %5373 = vmatmul.f32.gmra.mxu0 %v4032
          %v5374 = vpop.f32.mrf.mxu0
          %v5375 = vadd.f32 0.0, %v5374
          %5376 = vmatmul.f32.gmra.mxu0 %v4035
          %v5377 = vpop.f32.mrf.mxu0
          %v5378 = vadd.f32 0.0, %v5377
          %5379 = vmatmul.f32.gmra.mxu0 %v4038
          %v5380 = vpop.f32.mrf.mxu0
          %5381 = vmatmul.f32.gmra.mxu0 %v4041
          %v5382 = vpop.f32.mrf.mxu0
          %v5383 = vadd.f32 0.0, %v5382
          %5384 = vmatmul.f32.gmra.mxu0 %v4044
          %v5385 = vpop.f32.mrf.mxu0
          %v5386 = vadd.f32 0.0, %v5385
          %5387 = vmatmul.f32.gmra.mxu0 %v4047
          %v5388 = vpop.f32.mrf.mxu0
          %5389 = vmatmul.f32.gmra.mxu0 %v4050
          %v5390 = vpop.f32.mrf.mxu0
          %v5391 = vadd.f32 0.0, %v5390
          %5392 = vmatmul.f32.gmra.mxu0 %v4053
          %v5393 = vpop.f32.mrf.mxu0
          %v5394 = vadd.f32 0.0, %v5393
          %5395 = vmatmul.f32.gmra.mxu0 %v4056
          %v5396 = vpop.f32.mrf.mxu0
          %5397 = vmatmul.f32.gmra.mxu0 %v4059
          %v5398 = vpop.f32.mrf.mxu0
          %v5399 = vadd.f32 0.0, %v5398
          %5400 = vmatmul.f32.gmra.mxu0 %v4062
          %v5401 = vpop.f32.mrf.mxu0
          %v5402 = vadd.f32 0.0, %v5401
          %5403 = vmatmul.f32.gmra.mxu0 %v4065
          %v5404 = vpop.f32.mrf.mxu0
          %5405 = vmatmul.f32.gmra.mxu0 %v3906
          %v5406 = vpop.f32.mrf.mxu0
          %5407 = vmatmul.f32.gmra.mxu0 %v3909
          %v5408 = vpop.f32.mrf.mxu0
          %5409 = vmatmul.f32.gmra.mxu0 %v3912
          %v5410 = vpop.f32.mrf.mxu0
          %5411 = vmatmul.f32.gmra.mxu0 %v3915
          %v5412 = vpop.f32.mrf.mxu0
          %5413 = vmatmul.f32.gmra.mxu0 %v3918
          %v5414 = vpop.f32.mrf.mxu0
          %5415 = vmatmul.f32.gmra.mxu0 %v3921
          %v5416 = vpop.f32.mrf.mxu0
          %5417 = vdwg.mxu0
          %v5418 = vadd.f32 %v5219, %v5279
          %v5419 = vadd.f32 %v5220, %v5282
          %v5420 = vadd.f32 %v5221, %v5287
          %v5421 = vadd.f32 %v5222, %v5290
          %v5422 = vadd.f32 %v5223, %v5295
          %v5423 = vadd.f32 %v5224, %v5298
          %v5424 = vadd.f32 %v5225, %v5303
          %v5425 = vadd.f32 %v5226, %v5306
          %v5426 = vadd.f32 %v5227, %v5311
          %v5427 = vadd.f32 %v5228, %v5314
          %v5428 = vadd.f32 %v5229, %v5319
          %v5429 = vadd.f32 %v5230, %v5322
          %v5430 = vadd.f32 %v5231, %v5327
          %v5431 = vadd.f32 %v5232, %v5330
          %v5432 = vadd.f32 %v5233, %v5335
          %v5433 = vadd.f32 %v5234, %v5338
          %v5434 = vadd.f32 %v5235, %v5343
          %v5435 = vadd.f32 %v5236, %v5346
          %v5436 = vadd.f32 %v5237, %v5351
          %v5437 = vadd.f32 %v5238, %v5354
          %v5438 = vadd.f32 %v5239, %v5359
          %v5439 = vadd.f32 %v5240, %v5362
          %v5440 = vadd.f32 %v5241, %v5367
          %v5441 = vadd.f32 %v5242, %v5370
          %v5442 = vadd.f32 %v5243, %v5375
          %v5443 = vadd.f32 %v5244, %v5378
          %v5444 = vadd.f32 %v5245, %v5383
          %v5445 = vadd.f32 %v5246, %v5386
          %v5446 = vadd.f32 %v5247, %v5391
          %v5447 = vadd.f32 %v5248, %v5394
          %v5448 = vadd.f32 %v5249, %v5399
          %v5449 = vadd.f32 %v5250, %v5402
          %s5450 = scalar_lea.vmem [#allocation5], %s3020
          %v5451 = vld [vmem:[%s5450] sm:$0x1]
          %v5453 = vperm.slane %v5451, 0
          %v5455 = vadd.f32 %v5418, %v5453
          %v5456 = vadd.f32 %v5419, %v5453
          %v5457 = vadd.f32 %v5420, %v5453
          %v5458 = vadd.f32 %v5421, %v5453
          %v5459 = vadd.f32 %v5422, %v5453
          %v5460 = vadd.f32 %v5423, %v5453
          %v5461 = vadd.f32 %v5424, %v5453
          %v5462 = vadd.f32 %v5425, %v5453
          %v5463 = vadd.f32 %v5426, %v5453
          %v5464 = vadd.f32 %v5427, %v5453
          %v5465 = vadd.f32 %v5428, %v5453
          %v5466 = vadd.f32 %v5429, %v5453
          %v5467 = vadd.f32 %v5430, %v5453
          %v5468 = vadd.f32 %v5431, %v5453
          %v5469 = vadd.f32 %v5432, %v5453
          %v5470 = vadd.f32 %v5433, %v5453
          %v5471 = vadd.f32 %v5434, %v5453
          %v5472 = vadd.f32 %v5435, %v5453
          %v5473 = vadd.f32 %v5436, %v5453
          %v5474 = vadd.f32 %v5437, %v5453
          %v5475 = vadd.f32 %v5438, %v5453
          %v5476 = vadd.f32 %v5439, %v5453
          %v5477 = vadd.f32 %v5440, %v5453
          %v5478 = vadd.f32 %v5441, %v5453
          %v5479 = vadd.f32 %v5442, %v5453
          %v5480 = vadd.f32 %v5443, %v5453
          %v5481 = vadd.f32 %v5444, %v5453
          %v5482 = vadd.f32 %v5445, %v5453
          %v5483 = vadd.f32 %v5446, %v5453
          %v5484 = vadd.f32 %v5447, %v5453
          %v5485 = vadd.f32 %v5448, %v5453
          %v5486 = vadd.f32 %v5449, %v5453
          %v5487 = vmax.f32 %v5455, 0.0
          %v5488 = vmax.f32 %v5456, 0.0
          %v5489 = vmax.f32 %v5457, 0.0
          %v5490 = vmax.f32 %v5458, 0.0
          %v5491 = vmax.f32 %v5459, 0.0
          %v5492 = vmax.f32 %v5460, 0.0
          %v5493 = vmax.f32 %v5461, 0.0
          %v5494 = vmax.f32 %v5462, 0.0
          %v5495 = vmax.f32 %v5463, 0.0
          %v5496 = vmax.f32 %v5464, 0.0
          %v5497 = vmax.f32 %v5465, 0.0
          %v5498 = vmax.f32 %v5466, 0.0
          %v5499 = vmax.f32 %v5467, 0.0
          %v5500 = vmax.f32 %v5468, 0.0
          %v5501 = vmax.f32 %v5469, 0.0
          %v5502 = vmax.f32 %v5470, 0.0
          %v5503 = vmax.f32 %v5471, 0.0
          %v5504 = vmax.f32 %v5472, 0.0
          %v5505 = vmax.f32 %v5473, 0.0
          %v5506 = vmax.f32 %v5474, 0.0
          %v5507 = vmax.f32 %v5475, 0.0
          %v5508 = vmax.f32 %v5476, 0.0
          %v5509 = vmax.f32 %v5477, 0.0
          %v5510 = vmax.f32 %v5478, 0.0
          %v5511 = vmax.f32 %v5479, 0.0
          %v5512 = vmax.f32 %v5480, 0.0
          %v5513 = vmax.f32 %v5481, 0.0
          %v5514 = vmax.f32 %v5482, 0.0
          %v5515 = vmax.f32 %v5483, 0.0
          %v5516 = vmax.f32 %v5484, 0.0
          %v5517 = vmax.f32 %v5485, 0.0
          %v5518 = vmax.f32 %v5486, 0.0
          %5519 = vst.msk [vmem:[%s346 + $0x1] sm:$0xff] %vm205, %v5487
          %5520 = vst.msk [vmem:[%s346 + $0x9] sm:$0xff] %vm205, %v5488
          %5521 = vst.msk [vmem:[%s346 + $0x19] sm:$0xff] %vm205, %v5489
          %5522 = vst.msk [vmem:[%s346 + $0x21] sm:$0xff] %vm205, %v5490
          %5523 = vst.msk [vmem:[%s346 + $0x31] sm:$0xff] %vm205, %v5491
          %5524 = vst.msk [vmem:[%s346 + $0x39] sm:$0xff] %vm205, %v5492
          %5525 = vst.msk [vmem:[%s346 + $0x49] sm:$0xff] %vm205, %v5493
          %5526 = vst.msk [vmem:[%s346 + $0x51] sm:$0xff] %vm205, %v5494
          %5527 = vst.msk [vmem:[%s346 + $0x61] sm:$0xff] %vm205, %v5495
          %5528 = vst.msk [vmem:[%s346 + $0x69] sm:$0xff] %vm205, %v5496
          %5529 = vst.msk [vmem:[%s346 + $0x79] sm:$0xff] %vm205, %v5497
          %5530 = vst.msk [vmem:[%s346 + $0x81] sm:$0xff] %vm205, %v5498
          %5531 = vst.msk [vmem:[%s346 + $0x91] sm:$0xff] %vm205, %v5499
          %5532 = vst.msk [vmem:[%s346 + $0x99] sm:$0xff] %vm205, %v5500
          %5533 = vst.msk [vmem:[%s346 + $0xa9] sm:$0xff] %vm205, %v5501
          %5534 = vst.msk [vmem:[%s346 + $0xb1] sm:$0xff] %vm205, %v5502
          %5535 = vst.msk [vmem:[%s346 + $0xc1] sm:$0xff] %vm205, %v5503
          %5536 = vst.msk [vmem:[%s346 + $0xc9] sm:$0xff] %vm205, %v5504
          %5537 = vst.msk [vmem:[%s346 + $0xd9] sm:$0xff] %vm205, %v5505
          %5538 = vst.msk [vmem:[%s346 + $0xe1] sm:$0xff] %vm205, %v5506
          %5539 = vst.msk [vmem:[%s346 + $0xf1] sm:$0xff] %vm205, %v5507
          %5540 = vst.msk [vmem:[%s346 + $0xf9] sm:$0xff] %vm205, %v5508
          %5541 = vst.msk [vmem:[%s346 + $0x109] sm:$0xff] %vm205, %v5509
          %5542 = vst.msk [vmem:[%s346 + $0x111] sm:$0xff] %vm205, %v5510
          %5543 = vst.msk [vmem:[%s346 + $0x121] sm:$0xff] %vm205, %v5511
          %5544 = vst.msk [vmem:[%s346 + $0x129] sm:$0xff] %vm205, %v5512
          %5545 = vst.msk [vmem:[%s346 + $0x139] sm:$0xff] %vm205, %v5513
          %5546 = vst.msk [vmem:[%s346 + $0x141] sm:$0xff] %vm205, %v5514
          %5547 = vst.msk [vmem:[%s346 + $0x151] sm:$0xff] %vm205, %v5515
          %5548 = vst.msk [vmem:[%s346 + $0x159] sm:$0xff] %vm205, %v5516
          %5549 = vst.msk [vmem:[%s346 + $0x169] sm:$0xff] %vm205, %v5517
          %5550 = vst.msk [vmem:[%s346 + $0x171] sm:$0xff] %vm205, %v5518
          %v5551 = vld [vmem:[#allocation2] sm:$0xff]
          %v5552 = vld [vmem:[#allocation2 + $0x8] sm:$0xff]
          %v5553 = vld [vmem:[#allocation2 + $0x10] sm:$0xff]
          %v5554 = vld [vmem:[#allocation2 + $0x18] sm:$0xff]
          %v5555 = vld [vmem:[#allocation2 + $0x20] sm:$0xff]
          %v5556 = vld [vmem:[#allocation2 + $0x28] sm:$0xff]
          %v5557 = vld [vmem:[#allocation2 + $0x30] sm:$0xff]
          %v5558 = vld [vmem:[#allocation2 + $0x38] sm:$0xff]
          %v5559 = vld [vmem:[#allocation2 + $0x40] sm:$0xff]
          %v5560 = vld [vmem:[#allocation2 + $0x48] sm:$0xff]
          %v5561 = vld [vmem:[#allocation2 + $0x50] sm:$0xff]
          %v5562 = vld [vmem:[#allocation2 + $0x58] sm:$0xff]
          %v5563 = vld [vmem:[#allocation2 + $0x60] sm:$0xff]
          %v5564 = vld [vmem:[#allocation2 + $0x68] sm:$0xff]
          %v5565 = vld [vmem:[#allocation2 + $0x70] sm:$0xff]
          %v5566 = vld [vmem:[#allocation2 + $0x78] sm:$0xff]
          %v5567 = vld [vmem:[#allocation2 + $0x80] sm:$0xff]
          %v5568 = vld [vmem:[#allocation2 + $0x88] sm:$0xff]
          %v5569 = vld [vmem:[#allocation2 + $0x90] sm:$0xff]
          %v5570 = vld [vmem:[#allocation2 + $0x98] sm:$0xff]
          %v5571 = vld [vmem:[#allocation2 + $0xa0] sm:$0xff]
          %v5572 = vld [vmem:[#allocation2 + $0xa8] sm:$0xff]
          %v5573 = vld [vmem:[#allocation2 + $0xb0] sm:$0xff]
          %v5574 = vld [vmem:[#allocation2 + $0xb8] sm:$0xff]
          %v5575 = vld [vmem:[#allocation2 + $0xc0] sm:$0xff]
          %v5576 = vld [vmem:[#allocation2 + $0xc8] sm:$0xff]
          %v5577 = vld [vmem:[#allocation2 + $0xd0] sm:$0xff]
          %v5578 = vld [vmem:[#allocation2 + $0xd8] sm:$0xff]
          %v5579 = vld [vmem:[#allocation2 + $0xe0] sm:$0xff]
          %v5580 = vld [vmem:[#allocation2 + $0xe8] sm:$0xff]
          %v5581 = vld [vmem:[#allocation2 + $0xf0] sm:$0xff]
          %v5582 = vld [vmem:[#allocation2 + $0xf8] sm:$0xff]
          %v5583 = vld [vmem:[#allocation2 + $0x100] sm:$0xff]
          %v5584 = vld [vmem:[#allocation2 + $0x108] sm:$0xff]
          %v5585 = vld [vmem:[#allocation2 + $0x110] sm:$0xff]
          %v5586 = vld [vmem:[#allocation2 + $0x118] sm:$0xff]
          %v5587 = vld [vmem:[#allocation2 + $0x120] sm:$0xff]
          %v5588 = vld [vmem:[#allocation2 + $0x128] sm:$0xff]
          %v5589 = vld [vmem:[#allocation2 + $0x130] sm:$0xff]
          %v5590 = vld [vmem:[#allocation2 + $0x138] sm:$0xff]
          %v5591 = vld [vmem:[#allocation2 + $0x140] sm:$0xff]
          %v5592 = vld [vmem:[#allocation2 + $0x148] sm:$0xff]
          %v5593 = vld [vmem:[#allocation2 + $0x150] sm:$0xff]
          %v5594 = vld [vmem:[#allocation2 + $0x158] sm:$0xff]
          %v5595 = vld [vmem:[#allocation2 + $0x160] sm:$0xff]
          %v5596 = vld [vmem:[#allocation2 + $0x168] sm:$0xff]
          %v5597 = vld [vmem:[#allocation2 + $0x170] sm:$0xff]
          %v5598 = vld [vmem:[#allocation2 + $0x178] sm:$0xff]
          %v5599 = vld [vmem:[#allocation2 + $0x180] sm:$0xff]
          %v5600 = vld [vmem:[#allocation2 + $0x188] sm:$0xff]
          %v5601 = vld [vmem:[#allocation2 + $0x190] sm:$0xff]
          %v5602 = vld [vmem:[#allocation2 + $0x198] sm:$0xff]
          %v5603 = vld [vmem:[#allocation2 + $0x1a0] sm:$0xff]
          %v5604 = vld [vmem:[#allocation2 + $0x1a8] sm:$0xff]
          %s5605 = sadd.s32 %s3019, 2
          %s5606 = smul.u32 %s5605, 576
          %s5607 = scalar_lea.vmem [#allocation3], %s5606
          %v5608 = vld [vmem:[%s5607] sm:$0xff]
          %v5609 = vld [vmem:[%s5607 + $0x8] sm:$0xff]
          %v5610 = vld [vmem:[%s5607 + $0x10] sm:$0xff]
          %v5611 = vld [vmem:[%s5607 + $0x18] sm:$0xff]
          %v5612 = vld [vmem:[%s5607 + $0x20] sm:$0xff]
          %v5613 = vld [vmem:[%s5607 + $0x28] sm:$0xff]
          %v5614 = vld [vmem:[%s5607 + $0x30] sm:$0xff]
          %v5615 = vld [vmem:[%s5607 + $0x38] sm:$0xff]
          %v5616 = vrot.slane %v5551, 1
          %v5617 = vrot.slane %v5552, 1
          %v5618 = vrot.slane %v5553, 1
          %v5619 = vrot.slane %v5554, 1
          %v5620 = vrot.slane %v5555, 1
          %v5621 = vrot.slane %v5556, 1
          %v5622 = vrot.slane %v5557, 1
          %v5623 = vrot.slane %v5558, 1
          %v5624 = vrot.slane %v5559, 1
          %v5625 = vrot.slane %v5560, 1
          %v5626 = vrot.slane %v5561, 1
          %v5627 = vrot.slane %v5562, 1
          %v5628 = vrot.slane %v5563, 1
          %v5629 = vrot.slane %v5564, 1
          %v5630 = vrot.slane %v5565, 1
          %v5631 = vrot.slane %v5566, 1
          %v5632 = vrot.slane %v5567, 1
          %v5633 = vrot.slane %v5568, 1
          %v5634 = vrot.slane %v5569, 1
          %v5635 = vrot.slane %v5570, 1
          %v5636 = vrot.slane %v5571, 1
          %v5637 = vrot.slane %v5572, 1
          %v5638 = vrot.slane %v5573, 1
          %v5639 = vrot.slane %v5574, 1
          %v5640 = vrot.slane %v5575, 1
          %v5641 = vrot.slane %v5576, 1
          %v5642 = vrot.slane %v5577, 1
          %v5643 = vrot.slane %v5578, 1
          %v5644 = vrot.slane %v5579, 1
          %v5645 = vrot.slane %v5580, 1
          %v5646 = vrot.slane %v5581, 1
          %v5647 = vrot.slane %v5582, 1
          %v5648 = vrot.slane %v5583, 1
          %v5649 = vrot.slane %v5584, 1
          %v5650 = vrot.slane %v5585, 1
          %v5651 = vrot.slane %v5586, 1
          %v5652 = vrot.slane %v5587, 1
          %v5653 = vrot.slane %v5588, 1
          %v5654 = vrot.slane %v5589, 1
          %v5655 = vrot.slane %v5590, 1
          %v5656 = vrot.slane %v5591, 1
          %v5657 = vrot.slane %v5592, 1
          %v5658 = vrot.slane %v5593, 1
          %v5659 = vrot.slane %v5594, 1
          %v5660 = vrot.slane %v5595, 1
          %v5661 = vrot.slane %v5596, 1
          %v5662 = vrot.slane %v5597, 1
          %v5663 = vrot.slane %v5598, 1
          %v5664 = vrot.slane %v5599, 1
          %v5665 = vrot.slane %v5600, 1
          %v5666 = vrot.slane %v5601, 1
          %v5667 = vrot.slane %v5602, 1
          %v5668 = vrot.slane %v5603, 1
          %v5669 = vrot.slane %v5604, 1
          %v5670 = vsel %vm498, %v5668, %v5669
          %v5671 = vsel %vm498, %v5667, %v5668
          %v5672 = vsel %vm498, %v5666, %v5667
          %v5673 = vsel %vm498, %v5665, %v5666
          %v5674 = vsel %vm498, %v5664, %v5665
          %v5675 = vsel %vm498, %v5663, %v5664
          %v5676 = vsel %vm498, %v5662, %v5663
          %v5677 = vsel %vm498, %v5661, %v5662
          %v5678 = vsel %vm498, %v5660, %v5661
          %v5679 = vsel %vm498, %v5659, %v5660
          %v5680 = vsel %vm498, %v5658, %v5659
          %v5681 = vsel %vm498, %v5657, %v5658
          %v5682 = vsel %vm498, %v5656, %v5657
          %v5683 = vsel %vm498, %v5655, %v5656
          %v5684 = vsel %vm498, %v5654, %v5655
          %v5685 = vsel %vm498, %v5653, %v5654
          %v5686 = vsel %vm498, %v5652, %v5653
          %v5687 = vsel %vm498, %v5651, %v5652
          %v5688 = vsel %vm498, %v5650, %v5651
          %v5689 = vsel %vm498, %v5649, %v5650
          %v5690 = vsel %vm498, %v5648, %v5649
          %v5691 = vsel %vm498, %v5647, %v5648
          %v5692 = vsel %vm498, %v5646, %v5647
          %v5693 = vsel %vm498, %v5645, %v5646
          %v5694 = vsel %vm498, %v5644, %v5645
          %v5695 = vsel %vm498, %v5643, %v5644
          %v5696 = vsel %vm498, %v5642, %v5643
          %v5697 = vsel %vm498, %v5641, %v5642
          %v5698 = vsel %vm498, %v5640, %v5641
          %v5699 = vsel %vm498, %v5639, %v5640
          %v5700 = vsel %vm498, %v5638, %v5639
          %v5701 = vsel %vm498, %v5637, %v5638
          %v5702 = vsel %vm498, %v5636, %v5637
          %v5703 = vsel %vm498, %v5635, %v5636
          %v5704 = vsel %vm498, %v5634, %v5635
          %v5705 = vsel %vm498, %v5633, %v5634
          %v5706 = vsel %vm498, %v5632, %v5633
          %v5707 = vsel %vm498, %v5631, %v5632
          %v5708 = vsel %vm498, %v5630, %v5631
          %v5709 = vsel %vm498, %v5629, %v5630
          %v5710 = vsel %vm498, %v5628, %v5629
          %v5711 = vsel %vm498, %v5627, %v5628
          %v5712 = vsel %vm498, %v5626, %v5627
          %v5713 = vsel %vm498, %v5625, %v5626
          %v5714 = vsel %vm498, %v5624, %v5625
          %v5715 = vsel %vm498, %v5623, %v5624
          %v5716 = vsel %vm498, %v5622, %v5623
          %v5717 = vsel %vm498, %v5621, %v5622
          %v5718 = vsel %vm498, %v5620, %v5621
          %v5719 = vsel %vm498, %v5619, %v5620
          %v5720 = vsel %vm498, %v5618, %v5619
          %v5721 = vsel %vm498, %v5617, %v5618
          %v5722 = vsel %vm498, %v5616, %v5617
          %v5723 = vsel %vm498, %v5669, %v5616
          %s5724 = sadd.s32 64, %s5606
          %s5725 = scalar_lea.vmem [#allocation3], %s5724
          %v5726 = vld [vmem:[%s5725] sm:$0xff]
          %v5727 = vld [vmem:[%s5725 + $0x8] sm:$0xff]
          %v5728 = vld [vmem:[%s5725 + $0x10] sm:$0xff]
          %v5729 = vld [vmem:[%s5725 + $0x18] sm:$0xff]
          %v5730 = vld [vmem:[%s5725 + $0x20] sm:$0xff]
          %v5731 = vld [vmem:[%s5725 + $0x28] sm:$0xff]
          %v5732 = vld [vmem:[%s5725 + $0x30] sm:$0xff]
          %v5733 = vld [vmem:[%s5725 + $0x38] sm:$0xff]
          %v5735 = vsel %vm205, %v5722, 0
          %v5738 = vsel %vm205, %v5721, 0
          %v5741 = vsel %vm205, %v5720, 0
          %v5744 = vsel %vm205, %v5719, 0
          %v5747 = vsel %vm205, %v5718, 0
          %v5750 = vsel %vm205, %v5717, 0
          %v5753 = vsel %vm205, %v5716, 0
          %v5756 = vsel %vm205, %v5715, 0
          %v5759 = vsel %vm205, %v5714, 0
          %v5762 = vsel %vm205, %v5713, 0
          %v5765 = vsel %vm205, %v5712, 0
          %v5768 = vsel %vm205, %v5711, 0
          %v5771 = vsel %vm205, %v5710, 0
          %v5774 = vsel %vm205, %v5709, 0
          %v5777 = vsel %vm205, %v5708, 0
          %v5780 = vsel %vm205, %v5707, 0
          %v5783 = vsel %vm205, %v5706, 0
          %v5786 = vsel %vm205, %v5705, 0
          %v5789 = vsel %vm205, %v5704, 0
          %v5792 = vsel %vm205, %v5703, 0
          %v5795 = vsel %vm205, %v5702, 0
          %v5798 = vsel %vm205, %v5701, 0
          %v5801 = vsel %vm205, %v5700, 0
          %v5804 = vsel %vm205, %v5699, 0
          %v5807 = vsel %vm205, %v5698, 0
          %v5810 = vsel %vm205, %v5697, 0
          %v5813 = vsel %vm205, %v5696, 0
          %v5816 = vsel %vm205, %v5695, 0
          %v5819 = vsel %vm205, %v5694, 0
          %v5822 = vsel %vm205, %v5693, 0
          %v5825 = vsel %vm205, %v5692, 0
          %v5828 = vsel %vm205, %v5691, 0
          %v5831 = vsel %vm205, %v5690, 0
          %v5834 = vsel %vm205, %v5689, 0
          %v5837 = vsel %vm205, %v5688, 0
          %v5840 = vsel %vm205, %v5687, 0
          %v5843 = vsel %vm205, %v5686, 0
          %v5846 = vsel %vm205, %v5685, 0
          %v5849 = vsel %vm205, %v5684, 0
          %v5852 = vsel %vm205, %v5683, 0
          %v5855 = vsel %vm205, %v5682, 0
          %v5858 = vsel %vm205, %v5681, 0
          %v5861 = vsel %vm205, %v5680, 0
          %v5864 = vsel %vm205, %v5679, 0
          %v5867 = vsel %vm205, %v5678, 0
          %v5870 = vsel %vm205, %v5677, 0
          %v5873 = vsel %vm205, %v5676, 0
          %v5876 = vsel %vm205, %v5675, 0
          %v5879 = vsel %vm205, %v5674, 0
          %v5882 = vsel %vm205, %v5673, 0
          %v5885 = vsel %vm205, %v5672, 0
          %v5888 = vsel %vm205, %v5671, 0
          %v5891 = vsel %vm205, %v5670, 0
          %v5894 = vsel %vm205, %v5723, 0
          %5896 = vmatpush.msra.mxu0 0.0
          %5897 = vmatpush.msra.mxu0 0.0
          %5898 = vmatpush.msra.mxu0 0.0
          %5899 = vmatpush.msra.mxu0 0.0
          %5900 = vmatpush.msra.mxu0 0.0
          %5901 = vmatpush.msra.mxu0 0.0
          %5902 = vmatpush.msra.mxu0 0.0
          %5903 = vmatpush.msra.mxu0 0.0
          %5904 = vmatpush.msra.mxu0 %v5733
          %5905 = vmatpush.msra.mxu0 %v5732
          %5906 = vmatpush.msra.mxu0 %v5731
          %5907 = vmatpush.msra.mxu0 %v5730
          %5908 = vmatpush.msra.mxu0 %v5729
          %5909 = vmatpush.msra.mxu0 %v5728
          %5910 = vmatpush.msra.mxu0 %v5727
          %5911 = vmatpush.msra.mxu0 %v5726
          %5912 = vmatmul.f32.gmra.mxu0 %v5735
          %v5913 = vpop.f32.mrf.mxu0
          %v5914 = vadd.f32 0.0, %v5913
          %5915 = vmatmul.f32.gmra.mxu0 %v5738
          %v5916 = vpop.f32.mrf.mxu0
          %v5917 = vadd.f32 0.0, %v5916
          %5918 = vmatmul.f32.gmra.mxu0 %v5741
          %v5919 = vpop.f32.mrf.mxu0
          %5920 = vmatmul.f32.gmra.mxu0 %v5744
          %v5921 = vpop.f32.mrf.mxu0
          %v5922 = vadd.f32 0.0, %v5921
          %5923 = vmatmul.f32.gmra.mxu0 %v5747
          %v5924 = vpop.f32.mrf.mxu0
          %v5925 = vadd.f32 0.0, %v5924
          %5926 = vmatmul.f32.gmra.mxu0 %v5750
          %v5927 = vpop.f32.mrf.mxu0
          %5928 = vmatmul.f32.gmra.mxu0 %v5753
          %v5929 = vpop.f32.mrf.mxu0
          %v5930 = vadd.f32 0.0, %v5929
          %5931 = vmatmul.f32.gmra.mxu0 %v5756
          %v5932 = vpop.f32.mrf.mxu0
          %v5933 = vadd.f32 0.0, %v5932
          %5934 = vmatmul.f32.gmra.mxu0 %v5759
          %v5935 = vpop.f32.mrf.mxu0
          %5936 = vmatmul.f32.gmra.mxu0 %v5762
          %v5937 = vpop.f32.mrf.mxu0
          %v5938 = vadd.f32 0.0, %v5937
          %5939 = vmatmul.f32.gmra.mxu0 %v5765
          %v5940 = vpop.f32.mrf.mxu0
          %v5941 = vadd.f32 0.0, %v5940
          %5942 = vmatmul.f32.gmra.mxu0 %v5768
          %v5943 = vpop.f32.mrf.mxu0
          %5944 = vmatmul.f32.gmra.mxu0 %v5771
          %v5945 = vpop.f32.mrf.mxu0
          %v5946 = vadd.f32 0.0, %v5945
          %5947 = vmatmul.f32.gmra.mxu0 %v5774
          %v5948 = vpop.f32.mrf.mxu0
          %v5949 = vadd.f32 0.0, %v5948
          %5950 = vmatmul.f32.gmra.mxu0 %v5777
          %v5951 = vpop.f32.mrf.mxu0
          %5952 = vmatmul.f32.gmra.mxu0 %v5780
          %v5953 = vpop.f32.mrf.mxu0
          %v5954 = vadd.f32 0.0, %v5953
          %5955 = vmatmul.f32.gmra.mxu0 %v5783
          %v5956 = vpop.f32.mrf.mxu0
          %v5957 = vadd.f32 0.0, %v5956
          %5958 = vmatmul.f32.gmra.mxu0 %v5786
          %v5959 = vpop.f32.mrf.mxu0
          %5960 = vmatmul.f32.gmra.mxu0 %v5789
          %v5961 = vpop.f32.mrf.mxu0
          %v5962 = vadd.f32 0.0, %v5961
          %5963 = vmatmul.f32.gmra.mxu0 %v5792
          %v5964 = vpop.f32.mrf.mxu0
          %v5965 = vadd.f32 0.0, %v5964
          %5966 = vmatmul.f32.gmra.mxu0 %v5795
          %v5967 = vpop.f32.mrf.mxu0
          %5968 = vmatmul.f32.gmra.mxu0 %v5798
          %v5969 = vpop.f32.mrf.mxu0
          %v5970 = vadd.f32 0.0, %v5969
          %5971 = vmatmul.f32.gmra.mxu0 %v5801
          %v5972 = vpop.f32.mrf.mxu0
          %v5973 = vadd.f32 0.0, %v5972
          %5974 = vmatmul.f32.gmra.mxu0 %v5804
          %v5975 = vpop.f32.mrf.mxu0
          %5976 = vmatmul.f32.gmra.mxu0 %v5807
          %v5977 = vpop.f32.mrf.mxu0
          %v5978 = vadd.f32 0.0, %v5977
          %5979 = vmatmul.f32.gmra.mxu0 %v5810
          %v5980 = vpop.f32.mrf.mxu0
          %v5981 = vadd.f32 0.0, %v5980
          %5982 = vmatmul.f32.gmra.mxu0 %v5813
          %v5983 = vpop.f32.mrf.mxu0
          %5984 = vmatmul.f32.gmra.mxu0 %v5816
          %v5985 = vpop.f32.mrf.mxu0
          %v5986 = vadd.f32 0.0, %v5985
          %5987 = vmatmul.f32.gmra.mxu0 %v5819
          %v5988 = vpop.f32.mrf.mxu0
          %v5989 = vadd.f32 0.0, %v5988
          %5990 = vmatmul.f32.gmra.mxu0 %v5822
          %v5991 = vpop.f32.mrf.mxu0
          %5992 = vmatmul.f32.gmra.mxu0 %v5825
          %v5993 = vpop.f32.mrf.mxu0
          %v5994 = vadd.f32 0.0, %v5993
          %5995 = vmatmul.f32.gmra.mxu0 %v5828
          %v5996 = vpop.f32.mrf.mxu0
          %v5997 = vadd.f32 0.0, %v5996
          %5998 = vmatmul.f32.gmra.mxu0 %v5831
          %v5999 = vpop.f32.mrf.mxu0
          %6000 = vmatmul.f32.gmra.mxu0 %v5834
          %v6001 = vpop.f32.mrf.mxu0
          %v6002 = vadd.f32 0.0, %v6001
          %6003 = vmatmul.f32.gmra.mxu0 %v5837
          %v6004 = vpop.f32.mrf.mxu0
          %v6005 = vadd.f32 0.0, %v6004
          %6006 = vmatmul.f32.gmra.mxu0 %v5840
          %v6007 = vpop.f32.mrf.mxu0
          %6008 = vmatmul.f32.gmra.mxu0 %v5843
          %v6009 = vpop.f32.mrf.mxu0
          %v6010 = vadd.f32 0.0, %v6009
          %6011 = vmatmul.f32.gmra.mxu0 %v5846
          %v6012 = vpop.f32.mrf.mxu0
          %v6013 = vadd.f32 0.0, %v6012
          %6014 = vmatmul.f32.gmra.mxu0 %v5849
          %v6015 = vpop.f32.mrf.mxu0
          %6016 = vmatmul.f32.gmra.mxu0 %v5852
          %v6017 = vpop.f32.mrf.mxu0
          %v6018 = vadd.f32 0.0, %v6017
          %6019 = vmatmul.f32.gmra.mxu0 %v5855
          %v6020 = vpop.f32.mrf.mxu0
          %v6021 = vadd.f32 0.0, %v6020
          %6022 = vmatmul.f32.gmra.mxu0 %v5858
          %v6023 = vpop.f32.mrf.mxu0
          %6024 = vmatmul.f32.gmra.mxu0 %v5861
          %v6025 = vpop.f32.mrf.mxu0
          %v6026 = vadd.f32 0.0, %v6025
          %6027 = vmatmul.f32.gmra.mxu0 %v5864
          %v6028 = vpop.f32.mrf.mxu0
          %v6029 = vadd.f32 0.0, %v6028
          %6030 = vmatmul.f32.gmra.mxu0 %v5867
          %v6031 = vpop.f32.mrf.mxu0
          %6032 = vmatmul.f32.gmra.mxu0 %v5870
          %v6033 = vpop.f32.mrf.mxu0
          %v6034 = vadd.f32 0.0, %v6033
          %6035 = vmatmul.f32.gmra.mxu0 %v5873
          %v6036 = vpop.f32.mrf.mxu0
          %v6037 = vadd.f32 0.0, %v6036
          %6038 = vmatmul.f32.gmra.mxu0 %v5876
          %v6039 = vpop.f32.mrf.mxu0
          %6040 = vmatmul.f32.gmra.mxu0 %v5879
          %v6041 = vpop.f32.mrf.mxu0
          %6042 = vmatmul.f32.gmra.mxu0 %v5882
          %v6043 = vpop.f32.mrf.mxu0
          %6044 = vmatmul.f32.gmra.mxu0 %v5885
          %v6045 = vpop.f32.mrf.mxu0
          %6046 = vmatmul.f32.gmra.mxu0 %v5888
          %v6047 = vpop.f32.mrf.mxu0
          %6048 = vmatmul.f32.gmra.mxu0 %v5891
          %v6049 = vpop.f32.mrf.mxu0
          %6050 = vmatmul.f32.gmra.mxu0 %v5894
          %v6051 = vpop.f32.mrf.mxu0
          %6052 = vdwg.mxu0
          %v6054 = vsel %vm205, %v5551, 0
          %v6057 = vsel %vm205, %v5552, 0
          %v6060 = vsel %vm205, %v5553, 0
          %v6063 = vsel %vm205, %v5554, 0
          %v6066 = vsel %vm205, %v5555, 0
          %v6069 = vsel %vm205, %v5556, 0
          %v6072 = vsel %vm205, %v5557, 0
          %v6075 = vsel %vm205, %v5558, 0
          %v6078 = vsel %vm205, %v5559, 0
          %v6081 = vsel %vm205, %v5560, 0
          %v6084 = vsel %vm205, %v5561, 0
          %v6087 = vsel %vm205, %v5562, 0
          %v6090 = vsel %vm205, %v5563, 0
          %v6093 = vsel %vm205, %v5564, 0
          %v6096 = vsel %vm205, %v5565, 0
          %v6099 = vsel %vm205, %v5566, 0
          %v6102 = vsel %vm205, %v5567, 0
          %v6105 = vsel %vm205, %v5568, 0
          %v6108 = vsel %vm205, %v5569, 0
          %v6111 = vsel %vm205, %v5570, 0
          %v6114 = vsel %vm205, %v5571, 0
          %v6117 = vsel %vm205, %v5572, 0
          %v6120 = vsel %vm205, %v5573, 0
          %v6123 = vsel %vm205, %v5574, 0
          %v6126 = vsel %vm205, %v5575, 0
          %v6129 = vsel %vm205, %v5576, 0
          %v6132 = vsel %vm205, %v5577, 0
          %v6135 = vsel %vm205, %v5578, 0
          %v6138 = vsel %vm205, %v5579, 0
          %v6141 = vsel %vm205, %v5580, 0
          %v6144 = vsel %vm205, %v5581, 0
          %v6147 = vsel %vm205, %v5582, 0
          %v6150 = vsel %vm205, %v5583, 0
          %v6153 = vsel %vm205, %v5584, 0
          %v6156 = vsel %vm205, %v5585, 0
          %v6159 = vsel %vm205, %v5586, 0
          %v6162 = vsel %vm205, %v5587, 0
          %v6165 = vsel %vm205, %v5588, 0
          %v6168 = vsel %vm205, %v5589, 0
          %v6171 = vsel %vm205, %v5590, 0
          %v6174 = vsel %vm205, %v5591, 0
          %v6177 = vsel %vm205, %v5592, 0
          %v6180 = vsel %vm205, %v5593, 0
          %v6183 = vsel %vm205, %v5594, 0
          %v6186 = vsel %vm205, %v5595, 0
          %v6189 = vsel %vm205, %v5596, 0
          %v6192 = vsel %vm205, %v5597, 0
          %v6195 = vsel %vm205, %v5598, 0
          %v6198 = vsel %vm205, %v5599, 0
          %v6201 = vsel %vm205, %v5600, 0
          %v6204 = vsel %vm205, %v5601, 0
          %v6207 = vsel %vm205, %v5602, 0
          %v6210 = vsel %vm205, %v5603, 0
          %v6213 = vsel %vm205, %v5604, 0
          %6215 = vmatpush.msra.mxu0 0.0
          %6216 = vmatpush.msra.mxu0 0.0
          %6217 = vmatpush.msra.mxu0 0.0
          %6218 = vmatpush.msra.mxu0 0.0
          %6219 = vmatpush.msra.mxu0 0.0
          %6220 = vmatpush.msra.mxu0 0.0
          %6221 = vmatpush.msra.mxu0 0.0
          %6222 = vmatpush.msra.mxu0 0.0
          %6223 = vmatpush.msra.mxu0 %v5615
          %6224 = vmatpush.msra.mxu0 %v5614
          %6225 = vmatpush.msra.mxu0 %v5613
          %6226 = vmatpush.msra.mxu0 %v5612
          %6227 = vmatpush.msra.mxu0 %v5611
          %6228 = vmatpush.msra.mxu0 %v5610
          %6229 = vmatpush.msra.mxu0 %v5609
          %6230 = vmatpush.msra.mxu0 %v5608
          %6231 = vmatmul.f32.gmra.mxu0 %v6054
          %v6232 = vpop.f32.mrf.mxu0
          %v6233 = vadd.f32 %v5914, %v6232
          %6234 = vmatmul.f32.gmra.mxu0 %v6057
          %v6235 = vpop.f32.mrf.mxu0
          %v6236 = vadd.f32 %v5917, %v6235
          %6237 = vmatmul.f32.gmra.mxu0 %v6060
          %v6238 = vpop.f32.mrf.mxu0
          %6239 = vmatmul.f32.gmra.mxu0 %v6063
          %v6240 = vpop.f32.mrf.mxu0
          %v6241 = vadd.f32 %v5922, %v6240
          %6242 = vmatmul.f32.gmra.mxu0 %v6066
          %v6243 = vpop.f32.mrf.mxu0
          %v6244 = vadd.f32 %v5925, %v6243
          %6245 = vmatmul.f32.gmra.mxu0 %v6069
          %v6246 = vpop.f32.mrf.mxu0
          %6247 = vmatmul.f32.gmra.mxu0 %v6072
          %v6248 = vpop.f32.mrf.mxu0
          %v6249 = vadd.f32 %v5930, %v6248
          %6250 = vmatmul.f32.gmra.mxu0 %v6075
          %v6251 = vpop.f32.mrf.mxu0
          %v6252 = vadd.f32 %v5933, %v6251
          %6253 = vmatmul.f32.gmra.mxu0 %v6078
          %v6254 = vpop.f32.mrf.mxu0
          %6255 = vmatmul.f32.gmra.mxu0 %v6081
          %v6256 = vpop.f32.mrf.mxu0
          %v6257 = vadd.f32 %v5938, %v6256
          %6258 = vmatmul.f32.gmra.mxu0 %v6084
          %v6259 = vpop.f32.mrf.mxu0
          %v6260 = vadd.f32 %v5941, %v6259
          %6261 = vmatmul.f32.gmra.mxu0 %v6087
          %v6262 = vpop.f32.mrf.mxu0
          %6263 = vmatmul.f32.gmra.mxu0 %v6090
          %v6264 = vpop.f32.mrf.mxu0
          %v6265 = vadd.f32 %v5946, %v6264
          %6266 = vmatmul.f32.gmra.mxu0 %v6093
          %v6267 = vpop.f32.mrf.mxu0
          %v6268 = vadd.f32 %v5949, %v6267
          %6269 = vmatmul.f32.gmra.mxu0 %v6096
          %v6270 = vpop.f32.mrf.mxu0
          %6271 = vmatmul.f32.gmra.mxu0 %v6099
          %v6272 = vpop.f32.mrf.mxu0
          %v6273 = vadd.f32 %v5954, %v6272
          %6274 = vmatmul.f32.gmra.mxu0 %v6102
          %v6275 = vpop.f32.mrf.mxu0
          %v6276 = vadd.f32 %v5957, %v6275
          %6277 = vmatmul.f32.gmra.mxu0 %v6105
          %v6278 = vpop.f32.mrf.mxu0
          %6279 = vmatmul.f32.gmra.mxu0 %v6108
          %v6280 = vpop.f32.mrf.mxu0
          %v6281 = vadd.f32 %v5962, %v6280
          %6282 = vmatmul.f32.gmra.mxu0 %v6111
          %v6283 = vpop.f32.mrf.mxu0
          %v6284 = vadd.f32 %v5965, %v6283
          %6285 = vmatmul.f32.gmra.mxu0 %v6114
          %v6286 = vpop.f32.mrf.mxu0
          %6287 = vmatmul.f32.gmra.mxu0 %v6117
          %v6288 = vpop.f32.mrf.mxu0
          %v6289 = vadd.f32 %v5970, %v6288
          %6290 = vmatmul.f32.gmra.mxu0 %v6120
          %v6291 = vpop.f32.mrf.mxu0
          %v6292 = vadd.f32 %v5973, %v6291
          %6293 = vmatmul.f32.gmra.mxu0 %v6123
          %v6294 = vpop.f32.mrf.mxu0
          %6295 = vmatmul.f32.gmra.mxu0 %v6126
          %v6296 = vpop.f32.mrf.mxu0
          %v6297 = vadd.f32 %v5978, %v6296
          %6298 = vmatmul.f32.gmra.mxu0 %v6129
          %v6299 = vpop.f32.mrf.mxu0
          %v6300 = vadd.f32 %v5981, %v6299
          %6301 = vmatmul.f32.gmra.mxu0 %v6132
          %v6302 = vpop.f32.mrf.mxu0
          %6303 = vmatmul.f32.gmra.mxu0 %v6135
          %v6304 = vpop.f32.mrf.mxu0
          %v6305 = vadd.f32 %v5986, %v6304
          %6306 = vmatmul.f32.gmra.mxu0 %v6138
          %v6307 = vpop.f32.mrf.mxu0
          %v6308 = vadd.f32 %v5989, %v6307
          %6309 = vmatmul.f32.gmra.mxu0 %v6141
          %v6310 = vpop.f32.mrf.mxu0
          %6311 = vmatmul.f32.gmra.mxu0 %v6144
          %v6312 = vpop.f32.mrf.mxu0
          %v6313 = vadd.f32 %v5994, %v6312
          %6314 = vmatmul.f32.gmra.mxu0 %v6147
          %v6315 = vpop.f32.mrf.mxu0
          %v6316 = vadd.f32 %v5997, %v6315
          %6317 = vmatmul.f32.gmra.mxu0 %v6150
          %v6318 = vpop.f32.mrf.mxu0
          %6319 = vmatmul.f32.gmra.mxu0 %v6153
          %v6320 = vpop.f32.mrf.mxu0
          %v6321 = vadd.f32 %v6002, %v6320
          %6322 = vmatmul.f32.gmra.mxu0 %v6156
          %v6323 = vpop.f32.mrf.mxu0
          %v6324 = vadd.f32 %v6005, %v6323
          %6325 = vmatmul.f32.gmra.mxu0 %v6159
          %v6326 = vpop.f32.mrf.mxu0
          %6327 = vmatmul.f32.gmra.mxu0 %v6162
          %v6328 = vpop.f32.mrf.mxu0
          %v6329 = vadd.f32 %v6010, %v6328
          %6330 = vmatmul.f32.gmra.mxu0 %v6165
          %v6331 = vpop.f32.mrf.mxu0
          %v6332 = vadd.f32 %v6013, %v6331
          %6333 = vmatmul.f32.gmra.mxu0 %v6168
          %v6334 = vpop.f32.mrf.mxu0
          %6335 = vmatmul.f32.gmra.mxu0 %v6171
          %v6336 = vpop.f32.mrf.mxu0
          %v6337 = vadd.f32 %v6018, %v6336
          %6338 = vmatmul.f32.gmra.mxu0 %v6174
          %v6339 = vpop.f32.mrf.mxu0
          %v6340 = vadd.f32 %v6021, %v6339
          %6341 = vmatmul.f32.gmra.mxu0 %v6177
          %v6342 = vpop.f32.mrf.mxu0
          %6343 = vmatmul.f32.gmra.mxu0 %v6180
          %v6344 = vpop.f32.mrf.mxu0
          %v6345 = vadd.f32 %v6026, %v6344
          %6346 = vmatmul.f32.gmra.mxu0 %v6183
          %v6347 = vpop.f32.mrf.mxu0
          %v6348 = vadd.f32 %v6029, %v6347
          %6349 = vmatmul.f32.gmra.mxu0 %v6186
          %v6350 = vpop.f32.mrf.mxu0
          %6351 = vmatmul.f32.gmra.mxu0 %v6189
          %v6352 = vpop.f32.mrf.mxu0
          %v6353 = vadd.f32 %v6034, %v6352
          %6354 = vmatmul.f32.gmra.mxu0 %v6192
          %v6355 = vpop.f32.mrf.mxu0
          %v6356 = vadd.f32 %v6037, %v6355
          %6357 = vmatmul.f32.gmra.mxu0 %v6195
          %v6358 = vpop.f32.mrf.mxu0
          %6359 = vmatmul.f32.gmra.mxu0 %v6198
          %v6360 = vpop.f32.mrf.mxu0
          %6361 = vmatmul.f32.gmra.mxu0 %v6201
          %v6362 = vpop.f32.mrf.mxu0
          %6363 = vmatmul.f32.gmra.mxu0 %v6204
          %v6364 = vpop.f32.mrf.mxu0
          %6365 = vmatmul.f32.gmra.mxu0 %v6207
          %v6366 = vpop.f32.mrf.mxu0
          %6367 = vmatmul.f32.gmra.mxu0 %v6210
          %v6368 = vpop.f32.mrf.mxu0
          %6369 = vmatmul.f32.gmra.mxu0 %v6213
          %v6370 = vpop.f32.mrf.mxu0
          %6371 = vdwg.mxu0
          %v6372 = vrot.slane %v5551, 2
          %v6373 = vrot.slane %v5552, 2
          %v6374 = vrot.slane %v5553, 2
          %v6375 = vrot.slane %v5554, 2
          %v6376 = vrot.slane %v5555, 2
          %v6377 = vrot.slane %v5556, 2
          %v6378 = vrot.slane %v5557, 2
          %v6379 = vrot.slane %v5558, 2
          %v6380 = vrot.slane %v5559, 2
          %v6381 = vrot.slane %v5560, 2
          %v6382 = vrot.slane %v5561, 2
          %v6383 = vrot.slane %v5562, 2
          %v6384 = vrot.slane %v5563, 2
          %v6385 = vrot.slane %v5564, 2
          %v6386 = vrot.slane %v5565, 2
          %v6387 = vrot.slane %v5566, 2
          %v6388 = vrot.slane %v5567, 2
          %v6389 = vrot.slane %v5568, 2
          %v6390 = vrot.slane %v5569, 2
          %v6391 = vrot.slane %v5570, 2
          %v6392 = vrot.slane %v5571, 2
          %v6393 = vrot.slane %v5572, 2
          %v6394 = vrot.slane %v5573, 2
          %v6395 = vrot.slane %v5574, 2
          %v6396 = vrot.slane %v5575, 2
          %v6397 = vrot.slane %v5576, 2
          %v6398 = vrot.slane %v5577, 2
          %v6399 = vrot.slane %v5578, 2
          %v6400 = vrot.slane %v5579, 2
          %v6401 = vrot.slane %v5580, 2
          %v6402 = vrot.slane %v5581, 2
          %v6403 = vrot.slane %v5582, 2
          %v6404 = vrot.slane %v5583, 2
          %v6405 = vrot.slane %v5584, 2
          %v6406 = vrot.slane %v5585, 2
          %v6407 = vrot.slane %v5586, 2
          %v6408 = vrot.slane %v5587, 2
          %v6409 = vrot.slane %v5588, 2
          %v6410 = vrot.slane %v5589, 2
          %v6411 = vrot.slane %v5590, 2
          %v6412 = vrot.slane %v5591, 2
          %v6413 = vrot.slane %v5592, 2
          %v6414 = vrot.slane %v5593, 2
          %v6415 = vrot.slane %v5594, 2
          %v6416 = vrot.slane %v5595, 2
          %v6417 = vrot.slane %v5596, 2
          %v6418 = vrot.slane %v5597, 2
          %v6419 = vrot.slane %v5598, 2
          %v6420 = vrot.slane %v5599, 2
          %v6421 = vrot.slane %v5600, 2
          %v6422 = vrot.slane %v5601, 2
          %v6423 = vrot.slane %v5602, 2
          %v6424 = vrot.slane %v5603, 2
          %v6425 = vrot.slane %v5604, 2
          %v6426 = vsel %vm1254, %v6424, %v6425
          %v6427 = vsel %vm1254, %v6423, %v6424
          %v6428 = vsel %vm1254, %v6422, %v6423
          %v6429 = vsel %vm1254, %v6421, %v6422
          %v6430 = vsel %vm1254, %v6420, %v6421
          %v6431 = vsel %vm1254, %v6419, %v6420
          %v6432 = vsel %vm1254, %v6418, %v6419
          %v6433 = vsel %vm1254, %v6417, %v6418
          %v6434 = vsel %vm1254, %v6416, %v6417
          %v6435 = vsel %vm1254, %v6415, %v6416
          %v6436 = vsel %vm1254, %v6414, %v6415
          %v6437 = vsel %vm1254, %v6413, %v6414
          %v6438 = vsel %vm1254, %v6412, %v6413
          %v6439 = vsel %vm1254, %v6411, %v6412
          %v6440 = vsel %vm1254, %v6410, %v6411
          %v6441 = vsel %vm1254, %v6409, %v6410
          %v6442 = vsel %vm1254, %v6408, %v6409
          %v6443 = vsel %vm1254, %v6407, %v6408
          %v6444 = vsel %vm1254, %v6406, %v6407
          %v6445 = vsel %vm1254, %v6405, %v6406
          %v6446 = vsel %vm1254, %v6404, %v6405
          %v6447 = vsel %vm1254, %v6403, %v6404
          %v6448 = vsel %vm1254, %v6402, %v6403
          %v6449 = vsel %vm1254, %v6401, %v6402
          %v6450 = vsel %vm1254, %v6400, %v6401
          %v6451 = vsel %vm1254, %v6399, %v6400
          %v6452 = vsel %vm1254, %v6398, %v6399
          %v6453 = vsel %vm1254, %v6397, %v6398
          %v6454 = vsel %vm1254, %v6396, %v6397
          %v6455 = vsel %vm1254, %v6395, %v6396
          %v6456 = vsel %vm1254, %v6394, %v6395
          %v6457 = vsel %vm1254, %v6393, %v6394
          %v6458 = vsel %vm1254, %v6392, %v6393
          %v6459 = vsel %vm1254, %v6391, %v6392
          %v6460 = vsel %vm1254, %v6390, %v6391
          %v6461 = vsel %vm1254, %v6389, %v6390
          %v6462 = vsel %vm1254, %v6388, %v6389
          %v6463 = vsel %vm1254, %v6387, %v6388
          %v6464 = vsel %vm1254, %v6386, %v6387
          %v6465 = vsel %vm1254, %v6385, %v6386
          %v6466 = vsel %vm1254, %v6384, %v6385
          %v6467 = vsel %vm1254, %v6383, %v6384
          %v6468 = vsel %vm1254, %v6382, %v6383
          %v6469 = vsel %vm1254, %v6381, %v6382
          %v6470 = vsel %vm1254, %v6380, %v6381
          %v6471 = vsel %vm1254, %v6379, %v6380
          %v6472 = vsel %vm1254, %v6378, %v6379
          %v6473 = vsel %vm1254, %v6377, %v6378
          %v6474 = vsel %vm1254, %v6376, %v6377
          %v6475 = vsel %vm1254, %v6375, %v6376
          %v6476 = vsel %vm1254, %v6374, %v6375
          %v6477 = vsel %vm1254, %v6373, %v6374
          %v6478 = vsel %vm1254, %v6372, %v6373
          %v6479 = vsel %vm1254, %v6425, %v6372
          %s6480 = sadd.s32 128, %s5606
          %s6481 = scalar_lea.vmem [#allocation3], %s6480
          %v6482 = vld [vmem:[%s6481] sm:$0xff]
          %v6483 = vld [vmem:[%s6481 + $0x8] sm:$0xff]
          %v6484 = vld [vmem:[%s6481 + $0x10] sm:$0xff]
          %v6485 = vld [vmem:[%s6481 + $0x18] sm:$0xff]
          %v6486 = vld [vmem:[%s6481 + $0x20] sm:$0xff]
          %v6487 = vld [vmem:[%s6481 + $0x28] sm:$0xff]
          %v6488 = vld [vmem:[%s6481 + $0x30] sm:$0xff]
          %v6489 = vld [vmem:[%s6481 + $0x38] sm:$0xff]
          %v6491 = vsel %vm205, %v6478, 0
          %v6494 = vsel %vm205, %v6477, 0
          %v6497 = vsel %vm205, %v6476, 0
          %v6500 = vsel %vm205, %v6475, 0
          %v6503 = vsel %vm205, %v6474, 0
          %v6506 = vsel %vm205, %v6473, 0
          %v6509 = vsel %vm205, %v6472, 0
          %v6512 = vsel %vm205, %v6471, 0
          %v6515 = vsel %vm205, %v6470, 0
          %v6518 = vsel %vm205, %v6469, 0
          %v6521 = vsel %vm205, %v6468, 0
          %v6524 = vsel %vm205, %v6467, 0
          %v6527 = vsel %vm205, %v6466, 0
          %v6530 = vsel %vm205, %v6465, 0
          %v6533 = vsel %vm205, %v6464, 0
          %v6536 = vsel %vm205, %v6463, 0
          %v6539 = vsel %vm205, %v6462, 0
          %v6542 = vsel %vm205, %v6461, 0
          %v6545 = vsel %vm205, %v6460, 0
          %v6548 = vsel %vm205, %v6459, 0
          %v6551 = vsel %vm205, %v6458, 0
          %v6554 = vsel %vm205, %v6457, 0
          %v6557 = vsel %vm205, %v6456, 0
          %v6560 = vsel %vm205, %v6455, 0
          %v6563 = vsel %vm205, %v6454, 0
          %v6566 = vsel %vm205, %v6453, 0
          %v6569 = vsel %vm205, %v6452, 0
          %v6572 = vsel %vm205, %v6451, 0
          %v6575 = vsel %vm205, %v6450, 0
          %v6578 = vsel %vm205, %v6449, 0
          %v6581 = vsel %vm205, %v6448, 0
          %v6584 = vsel %vm205, %v6447, 0
          %v6587 = vsel %vm205, %v6446, 0
          %v6590 = vsel %vm205, %v6445, 0
          %v6593 = vsel %vm205, %v6444, 0
          %v6596 = vsel %vm205, %v6443, 0
          %v6599 = vsel %vm205, %v6442, 0
          %v6602 = vsel %vm205, %v6441, 0
          %v6605 = vsel %vm205, %v6440, 0
          %v6608 = vsel %vm205, %v6439, 0
          %v6611 = vsel %vm205, %v6438, 0
          %v6614 = vsel %vm205, %v6437, 0
          %v6617 = vsel %vm205, %v6436, 0
          %v6620 = vsel %vm205, %v6435, 0
          %v6623 = vsel %vm205, %v6434, 0
          %v6626 = vsel %vm205, %v6433, 0
          %v6629 = vsel %vm205, %v6432, 0
          %v6632 = vsel %vm205, %v6431, 0
          %v6635 = vsel %vm205, %v6430, 0
          %v6638 = vsel %vm205, %v6429, 0
          %v6641 = vsel %vm205, %v6428, 0
          %v6644 = vsel %vm205, %v6427, 0
          %v6647 = vsel %vm205, %v6426, 0
          %v6650 = vsel %vm205, %v6479, 0
          %6652 = vmatpush.msra.mxu0 0.0
          %6653 = vmatpush.msra.mxu0 0.0
          %6654 = vmatpush.msra.mxu0 0.0
          %6655 = vmatpush.msra.mxu0 0.0
          %6656 = vmatpush.msra.mxu0 0.0
          %6657 = vmatpush.msra.mxu0 0.0
          %6658 = vmatpush.msra.mxu0 0.0
          %6659 = vmatpush.msra.mxu0 0.0
          %6660 = vmatpush.msra.mxu0 %v6489
          %6661 = vmatpush.msra.mxu0 %v6488
          %6662 = vmatpush.msra.mxu0 %v6487
          %6663 = vmatpush.msra.mxu0 %v6486
          %6664 = vmatpush.msra.mxu0 %v6485
          %6665 = vmatpush.msra.mxu0 %v6484
          %6666 = vmatpush.msra.mxu0 %v6483
          %6667 = vmatpush.msra.mxu0 %v6482
          %6668 = vmatmul.f32.gmra.mxu0 %v6491
          %v6669 = vpop.f32.mrf.mxu0
          %v6670 = vadd.f32 0.0, %v6669
          %6671 = vmatmul.f32.gmra.mxu0 %v6494
          %v6672 = vpop.f32.mrf.mxu0
          %v6673 = vadd.f32 0.0, %v6672
          %6674 = vmatmul.f32.gmra.mxu0 %v6497
          %v6675 = vpop.f32.mrf.mxu0
          %6676 = vmatmul.f32.gmra.mxu0 %v6500
          %v6677 = vpop.f32.mrf.mxu0
          %v6678 = vadd.f32 0.0, %v6677
          %6679 = vmatmul.f32.gmra.mxu0 %v6503
          %v6680 = vpop.f32.mrf.mxu0
          %v6681 = vadd.f32 0.0, %v6680
          %6682 = vmatmul.f32.gmra.mxu0 %v6506
          %v6683 = vpop.f32.mrf.mxu0
          %6684 = vmatmul.f32.gmra.mxu0 %v6509
          %v6685 = vpop.f32.mrf.mxu0
          %v6686 = vadd.f32 0.0, %v6685
          %6687 = vmatmul.f32.gmra.mxu0 %v6512
          %v6688 = vpop.f32.mrf.mxu0
          %v6689 = vadd.f32 0.0, %v6688
          %6690 = vmatmul.f32.gmra.mxu0 %v6515
          %v6691 = vpop.f32.mrf.mxu0
          %6692 = vmatmul.f32.gmra.mxu0 %v6518
          %v6693 = vpop.f32.mrf.mxu0
          %v6694 = vadd.f32 0.0, %v6693
          %6695 = vmatmul.f32.gmra.mxu0 %v6521
          %v6696 = vpop.f32.mrf.mxu0
          %v6697 = vadd.f32 0.0, %v6696
          %6698 = vmatmul.f32.gmra.mxu0 %v6524
          %v6699 = vpop.f32.mrf.mxu0
          %6700 = vmatmul.f32.gmra.mxu0 %v6527
          %v6701 = vpop.f32.mrf.mxu0
          %v6702 = vadd.f32 0.0, %v6701
          %6703 = vmatmul.f32.gmra.mxu0 %v6530
          %v6704 = vpop.f32.mrf.mxu0
          %v6705 = vadd.f32 0.0, %v6704
          %6706 = vmatmul.f32.gmra.mxu0 %v6533
          %v6707 = vpop.f32.mrf.mxu0
          %6708 = vmatmul.f32.gmra.mxu0 %v6536
          %v6709 = vpop.f32.mrf.mxu0
          %v6710 = vadd.f32 0.0, %v6709
          %6711 = vmatmul.f32.gmra.mxu0 %v6539
          %v6712 = vpop.f32.mrf.mxu0
          %v6713 = vadd.f32 0.0, %v6712
          %6714 = vmatmul.f32.gmra.mxu0 %v6542
          %v6715 = vpop.f32.mrf.mxu0
          %6716 = vmatmul.f32.gmra.mxu0 %v6545
          %v6717 = vpop.f32.mrf.mxu0
          %v6718 = vadd.f32 0.0, %v6717
          %6719 = vmatmul.f32.gmra.mxu0 %v6548
          %v6720 = vpop.f32.mrf.mxu0
          %v6721 = vadd.f32 0.0, %v6720
          %6722 = vmatmul.f32.gmra.mxu0 %v6551
          %v6723 = vpop.f32.mrf.mxu0
          %6724 = vmatmul.f32.gmra.mxu0 %v6554
          %v6725 = vpop.f32.mrf.mxu0
          %v6726 = vadd.f32 0.0, %v6725
          %6727 = vmatmul.f32.gmra.mxu0 %v6557
          %v6728 = vpop.f32.mrf.mxu0
          %v6729 = vadd.f32 0.0, %v6728
          %6730 = vmatmul.f32.gmra.mxu0 %v6560
          %v6731 = vpop.f32.mrf.mxu0
          %6732 = vmatmul.f32.gmra.mxu0 %v6563
          %v6733 = vpop.f32.mrf.mxu0
          %v6734 = vadd.f32 0.0, %v6733
          %6735 = vmatmul.f32.gmra.mxu0 %v6566
          %v6736 = vpop.f32.mrf.mxu0
          %v6737 = vadd.f32 0.0, %v6736
          %6738 = vmatmul.f32.gmra.mxu0 %v6569
          %v6739 = vpop.f32.mrf.mxu0
          %6740 = vmatmul.f32.gmra.mxu0 %v6572
          %v6741 = vpop.f32.mrf.mxu0
          %v6742 = vadd.f32 0.0, %v6741
          %6743 = vmatmul.f32.gmra.mxu0 %v6575
          %v6744 = vpop.f32.mrf.mxu0
          %v6745 = vadd.f32 0.0, %v6744
          %6746 = vmatmul.f32.gmra.mxu0 %v6578
          %v6747 = vpop.f32.mrf.mxu0
          %6748 = vmatmul.f32.gmra.mxu0 %v6581
          %v6749 = vpop.f32.mrf.mxu0
          %v6750 = vadd.f32 0.0, %v6749
          %6751 = vmatmul.f32.gmra.mxu0 %v6584
          %v6752 = vpop.f32.mrf.mxu0
          %v6753 = vadd.f32 0.0, %v6752
          %6754 = vmatmul.f32.gmra.mxu0 %v6587
          %v6755 = vpop.f32.mrf.mxu0
          %6756 = vmatmul.f32.gmra.mxu0 %v6590
          %v6757 = vpop.f32.mrf.mxu0
          %v6758 = vadd.f32 0.0, %v6757
          %6759 = vmatmul.f32.gmra.mxu0 %v6593
          %v6760 = vpop.f32.mrf.mxu0
          %v6761 = vadd.f32 0.0, %v6760
          %6762 = vmatmul.f32.gmra.mxu0 %v6596
          %v6763 = vpop.f32.mrf.mxu0
          %6764 = vmatmul.f32.gmra.mxu0 %v6599
          %v6765 = vpop.f32.mrf.mxu0
          %v6766 = vadd.f32 0.0, %v6765
          %6767 = vmatmul.f32.gmra.mxu0 %v6602
          %v6768 = vpop.f32.mrf.mxu0
          %v6769 = vadd.f32 0.0, %v6768
          %6770 = vmatmul.f32.gmra.mxu0 %v6605
          %v6771 = vpop.f32.mrf.mxu0
          %6772 = vmatmul.f32.gmra.mxu0 %v6608
          %v6773 = vpop.f32.mrf.mxu0
          %v6774 = vadd.f32 0.0, %v6773
          %6775 = vmatmul.f32.gmra.mxu0 %v6611
          %v6776 = vpop.f32.mrf.mxu0
          %v6777 = vadd.f32 0.0, %v6776
          %6778 = vmatmul.f32.gmra.mxu0 %v6614
          %v6779 = vpop.f32.mrf.mxu0
          %6780 = vmatmul.f32.gmra.mxu0 %v6617
          %v6781 = vpop.f32.mrf.mxu0
          %v6782 = vadd.f32 0.0, %v6781
          %6783 = vmatmul.f32.gmra.mxu0 %v6620
          %v6784 = vpop.f32.mrf.mxu0
          %v6785 = vadd.f32 0.0, %v6784
          %6786 = vmatmul.f32.gmra.mxu0 %v6623
          %v6787 = vpop.f32.mrf.mxu0
          %6788 = vmatmul.f32.gmra.mxu0 %v6626
          %v6789 = vpop.f32.mrf.mxu0
          %v6790 = vadd.f32 0.0, %v6789
          %6791 = vmatmul.f32.gmra.mxu0 %v6629
          %v6792 = vpop.f32.mrf.mxu0
          %v6793 = vadd.f32 0.0, %v6792
          %6794 = vmatmul.f32.gmra.mxu0 %v6632
          %v6795 = vpop.f32.mrf.mxu0
          %6796 = vmatmul.f32.gmra.mxu0 %v6635
          %v6797 = vpop.f32.mrf.mxu0
          %6798 = vmatmul.f32.gmra.mxu0 %v6638
          %v6799 = vpop.f32.mrf.mxu0
          %6800 = vmatmul.f32.gmra.mxu0 %v6641
          %v6801 = vpop.f32.mrf.mxu0
          %6802 = vmatmul.f32.gmra.mxu0 %v6644
          %v6803 = vpop.f32.mrf.mxu0
          %6804 = vmatmul.f32.gmra.mxu0 %v6647
          %v6805 = vpop.f32.mrf.mxu0
          %6806 = vmatmul.f32.gmra.mxu0 %v6650
          %v6807 = vpop.f32.mrf.mxu0
          %6808 = vdwg.mxu0
          %v6809 = vadd.f32 %v6233, %v6670
          %v6810 = vadd.f32 %v6236, %v6673
          %v6811 = vadd.f32 %v6241, %v6678
          %v6812 = vadd.f32 %v6244, %v6681
          %v6813 = vadd.f32 %v6249, %v6686
          %v6814 = vadd.f32 %v6252, %v6689
          %v6815 = vadd.f32 %v6257, %v6694
          %v6816 = vadd.f32 %v6260, %v6697
          %v6817 = vadd.f32 %v6265, %v6702
          %v6818 = vadd.f32 %v6268, %v6705
          %v6819 = vadd.f32 %v6273, %v6710
          %v6820 = vadd.f32 %v6276, %v6713
          %v6821 = vadd.f32 %v6281, %v6718
          %v6822 = vadd.f32 %v6284, %v6721
          %v6823 = vadd.f32 %v6289, %v6726
          %v6824 = vadd.f32 %v6292, %v6729
          %v6825 = vadd.f32 %v6297, %v6734
          %v6826 = vadd.f32 %v6300, %v6737
          %v6827 = vadd.f32 %v6305, %v6742
          %v6828 = vadd.f32 %v6308, %v6745
          %v6829 = vadd.f32 %v6313, %v6750
          %v6830 = vadd.f32 %v6316, %v6753
          %v6831 = vadd.f32 %v6321, %v6758
          %v6832 = vadd.f32 %v6324, %v6761
          %v6833 = vadd.f32 %v6329, %v6766
          %v6834 = vadd.f32 %v6332, %v6769
          %v6835 = vadd.f32 %v6337, %v6774
          %v6836 = vadd.f32 %v6340, %v6777
          %v6837 = vadd.f32 %v6345, %v6782
          %v6838 = vadd.f32 %v6348, %v6785
          %v6839 = vadd.f32 %v6353, %v6790
          %v6840 = vadd.f32 %v6356, %v6793
          %s6841 = sadd.s32 192, %s5606
          %s6842 = scalar_lea.vmem [#allocation3], %s6841
          %v6843 = vld [vmem:[%s6842] sm:$0xff]
          %v6844 = vld [vmem:[%s6842 + $0x8] sm:$0xff]
          %v6845 = vld [vmem:[%s6842 + $0x10] sm:$0xff]
          %v6846 = vld [vmem:[%s6842 + $0x18] sm:$0xff]
          %v6847 = vld [vmem:[%s6842 + $0x20] sm:$0xff]
          %v6848 = vld [vmem:[%s6842 + $0x28] sm:$0xff]
          %v6849 = vld [vmem:[%s6842 + $0x30] sm:$0xff]
          %v6850 = vld [vmem:[%s6842 + $0x38] sm:$0xff]
          %6851 = vmatpush.msra.mxu0 0.0
          %6852 = vmatpush.msra.mxu0 0.0
          %6853 = vmatpush.msra.mxu0 0.0
          %6854 = vmatpush.msra.mxu0 0.0
          %6855 = vmatpush.msra.mxu0 0.0
          %6856 = vmatpush.msra.mxu0 0.0
          %6857 = vmatpush.msra.mxu0 0.0
          %6858 = vmatpush.msra.mxu0 0.0
          %6859 = vmatpush.msra.mxu0 %v6850
          %6860 = vmatpush.msra.mxu0 %v6849
          %6861 = vmatpush.msra.mxu0 %v6848
          %6862 = vmatpush.msra.mxu0 %v6847
          %6863 = vmatpush.msra.mxu0 %v6846
          %6864 = vmatpush.msra.mxu0 %v6845
          %6865 = vmatpush.msra.mxu0 %v6844
          %6866 = vmatpush.msra.mxu0 %v6843
          %6867 = vmatmul.f32.gmra.mxu0 %v6063
          %v6868 = vpop.f32.mrf.mxu0
          %v6869 = vadd.f32 0.0, %v6868
          %6870 = vmatmul.f32.gmra.mxu0 %v6066
          %v6871 = vpop.f32.mrf.mxu0
          %v6872 = vadd.f32 0.0, %v6871
          %6873 = vmatmul.f32.gmra.mxu0 %v6069
          %v6874 = vpop.f32.mrf.mxu0
          %6875 = vmatmul.f32.gmra.mxu0 %v6072
          %v6876 = vpop.f32.mrf.mxu0
          %v6877 = vadd.f32 0.0, %v6876
          %6878 = vmatmul.f32.gmra.mxu0 %v6075
          %v6879 = vpop.f32.mrf.mxu0
          %v6880 = vadd.f32 0.0, %v6879
          %6881 = vmatmul.f32.gmra.mxu0 %v6078
          %v6882 = vpop.f32.mrf.mxu0
          %6883 = vmatmul.f32.gmra.mxu0 %v6081
          %v6884 = vpop.f32.mrf.mxu0
          %v6885 = vadd.f32 0.0, %v6884
          %6886 = vmatmul.f32.gmra.mxu0 %v6084
          %v6887 = vpop.f32.mrf.mxu0
          %v6888 = vadd.f32 0.0, %v6887
          %6889 = vmatmul.f32.gmra.mxu0 %v6087
          %v6890 = vpop.f32.mrf.mxu0
          %6891 = vmatmul.f32.gmra.mxu0 %v6090
          %v6892 = vpop.f32.mrf.mxu0
          %v6893 = vadd.f32 0.0, %v6892
          %6894 = vmatmul.f32.gmra.mxu0 %v6093
          %v6895 = vpop.f32.mrf.mxu0
          %v6896 = vadd.f32 0.0, %v6895
          %6897 = vmatmul.f32.gmra.mxu0 %v6096
          %v6898 = vpop.f32.mrf.mxu0
          %6899 = vmatmul.f32.gmra.mxu0 %v6099
          %v6900 = vpop.f32.mrf.mxu0
          %v6901 = vadd.f32 0.0, %v6900
          %6902 = vmatmul.f32.gmra.mxu0 %v6102
          %v6903 = vpop.f32.mrf.mxu0
          %v6904 = vadd.f32 0.0, %v6903
          %6905 = vmatmul.f32.gmra.mxu0 %v6105
          %v6906 = vpop.f32.mrf.mxu0
          %6907 = vmatmul.f32.gmra.mxu0 %v6108
          %v6908 = vpop.f32.mrf.mxu0
          %v6909 = vadd.f32 0.0, %v6908
          %6910 = vmatmul.f32.gmra.mxu0 %v6111
          %v6911 = vpop.f32.mrf.mxu0
          %v6912 = vadd.f32 0.0, %v6911
          %6913 = vmatmul.f32.gmra.mxu0 %v6114
          %v6914 = vpop.f32.mrf.mxu0
          %6915 = vmatmul.f32.gmra.mxu0 %v6117
          %v6916 = vpop.f32.mrf.mxu0
          %v6917 = vadd.f32 0.0, %v6916
          %6918 = vmatmul.f32.gmra.mxu0 %v6120
          %v6919 = vpop.f32.mrf.mxu0
          %v6920 = vadd.f32 0.0, %v6919
          %6921 = vmatmul.f32.gmra.mxu0 %v6123
          %v6922 = vpop.f32.mrf.mxu0
          %6923 = vmatmul.f32.gmra.mxu0 %v6126
          %v6924 = vpop.f32.mrf.mxu0
          %v6925 = vadd.f32 0.0, %v6924
          %6926 = vmatmul.f32.gmra.mxu0 %v6129
          %v6927 = vpop.f32.mrf.mxu0
          %v6928 = vadd.f32 0.0, %v6927
          %6929 = vmatmul.f32.gmra.mxu0 %v6132
          %v6930 = vpop.f32.mrf.mxu0
          %6931 = vmatmul.f32.gmra.mxu0 %v6135
          %v6932 = vpop.f32.mrf.mxu0
          %v6933 = vadd.f32 0.0, %v6932
          %6934 = vmatmul.f32.gmra.mxu0 %v6138
          %v6935 = vpop.f32.mrf.mxu0
          %v6936 = vadd.f32 0.0, %v6935
          %6937 = vmatmul.f32.gmra.mxu0 %v6141
          %v6938 = vpop.f32.mrf.mxu0
          %6939 = vmatmul.f32.gmra.mxu0 %v6144
          %v6940 = vpop.f32.mrf.mxu0
          %v6941 = vadd.f32 0.0, %v6940
          %6942 = vmatmul.f32.gmra.mxu0 %v6147
          %v6943 = vpop.f32.mrf.mxu0
          %v6944 = vadd.f32 0.0, %v6943
          %6945 = vmatmul.f32.gmra.mxu0 %v6150
          %v6946 = vpop.f32.mrf.mxu0
          %6947 = vmatmul.f32.gmra.mxu0 %v6153
          %v6948 = vpop.f32.mrf.mxu0
          %v6949 = vadd.f32 0.0, %v6948
          %6950 = vmatmul.f32.gmra.mxu0 %v6156
          %v6951 = vpop.f32.mrf.mxu0
          %v6952 = vadd.f32 0.0, %v6951
          %6953 = vmatmul.f32.gmra.mxu0 %v6159
          %v6954 = vpop.f32.mrf.mxu0
          %6955 = vmatmul.f32.gmra.mxu0 %v6162
          %v6956 = vpop.f32.mrf.mxu0
          %v6957 = vadd.f32 0.0, %v6956
          %6958 = vmatmul.f32.gmra.mxu0 %v6165
          %v6959 = vpop.f32.mrf.mxu0
          %v6960 = vadd.f32 0.0, %v6959
          %6961 = vmatmul.f32.gmra.mxu0 %v6168
          %v6962 = vpop.f32.mrf.mxu0
          %6963 = vmatmul.f32.gmra.mxu0 %v6171
          %v6964 = vpop.f32.mrf.mxu0
          %v6965 = vadd.f32 0.0, %v6964
          %6966 = vmatmul.f32.gmra.mxu0 %v6174
          %v6967 = vpop.f32.mrf.mxu0
          %v6968 = vadd.f32 0.0, %v6967
          %6969 = vmatmul.f32.gmra.mxu0 %v6177
          %v6970 = vpop.f32.mrf.mxu0
          %6971 = vmatmul.f32.gmra.mxu0 %v6180
          %v6972 = vpop.f32.mrf.mxu0
          %v6973 = vadd.f32 0.0, %v6972
          %6974 = vmatmul.f32.gmra.mxu0 %v6183
          %v6975 = vpop.f32.mrf.mxu0
          %v6976 = vadd.f32 0.0, %v6975
          %6977 = vmatmul.f32.gmra.mxu0 %v6186
          %v6978 = vpop.f32.mrf.mxu0
          %6979 = vmatmul.f32.gmra.mxu0 %v6189
          %v6980 = vpop.f32.mrf.mxu0
          %v6981 = vadd.f32 0.0, %v6980
          %6982 = vmatmul.f32.gmra.mxu0 %v6192
          %v6983 = vpop.f32.mrf.mxu0
          %v6984 = vadd.f32 0.0, %v6983
          %6985 = vmatmul.f32.gmra.mxu0 %v6195
          %v6986 = vpop.f32.mrf.mxu0
          %6987 = vmatmul.f32.gmra.mxu0 %v6198
          %v6988 = vpop.f32.mrf.mxu0
          %v6989 = vadd.f32 0.0, %v6988
          %6990 = vmatmul.f32.gmra.mxu0 %v6201
          %v6991 = vpop.f32.mrf.mxu0
          %v6992 = vadd.f32 0.0, %v6991
          %6993 = vmatmul.f32.gmra.mxu0 %v6204
          %v6994 = vpop.f32.mrf.mxu0
          %6995 = vmatmul.f32.gmra.mxu0 %v6207
          %v6996 = vpop.f32.mrf.mxu0
          %6997 = vmatmul.f32.gmra.mxu0 %v6210
          %v6998 = vpop.f32.mrf.mxu0
          %6999 = vmatmul.f32.gmra.mxu0 %v6213
          %v7000 = vpop.f32.mrf.mxu0
          %7001 = vmatmul.f32.gmra.mxu0 %v6054
          %v7002 = vpop.f32.mrf.mxu0
          %7003 = vmatmul.f32.gmra.mxu0 %v6057
          %v7004 = vpop.f32.mrf.mxu0
          %7005 = vmatmul.f32.gmra.mxu0 %v6060
          %v7006 = vpop.f32.mrf.mxu0
          %7007 = vdwg.mxu0
          %v7008 = vadd.f32 %v6809, %v6869
          %v7009 = vadd.f32 %v6810, %v6872
          %v7010 = vadd.f32 %v6811, %v6877
          %v7011 = vadd.f32 %v6812, %v6880
          %v7012 = vadd.f32 %v6813, %v6885
          %v7013 = vadd.f32 %v6814, %v6888
          %v7014 = vadd.f32 %v6815, %v6893
          %v7015 = vadd.f32 %v6816, %v6896
          %v7016 = vadd.f32 %v6817, %v6901
          %v7017 = vadd.f32 %v6818, %v6904
          %v7018 = vadd.f32 %v6819, %v6909
          %v7019 = vadd.f32 %v6820, %v6912
          %v7020 = vadd.f32 %v6821, %v6917
          %v7021 = vadd.f32 %v6822, %v6920
          %v7022 = vadd.f32 %v6823, %v6925
          %v7023 = vadd.f32 %v6824, %v6928
          %v7024 = vadd.f32 %v6825, %v6933
          %v7025 = vadd.f32 %v6826, %v6936
          %v7026 = vadd.f32 %v6827, %v6941
          %v7027 = vadd.f32 %v6828, %v6944
          %v7028 = vadd.f32 %v6829, %v6949
          %v7029 = vadd.f32 %v6830, %v6952
          %v7030 = vadd.f32 %v6831, %v6957
          %v7031 = vadd.f32 %v6832, %v6960
          %v7032 = vadd.f32 %v6833, %v6965
          %v7033 = vadd.f32 %v6834, %v6968
          %v7034 = vadd.f32 %v6835, %v6973
          %v7035 = vadd.f32 %v6836, %v6976
          %v7036 = vadd.f32 %v6837, %v6981
          %v7037 = vadd.f32 %v6838, %v6984
          %v7038 = vadd.f32 %v6839, %v6989
          %v7039 = vadd.f32 %v6840, %v6992
          %s7040 = sadd.s32 256, %s5606
          %s7041 = scalar_lea.vmem [#allocation3], %s7040
          %v7042 = vld [vmem:[%s7041] sm:$0xff]
          %v7043 = vld [vmem:[%s7041 + $0x8] sm:$0xff]
          %v7044 = vld [vmem:[%s7041 + $0x10] sm:$0xff]
          %v7045 = vld [vmem:[%s7041 + $0x18] sm:$0xff]
          %v7046 = vld [vmem:[%s7041 + $0x20] sm:$0xff]
          %v7047 = vld [vmem:[%s7041 + $0x28] sm:$0xff]
          %v7048 = vld [vmem:[%s7041 + $0x30] sm:$0xff]
          %v7049 = vld [vmem:[%s7041 + $0x38] sm:$0xff]
          %7050 = vmatpush.msra.mxu0 0.0
          %7051 = vmatpush.msra.mxu0 0.0
          %7052 = vmatpush.msra.mxu0 0.0
          %7053 = vmatpush.msra.mxu0 0.0
          %7054 = vmatpush.msra.mxu0 0.0
          %7055 = vmatpush.msra.mxu0 0.0
          %7056 = vmatpush.msra.mxu0 0.0
          %7057 = vmatpush.msra.mxu0 0.0
          %7058 = vmatpush.msra.mxu0 %v7049
          %7059 = vmatpush.msra.mxu0 %v7048
          %7060 = vmatpush.msra.mxu0 %v7047
          %7061 = vmatpush.msra.mxu0 %v7046
          %7062 = vmatpush.msra.mxu0 %v7045
          %7063 = vmatpush.msra.mxu0 %v7044
          %7064 = vmatpush.msra.mxu0 %v7043
          %7065 = vmatpush.msra.mxu0 %v7042
          %7066 = vmatmul.f32.gmra.mxu0 %v5744
          %v7067 = vpop.f32.mrf.mxu0
          %v7068 = vadd.f32 0.0, %v7067
          %7069 = vmatmul.f32.gmra.mxu0 %v5747
          %v7070 = vpop.f32.mrf.mxu0
          %v7071 = vadd.f32 0.0, %v7070
          %7072 = vmatmul.f32.gmra.mxu0 %v5750
          %v7073 = vpop.f32.mrf.mxu0
          %7074 = vmatmul.f32.gmra.mxu0 %v5753
          %v7075 = vpop.f32.mrf.mxu0
          %v7076 = vadd.f32 0.0, %v7075
          %7077 = vmatmul.f32.gmra.mxu0 %v5756
          %v7078 = vpop.f32.mrf.mxu0
          %v7079 = vadd.f32 0.0, %v7078
          %7080 = vmatmul.f32.gmra.mxu0 %v5759
          %v7081 = vpop.f32.mrf.mxu0
          %7082 = vmatmul.f32.gmra.mxu0 %v5762
          %v7083 = vpop.f32.mrf.mxu0
          %v7084 = vadd.f32 0.0, %v7083
          %7085 = vmatmul.f32.gmra.mxu0 %v5765
          %v7086 = vpop.f32.mrf.mxu0
          %v7087 = vadd.f32 0.0, %v7086
          %7088 = vmatmul.f32.gmra.mxu0 %v5768
          %v7089 = vpop.f32.mrf.mxu0
          %7090 = vmatmul.f32.gmra.mxu0 %v5771
          %v7091 = vpop.f32.mrf.mxu0
          %v7092 = vadd.f32 0.0, %v7091
          %7093 = vmatmul.f32.gmra.mxu0 %v5774
          %v7094 = vpop.f32.mrf.mxu0
          %v7095 = vadd.f32 0.0, %v7094
          %7096 = vmatmul.f32.gmra.mxu0 %v5777
          %v7097 = vpop.f32.mrf.mxu0
          %7098 = vmatmul.f32.gmra.mxu0 %v5780
          %v7099 = vpop.f32.mrf.mxu0
          %v7100 = vadd.f32 0.0, %v7099
          %7101 = vmatmul.f32.gmra.mxu0 %v5783
          %v7102 = vpop.f32.mrf.mxu0
          %v7103 = vadd.f32 0.0, %v7102
          %7104 = vmatmul.f32.gmra.mxu0 %v5786
          %v7105 = vpop.f32.mrf.mxu0
          %7106 = vmatmul.f32.gmra.mxu0 %v5789
          %v7107 = vpop.f32.mrf.mxu0
          %v7108 = vadd.f32 0.0, %v7107
          %7109 = vmatmul.f32.gmra.mxu0 %v5792
          %v7110 = vpop.f32.mrf.mxu0
          %v7111 = vadd.f32 0.0, %v7110
          %7112 = vmatmul.f32.gmra.mxu0 %v5795
          %v7113 = vpop.f32.mrf.mxu0
          %7114 = vmatmul.f32.gmra.mxu0 %v5798
          %v7115 = vpop.f32.mrf.mxu0
          %v7116 = vadd.f32 0.0, %v7115
          %7117 = vmatmul.f32.gmra.mxu0 %v5801
          %v7118 = vpop.f32.mrf.mxu0
          %v7119 = vadd.f32 0.0, %v7118
          %7120 = vmatmul.f32.gmra.mxu0 %v5804
          %v7121 = vpop.f32.mrf.mxu0
          %7122 = vmatmul.f32.gmra.mxu0 %v5807
          %v7123 = vpop.f32.mrf.mxu0
          %v7124 = vadd.f32 0.0, %v7123
          %7125 = vmatmul.f32.gmra.mxu0 %v5810
          %v7126 = vpop.f32.mrf.mxu0
          %v7127 = vadd.f32 0.0, %v7126
          %7128 = vmatmul.f32.gmra.mxu0 %v5813
          %v7129 = vpop.f32.mrf.mxu0
          %7130 = vmatmul.f32.gmra.mxu0 %v5816
          %v7131 = vpop.f32.mrf.mxu0
          %v7132 = vadd.f32 0.0, %v7131
          %7133 = vmatmul.f32.gmra.mxu0 %v5819
          %v7134 = vpop.f32.mrf.mxu0
          %v7135 = vadd.f32 0.0, %v7134
          %7136 = vmatmul.f32.gmra.mxu0 %v5822
          %v7137 = vpop.f32.mrf.mxu0
          %7138 = vmatmul.f32.gmra.mxu0 %v5825
          %v7139 = vpop.f32.mrf.mxu0
          %v7140 = vadd.f32 0.0, %v7139
          %7141 = vmatmul.f32.gmra.mxu0 %v5828
          %v7142 = vpop.f32.mrf.mxu0
          %v7143 = vadd.f32 0.0, %v7142
          %7144 = vmatmul.f32.gmra.mxu0 %v5831
          %v7145 = vpop.f32.mrf.mxu0
          %7146 = vmatmul.f32.gmra.mxu0 %v5834
          %v7147 = vpop.f32.mrf.mxu0
          %v7148 = vadd.f32 0.0, %v7147
          %7149 = vmatmul.f32.gmra.mxu0 %v5837
          %v7150 = vpop.f32.mrf.mxu0
          %v7151 = vadd.f32 0.0, %v7150
          %7152 = vmatmul.f32.gmra.mxu0 %v5840
          %v7153 = vpop.f32.mrf.mxu0
          %7154 = vmatmul.f32.gmra.mxu0 %v5843
          %v7155 = vpop.f32.mrf.mxu0
          %v7156 = vadd.f32 0.0, %v7155
          %7157 = vmatmul.f32.gmra.mxu0 %v5846
          %v7158 = vpop.f32.mrf.mxu0
          %v7159 = vadd.f32 0.0, %v7158
          %7160 = vmatmul.f32.gmra.mxu0 %v5849
          %v7161 = vpop.f32.mrf.mxu0
          %7162 = vmatmul.f32.gmra.mxu0 %v5852
          %v7163 = vpop.f32.mrf.mxu0
          %v7164 = vadd.f32 0.0, %v7163
          %7165 = vmatmul.f32.gmra.mxu0 %v5855
          %v7166 = vpop.f32.mrf.mxu0
          %v7167 = vadd.f32 0.0, %v7166
          %7168 = vmatmul.f32.gmra.mxu0 %v5858
          %v7169 = vpop.f32.mrf.mxu0
          %7170 = vmatmul.f32.gmra.mxu0 %v5861
          %v7171 = vpop.f32.mrf.mxu0
          %v7172 = vadd.f32 0.0, %v7171
          %7173 = vmatmul.f32.gmra.mxu0 %v5864
          %v7174 = vpop.f32.mrf.mxu0
          %v7175 = vadd.f32 0.0, %v7174
          %7176 = vmatmul.f32.gmra.mxu0 %v5867
          %v7177 = vpop.f32.mrf.mxu0
          %7178 = vmatmul.f32.gmra.mxu0 %v5870
          %v7179 = vpop.f32.mrf.mxu0
          %v7180 = vadd.f32 0.0, %v7179
          %7181 = vmatmul.f32.gmra.mxu0 %v5873
          %v7182 = vpop.f32.mrf.mxu0
          %v7183 = vadd.f32 0.0, %v7182
          %7184 = vmatmul.f32.gmra.mxu0 %v5876
          %v7185 = vpop.f32.mrf.mxu0
          %7186 = vmatmul.f32.gmra.mxu0 %v5879
          %v7187 = vpop.f32.mrf.mxu0
          %v7188 = vadd.f32 0.0, %v7187
          %7189 = vmatmul.f32.gmra.mxu0 %v5882
          %v7190 = vpop.f32.mrf.mxu0
          %v7191 = vadd.f32 0.0, %v7190
          %7192 = vmatmul.f32.gmra.mxu0 %v5885
          %v7193 = vpop.f32.mrf.mxu0
          %7194 = vmatmul.f32.gmra.mxu0 %v5888
          %v7195 = vpop.f32.mrf.mxu0
          %7196 = vmatmul.f32.gmra.mxu0 %v5891
          %v7197 = vpop.f32.mrf.mxu0
          %7198 = vmatmul.f32.gmra.mxu0 %v5894
          %v7199 = vpop.f32.mrf.mxu0
          %7200 = vmatmul.f32.gmra.mxu0 %v5735
          %v7201 = vpop.f32.mrf.mxu0
          %7202 = vmatmul.f32.gmra.mxu0 %v5738
          %v7203 = vpop.f32.mrf.mxu0
          %7204 = vmatmul.f32.gmra.mxu0 %v5741
          %v7205 = vpop.f32.mrf.mxu0
          %7206 = vdwg.mxu0
          %v7207 = vadd.f32 %v7008, %v7068
          %v7208 = vadd.f32 %v7009, %v7071
          %v7209 = vadd.f32 %v7010, %v7076
          %v7210 = vadd.f32 %v7011, %v7079
          %v7211 = vadd.f32 %v7012, %v7084
          %v7212 = vadd.f32 %v7013, %v7087
          %v7213 = vadd.f32 %v7014, %v7092
          %v7214 = vadd.f32 %v7015, %v7095
          %v7215 = vadd.f32 %v7016, %v7100
          %v7216 = vadd.f32 %v7017, %v7103
          %v7217 = vadd.f32 %v7018, %v7108
          %v7218 = vadd.f32 %v7019, %v7111
          %v7219 = vadd.f32 %v7020, %v7116
          %v7220 = vadd.f32 %v7021, %v7119
          %v7221 = vadd.f32 %v7022, %v7124
          %v7222 = vadd.f32 %v7023, %v7127
          %v7223 = vadd.f32 %v7024, %v7132
          %v7224 = vadd.f32 %v7025, %v7135
          %v7225 = vadd.f32 %v7026, %v7140
          %v7226 = vadd.f32 %v7027, %v7143
          %v7227 = vadd.f32 %v7028, %v7148
          %v7228 = vadd.f32 %v7029, %v7151
          %v7229 = vadd.f32 %v7030, %v7156
          %v7230 = vadd.f32 %v7031, %v7159
          %v7231 = vadd.f32 %v7032, %v7164
          %v7232 = vadd.f32 %v7033, %v7167
          %v7233 = vadd.f32 %v7034, %v7172
          %v7234 = vadd.f32 %v7035, %v7175
          %v7235 = vadd.f32 %v7036, %v7180
          %v7236 = vadd.f32 %v7037, %v7183
          %v7237 = vadd.f32 %v7038, %v7188
          %v7238 = vadd.f32 %v7039, %v7191
          %s7239 = sadd.s32 320, %s5606
          %s7240 = scalar_lea.vmem [#allocation3], %s7239
          %v7241 = vld [vmem:[%s7240] sm:$0xff]
          %v7242 = vld [vmem:[%s7240 + $0x8] sm:$0xff]
          %v7243 = vld [vmem:[%s7240 + $0x10] sm:$0xff]
          %v7244 = vld [vmem:[%s7240 + $0x18] sm:$0xff]
          %v7245 = vld [vmem:[%s7240 + $0x20] sm:$0xff]
          %v7246 = vld [vmem:[%s7240 + $0x28] sm:$0xff]
          %v7247 = vld [vmem:[%s7240 + $0x30] sm:$0xff]
          %v7248 = vld [vmem:[%s7240 + $0x38] sm:$0xff]
          %7249 = vmatpush.msra.mxu0 0.0
          %7250 = vmatpush.msra.mxu0 0.0
          %7251 = vmatpush.msra.mxu0 0.0
          %7252 = vmatpush.msra.mxu0 0.0
          %7253 = vmatpush.msra.mxu0 0.0
          %7254 = vmatpush.msra.mxu0 0.0
          %7255 = vmatpush.msra.mxu0 0.0
          %7256 = vmatpush.msra.mxu0 0.0
          %7257 = vmatpush.msra.mxu0 %v7248
          %7258 = vmatpush.msra.mxu0 %v7247
          %7259 = vmatpush.msra.mxu0 %v7246
          %7260 = vmatpush.msra.mxu0 %v7245
          %7261 = vmatpush.msra.mxu0 %v7244
          %7262 = vmatpush.msra.mxu0 %v7243
          %7263 = vmatpush.msra.mxu0 %v7242
          %7264 = vmatpush.msra.mxu0 %v7241
          %7265 = vmatmul.f32.gmra.mxu0 %v6500
          %v7266 = vpop.f32.mrf.mxu0
          %v7267 = vadd.f32 0.0, %v7266
          %7268 = vmatmul.f32.gmra.mxu0 %v6503
          %v7269 = vpop.f32.mrf.mxu0
          %v7270 = vadd.f32 0.0, %v7269
          %7271 = vmatmul.f32.gmra.mxu0 %v6506
          %v7272 = vpop.f32.mrf.mxu0
          %7273 = vmatmul.f32.gmra.mxu0 %v6509
          %v7274 = vpop.f32.mrf.mxu0
          %v7275 = vadd.f32 0.0, %v7274
          %7276 = vmatmul.f32.gmra.mxu0 %v6512
          %v7277 = vpop.f32.mrf.mxu0
          %v7278 = vadd.f32 0.0, %v7277
          %7279 = vmatmul.f32.gmra.mxu0 %v6515
          %v7280 = vpop.f32.mrf.mxu0
          %7281 = vmatmul.f32.gmra.mxu0 %v6518
          %v7282 = vpop.f32.mrf.mxu0
          %v7283 = vadd.f32 0.0, %v7282
          %7284 = vmatmul.f32.gmra.mxu0 %v6521
          %v7285 = vpop.f32.mrf.mxu0
          %v7286 = vadd.f32 0.0, %v7285
          %7287 = vmatmul.f32.gmra.mxu0 %v6524
          %v7288 = vpop.f32.mrf.mxu0
          %7289 = vmatmul.f32.gmra.mxu0 %v6527
          %v7290 = vpop.f32.mrf.mxu0
          %v7291 = vadd.f32 0.0, %v7290
          %7292 = vmatmul.f32.gmra.mxu0 %v6530
          %v7293 = vpop.f32.mrf.mxu0
          %v7294 = vadd.f32 0.0, %v7293
          %7295 = vmatmul.f32.gmra.mxu0 %v6533
          %v7296 = vpop.f32.mrf.mxu0
          %7297 = vmatmul.f32.gmra.mxu0 %v6536
          %v7298 = vpop.f32.mrf.mxu0
          %v7299 = vadd.f32 0.0, %v7298
          %7300 = vmatmul.f32.gmra.mxu0 %v6539
          %v7301 = vpop.f32.mrf.mxu0
          %v7302 = vadd.f32 0.0, %v7301
          %7303 = vmatmul.f32.gmra.mxu0 %v6542
          %v7304 = vpop.f32.mrf.mxu0
          %7305 = vmatmul.f32.gmra.mxu0 %v6545
          %v7306 = vpop.f32.mrf.mxu0
          %v7307 = vadd.f32 0.0, %v7306
          %7308 = vmatmul.f32.gmra.mxu0 %v6548
          %v7309 = vpop.f32.mrf.mxu0
          %v7310 = vadd.f32 0.0, %v7309
          %7311 = vmatmul.f32.gmra.mxu0 %v6551
          %v7312 = vpop.f32.mrf.mxu0
          %7313 = vmatmul.f32.gmra.mxu0 %v6554
          %v7314 = vpop.f32.mrf.mxu0
          %v7315 = vadd.f32 0.0, %v7314
          %7316 = vmatmul.f32.gmra.mxu0 %v6557
          %v7317 = vpop.f32.mrf.mxu0
          %v7318 = vadd.f32 0.0, %v7317
          %7319 = vmatmul.f32.gmra.mxu0 %v6560
          %v7320 = vpop.f32.mrf.mxu0
          %7321 = vmatmul.f32.gmra.mxu0 %v6563
          %v7322 = vpop.f32.mrf.mxu0
          %v7323 = vadd.f32 0.0, %v7322
          %7324 = vmatmul.f32.gmra.mxu0 %v6566
          %v7325 = vpop.f32.mrf.mxu0
          %v7326 = vadd.f32 0.0, %v7325
          %7327 = vmatmul.f32.gmra.mxu0 %v6569
          %v7328 = vpop.f32.mrf.mxu0
          %7329 = vmatmul.f32.gmra.mxu0 %v6572
          %v7330 = vpop.f32.mrf.mxu0
          %v7331 = vadd.f32 0.0, %v7330
          %7332 = vmatmul.f32.gmra.mxu0 %v6575
          %v7333 = vpop.f32.mrf.mxu0
          %v7334 = vadd.f32 0.0, %v7333
          %7335 = vmatmul.f32.gmra.mxu0 %v6578
          %v7336 = vpop.f32.mrf.mxu0
          %7337 = vmatmul.f32.gmra.mxu0 %v6581
          %v7338 = vpop.f32.mrf.mxu0
          %v7339 = vadd.f32 0.0, %v7338
          %7340 = vmatmul.f32.gmra.mxu0 %v6584
          %v7341 = vpop.f32.mrf.mxu0
          %v7342 = vadd.f32 0.0, %v7341
          %7343 = vmatmul.f32.gmra.mxu0 %v6587
          %v7344 = vpop.f32.mrf.mxu0
          %7345 = vmatmul.f32.gmra.mxu0 %v6590
          %v7346 = vpop.f32.mrf.mxu0
          %v7347 = vadd.f32 0.0, %v7346
          %7348 = vmatmul.f32.gmra.mxu0 %v6593
          %v7349 = vpop.f32.mrf.mxu0
          %v7350 = vadd.f32 0.0, %v7349
          %7351 = vmatmul.f32.gmra.mxu0 %v6596
          %v7352 = vpop.f32.mrf.mxu0
          %7353 = vmatmul.f32.gmra.mxu0 %v6599
          %v7354 = vpop.f32.mrf.mxu0
          %v7355 = vadd.f32 0.0, %v7354
          %7356 = vmatmul.f32.gmra.mxu0 %v6602
          %v7357 = vpop.f32.mrf.mxu0
          %v7358 = vadd.f32 0.0, %v7357
          %7359 = vmatmul.f32.gmra.mxu0 %v6605
          %v7360 = vpop.f32.mrf.mxu0
          %7361 = vmatmul.f32.gmra.mxu0 %v6608
          %v7362 = vpop.f32.mrf.mxu0
          %v7363 = vadd.f32 0.0, %v7362
          %7364 = vmatmul.f32.gmra.mxu0 %v6611
          %v7365 = vpop.f32.mrf.mxu0
          %v7366 = vadd.f32 0.0, %v7365
          %7367 = vmatmul.f32.gmra.mxu0 %v6614
          %v7368 = vpop.f32.mrf.mxu0
          %7369 = vmatmul.f32.gmra.mxu0 %v6617
          %v7370 = vpop.f32.mrf.mxu0
          %v7371 = vadd.f32 0.0, %v7370
          %7372 = vmatmul.f32.gmra.mxu0 %v6620
          %v7373 = vpop.f32.mrf.mxu0
          %v7374 = vadd.f32 0.0, %v7373
          %7375 = vmatmul.f32.gmra.mxu0 %v6623
          %v7376 = vpop.f32.mrf.mxu0
          %7377 = vmatmul.f32.gmra.mxu0 %v6626
          %v7378 = vpop.f32.mrf.mxu0
          %v7379 = vadd.f32 0.0, %v7378
          %7380 = vmatmul.f32.gmra.mxu0 %v6629
          %v7381 = vpop.f32.mrf.mxu0
          %v7382 = vadd.f32 0.0, %v7381
          %7383 = vmatmul.f32.gmra.mxu0 %v6632
          %v7384 = vpop.f32.mrf.mxu0
          %7385 = vmatmul.f32.gmra.mxu0 %v6635
          %v7386 = vpop.f32.mrf.mxu0
          %v7387 = vadd.f32 0.0, %v7386
          %7388 = vmatmul.f32.gmra.mxu0 %v6638
          %v7389 = vpop.f32.mrf.mxu0
          %v7390 = vadd.f32 0.0, %v7389
          %7391 = vmatmul.f32.gmra.mxu0 %v6641
          %v7392 = vpop.f32.mrf.mxu0
          %7393 = vmatmul.f32.gmra.mxu0 %v6644
          %v7394 = vpop.f32.mrf.mxu0
          %7395 = vmatmul.f32.gmra.mxu0 %v6647
          %v7396 = vpop.f32.mrf.mxu0
          %7397 = vmatmul.f32.gmra.mxu0 %v6650
          %v7398 = vpop.f32.mrf.mxu0
          %7399 = vmatmul.f32.gmra.mxu0 %v6491
          %v7400 = vpop.f32.mrf.mxu0
          %7401 = vmatmul.f32.gmra.mxu0 %v6494
          %v7402 = vpop.f32.mrf.mxu0
          %7403 = vmatmul.f32.gmra.mxu0 %v6497
          %v7404 = vpop.f32.mrf.mxu0
          %7405 = vdwg.mxu0
          %v7406 = vadd.f32 %v7207, %v7267
          %v7407 = vadd.f32 %v7208, %v7270
          %v7408 = vadd.f32 %v7209, %v7275
          %v7409 = vadd.f32 %v7210, %v7278
          %v7410 = vadd.f32 %v7211, %v7283
          %v7411 = vadd.f32 %v7212, %v7286
          %v7412 = vadd.f32 %v7213, %v7291
          %v7413 = vadd.f32 %v7214, %v7294
          %v7414 = vadd.f32 %v7215, %v7299
          %v7415 = vadd.f32 %v7216, %v7302
          %v7416 = vadd.f32 %v7217, %v7307
          %v7417 = vadd.f32 %v7218, %v7310
          %v7418 = vadd.f32 %v7219, %v7315
          %v7419 = vadd.f32 %v7220, %v7318
          %v7420 = vadd.f32 %v7221, %v7323
          %v7421 = vadd.f32 %v7222, %v7326
          %v7422 = vadd.f32 %v7223, %v7331
          %v7423 = vadd.f32 %v7224, %v7334
          %v7424 = vadd.f32 %v7225, %v7339
          %v7425 = vadd.f32 %v7226, %v7342
          %v7426 = vadd.f32 %v7227, %v7347
          %v7427 = vadd.f32 %v7228, %v7350
          %v7428 = vadd.f32 %v7229, %v7355
          %v7429 = vadd.f32 %v7230, %v7358
          %v7430 = vadd.f32 %v7231, %v7363
          %v7431 = vadd.f32 %v7232, %v7366
          %v7432 = vadd.f32 %v7233, %v7371
          %v7433 = vadd.f32 %v7234, %v7374
          %v7434 = vadd.f32 %v7235, %v7379
          %v7435 = vadd.f32 %v7236, %v7382
          %v7436 = vadd.f32 %v7237, %v7387
          %v7437 = vadd.f32 %v7238, %v7390
          %s7438 = sadd.s32 384, %s5606
          %s7439 = scalar_lea.vmem [#allocation3], %s7438
          %v7440 = vld [vmem:[%s7439] sm:$0xff]
          %v7441 = vld [vmem:[%s7439 + $0x8] sm:$0xff]
          %v7442 = vld [vmem:[%s7439 + $0x10] sm:$0xff]
          %v7443 = vld [vmem:[%s7439 + $0x18] sm:$0xff]
          %v7444 = vld [vmem:[%s7439 + $0x20] sm:$0xff]
          %v7445 = vld [vmem:[%s7439 + $0x28] sm:$0xff]
          %v7446 = vld [vmem:[%s7439 + $0x30] sm:$0xff]
          %v7447 = vld [vmem:[%s7439 + $0x38] sm:$0xff]
          %7448 = vmatpush.msra.mxu0 0.0
          %7449 = vmatpush.msra.mxu0 0.0
          %7450 = vmatpush.msra.mxu0 0.0
          %7451 = vmatpush.msra.mxu0 0.0
          %7452 = vmatpush.msra.mxu0 0.0
          %7453 = vmatpush.msra.mxu0 0.0
          %7454 = vmatpush.msra.mxu0 0.0
          %7455 = vmatpush.msra.mxu0 0.0
          %7456 = vmatpush.msra.mxu0 %v7447
          %7457 = vmatpush.msra.mxu0 %v7446
          %7458 = vmatpush.msra.mxu0 %v7445
          %7459 = vmatpush.msra.mxu0 %v7444
          %7460 = vmatpush.msra.mxu0 %v7443
          %7461 = vmatpush.msra.mxu0 %v7442
          %7462 = vmatpush.msra.mxu0 %v7441
          %7463 = vmatpush.msra.mxu0 %v7440
          %7464 = vmatmul.f32.gmra.mxu0 %v6072
          %v7465 = vpop.f32.mrf.mxu0
          %v7466 = vadd.f32 0.0, %v7465
          %7467 = vmatmul.f32.gmra.mxu0 %v6075
          %v7468 = vpop.f32.mrf.mxu0
          %v7469 = vadd.f32 0.0, %v7468
          %7470 = vmatmul.f32.gmra.mxu0 %v6078
          %v7471 = vpop.f32.mrf.mxu0
          %7472 = vmatmul.f32.gmra.mxu0 %v6081
          %v7473 = vpop.f32.mrf.mxu0
          %v7474 = vadd.f32 0.0, %v7473
          %7475 = vmatmul.f32.gmra.mxu0 %v6084
          %v7476 = vpop.f32.mrf.mxu0
          %v7477 = vadd.f32 0.0, %v7476
          %7478 = vmatmul.f32.gmra.mxu0 %v6087
          %v7479 = vpop.f32.mrf.mxu0
          %7480 = vmatmul.f32.gmra.mxu0 %v6090
          %v7481 = vpop.f32.mrf.mxu0
          %v7482 = vadd.f32 0.0, %v7481
          %7483 = vmatmul.f32.gmra.mxu0 %v6093
          %v7484 = vpop.f32.mrf.mxu0
          %v7485 = vadd.f32 0.0, %v7484
          %7486 = vmatmul.f32.gmra.mxu0 %v6096
          %v7487 = vpop.f32.mrf.mxu0
          %7488 = vmatmul.f32.gmra.mxu0 %v6099
          %v7489 = vpop.f32.mrf.mxu0
          %v7490 = vadd.f32 0.0, %v7489
          %7491 = vmatmul.f32.gmra.mxu0 %v6102
          %v7492 = vpop.f32.mrf.mxu0
          %v7493 = vadd.f32 0.0, %v7492
          %7494 = vmatmul.f32.gmra.mxu0 %v6105
          %v7495 = vpop.f32.mrf.mxu0
          %7496 = vmatmul.f32.gmra.mxu0 %v6108
          %v7497 = vpop.f32.mrf.mxu0
          %v7498 = vadd.f32 0.0, %v7497
          %7499 = vmatmul.f32.gmra.mxu0 %v6111
          %v7500 = vpop.f32.mrf.mxu0
          %v7501 = vadd.f32 0.0, %v7500
          %7502 = vmatmul.f32.gmra.mxu0 %v6114
          %v7503 = vpop.f32.mrf.mxu0
          %7504 = vmatmul.f32.gmra.mxu0 %v6117
          %v7505 = vpop.f32.mrf.mxu0
          %v7506 = vadd.f32 0.0, %v7505
          %7507 = vmatmul.f32.gmra.mxu0 %v6120
          %v7508 = vpop.f32.mrf.mxu0
          %v7509 = vadd.f32 0.0, %v7508
          %7510 = vmatmul.f32.gmra.mxu0 %v6123
          %v7511 = vpop.f32.mrf.mxu0
          %7512 = vmatmul.f32.gmra.mxu0 %v6126
          %v7513 = vpop.f32.mrf.mxu0
          %v7514 = vadd.f32 0.0, %v7513
          %7515 = vmatmul.f32.gmra.mxu0 %v6129
          %v7516 = vpop.f32.mrf.mxu0
          %v7517 = vadd.f32 0.0, %v7516
          %7518 = vmatmul.f32.gmra.mxu0 %v6132
          %v7519 = vpop.f32.mrf.mxu0
          %7520 = vmatmul.f32.gmra.mxu0 %v6135
          %v7521 = vpop.f32.mrf.mxu0
          %v7522 = vadd.f32 0.0, %v7521
          %7523 = vmatmul.f32.gmra.mxu0 %v6138
          %v7524 = vpop.f32.mrf.mxu0
          %v7525 = vadd.f32 0.0, %v7524
          %7526 = vmatmul.f32.gmra.mxu0 %v6141
          %v7527 = vpop.f32.mrf.mxu0
          %7528 = vmatmul.f32.gmra.mxu0 %v6144
          %v7529 = vpop.f32.mrf.mxu0
          %v7530 = vadd.f32 0.0, %v7529
          %7531 = vmatmul.f32.gmra.mxu0 %v6147
          %v7532 = vpop.f32.mrf.mxu0
          %v7533 = vadd.f32 0.0, %v7532
          %7534 = vmatmul.f32.gmra.mxu0 %v6150
          %v7535 = vpop.f32.mrf.mxu0
          %7536 = vmatmul.f32.gmra.mxu0 %v6153
          %v7537 = vpop.f32.mrf.mxu0
          %v7538 = vadd.f32 0.0, %v7537
          %7539 = vmatmul.f32.gmra.mxu0 %v6156
          %v7540 = vpop.f32.mrf.mxu0
          %v7541 = vadd.f32 0.0, %v7540
          %7542 = vmatmul.f32.gmra.mxu0 %v6159
          %v7543 = vpop.f32.mrf.mxu0
          %7544 = vmatmul.f32.gmra.mxu0 %v6162
          %v7545 = vpop.f32.mrf.mxu0
          %v7546 = vadd.f32 0.0, %v7545
          %7547 = vmatmul.f32.gmra.mxu0 %v6165
          %v7548 = vpop.f32.mrf.mxu0
          %v7549 = vadd.f32 0.0, %v7548
          %7550 = vmatmul.f32.gmra.mxu0 %v6168
          %v7551 = vpop.f32.mrf.mxu0
          %7552 = vmatmul.f32.gmra.mxu0 %v6171
          %v7553 = vpop.f32.mrf.mxu0
          %v7554 = vadd.f32 0.0, %v7553
          %7555 = vmatmul.f32.gmra.mxu0 %v6174
          %v7556 = vpop.f32.mrf.mxu0
          %v7557 = vadd.f32 0.0, %v7556
          %7558 = vmatmul.f32.gmra.mxu0 %v6177
          %v7559 = vpop.f32.mrf.mxu0
          %7560 = vmatmul.f32.gmra.mxu0 %v6180
          %v7561 = vpop.f32.mrf.mxu0
          %v7562 = vadd.f32 0.0, %v7561
          %7563 = vmatmul.f32.gmra.mxu0 %v6183
          %v7564 = vpop.f32.mrf.mxu0
          %v7565 = vadd.f32 0.0, %v7564
          %7566 = vmatmul.f32.gmra.mxu0 %v6186
          %v7567 = vpop.f32.mrf.mxu0
          %7568 = vmatmul.f32.gmra.mxu0 %v6189
          %v7569 = vpop.f32.mrf.mxu0
          %v7570 = vadd.f32 0.0, %v7569
          %7571 = vmatmul.f32.gmra.mxu0 %v6192
          %v7572 = vpop.f32.mrf.mxu0
          %v7573 = vadd.f32 0.0, %v7572
          %7574 = vmatmul.f32.gmra.mxu0 %v6195
          %v7575 = vpop.f32.mrf.mxu0
          %7576 = vmatmul.f32.gmra.mxu0 %v6198
          %v7577 = vpop.f32.mrf.mxu0
          %v7578 = vadd.f32 0.0, %v7577
          %7579 = vmatmul.f32.gmra.mxu0 %v6201
          %v7580 = vpop.f32.mrf.mxu0
          %v7581 = vadd.f32 0.0, %v7580
          %7582 = vmatmul.f32.gmra.mxu0 %v6204
          %v7583 = vpop.f32.mrf.mxu0
          %7584 = vmatmul.f32.gmra.mxu0 %v6207
          %v7585 = vpop.f32.mrf.mxu0
          %v7586 = vadd.f32 0.0, %v7585
          %7587 = vmatmul.f32.gmra.mxu0 %v6210
          %v7588 = vpop.f32.mrf.mxu0
          %v7589 = vadd.f32 0.0, %v7588
          %7590 = vmatmul.f32.gmra.mxu0 %v6213
          %v7591 = vpop.f32.mrf.mxu0
          %7592 = vmatmul.f32.gmra.mxu0 %v6054
          %v7593 = vpop.f32.mrf.mxu0
          %7594 = vmatmul.f32.gmra.mxu0 %v6057
          %v7595 = vpop.f32.mrf.mxu0
          %7596 = vmatmul.f32.gmra.mxu0 %v6060
          %v7597 = vpop.f32.mrf.mxu0
          %7598 = vmatmul.f32.gmra.mxu0 %v6063
          %v7599 = vpop.f32.mrf.mxu0
          %7600 = vmatmul.f32.gmra.mxu0 %v6066
          %v7601 = vpop.f32.mrf.mxu0
          %7602 = vmatmul.f32.gmra.mxu0 %v6069
          %v7603 = vpop.f32.mrf.mxu0
          %7604 = vdwg.mxu0
          %v7605 = vadd.f32 %v7406, %v7466
          %v7606 = vadd.f32 %v7407, %v7469
          %v7607 = vadd.f32 %v7408, %v7474
          %v7608 = vadd.f32 %v7409, %v7477
          %v7609 = vadd.f32 %v7410, %v7482
          %v7610 = vadd.f32 %v7411, %v7485
          %v7611 = vadd.f32 %v7412, %v7490
          %v7612 = vadd.f32 %v7413, %v7493
          %v7613 = vadd.f32 %v7414, %v7498
          %v7614 = vadd.f32 %v7415, %v7501
          %v7615 = vadd.f32 %v7416, %v7506
          %v7616 = vadd.f32 %v7417, %v7509
          %v7617 = vadd.f32 %v7418, %v7514
          %v7618 = vadd.f32 %v7419, %v7517
          %v7619 = vadd.f32 %v7420, %v7522
          %v7620 = vadd.f32 %v7421, %v7525
          %v7621 = vadd.f32 %v7422, %v7530
          %v7622 = vadd.f32 %v7423, %v7533
          %v7623 = vadd.f32 %v7424, %v7538
          %v7624 = vadd.f32 %v7425, %v7541
          %v7625 = vadd.f32 %v7426, %v7546
          %v7626 = vadd.f32 %v7427, %v7549
          %v7627 = vadd.f32 %v7428, %v7554
          %v7628 = vadd.f32 %v7429, %v7557
          %v7629 = vadd.f32 %v7430, %v7562
          %v7630 = vadd.f32 %v7431, %v7565
          %v7631 = vadd.f32 %v7432, %v7570
          %v7632 = vadd.f32 %v7433, %v7573
          %v7633 = vadd.f32 %v7434, %v7578
          %v7634 = vadd.f32 %v7435, %v7581
          %v7635 = vadd.f32 %v7436, %v7586
          %v7636 = vadd.f32 %v7437, %v7589
          %s7637 = sadd.s32 448, %s5606
          %s7638 = scalar_lea.vmem [#allocation3], %s7637
          %v7639 = vld [vmem:[%s7638] sm:$0xff]
          %v7640 = vld [vmem:[%s7638 + $0x8] sm:$0xff]
          %v7641 = vld [vmem:[%s7638 + $0x10] sm:$0xff]
          %v7642 = vld [vmem:[%s7638 + $0x18] sm:$0xff]
          %v7643 = vld [vmem:[%s7638 + $0x20] sm:$0xff]
          %v7644 = vld [vmem:[%s7638 + $0x28] sm:$0xff]
          %v7645 = vld [vmem:[%s7638 + $0x30] sm:$0xff]
          %v7646 = vld [vmem:[%s7638 + $0x38] sm:$0xff]
          %7647 = vmatpush.msra.mxu0 0.0
          %7648 = vmatpush.msra.mxu0 0.0
          %7649 = vmatpush.msra.mxu0 0.0
          %7650 = vmatpush.msra.mxu0 0.0
          %7651 = vmatpush.msra.mxu0 0.0
          %7652 = vmatpush.msra.mxu0 0.0
          %7653 = vmatpush.msra.mxu0 0.0
          %7654 = vmatpush.msra.mxu0 0.0
          %7655 = vmatpush.msra.mxu0 %v7646
          %7656 = vmatpush.msra.mxu0 %v7645
          %7657 = vmatpush.msra.mxu0 %v7644
          %7658 = vmatpush.msra.mxu0 %v7643
          %7659 = vmatpush.msra.mxu0 %v7642
          %7660 = vmatpush.msra.mxu0 %v7641
          %7661 = vmatpush.msra.mxu0 %v7640
          %7662 = vmatpush.msra.mxu0 %v7639
          %7663 = vmatmul.f32.gmra.mxu0 %v5753
          %v7664 = vpop.f32.mrf.mxu0
          %v7665 = vadd.f32 0.0, %v7664
          %7666 = vmatmul.f32.gmra.mxu0 %v5756
          %v7667 = vpop.f32.mrf.mxu0
          %v7668 = vadd.f32 0.0, %v7667
          %7669 = vmatmul.f32.gmra.mxu0 %v5759
          %v7670 = vpop.f32.mrf.mxu0
          %7671 = vmatmul.f32.gmra.mxu0 %v5762
          %v7672 = vpop.f32.mrf.mxu0
          %v7673 = vadd.f32 0.0, %v7672
          %7674 = vmatmul.f32.gmra.mxu0 %v5765
          %v7675 = vpop.f32.mrf.mxu0
          %v7676 = vadd.f32 0.0, %v7675
          %7677 = vmatmul.f32.gmra.mxu0 %v5768
          %v7678 = vpop.f32.mrf.mxu0
          %7679 = vmatmul.f32.gmra.mxu0 %v5771
          %v7680 = vpop.f32.mrf.mxu0
          %v7681 = vadd.f32 0.0, %v7680
          %7682 = vmatmul.f32.gmra.mxu0 %v5774
          %v7683 = vpop.f32.mrf.mxu0
          %v7684 = vadd.f32 0.0, %v7683
          %7685 = vmatmul.f32.gmra.mxu0 %v5777
          %v7686 = vpop.f32.mrf.mxu0
          %7687 = vmatmul.f32.gmra.mxu0 %v5780
          %v7688 = vpop.f32.mrf.mxu0
          %v7689 = vadd.f32 0.0, %v7688
          %7690 = vmatmul.f32.gmra.mxu0 %v5783
          %v7691 = vpop.f32.mrf.mxu0
          %v7692 = vadd.f32 0.0, %v7691
          %7693 = vmatmul.f32.gmra.mxu0 %v5786
          %v7694 = vpop.f32.mrf.mxu0
          %7695 = vmatmul.f32.gmra.mxu0 %v5789
          %v7696 = vpop.f32.mrf.mxu0
          %v7697 = vadd.f32 0.0, %v7696
          %7698 = vmatmul.f32.gmra.mxu0 %v5792
          %v7699 = vpop.f32.mrf.mxu0
          %v7700 = vadd.f32 0.0, %v7699
          %7701 = vmatmul.f32.gmra.mxu0 %v5795
          %v7702 = vpop.f32.mrf.mxu0
          %7703 = vmatmul.f32.gmra.mxu0 %v5798
          %v7704 = vpop.f32.mrf.mxu0
          %v7705 = vadd.f32 0.0, %v7704
          %7706 = vmatmul.f32.gmra.mxu0 %v5801
          %v7707 = vpop.f32.mrf.mxu0
          %v7708 = vadd.f32 0.0, %v7707
          %7709 = vmatmul.f32.gmra.mxu0 %v5804
          %v7710 = vpop.f32.mrf.mxu0
          %7711 = vmatmul.f32.gmra.mxu0 %v5807
          %v7712 = vpop.f32.mrf.mxu0
          %v7713 = vadd.f32 0.0, %v7712
          %7714 = vmatmul.f32.gmra.mxu0 %v5810
          %v7715 = vpop.f32.mrf.mxu0
          %v7716 = vadd.f32 0.0, %v7715
          %7717 = vmatmul.f32.gmra.mxu0 %v5813
          %v7718 = vpop.f32.mrf.mxu0
          %7719 = vmatmul.f32.gmra.mxu0 %v5816
          %v7720 = vpop.f32.mrf.mxu0
          %v7721 = vadd.f32 0.0, %v7720
          %7722 = vmatmul.f32.gmra.mxu0 %v5819
          %v7723 = vpop.f32.mrf.mxu0
          %v7724 = vadd.f32 0.0, %v7723
          %7725 = vmatmul.f32.gmra.mxu0 %v5822
          %v7726 = vpop.f32.mrf.mxu0
          %7727 = vmatmul.f32.gmra.mxu0 %v5825
          %v7728 = vpop.f32.mrf.mxu0
          %v7729 = vadd.f32 0.0, %v7728
          %7730 = vmatmul.f32.gmra.mxu0 %v5828
          %v7731 = vpop.f32.mrf.mxu0
          %v7732 = vadd.f32 0.0, %v7731
          %7733 = vmatmul.f32.gmra.mxu0 %v5831
          %v7734 = vpop.f32.mrf.mxu0
          %7735 = vmatmul.f32.gmra.mxu0 %v5834
          %v7736 = vpop.f32.mrf.mxu0
          %v7737 = vadd.f32 0.0, %v7736
          %7738 = vmatmul.f32.gmra.mxu0 %v5837
          %v7739 = vpop.f32.mrf.mxu0
          %v7740 = vadd.f32 0.0, %v7739
          %7741 = vmatmul.f32.gmra.mxu0 %v5840
          %v7742 = vpop.f32.mrf.mxu0
          %7743 = vmatmul.f32.gmra.mxu0 %v5843
          %v7744 = vpop.f32.mrf.mxu0
          %v7745 = vadd.f32 0.0, %v7744
          %7746 = vmatmul.f32.gmra.mxu0 %v5846
          %v7747 = vpop.f32.mrf.mxu0
          %v7748 = vadd.f32 0.0, %v7747
          %7749 = vmatmul.f32.gmra.mxu0 %v5849
          %v7750 = vpop.f32.mrf.mxu0
          %7751 = vmatmul.f32.gmra.mxu0 %v5852
          %v7752 = vpop.f32.mrf.mxu0
          %v7753 = vadd.f32 0.0, %v7752
          %7754 = vmatmul.f32.gmra.mxu0 %v5855
          %v7755 = vpop.f32.mrf.mxu0
          %v7756 = vadd.f32 0.0, %v7755
          %7757 = vmatmul.f32.gmra.mxu0 %v5858
          %v7758 = vpop.f32.mrf.mxu0
          %7759 = vmatmul.f32.gmra.mxu0 %v5861
          %v7760 = vpop.f32.mrf.mxu0
          %v7761 = vadd.f32 0.0, %v7760
          %7762 = vmatmul.f32.gmra.mxu0 %v5864
          %v7763 = vpop.f32.mrf.mxu0
          %v7764 = vadd.f32 0.0, %v7763
          %7765 = vmatmul.f32.gmra.mxu0 %v5867
          %v7766 = vpop.f32.mrf.mxu0
          %7767 = vmatmul.f32.gmra.mxu0 %v5870
          %v7768 = vpop.f32.mrf.mxu0
          %v7769 = vadd.f32 0.0, %v7768
          %7770 = vmatmul.f32.gmra.mxu0 %v5873
          %v7771 = vpop.f32.mrf.mxu0
          %v7772 = vadd.f32 0.0, %v7771
          %7773 = vmatmul.f32.gmra.mxu0 %v5876
          %v7774 = vpop.f32.mrf.mxu0
          %7775 = vmatmul.f32.gmra.mxu0 %v5879
          %v7776 = vpop.f32.mrf.mxu0
          %v7777 = vadd.f32 0.0, %v7776
          %7778 = vmatmul.f32.gmra.mxu0 %v5882
          %v7779 = vpop.f32.mrf.mxu0
          %v7780 = vadd.f32 0.0, %v7779
          %7781 = vmatmul.f32.gmra.mxu0 %v5885
          %v7782 = vpop.f32.mrf.mxu0
          %7783 = vmatmul.f32.gmra.mxu0 %v5888
          %v7784 = vpop.f32.mrf.mxu0
          %v7785 = vadd.f32 0.0, %v7784
          %7786 = vmatmul.f32.gmra.mxu0 %v5891
          %v7787 = vpop.f32.mrf.mxu0
          %v7788 = vadd.f32 0.0, %v7787
          %7789 = vmatmul.f32.gmra.mxu0 %v5894
          %v7790 = vpop.f32.mrf.mxu0
          %7791 = vmatmul.f32.gmra.mxu0 %v5735
          %v7792 = vpop.f32.mrf.mxu0
          %7793 = vmatmul.f32.gmra.mxu0 %v5738
          %v7794 = vpop.f32.mrf.mxu0
          %7795 = vmatmul.f32.gmra.mxu0 %v5741
          %v7796 = vpop.f32.mrf.mxu0
          %7797 = vmatmul.f32.gmra.mxu0 %v5744
          %v7798 = vpop.f32.mrf.mxu0
          %7799 = vmatmul.f32.gmra.mxu0 %v5747
          %v7800 = vpop.f32.mrf.mxu0
          %7801 = vmatmul.f32.gmra.mxu0 %v5750
          %v7802 = vpop.f32.mrf.mxu0
          %7803 = vdwg.mxu0
          %v7804 = vadd.f32 %v7605, %v7665
          %v7805 = vadd.f32 %v7606, %v7668
          %v7806 = vadd.f32 %v7607, %v7673
          %v7807 = vadd.f32 %v7608, %v7676
          %v7808 = vadd.f32 %v7609, %v7681
          %v7809 = vadd.f32 %v7610, %v7684
          %v7810 = vadd.f32 %v7611, %v7689
          %v7811 = vadd.f32 %v7612, %v7692
          %v7812 = vadd.f32 %v7613, %v7697
          %v7813 = vadd.f32 %v7614, %v7700
          %v7814 = vadd.f32 %v7615, %v7705
          %v7815 = vadd.f32 %v7616, %v7708
          %v7816 = vadd.f32 %v7617, %v7713
          %v7817 = vadd.f32 %v7618, %v7716
          %v7818 = vadd.f32 %v7619, %v7721
          %v7819 = vadd.f32 %v7620, %v7724
          %v7820 = vadd.f32 %v7621, %v7729
          %v7821 = vadd.f32 %v7622, %v7732
          %v7822 = vadd.f32 %v7623, %v7737
          %v7823 = vadd.f32 %v7624, %v7740
          %v7824 = vadd.f32 %v7625, %v7745
          %v7825 = vadd.f32 %v7626, %v7748
          %v7826 = vadd.f32 %v7627, %v7753
          %v7827 = vadd.f32 %v7628, %v7756
          %v7828 = vadd.f32 %v7629, %v7761
          %v7829 = vadd.f32 %v7630, %v7764
          %v7830 = vadd.f32 %v7631, %v7769
          %v7831 = vadd.f32 %v7632, %v7772
          %v7832 = vadd.f32 %v7633, %v7777
          %v7833 = vadd.f32 %v7634, %v7780
          %v7834 = vadd.f32 %v7635, %v7785
          %v7835 = vadd.f32 %v7636, %v7788
          %s7836 = sadd.s32 512, %s5606
          %s7837 = scalar_lea.vmem [#allocation3], %s7836
          %v7838 = vld [vmem:[%s7837] sm:$0xff]
          %v7839 = vld [vmem:[%s7837 + $0x8] sm:$0xff]
          %v7840 = vld [vmem:[%s7837 + $0x10] sm:$0xff]
          %v7841 = vld [vmem:[%s7837 + $0x18] sm:$0xff]
          %v7842 = vld [vmem:[%s7837 + $0x20] sm:$0xff]
          %v7843 = vld [vmem:[%s7837 + $0x28] sm:$0xff]
          %v7844 = vld [vmem:[%s7837 + $0x30] sm:$0xff]
          %v7845 = vld [vmem:[%s7837 + $0x38] sm:$0xff]
          %7846 = vmatpush.msra.mxu0 0.0
          %7847 = vmatpush.msra.mxu0 0.0
          %7848 = vmatpush.msra.mxu0 0.0
          %7849 = vmatpush.msra.mxu0 0.0
          %7850 = vmatpush.msra.mxu0 0.0
          %7851 = vmatpush.msra.mxu0 0.0
          %7852 = vmatpush.msra.mxu0 0.0
          %7853 = vmatpush.msra.mxu0 0.0
          %7854 = vmatpush.msra.mxu0 %v7845
          %7855 = vmatpush.msra.mxu0 %v7844
          %7856 = vmatpush.msra.mxu0 %v7843
          %7857 = vmatpush.msra.mxu0 %v7842
          %7858 = vmatpush.msra.mxu0 %v7841
          %7859 = vmatpush.msra.mxu0 %v7840
          %7860 = vmatpush.msra.mxu0 %v7839
          %7861 = vmatpush.msra.mxu0 %v7838
          %7862 = vmatmul.f32.gmra.mxu0 %v6509
          %v7863 = vpop.f32.mrf.mxu0
          %v7864 = vadd.f32 0.0, %v7863
          %7865 = vmatmul.f32.gmra.mxu0 %v6512
          %v7866 = vpop.f32.mrf.mxu0
          %v7867 = vadd.f32 0.0, %v7866
          %7868 = vmatmul.f32.gmra.mxu0 %v6515
          %v7869 = vpop.f32.mrf.mxu0
          %7870 = vmatmul.f32.gmra.mxu0 %v6518
          %v7871 = vpop.f32.mrf.mxu0
          %v7872 = vadd.f32 0.0, %v7871
          %7873 = vmatmul.f32.gmra.mxu0 %v6521
          %v7874 = vpop.f32.mrf.mxu0
          %v7875 = vadd.f32 0.0, %v7874
          %7876 = vmatmul.f32.gmra.mxu0 %v6524
          %v7877 = vpop.f32.mrf.mxu0
          %7878 = vmatmul.f32.gmra.mxu0 %v6527
          %v7879 = vpop.f32.mrf.mxu0
          %v7880 = vadd.f32 0.0, %v7879
          %7881 = vmatmul.f32.gmra.mxu0 %v6530
          %v7882 = vpop.f32.mrf.mxu0
          %v7883 = vadd.f32 0.0, %v7882
          %7884 = vmatmul.f32.gmra.mxu0 %v6533
          %v7885 = vpop.f32.mrf.mxu0
          %7886 = vmatmul.f32.gmra.mxu0 %v6536
          %v7887 = vpop.f32.mrf.mxu0
          %v7888 = vadd.f32 0.0, %v7887
          %7889 = vmatmul.f32.gmra.mxu0 %v6539
          %v7890 = vpop.f32.mrf.mxu0
          %v7891 = vadd.f32 0.0, %v7890
          %7892 = vmatmul.f32.gmra.mxu0 %v6542
          %v7893 = vpop.f32.mrf.mxu0
          %7894 = vmatmul.f32.gmra.mxu0 %v6545
          %v7895 = vpop.f32.mrf.mxu0
          %v7896 = vadd.f32 0.0, %v7895
          %7897 = vmatmul.f32.gmra.mxu0 %v6548
          %v7898 = vpop.f32.mrf.mxu0
          %v7899 = vadd.f32 0.0, %v7898
          %7900 = vmatmul.f32.gmra.mxu0 %v6551
          %v7901 = vpop.f32.mrf.mxu0
          %7902 = vmatmul.f32.gmra.mxu0 %v6554
          %v7903 = vpop.f32.mrf.mxu0
          %v7904 = vadd.f32 0.0, %v7903
          %7905 = vmatmul.f32.gmra.mxu0 %v6557
          %v7906 = vpop.f32.mrf.mxu0
          %v7907 = vadd.f32 0.0, %v7906
          %7908 = vmatmul.f32.gmra.mxu0 %v6560
          %v7909 = vpop.f32.mrf.mxu0
          %7910 = vmatmul.f32.gmra.mxu0 %v6563
          %v7911 = vpop.f32.mrf.mxu0
          %v7912 = vadd.f32 0.0, %v7911
          %7913 = vmatmul.f32.gmra.mxu0 %v6566
          %v7914 = vpop.f32.mrf.mxu0
          %v7915 = vadd.f32 0.0, %v7914
          %7916 = vmatmul.f32.gmra.mxu0 %v6569
          %v7917 = vpop.f32.mrf.mxu0
          %7918 = vmatmul.f32.gmra.mxu0 %v6572
          %v7919 = vpop.f32.mrf.mxu0
          %v7920 = vadd.f32 0.0, %v7919
          %7921 = vmatmul.f32.gmra.mxu0 %v6575
          %v7922 = vpop.f32.mrf.mxu0
          %v7923 = vadd.f32 0.0, %v7922
          %7924 = vmatmul.f32.gmra.mxu0 %v6578
          %v7925 = vpop.f32.mrf.mxu0
          %7926 = vmatmul.f32.gmra.mxu0 %v6581
          %v7927 = vpop.f32.mrf.mxu0
          %v7928 = vadd.f32 0.0, %v7927
          %7929 = vmatmul.f32.gmra.mxu0 %v6584
          %v7930 = vpop.f32.mrf.mxu0
          %v7931 = vadd.f32 0.0, %v7930
          %7932 = vmatmul.f32.gmra.mxu0 %v6587
          %v7933 = vpop.f32.mrf.mxu0
          %7934 = vmatmul.f32.gmra.mxu0 %v6590
          %v7935 = vpop.f32.mrf.mxu0
          %v7936 = vadd.f32 0.0, %v7935
          %7937 = vmatmul.f32.gmra.mxu0 %v6593
          %v7938 = vpop.f32.mrf.mxu0
          %v7939 = vadd.f32 0.0, %v7938
          %7940 = vmatmul.f32.gmra.mxu0 %v6596
          %v7941 = vpop.f32.mrf.mxu0
          %7942 = vmatmul.f32.gmra.mxu0 %v6599
          %v7943 = vpop.f32.mrf.mxu0
          %v7944 = vadd.f32 0.0, %v7943
          %7945 = vmatmul.f32.gmra.mxu0 %v6602
          %v7946 = vpop.f32.mrf.mxu0
          %v7947 = vadd.f32 0.0, %v7946
          %7948 = vmatmul.f32.gmra.mxu0 %v6605
          %v7949 = vpop.f32.mrf.mxu0
          %7950 = vmatmul.f32.gmra.mxu0 %v6608
          %v7951 = vpop.f32.mrf.mxu0
          %v7952 = vadd.f32 0.0, %v7951
          %7953 = vmatmul.f32.gmra.mxu0 %v6611
          %v7954 = vpop.f32.mrf.mxu0
          %v7955 = vadd.f32 0.0, %v7954
          %7956 = vmatmul.f32.gmra.mxu0 %v6614
          %v7957 = vpop.f32.mrf.mxu0
          %7958 = vmatmul.f32.gmra.mxu0 %v6617
          %v7959 = vpop.f32.mrf.mxu0
          %v7960 = vadd.f32 0.0, %v7959
          %7961 = vmatmul.f32.gmra.mxu0 %v6620
          %v7962 = vpop.f32.mrf.mxu0
          %v7963 = vadd.f32 0.0, %v7962
          %7964 = vmatmul.f32.gmra.mxu0 %v6623
          %v7965 = vpop.f32.mrf.mxu0
          %7966 = vmatmul.f32.gmra.mxu0 %v6626
          %v7967 = vpop.f32.mrf.mxu0
          %v7968 = vadd.f32 0.0, %v7967
          %7969 = vmatmul.f32.gmra.mxu0 %v6629
          %v7970 = vpop.f32.mrf.mxu0
          %v7971 = vadd.f32 0.0, %v7970
          %7972 = vmatmul.f32.gmra.mxu0 %v6632
          %v7973 = vpop.f32.mrf.mxu0
          %7974 = vmatmul.f32.gmra.mxu0 %v6635
          %v7975 = vpop.f32.mrf.mxu0
          %v7976 = vadd.f32 0.0, %v7975
          %7977 = vmatmul.f32.gmra.mxu0 %v6638
          %v7978 = vpop.f32.mrf.mxu0
          %v7979 = vadd.f32 0.0, %v7978
          %7980 = vmatmul.f32.gmra.mxu0 %v6641
          %v7981 = vpop.f32.mrf.mxu0
          %7982 = vmatmul.f32.gmra.mxu0 %v6644
          %v7983 = vpop.f32.mrf.mxu0
          %v7984 = vadd.f32 0.0, %v7983
          %7985 = vmatmul.f32.gmra.mxu0 %v6647
          %v7986 = vpop.f32.mrf.mxu0
          %v7987 = vadd.f32 0.0, %v7986
          %7988 = vmatmul.f32.gmra.mxu0 %v6650
          %v7989 = vpop.f32.mrf.mxu0
          %7990 = vmatmul.f32.gmra.mxu0 %v6491
          %v7991 = vpop.f32.mrf.mxu0
          %7992 = vmatmul.f32.gmra.mxu0 %v6494
          %v7993 = vpop.f32.mrf.mxu0
          %7994 = vmatmul.f32.gmra.mxu0 %v6497
          %v7995 = vpop.f32.mrf.mxu0
          %7996 = vmatmul.f32.gmra.mxu0 %v6500
          %v7997 = vpop.f32.mrf.mxu0
          %7998 = vmatmul.f32.gmra.mxu0 %v6503
          %v7999 = vpop.f32.mrf.mxu0
          %8000 = vmatmul.f32.gmra.mxu0 %v6506
          %v8001 = vpop.f32.mrf.mxu0
          %8002 = vdwg.mxu0
          %v8003 = vadd.f32 %v7804, %v7864
          %v8004 = vadd.f32 %v7805, %v7867
          %v8005 = vadd.f32 %v7806, %v7872
          %v8006 = vadd.f32 %v7807, %v7875
          %v8007 = vadd.f32 %v7808, %v7880
          %v8008 = vadd.f32 %v7809, %v7883
          %v8009 = vadd.f32 %v7810, %v7888
          %v8010 = vadd.f32 %v7811, %v7891
          %v8011 = vadd.f32 %v7812, %v7896
          %v8012 = vadd.f32 %v7813, %v7899
          %v8013 = vadd.f32 %v7814, %v7904
          %v8014 = vadd.f32 %v7815, %v7907
          %v8015 = vadd.f32 %v7816, %v7912
          %v8016 = vadd.f32 %v7817, %v7915
          %v8017 = vadd.f32 %v7818, %v7920
          %v8018 = vadd.f32 %v7819, %v7923
          %v8019 = vadd.f32 %v7820, %v7928
          %v8020 = vadd.f32 %v7821, %v7931
          %v8021 = vadd.f32 %v7822, %v7936
          %v8022 = vadd.f32 %v7823, %v7939
          %v8023 = vadd.f32 %v7824, %v7944
          %v8024 = vadd.f32 %v7825, %v7947
          %v8025 = vadd.f32 %v7826, %v7952
          %v8026 = vadd.f32 %v7827, %v7955
          %v8027 = vadd.f32 %v7828, %v7960
          %v8028 = vadd.f32 %v7829, %v7963
          %v8029 = vadd.f32 %v7830, %v7968
          %v8030 = vadd.f32 %v7831, %v7971
          %v8031 = vadd.f32 %v7832, %v7976
          %v8032 = vadd.f32 %v7833, %v7979
          %v8033 = vadd.f32 %v7834, %v7984
          %v8034 = vadd.f32 %v7835, %v7987
          %s8035 = scalar_lea.vmem [#allocation5], %s5605
          %v8036 = vld [vmem:[%s8035] sm:$0x1]
          %v8038 = vperm.slane %v8036, 0
          %v8040 = vadd.f32 %v8003, %v8038
          %v8041 = vadd.f32 %v8004, %v8038
          %v8042 = vadd.f32 %v8005, %v8038
          %v8043 = vadd.f32 %v8006, %v8038
          %v8044 = vadd.f32 %v8007, %v8038
          %v8045 = vadd.f32 %v8008, %v8038
          %v8046 = vadd.f32 %v8009, %v8038
          %v8047 = vadd.f32 %v8010, %v8038
          %v8048 = vadd.f32 %v8011, %v8038
          %v8049 = vadd.f32 %v8012, %v8038
          %v8050 = vadd.f32 %v8013, %v8038
          %v8051 = vadd.f32 %v8014, %v8038
          %v8052 = vadd.f32 %v8015, %v8038
          %v8053 = vadd.f32 %v8016, %v8038
          %v8054 = vadd.f32 %v8017, %v8038
          %v8055 = vadd.f32 %v8018, %v8038
          %v8056 = vadd.f32 %v8019, %v8038
          %v8057 = vadd.f32 %v8020, %v8038
          %v8058 = vadd.f32 %v8021, %v8038
          %v8059 = vadd.f32 %v8022, %v8038
          %v8060 = vadd.f32 %v8023, %v8038
          %v8061 = vadd.f32 %v8024, %v8038
          %v8062 = vadd.f32 %v8025, %v8038
          %v8063 = vadd.f32 %v8026, %v8038
          %v8064 = vadd.f32 %v8027, %v8038
          %v8065 = vadd.f32 %v8028, %v8038
          %v8066 = vadd.f32 %v8029, %v8038
          %v8067 = vadd.f32 %v8030, %v8038
          %v8068 = vadd.f32 %v8031, %v8038
          %v8069 = vadd.f32 %v8032, %v8038
          %v8070 = vadd.f32 %v8033, %v8038
          %v8071 = vadd.f32 %v8034, %v8038
          %v8072 = vmax.f32 %v8040, 0.0
          %v8073 = vmax.f32 %v8041, 0.0
          %v8074 = vmax.f32 %v8042, 0.0
          %v8075 = vmax.f32 %v8043, 0.0
          %v8076 = vmax.f32 %v8044, 0.0
          %v8077 = vmax.f32 %v8045, 0.0
          %v8078 = vmax.f32 %v8046, 0.0
          %v8079 = vmax.f32 %v8047, 0.0
          %v8080 = vmax.f32 %v8048, 0.0
          %v8081 = vmax.f32 %v8049, 0.0
          %v8082 = vmax.f32 %v8050, 0.0
          %v8083 = vmax.f32 %v8051, 0.0
          %v8084 = vmax.f32 %v8052, 0.0
          %v8085 = vmax.f32 %v8053, 0.0
          %v8086 = vmax.f32 %v8054, 0.0
          %v8087 = vmax.f32 %v8055, 0.0
          %v8088 = vmax.f32 %v8056, 0.0
          %v8089 = vmax.f32 %v8057, 0.0
          %v8090 = vmax.f32 %v8058, 0.0
          %v8091 = vmax.f32 %v8059, 0.0
          %v8092 = vmax.f32 %v8060, 0.0
          %v8093 = vmax.f32 %v8061, 0.0
          %v8094 = vmax.f32 %v8062, 0.0
          %v8095 = vmax.f32 %v8063, 0.0
          %v8096 = vmax.f32 %v8064, 0.0
          %v8097 = vmax.f32 %v8065, 0.0
          %v8098 = vmax.f32 %v8066, 0.0
          %v8099 = vmax.f32 %v8067, 0.0
          %v8100 = vmax.f32 %v8068, 0.0
          %v8101 = vmax.f32 %v8069, 0.0
          %v8102 = vmax.f32 %v8070, 0.0
          %v8103 = vmax.f32 %v8071, 0.0
          %8104 = vst.msk [vmem:[%s2925 + $0x1] sm:$0xff] %vm205, %v8072
          %8105 = vst.msk [vmem:[%s2925 + $0x9] sm:$0xff] %vm205, %v8073
          %8106 = vst.msk [vmem:[%s2925 + $0x19] sm:$0xff] %vm205, %v8074
          %8107 = vst.msk [vmem:[%s2925 + $0x21] sm:$0xff] %vm205, %v8075
          %8108 = vst.msk [vmem:[%s2925 + $0x31] sm:$0xff] %vm205, %v8076
          %8109 = vst.msk [vmem:[%s2925 + $0x39] sm:$0xff] %vm205, %v8077
          %8110 = vst.msk [vmem:[%s2925 + $0x49] sm:$0xff] %vm205, %v8078
          %8111 = vst.msk [vmem:[%s2925 + $0x51] sm:$0xff] %vm205, %v8079
          %8112 = vst.msk [vmem:[%s2925 + $0x61] sm:$0xff] %vm205, %v8080
          %8113 = vst.msk [vmem:[%s2925 + $0x69] sm:$0xff] %vm205, %v8081
          %8114 = vst.msk [vmem:[%s2925 + $0x79] sm:$0xff] %vm205, %v8082
          %8115 = vst.msk [vmem:[%s2925 + $0x81] sm:$0xff] %vm205, %v8083
          %8116 = vst.msk [vmem:[%s2925 + $0x91] sm:$0xff] %vm205, %v8084
          %8117 = vst.msk [vmem:[%s2925 + $0x99] sm:$0xff] %vm205, %v8085
          %8118 = vst.msk [vmem:[%s2925 + $0xa9] sm:$0xff] %vm205, %v8086
          %8119 = vst.msk [vmem:[%s2925 + $0xb1] sm:$0xff] %vm205, %v8087
          %8120 = vst.msk [vmem:[%s2925 + $0xc1] sm:$0xff] %vm205, %v8088
          %8121 = vst.msk [vmem:[%s2925 + $0xc9] sm:$0xff] %vm205, %v8089
          %8122 = vst.msk [vmem:[%s2925 + $0xd9] sm:$0xff] %vm205, %v8090
          %8123 = vst.msk [vmem:[%s2925 + $0xe1] sm:$0xff] %vm205, %v8091
          %8124 = vst.msk [vmem:[%s2925 + $0xf1] sm:$0xff] %vm205, %v8092
          %8125 = vst.msk [vmem:[%s2925 + $0xf9] sm:$0xff] %vm205, %v8093
          %8126 = vst.msk [vmem:[%s2925 + $0x109] sm:$0xff] %vm205, %v8094
          %8127 = vst.msk [vmem:[%s2925 + $0x111] sm:$0xff] %vm205, %v8095
          %8128 = vst.msk [vmem:[%s2925 + $0x121] sm:$0xff] %vm205, %v8096
          %8129 = vst.msk [vmem:[%s2925 + $0x129] sm:$0xff] %vm205, %v8097
          %8130 = vst.msk [vmem:[%s2925 + $0x139] sm:$0xff] %vm205, %v8098
          %8131 = vst.msk [vmem:[%s2925 + $0x141] sm:$0xff] %vm205, %v8099
          %8132 = vst.msk [vmem:[%s2925 + $0x151] sm:$0xff] %vm205, %v8100
          %8133 = vst.msk [vmem:[%s2925 + $0x159] sm:$0xff] %vm205, %v8101
          %8134 = vst.msk [vmem:[%s2925 + $0x169] sm:$0xff] %vm205, %v8102
          %8135 = vst.msk [vmem:[%s2925 + $0x171] sm:$0xff] %vm205, %v8103
        $region45: #{vdsr_pallas.1} parent=31 // loop_footer
          %s2963 = sadd.s32 1, %s2959
        $region46: #{vdsr_pallas.1} parent=31 // loop_footer_branch
          %2958 = sbr.rel target = $region42
        $region47: #{vdsr_pallas.1} parent=31 // loop_exit
          _
        %s8136 = scalar_lea.vmem [#allocation2], 432
        %v8137 = vld [vmem:[%s8136] sm:$0xff]
        %v8138 = vld [vmem:[%s8136 + $0x8] sm:$0xff]
        %v8139 = vld [vmem:[%s8136 + $0x10] sm:$0xff]
        %v8140 = vld [vmem:[%s8136 + $0x18] sm:$0xff]
        %v8141 = vld [vmem:[%s8136 + $0x20] sm:$0xff]
        %v8142 = vld [vmem:[%s8136 + $0x28] sm:$0xff]
        %v8143 = vld [vmem:[%s8136 + $0x30] sm:$0xff]
        %v8144 = vld [vmem:[%s8136 + $0x38] sm:$0xff]
        %v8145 = vld [vmem:[%s8136 + $0x40] sm:$0xff]
        %v8146 = vld [vmem:[%s8136 + $0x48] sm:$0xff]
        %v8147 = vld [vmem:[%s8136 + $0x50] sm:$0xff]
        %v8148 = vld [vmem:[%s8136 + $0x58] sm:$0xff]
        %v8149 = vld [vmem:[%s8136 + $0x60] sm:$0xff]
        %v8150 = vld [vmem:[%s8136 + $0x68] sm:$0xff]
        %v8151 = vld [vmem:[%s8136 + $0x70] sm:$0xff]
        %v8152 = vld [vmem:[%s8136 + $0x78] sm:$0xff]
        %v8153 = vld [vmem:[%s8136 + $0x80] sm:$0xff]
        %v8154 = vld [vmem:[%s8136 + $0x88] sm:$0xff]
        %v8155 = vld [vmem:[%s8136 + $0x90] sm:$0xff]
        %v8156 = vld [vmem:[%s8136 + $0x98] sm:$0xff]
        %v8157 = vld [vmem:[%s8136 + $0xa0] sm:$0xff]
        %v8158 = vld [vmem:[%s8136 + $0xa8] sm:$0xff]
        %v8159 = vld [vmem:[%s8136 + $0xb0] sm:$0xff]
        %v8160 = vld [vmem:[%s8136 + $0xb8] sm:$0xff]
        %v8161 = vld [vmem:[%s8136 + $0xc0] sm:$0xff]
        %v8162 = vld [vmem:[%s8136 + $0xc8] sm:$0xff]
        %v8163 = vld [vmem:[%s8136 + $0xd0] sm:$0xff]
        %v8164 = vld [vmem:[%s8136 + $0xd8] sm:$0xff]
        %v8165 = vld [vmem:[%s8136 + $0xe0] sm:$0xff]
        %v8166 = vld [vmem:[%s8136 + $0xe8] sm:$0xff]
        %v8167 = vld [vmem:[%s8136 + $0xf0] sm:$0xff]
        %v8168 = vld [vmem:[%s8136 + $0xf8] sm:$0xff]
        %v8169 = vld [vmem:[%s8136 + $0x100] sm:$0xff]
        %v8170 = vld [vmem:[%s8136 + $0x108] sm:$0xff]
        %v8171 = vld [vmem:[%s8136 + $0x110] sm:$0xff]
        %v8172 = vld [vmem:[%s8136 + $0x118] sm:$0xff]
        %v8173 = vld [vmem:[%s8136 + $0x120] sm:$0xff]
        %v8174 = vld [vmem:[%s8136 + $0x128] sm:$0xff]
        %v8175 = vld [vmem:[%s8136 + $0x130] sm:$0xff]
        %v8176 = vld [vmem:[%s8136 + $0x138] sm:$0xff]
        %v8177 = vld [vmem:[%s8136 + $0x140] sm:$0xff]
        %v8178 = vld [vmem:[%s8136 + $0x148] sm:$0xff]
        %v8179 = vld [vmem:[%s8136 + $0x150] sm:$0xff]
        %v8180 = vld [vmem:[%s8136 + $0x158] sm:$0xff]
        %v8181 = vld [vmem:[%s8136 + $0x160] sm:$0xff]
        %v8182 = vld [vmem:[%s8136 + $0x168] sm:$0xff]
        %v8183 = vld [vmem:[%s8136 + $0x170] sm:$0xff]
        %v8184 = vld [vmem:[%s8136 + $0x178] sm:$0xff]
        %v8185 = vld [vmem:[%s8136 + $0x180] sm:$0xff]
        %v8186 = vld [vmem:[%s8136 + $0x188] sm:$0xff]
        %v8187 = vld [vmem:[%s8136 + $0x190] sm:$0xff]
        %v8188 = vld [vmem:[%s8136 + $0x198] sm:$0xff]
        %v8189 = vld [vmem:[%s8136 + $0x1a0] sm:$0xff]
        %v8190 = vld [vmem:[%s8136 + $0x1a8] sm:$0xff]
        %s8191 = scalar_lea.vmem [#allocation3], 10944
        %v8192 = vld [vmem:[%s8191] sm:$0xff]
        %v8193 = vld [vmem:[%s8191 + $0x8] sm:$0xff]
        %v8194 = vld [vmem:[%s8191 + $0x10] sm:$0xff]
        %v8195 = vld [vmem:[%s8191 + $0x18] sm:$0xff]
        %v8196 = vld [vmem:[%s8191 + $0x20] sm:$0xff]
        %v8197 = vld [vmem:[%s8191 + $0x28] sm:$0xff]
        %v8198 = vld [vmem:[%s8191 + $0x30] sm:$0xff]
        %v8199 = vld [vmem:[%s8191 + $0x38] sm:$0xff]
        %v8200 = vrot.slane %v8137, 1
        %v8201 = vrot.slane %v8138, 1
        %v8202 = vrot.slane %v8139, 1
        %v8203 = vrot.slane %v8140, 1
        %v8204 = vrot.slane %v8141, 1
        %v8205 = vrot.slane %v8142, 1
        %v8206 = vrot.slane %v8143, 1
        %v8207 = vrot.slane %v8144, 1
        %v8208 = vrot.slane %v8145, 1
        %v8209 = vrot.slane %v8146, 1
        %v8210 = vrot.slane %v8147, 1
        %v8211 = vrot.slane %v8148, 1
        %v8212 = vrot.slane %v8149, 1
        %v8213 = vrot.slane %v8150, 1
        %v8214 = vrot.slane %v8151, 1
        %v8215 = vrot.slane %v8152, 1
        %v8216 = vrot.slane %v8153, 1
        %v8217 = vrot.slane %v8154, 1
        %v8218 = vrot.slane %v8155, 1
        %v8219 = vrot.slane %v8156, 1
        %v8220 = vrot.slane %v8157, 1
        %v8221 = vrot.slane %v8158, 1
        %v8222 = vrot.slane %v8159, 1
        %v8223 = vrot.slane %v8160, 1
        %v8224 = vrot.slane %v8161, 1
        %v8225 = vrot.slane %v8162, 1
        %v8226 = vrot.slane %v8163, 1
        %v8227 = vrot.slane %v8164, 1
        %v8228 = vrot.slane %v8165, 1
        %v8229 = vrot.slane %v8166, 1
        %v8230 = vrot.slane %v8167, 1
        %v8231 = vrot.slane %v8168, 1
        %v8232 = vrot.slane %v8169, 1
        %v8233 = vrot.slane %v8170, 1
        %v8234 = vrot.slane %v8171, 1
        %v8235 = vrot.slane %v8172, 1
        %v8236 = vrot.slane %v8173, 1
        %v8237 = vrot.slane %v8174, 1
        %v8238 = vrot.slane %v8175, 1
        %v8239 = vrot.slane %v8176, 1
        %v8240 = vrot.slane %v8177, 1
        %v8241 = vrot.slane %v8178, 1
        %v8242 = vrot.slane %v8179, 1
        %v8243 = vrot.slane %v8180, 1
        %v8244 = vrot.slane %v8181, 1
        %v8245 = vrot.slane %v8182, 1
        %v8246 = vrot.slane %v8183, 1
        %v8247 = vrot.slane %v8184, 1
        %v8248 = vrot.slane %v8185, 1
        %v8249 = vrot.slane %v8186, 1
        %v8250 = vrot.slane %v8187, 1
        %v8251 = vrot.slane %v8188, 1
        %v8252 = vrot.slane %v8189, 1
        %v8253 = vrot.slane %v8190, 1
        %v8254 = vsel %vm498, %v8252, %v8253
        %v8255 = vsel %vm498, %v8251, %v8252
        %v8256 = vsel %vm498, %v8250, %v8251
        %v8257 = vsel %vm498, %v8249, %v8250
        %v8258 = vsel %vm498, %v8248, %v8249
        %v8259 = vsel %vm498, %v8247, %v8248
        %v8260 = vsel %vm498, %v8246, %v8247
        %v8261 = vsel %vm498, %v8245, %v8246
        %v8262 = vsel %vm498, %v8244, %v8245
        %v8263 = vsel %vm498, %v8243, %v8244
        %v8264 = vsel %vm498, %v8242, %v8243
        %v8265 = vsel %vm498, %v8241, %v8242
        %v8266 = vsel %vm498, %v8240, %v8241
        %v8267 = vsel %vm498, %v8239, %v8240
        %v8268 = vsel %vm498, %v8238, %v8239
        %v8269 = vsel %vm498, %v8237, %v8238
        %v8270 = vsel %vm498, %v8236, %v8237
        %v8271 = vsel %vm498, %v8235, %v8236
        %v8272 = vsel %vm498, %v8234, %v8235
        %v8273 = vsel %vm498, %v8233, %v8234
        %v8274 = vsel %vm498, %v8232, %v8233
        %v8275 = vsel %vm498, %v8231, %v8232
        %v8276 = vsel %vm498, %v8230, %v8231
        %v8277 = vsel %vm498, %v8229, %v8230
        %v8278 = vsel %vm498, %v8228, %v8229
        %v8279 = vsel %vm498, %v8227, %v8228
        %v8280 = vsel %vm498, %v8226, %v8227
        %v8281 = vsel %vm498, %v8225, %v8226
        %v8282 = vsel %vm498, %v8224, %v8225
        %v8283 = vsel %vm498, %v8223, %v8224
        %v8284 = vsel %vm498, %v8222, %v8223
        %v8285 = vsel %vm498, %v8221, %v8222
        %v8286 = vsel %vm498, %v8220, %v8221
        %v8287 = vsel %vm498, %v8219, %v8220
        %v8288 = vsel %vm498, %v8218, %v8219
        %v8289 = vsel %vm498, %v8217, %v8218
        %v8290 = vsel %vm498, %v8216, %v8217
        %v8291 = vsel %vm498, %v8215, %v8216
        %v8292 = vsel %vm498, %v8214, %v8215
        %v8293 = vsel %vm498, %v8213, %v8214
        %v8294 = vsel %vm498, %v8212, %v8213
        %v8295 = vsel %vm498, %v8211, %v8212
        %v8296 = vsel %vm498, %v8210, %v8211
        %v8297 = vsel %vm498, %v8209, %v8210
        %v8298 = vsel %vm498, %v8208, %v8209
        %v8299 = vsel %vm498, %v8207, %v8208
        %v8300 = vsel %vm498, %v8206, %v8207
        %v8301 = vsel %vm498, %v8205, %v8206
        %v8302 = vsel %vm498, %v8204, %v8205
        %v8303 = vsel %vm498, %v8203, %v8204
        %v8304 = vsel %vm498, %v8202, %v8203
        %v8305 = vsel %vm498, %v8201, %v8202
        %v8306 = vsel %vm498, %v8200, %v8201
        %v8307 = vsel %vm498, %v8253, %v8200
        %s8308 = scalar_lea.vmem [#allocation3], 11008
        %v8309 = vld [vmem:[%s8308] sm:$0xff]
        %v8310 = vld [vmem:[%s8308 + $0x8] sm:$0xff]
        %v8311 = vld [vmem:[%s8308 + $0x10] sm:$0xff]
        %v8312 = vld [vmem:[%s8308 + $0x18] sm:$0xff]
        %v8313 = vld [vmem:[%s8308 + $0x20] sm:$0xff]
        %v8314 = vld [vmem:[%s8308 + $0x28] sm:$0xff]
        %v8315 = vld [vmem:[%s8308 + $0x30] sm:$0xff]
        %v8316 = vld [vmem:[%s8308 + $0x38] sm:$0xff]
        %v8318 = vsel %vm205, %v8306, 0
        %v8321 = vsel %vm205, %v8305, 0
        %v8324 = vsel %vm205, %v8304, 0
        %v8327 = vsel %vm205, %v8303, 0
        %v8330 = vsel %vm205, %v8302, 0
        %v8333 = vsel %vm205, %v8301, 0
        %v8336 = vsel %vm205, %v8300, 0
        %v8339 = vsel %vm205, %v8299, 0
        %v8342 = vsel %vm205, %v8298, 0
        %v8345 = vsel %vm205, %v8297, 0
        %v8348 = vsel %vm205, %v8296, 0
        %v8351 = vsel %vm205, %v8295, 0
        %v8354 = vsel %vm205, %v8294, 0
        %v8357 = vsel %vm205, %v8293, 0
        %v8360 = vsel %vm205, %v8292, 0
        %v8363 = vsel %vm205, %v8291, 0
        %v8366 = vsel %vm205, %v8290, 0
        %v8369 = vsel %vm205, %v8289, 0
        %v8372 = vsel %vm205, %v8288, 0
        %v8375 = vsel %vm205, %v8287, 0
        %v8378 = vsel %vm205, %v8286, 0
        %v8381 = vsel %vm205, %v8285, 0
        %v8384 = vsel %vm205, %v8284, 0
        %v8387 = vsel %vm205, %v8283, 0
        %v8390 = vsel %vm205, %v8282, 0
        %v8393 = vsel %vm205, %v8281, 0
        %v8396 = vsel %vm205, %v8280, 0
        %v8399 = vsel %vm205, %v8279, 0
        %v8402 = vsel %vm205, %v8278, 0
        %v8405 = vsel %vm205, %v8277, 0
        %v8408 = vsel %vm205, %v8276, 0
        %v8411 = vsel %vm205, %v8275, 0
        %v8414 = vsel %vm205, %v8274, 0
        %v8417 = vsel %vm205, %v8273, 0
        %v8420 = vsel %vm205, %v8272, 0
        %v8423 = vsel %vm205, %v8271, 0
        %v8426 = vsel %vm205, %v8270, 0
        %v8429 = vsel %vm205, %v8269, 0
        %v8432 = vsel %vm205, %v8268, 0
        %v8435 = vsel %vm205, %v8267, 0
        %v8438 = vsel %vm205, %v8266, 0
        %v8441 = vsel %vm205, %v8265, 0
        %v8444 = vsel %vm205, %v8264, 0
        %v8447 = vsel %vm205, %v8263, 0
        %v8450 = vsel %vm205, %v8262, 0
        %v8453 = vsel %vm205, %v8261, 0
        %v8456 = vsel %vm205, %v8260, 0
        %v8459 = vsel %vm205, %v8259, 0
        %v8462 = vsel %vm205, %v8258, 0
        %v8465 = vsel %vm205, %v8257, 0
        %v8468 = vsel %vm205, %v8256, 0
        %v8471 = vsel %vm205, %v8255, 0
        %v8474 = vsel %vm205, %v8254, 0
        %v8477 = vsel %vm205, %v8307, 0
        %8479 = vmatpush.msra.mxu0 0.0
        %8480 = vmatpush.msra.mxu0 0.0
        %8481 = vmatpush.msra.mxu0 0.0
        %8482 = vmatpush.msra.mxu0 0.0
        %8483 = vmatpush.msra.mxu0 0.0
        %8484 = vmatpush.msra.mxu0 0.0
        %8485 = vmatpush.msra.mxu0 0.0
        %8486 = vmatpush.msra.mxu0 0.0
        %8487 = vmatpush.msra.mxu0 %v8316
        %8488 = vmatpush.msra.mxu0 %v8315
        %8489 = vmatpush.msra.mxu0 %v8314
        %8490 = vmatpush.msra.mxu0 %v8313
        %8491 = vmatpush.msra.mxu0 %v8312
        %8492 = vmatpush.msra.mxu0 %v8311
        %8493 = vmatpush.msra.mxu0 %v8310
        %8494 = vmatpush.msra.mxu0 %v8309
        %8495 = vmatmul.f32.gmra.mxu0 %v8318
        %v8496 = vpop.f32.mrf.mxu0
        %v8497 = vadd.f32 0.0, %v8496
        %8498 = vmatmul.f32.gmra.mxu0 %v8321
        %v8499 = vpop.f32.mrf.mxu0
        %v8500 = vadd.f32 0.0, %v8499
        %8501 = vmatmul.f32.gmra.mxu0 %v8324
        %v8502 = vpop.f32.mrf.mxu0
        %8503 = vmatmul.f32.gmra.mxu0 %v8327
        %v8504 = vpop.f32.mrf.mxu0
        %v8505 = vadd.f32 0.0, %v8504
        %8506 = vmatmul.f32.gmra.mxu0 %v8330
        %v8507 = vpop.f32.mrf.mxu0
        %v8508 = vadd.f32 0.0, %v8507
        %8509 = vmatmul.f32.gmra.mxu0 %v8333
        %v8510 = vpop.f32.mrf.mxu0
        %8511 = vmatmul.f32.gmra.mxu0 %v8336
        %v8512 = vpop.f32.mrf.mxu0
        %v8513 = vadd.f32 0.0, %v8512
        %8514 = vmatmul.f32.gmra.mxu0 %v8339
        %v8515 = vpop.f32.mrf.mxu0
        %v8516 = vadd.f32 0.0, %v8515
        %8517 = vmatmul.f32.gmra.mxu0 %v8342
        %v8518 = vpop.f32.mrf.mxu0
        %8519 = vmatmul.f32.gmra.mxu0 %v8345
        %v8520 = vpop.f32.mrf.mxu0
        %v8521 = vadd.f32 0.0, %v8520
        %8522 = vmatmul.f32.gmra.mxu0 %v8348
        %v8523 = vpop.f32.mrf.mxu0
        %v8524 = vadd.f32 0.0, %v8523
        %8525 = vmatmul.f32.gmra.mxu0 %v8351
        %v8526 = vpop.f32.mrf.mxu0
        %8527 = vmatmul.f32.gmra.mxu0 %v8354
        %v8528 = vpop.f32.mrf.mxu0
        %v8529 = vadd.f32 0.0, %v8528
        %8530 = vmatmul.f32.gmra.mxu0 %v8357
        %v8531 = vpop.f32.mrf.mxu0
        %v8532 = vadd.f32 0.0, %v8531
        %8533 = vmatmul.f32.gmra.mxu0 %v8360
        %v8534 = vpop.f32.mrf.mxu0
        %8535 = vmatmul.f32.gmra.mxu0 %v8363
        %v8536 = vpop.f32.mrf.mxu0
        %v8537 = vadd.f32 0.0, %v8536
        %8538 = vmatmul.f32.gmra.mxu0 %v8366
        %v8539 = vpop.f32.mrf.mxu0
        %v8540 = vadd.f32 0.0, %v8539
        %8541 = vmatmul.f32.gmra.mxu0 %v8369
        %v8542 = vpop.f32.mrf.mxu0
        %8543 = vmatmul.f32.gmra.mxu0 %v8372
        %v8544 = vpop.f32.mrf.mxu0
        %v8545 = vadd.f32 0.0, %v8544
        %8546 = vmatmul.f32.gmra.mxu0 %v8375
        %v8547 = vpop.f32.mrf.mxu0
        %v8548 = vadd.f32 0.0, %v8547
        %8549 = vmatmul.f32.gmra.mxu0 %v8378
        %v8550 = vpop.f32.mrf.mxu0
        %8551 = vmatmul.f32.gmra.mxu0 %v8381
        %v8552 = vpop.f32.mrf.mxu0
        %v8553 = vadd.f32 0.0, %v8552
        %8554 = vmatmul.f32.gmra.mxu0 %v8384
        %v8555 = vpop.f32.mrf.mxu0
        %v8556 = vadd.f32 0.0, %v8555
        %8557 = vmatmul.f32.gmra.mxu0 %v8387
        %v8558 = vpop.f32.mrf.mxu0
        %8559 = vmatmul.f32.gmra.mxu0 %v8390
        %v8560 = vpop.f32.mrf.mxu0
        %v8561 = vadd.f32 0.0, %v8560
        %8562 = vmatmul.f32.gmra.mxu0 %v8393
        %v8563 = vpop.f32.mrf.mxu0
        %v8564 = vadd.f32 0.0, %v8563
        %8565 = vmatmul.f32.gmra.mxu0 %v8396
        %v8566 = vpop.f32.mrf.mxu0
        %8567 = vmatmul.f32.gmra.mxu0 %v8399
        %v8568 = vpop.f32.mrf.mxu0
        %v8569 = vadd.f32 0.0, %v8568
        %8570 = vmatmul.f32.gmra.mxu0 %v8402
        %v8571 = vpop.f32.mrf.mxu0
        %v8572 = vadd.f32 0.0, %v8571
        %8573 = vmatmul.f32.gmra.mxu0 %v8405
        %v8574 = vpop.f32.mrf.mxu0
        %8575 = vmatmul.f32.gmra.mxu0 %v8408
        %v8576 = vpop.f32.mrf.mxu0
        %v8577 = vadd.f32 0.0, %v8576
        %8578 = vmatmul.f32.gmra.mxu0 %v8411
        %v8579 = vpop.f32.mrf.mxu0
        %v8580 = vadd.f32 0.0, %v8579
        %8581 = vmatmul.f32.gmra.mxu0 %v8414
        %v8582 = vpop.f32.mrf.mxu0
        %8583 = vmatmul.f32.gmra.mxu0 %v8417
        %v8584 = vpop.f32.mrf.mxu0
        %v8585 = vadd.f32 0.0, %v8584
        %8586 = vmatmul.f32.gmra.mxu0 %v8420
        %v8587 = vpop.f32.mrf.mxu0
        %v8588 = vadd.f32 0.0, %v8587
        %8589 = vmatmul.f32.gmra.mxu0 %v8423
        %v8590 = vpop.f32.mrf.mxu0
        %8591 = vmatmul.f32.gmra.mxu0 %v8426
        %v8592 = vpop.f32.mrf.mxu0
        %v8593 = vadd.f32 0.0, %v8592
        %8594 = vmatmul.f32.gmra.mxu0 %v8429
        %v8595 = vpop.f32.mrf.mxu0
        %v8596 = vadd.f32 0.0, %v8595
        %8597 = vmatmul.f32.gmra.mxu0 %v8432
        %v8598 = vpop.f32.mrf.mxu0
        %8599 = vmatmul.f32.gmra.mxu0 %v8435
        %v8600 = vpop.f32.mrf.mxu0
        %v8601 = vadd.f32 0.0, %v8600
        %8602 = vmatmul.f32.gmra.mxu0 %v8438
        %v8603 = vpop.f32.mrf.mxu0
        %v8604 = vadd.f32 0.0, %v8603
        %8605 = vmatmul.f32.gmra.mxu0 %v8441
        %v8606 = vpop.f32.mrf.mxu0
        %8607 = vmatmul.f32.gmra.mxu0 %v8444
        %v8608 = vpop.f32.mrf.mxu0
        %v8609 = vadd.f32 0.0, %v8608
        %8610 = vmatmul.f32.gmra.mxu0 %v8447
        %v8611 = vpop.f32.mrf.mxu0
        %v8612 = vadd.f32 0.0, %v8611
        %8613 = vmatmul.f32.gmra.mxu0 %v8450
        %v8614 = vpop.f32.mrf.mxu0
        %8615 = vmatmul.f32.gmra.mxu0 %v8453
        %v8616 = vpop.f32.mrf.mxu0
        %v8617 = vadd.f32 0.0, %v8616
        %8618 = vmatmul.f32.gmra.mxu0 %v8456
        %v8619 = vpop.f32.mrf.mxu0
        %v8620 = vadd.f32 0.0, %v8619
        %8621 = vmatmul.f32.gmra.mxu0 %v8459
        %v8622 = vpop.f32.mrf.mxu0
        %8623 = vmatmul.f32.gmra.mxu0 %v8462
        %v8624 = vpop.f32.mrf.mxu0
        %8625 = vmatmul.f32.gmra.mxu0 %v8465
        %v8626 = vpop.f32.mrf.mxu0
        %8627 = vmatmul.f32.gmra.mxu0 %v8468
        %v8628 = vpop.f32.mrf.mxu0
        %8629 = vmatmul.f32.gmra.mxu0 %v8471
        %v8630 = vpop.f32.mrf.mxu0
        %8631 = vmatmul.f32.gmra.mxu0 %v8474
        %v8632 = vpop.f32.mrf.mxu0
        %8633 = vmatmul.f32.gmra.mxu0 %v8477
        %v8634 = vpop.f32.mrf.mxu0
        %8635 = vdwg.mxu0
        %v8637 = vsel %vm205, %v8137, 0
        %v8640 = vsel %vm205, %v8138, 0
        %v8643 = vsel %vm205, %v8139, 0
        %v8646 = vsel %vm205, %v8140, 0
        %v8649 = vsel %vm205, %v8141, 0
        %v8652 = vsel %vm205, %v8142, 0
        %v8655 = vsel %vm205, %v8143, 0
        %v8658 = vsel %vm205, %v8144, 0
        %v8661 = vsel %vm205, %v8145, 0
        %v8664 = vsel %vm205, %v8146, 0
        %v8667 = vsel %vm205, %v8147, 0
        %v8670 = vsel %vm205, %v8148, 0
        %v8673 = vsel %vm205, %v8149, 0
        %v8676 = vsel %vm205, %v8150, 0
        %v8679 = vsel %vm205, %v8151, 0
        %v8682 = vsel %vm205, %v8152, 0
        %v8685 = vsel %vm205, %v8153, 0
        %v8688 = vsel %vm205, %v8154, 0
        %v8691 = vsel %vm205, %v8155, 0
        %v8694 = vsel %vm205, %v8156, 0
        %v8697 = vsel %vm205, %v8157, 0
        %v8700 = vsel %vm205, %v8158, 0
        %v8703 = vsel %vm205, %v8159, 0
        %v8706 = vsel %vm205, %v8160, 0
        %v8709 = vsel %vm205, %v8161, 0
        %v8712 = vsel %vm205, %v8162, 0
        %v8715 = vsel %vm205, %v8163, 0
        %v8718 = vsel %vm205, %v8164, 0
        %v8721 = vsel %vm205, %v8165, 0
        %v8724 = vsel %vm205, %v8166, 0
        %v8727 = vsel %vm205, %v8167, 0
        %v8730 = vsel %vm205, %v8168, 0
        %v8733 = vsel %vm205, %v8169, 0
        %v8736 = vsel %vm205, %v8170, 0
        %v8739 = vsel %vm205, %v8171, 0
        %v8742 = vsel %vm205, %v8172, 0
        %v8745 = vsel %vm205, %v8173, 0
        %v8748 = vsel %vm205, %v8174, 0
        %v8751 = vsel %vm205, %v8175, 0
        %v8754 = vsel %vm205, %v8176, 0
        %v8757 = vsel %vm205, %v8177, 0
        %v8760 = vsel %vm205, %v8178, 0
        %v8763 = vsel %vm205, %v8179, 0
        %v8766 = vsel %vm205, %v8180, 0
        %v8769 = vsel %vm205, %v8181, 0
        %v8772 = vsel %vm205, %v8182, 0
        %v8775 = vsel %vm205, %v8183, 0
        %v8778 = vsel %vm205, %v8184, 0
        %v8781 = vsel %vm205, %v8185, 0
        %v8784 = vsel %vm205, %v8186, 0
        %v8787 = vsel %vm205, %v8187, 0
        %v8790 = vsel %vm205, %v8188, 0
        %v8793 = vsel %vm205, %v8189, 0
        %v8796 = vsel %vm205, %v8190, 0
        %8798 = vmatpush.msra.mxu0 0.0
        %8799 = vmatpush.msra.mxu0 0.0
        %8800 = vmatpush.msra.mxu0 0.0
        %8801 = vmatpush.msra.mxu0 0.0
        %8802 = vmatpush.msra.mxu0 0.0
        %8803 = vmatpush.msra.mxu0 0.0
        %8804 = vmatpush.msra.mxu0 0.0
        %8805 = vmatpush.msra.mxu0 0.0
        %8806 = vmatpush.msra.mxu0 %v8199
        %8807 = vmatpush.msra.mxu0 %v8198
        %8808 = vmatpush.msra.mxu0 %v8197
        %8809 = vmatpush.msra.mxu0 %v8196
        %8810 = vmatpush.msra.mxu0 %v8195
        %8811 = vmatpush.msra.mxu0 %v8194
        %8812 = vmatpush.msra.mxu0 %v8193
        %8813 = vmatpush.msra.mxu0 %v8192
        %8814 = vmatmul.f32.gmra.mxu0 %v8637
        %v8815 = vpop.f32.mrf.mxu0
        %v8816 = vadd.f32 %v8497, %v8815
        %8817 = vmatmul.f32.gmra.mxu0 %v8640
        %v8818 = vpop.f32.mrf.mxu0
        %v8819 = vadd.f32 %v8500, %v8818
        %8820 = vmatmul.f32.gmra.mxu0 %v8643
        %v8821 = vpop.f32.mrf.mxu0
        %8822 = vmatmul.f32.gmra.mxu0 %v8646
        %v8823 = vpop.f32.mrf.mxu0
        %v8824 = vadd.f32 %v8505, %v8823
        %8825 = vmatmul.f32.gmra.mxu0 %v8649
        %v8826 = vpop.f32.mrf.mxu0
        %v8827 = vadd.f32 %v8508, %v8826
        %8828 = vmatmul.f32.gmra.mxu0 %v8652
        %v8829 = vpop.f32.mrf.mxu0
        %8830 = vmatmul.f32.gmra.mxu0 %v8655
        %v8831 = vpop.f32.mrf.mxu0
        %v8832 = vadd.f32 %v8513, %v8831
        %8833 = vmatmul.f32.gmra.mxu0 %v8658
        %v8834 = vpop.f32.mrf.mxu0
        %v8835 = vadd.f32 %v8516, %v8834
        %8836 = vmatmul.f32.gmra.mxu0 %v8661
        %v8837 = vpop.f32.mrf.mxu0
        %8838 = vmatmul.f32.gmra.mxu0 %v8664
        %v8839 = vpop.f32.mrf.mxu0
        %v8840 = vadd.f32 %v8521, %v8839
        %8841 = vmatmul.f32.gmra.mxu0 %v8667
        %v8842 = vpop.f32.mrf.mxu0
        %v8843 = vadd.f32 %v8524, %v8842
        %8844 = vmatmul.f32.gmra.mxu0 %v8670
        %v8845 = vpop.f32.mrf.mxu0
        %8846 = vmatmul.f32.gmra.mxu0 %v8673
        %v8847 = vpop.f32.mrf.mxu0
        %v8848 = vadd.f32 %v8529, %v8847
        %8849 = vmatmul.f32.gmra.mxu0 %v8676
        %v8850 = vpop.f32.mrf.mxu0
        %v8851 = vadd.f32 %v8532, %v8850
        %8852 = vmatmul.f32.gmra.mxu0 %v8679
        %v8853 = vpop.f32.mrf.mxu0
        %8854 = vmatmul.f32.gmra.mxu0 %v8682
        %v8855 = vpop.f32.mrf.mxu0
        %v8856 = vadd.f32 %v8537, %v8855
        %8857 = vmatmul.f32.gmra.mxu0 %v8685
        %v8858 = vpop.f32.mrf.mxu0
        %v8859 = vadd.f32 %v8540, %v8858
        %8860 = vmatmul.f32.gmra.mxu0 %v8688
        %v8861 = vpop.f32.mrf.mxu0
        %8862 = vmatmul.f32.gmra.mxu0 %v8691
        %v8863 = vpop.f32.mrf.mxu0
        %v8864 = vadd.f32 %v8545, %v8863
        %8865 = vmatmul.f32.gmra.mxu0 %v8694
        %v8866 = vpop.f32.mrf.mxu0
        %v8867 = vadd.f32 %v8548, %v8866
        %8868 = vmatmul.f32.gmra.mxu0 %v8697
        %v8869 = vpop.f32.mrf.mxu0
        %8870 = vmatmul.f32.gmra.mxu0 %v8700
        %v8871 = vpop.f32.mrf.mxu0
        %v8872 = vadd.f32 %v8553, %v8871
        %8873 = vmatmul.f32.gmra.mxu0 %v8703
        %v8874 = vpop.f32.mrf.mxu0
        %v8875 = vadd.f32 %v8556, %v8874
        %8876 = vmatmul.f32.gmra.mxu0 %v8706
        %v8877 = vpop.f32.mrf.mxu0
        %8878 = vmatmul.f32.gmra.mxu0 %v8709
        %v8879 = vpop.f32.mrf.mxu0
        %v8880 = vadd.f32 %v8561, %v8879
        %8881 = vmatmul.f32.gmra.mxu0 %v8712
        %v8882 = vpop.f32.mrf.mxu0
        %v8883 = vadd.f32 %v8564, %v8882
        %8884 = vmatmul.f32.gmra.mxu0 %v8715
        %v8885 = vpop.f32.mrf.mxu0
        %8886 = vmatmul.f32.gmra.mxu0 %v8718
        %v8887 = vpop.f32.mrf.mxu0
        %v8888 = vadd.f32 %v8569, %v8887
        %8889 = vmatmul.f32.gmra.mxu0 %v8721
        %v8890 = vpop.f32.mrf.mxu0
        %v8891 = vadd.f32 %v8572, %v8890
        %8892 = vmatmul.f32.gmra.mxu0 %v8724
        %v8893 = vpop.f32.mrf.mxu0
        %8894 = vmatmul.f32.gmra.mxu0 %v8727
        %v8895 = vpop.f32.mrf.mxu0
        %v8896 = vadd.f32 %v8577, %v8895
        %8897 = vmatmul.f32.gmra.mxu0 %v8730
        %v8898 = vpop.f32.mrf.mxu0
        %v8899 = vadd.f32 %v8580, %v8898
        %8900 = vmatmul.f32.gmra.mxu0 %v8733
        %v8901 = vpop.f32.mrf.mxu0
        %8902 = vmatmul.f32.gmra.mxu0 %v8736
        %v8903 = vpop.f32.mrf.mxu0
        %v8904 = vadd.f32 %v8585, %v8903
        %8905 = vmatmul.f32.gmra.mxu0 %v8739
        %v8906 = vpop.f32.mrf.mxu0
        %v8907 = vadd.f32 %v8588, %v8906
        %8908 = vmatmul.f32.gmra.mxu0 %v8742
        %v8909 = vpop.f32.mrf.mxu0
        %8910 = vmatmul.f32.gmra.mxu0 %v8745
        %v8911 = vpop.f32.mrf.mxu0
        %v8912 = vadd.f32 %v8593, %v8911
        %8913 = vmatmul.f32.gmra.mxu0 %v8748
        %v8914 = vpop.f32.mrf.mxu0
        %v8915 = vadd.f32 %v8596, %v8914
        %8916 = vmatmul.f32.gmra.mxu0 %v8751
        %v8917 = vpop.f32.mrf.mxu0
        %8918 = vmatmul.f32.gmra.mxu0 %v8754
        %v8919 = vpop.f32.mrf.mxu0
        %v8920 = vadd.f32 %v8601, %v8919
        %8921 = vmatmul.f32.gmra.mxu0 %v8757
        %v8922 = vpop.f32.mrf.mxu0
        %v8923 = vadd.f32 %v8604, %v8922
        %8924 = vmatmul.f32.gmra.mxu0 %v8760
        %v8925 = vpop.f32.mrf.mxu0
        %8926 = vmatmul.f32.gmra.mxu0 %v8763
        %v8927 = vpop.f32.mrf.mxu0
        %v8928 = vadd.f32 %v8609, %v8927
        %8929 = vmatmul.f32.gmra.mxu0 %v8766
        %v8930 = vpop.f32.mrf.mxu0
        %v8931 = vadd.f32 %v8612, %v8930
        %8932 = vmatmul.f32.gmra.mxu0 %v8769
        %v8933 = vpop.f32.mrf.mxu0
        %8934 = vmatmul.f32.gmra.mxu0 %v8772
        %v8935 = vpop.f32.mrf.mxu0
        %v8936 = vadd.f32 %v8617, %v8935
        %8937 = vmatmul.f32.gmra.mxu0 %v8775
        %v8938 = vpop.f32.mrf.mxu0
        %v8939 = vadd.f32 %v8620, %v8938
        %8940 = vmatmul.f32.gmra.mxu0 %v8778
        %v8941 = vpop.f32.mrf.mxu0
        %8942 = vmatmul.f32.gmra.mxu0 %v8781
        %v8943 = vpop.f32.mrf.mxu0
        %8944 = vmatmul.f32.gmra.mxu0 %v8784
        %v8945 = vpop.f32.mrf.mxu0
        %8946 = vmatmul.f32.gmra.mxu0 %v8787
        %v8947 = vpop.f32.mrf.mxu0
        %8948 = vmatmul.f32.gmra.mxu0 %v8790
        %v8949 = vpop.f32.mrf.mxu0
        %8950 = vmatmul.f32.gmra.mxu0 %v8793
        %v8951 = vpop.f32.mrf.mxu0
        %8952 = vmatmul.f32.gmra.mxu0 %v8796
        %v8953 = vpop.f32.mrf.mxu0
        %8954 = vdwg.mxu0
        %v8955 = vrot.slane %v8137, 2
        %v8956 = vrot.slane %v8138, 2
        %v8957 = vrot.slane %v8139, 2
        %v8958 = vrot.slane %v8140, 2
        %v8959 = vrot.slane %v8141, 2
        %v8960 = vrot.slane %v8142, 2
        %v8961 = vrot.slane %v8143, 2
        %v8962 = vrot.slane %v8144, 2
        %v8963 = vrot.slane %v8145, 2
        %v8964 = vrot.slane %v8146, 2
        %v8965 = vrot.slane %v8147, 2
        %v8966 = vrot.slane %v8148, 2
        %v8967 = vrot.slane %v8149, 2
        %v8968 = vrot.slane %v8150, 2
        %v8969 = vrot.slane %v8151, 2
        %v8970 = vrot.slane %v8152, 2
        %v8971 = vrot.slane %v8153, 2
        %v8972 = vrot.slane %v8154, 2
        %v8973 = vrot.slane %v8155, 2
        %v8974 = vrot.slane %v8156, 2
        %v8975 = vrot.slane %v8157, 2
        %v8976 = vrot.slane %v8158, 2
        %v8977 = vrot.slane %v8159, 2
        %v8978 = vrot.slane %v8160, 2
        %v8979 = vrot.slane %v8161, 2
        %v8980 = vrot.slane %v8162, 2
        %v8981 = vrot.slane %v8163, 2
        %v8982 = vrot.slane %v8164, 2
        %v8983 = vrot.slane %v8165, 2
        %v8984 = vrot.slane %v8166, 2
        %v8985 = vrot.slane %v8167, 2
        %v8986 = vrot.slane %v8168, 2
        %v8987 = vrot.slane %v8169, 2
        %v8988 = vrot.slane %v8170, 2
        %v8989 = vrot.slane %v8171, 2
        %v8990 = vrot.slane %v8172, 2
        %v8991 = vrot.slane %v8173, 2
        %v8992 = vrot.slane %v8174, 2
        %v8993 = vrot.slane %v8175, 2
        %v8994 = vrot.slane %v8176, 2
        %v8995 = vrot.slane %v8177, 2
        %v8996 = vrot.slane %v8178, 2
        %v8997 = vrot.slane %v8179, 2
        %v8998 = vrot.slane %v8180, 2
        %v8999 = vrot.slane %v8181, 2
        %v9000 = vrot.slane %v8182, 2
        %v9001 = vrot.slane %v8183, 2
        %v9002 = vrot.slane %v8184, 2
        %v9003 = vrot.slane %v8185, 2
        %v9004 = vrot.slane %v8186, 2
        %v9005 = vrot.slane %v8187, 2
        %v9006 = vrot.slane %v8188, 2
        %v9007 = vrot.slane %v8189, 2
        %v9008 = vrot.slane %v8190, 2
        %v9009 = vsel %vm1254, %v9007, %v9008
        %v9010 = vsel %vm1254, %v9006, %v9007
        %v9011 = vsel %vm1254, %v9005, %v9006
        %v9012 = vsel %vm1254, %v9004, %v9005
        %v9013 = vsel %vm1254, %v9003, %v9004
        %v9014 = vsel %vm1254, %v9002, %v9003
        %v9015 = vsel %vm1254, %v9001, %v9002
        %v9016 = vsel %vm1254, %v9000, %v9001
        %v9017 = vsel %vm1254, %v8999, %v9000
        %v9018 = vsel %vm1254, %v8998, %v8999
        %v9019 = vsel %vm1254, %v8997, %v8998
        %v9020 = vsel %vm1254, %v8996, %v8997
        %v9021 = vsel %vm1254, %v8995, %v8996
        %v9022 = vsel %vm1254, %v8994, %v8995
        %v9023 = vsel %vm1254, %v8993, %v8994
        %v9024 = vsel %vm1254, %v8992, %v8993
        %v9025 = vsel %vm1254, %v8991, %v8992
        %v9026 = vsel %vm1254, %v8990, %v8991
        %v9027 = vsel %vm1254, %v8989, %v8990
        %v9028 = vsel %vm1254, %v8988, %v8989
        %v9029 = vsel %vm1254, %v8987, %v8988
        %v9030 = vsel %vm1254, %v8986, %v8987
        %v9031 = vsel %vm1254, %v8985, %v8986
        %v9032 = vsel %vm1254, %v8984, %v8985
        %v9033 = vsel %vm1254, %v8983, %v8984
        %v9034 = vsel %vm1254, %v8982, %v8983
        %v9035 = vsel %vm1254, %v8981, %v8982
        %v9036 = vsel %vm1254, %v8980, %v8981
        %v9037 = vsel %vm1254, %v8979, %v8980
        %v9038 = vsel %vm1254, %v8978, %v8979
        %v9039 = vsel %vm1254, %v8977, %v8978
        %v9040 = vsel %vm1254, %v8976, %v8977
        %v9041 = vsel %vm1254, %v8975, %v8976
        %v9042 = vsel %vm1254, %v8974, %v8975
        %v9043 = vsel %vm1254, %v8973, %v8974
        %v9044 = vsel %vm1254, %v8972, %v8973
        %v9045 = vsel %vm1254, %v8971, %v8972
        %v9046 = vsel %vm1254, %v8970, %v8971
        %v9047 = vsel %vm1254, %v8969, %v8970
        %v9048 = vsel %vm1254, %v8968, %v8969
        %v9049 = vsel %vm1254, %v8967, %v8968
        %v9050 = vsel %vm1254, %v8966, %v8967
        %v9051 = vsel %vm1254, %v8965, %v8966
        %v9052 = vsel %vm1254, %v8964, %v8965
        %v9053 = vsel %vm1254, %v8963, %v8964
        %v9054 = vsel %vm1254, %v8962, %v8963
        %v9055 = vsel %vm1254, %v8961, %v8962
        %v9056 = vsel %vm1254, %v8960, %v8961
        %v9057 = vsel %vm1254, %v8959, %v8960
        %v9058 = vsel %vm1254, %v8958, %v8959
        %v9059 = vsel %vm1254, %v8957, %v8958
        %v9060 = vsel %vm1254, %v8956, %v8957
        %v9061 = vsel %vm1254, %v8955, %v8956
        %v9062 = vsel %vm1254, %v9008, %v8955
        %s9063 = scalar_lea.vmem [#allocation3], 11072
        %v9064 = vld [vmem:[%s9063] sm:$0xff]
        %v9065 = vld [vmem:[%s9063 + $0x8] sm:$0xff]
        %v9066 = vld [vmem:[%s9063 + $0x10] sm:$0xff]
        %v9067 = vld [vmem:[%s9063 + $0x18] sm:$0xff]
        %v9068 = vld [vmem:[%s9063 + $0x20] sm:$0xff]
        %v9069 = vld [vmem:[%s9063 + $0x28] sm:$0xff]
        %v9070 = vld [vmem:[%s9063 + $0x30] sm:$0xff]
        %v9071 = vld [vmem:[%s9063 + $0x38] sm:$0xff]
        %v9073 = vsel %vm205, %v9061, 0
        %v9076 = vsel %vm205, %v9060, 0
        %v9079 = vsel %vm205, %v9059, 0
        %v9082 = vsel %vm205, %v9058, 0
        %v9085 = vsel %vm205, %v9057, 0
        %v9088 = vsel %vm205, %v9056, 0
        %v9091 = vsel %vm205, %v9055, 0
        %v9094 = vsel %vm205, %v9054, 0
        %v9097 = vsel %vm205, %v9053, 0
        %v9100 = vsel %vm205, %v9052, 0
        %v9103 = vsel %vm205, %v9051, 0
        %v9106 = vsel %vm205, %v9050, 0
        %v9109 = vsel %vm205, %v9049, 0
        %v9112 = vsel %vm205, %v9048, 0
        %v9115 = vsel %vm205, %v9047, 0
        %v9118 = vsel %vm205, %v9046, 0
        %v9121 = vsel %vm205, %v9045, 0
        %v9124 = vsel %vm205, %v9044, 0
        %v9127 = vsel %vm205, %v9043, 0
        %v9130 = vsel %vm205, %v9042, 0
        %v9133 = vsel %vm205, %v9041, 0
        %v9136 = vsel %vm205, %v9040, 0
        %v9139 = vsel %vm205, %v9039, 0
        %v9142 = vsel %vm205, %v9038, 0
        %v9145 = vsel %vm205, %v9037, 0
        %v9148 = vsel %vm205, %v9036, 0
        %v9151 = vsel %vm205, %v9035, 0
        %v9154 = vsel %vm205, %v9034, 0
        %v9157 = vsel %vm205, %v9033, 0
        %v9160 = vsel %vm205, %v9032, 0
        %v9163 = vsel %vm205, %v9031, 0
        %v9166 = vsel %vm205, %v9030, 0
        %v9169 = vsel %vm205, %v9029, 0
        %v9172 = vsel %vm205, %v9028, 0
        %v9175 = vsel %vm205, %v9027, 0
        %v9178 = vsel %vm205, %v9026, 0
        %v9181 = vsel %vm205, %v9025, 0
        %v9184 = vsel %vm205, %v9024, 0
        %v9187 = vsel %vm205, %v9023, 0
        %v9190 = vsel %vm205, %v9022, 0
        %v9193 = vsel %vm205, %v9021, 0
        %v9196 = vsel %vm205, %v9020, 0
        %v9199 = vsel %vm205, %v9019, 0
        %v9202 = vsel %vm205, %v9018, 0
        %v9205 = vsel %vm205, %v9017, 0
        %v9208 = vsel %vm205, %v9016, 0
        %v9211 = vsel %vm205, %v9015, 0
        %v9214 = vsel %vm205, %v9014, 0
        %v9217 = vsel %vm205, %v9013, 0
        %v9220 = vsel %vm205, %v9012, 0
        %v9223 = vsel %vm205, %v9011, 0
        %v9226 = vsel %vm205, %v9010, 0
        %v9229 = vsel %vm205, %v9009, 0
        %v9232 = vsel %vm205, %v9062, 0
        %9234 = vmatpush.msra.mxu0 0.0
        %9235 = vmatpush.msra.mxu0 0.0
        %9236 = vmatpush.msra.mxu0 0.0
        %9237 = vmatpush.msra.mxu0 0.0
        %9238 = vmatpush.msra.mxu0 0.0
        %9239 = vmatpush.msra.mxu0 0.0
        %9240 = vmatpush.msra.mxu0 0.0
        %9241 = vmatpush.msra.mxu0 0.0
        %9242 = vmatpush.msra.mxu0 %v9071
        %9243 = vmatpush.msra.mxu0 %v9070
        %9244 = vmatpush.msra.mxu0 %v9069
        %9245 = vmatpush.msra.mxu0 %v9068
        %9246 = vmatpush.msra.mxu0 %v9067
        %9247 = vmatpush.msra.mxu0 %v9066
        %9248 = vmatpush.msra.mxu0 %v9065
        %9249 = vmatpush.msra.mxu0 %v9064
        %9250 = vmatmul.f32.gmra.mxu0 %v9073
        %v9251 = vpop.f32.mrf.mxu0
        %v9252 = vadd.f32 0.0, %v9251
        %9253 = vmatmul.f32.gmra.mxu0 %v9076
        %v9254 = vpop.f32.mrf.mxu0
        %v9255 = vadd.f32 0.0, %v9254
        %9256 = vmatmul.f32.gmra.mxu0 %v9079
        %v9257 = vpop.f32.mrf.mxu0
        %9258 = vmatmul.f32.gmra.mxu0 %v9082
        %v9259 = vpop.f32.mrf.mxu0
        %v9260 = vadd.f32 0.0, %v9259
        %9261 = vmatmul.f32.gmra.mxu0 %v9085
        %v9262 = vpop.f32.mrf.mxu0
        %v9263 = vadd.f32 0.0, %v9262
        %9264 = vmatmul.f32.gmra.mxu0 %v9088
        %v9265 = vpop.f32.mrf.mxu0
        %9266 = vmatmul.f32.gmra.mxu0 %v9091
        %v9267 = vpop.f32.mrf.mxu0
        %v9268 = vadd.f32 0.0, %v9267
        %9269 = vmatmul.f32.gmra.mxu0 %v9094
        %v9270 = vpop.f32.mrf.mxu0
        %v9271 = vadd.f32 0.0, %v9270
        %9272 = vmatmul.f32.gmra.mxu0 %v9097
        %v9273 = vpop.f32.mrf.mxu0
        %9274 = vmatmul.f32.gmra.mxu0 %v9100
        %v9275 = vpop.f32.mrf.mxu0
        %v9276 = vadd.f32 0.0, %v9275
        %9277 = vmatmul.f32.gmra.mxu0 %v9103
        %v9278 = vpop.f32.mrf.mxu0
        %v9279 = vadd.f32 0.0, %v9278
        %9280 = vmatmul.f32.gmra.mxu0 %v9106
        %v9281 = vpop.f32.mrf.mxu0
        %9282 = vmatmul.f32.gmra.mxu0 %v9109
        %v9283 = vpop.f32.mrf.mxu0
        %v9284 = vadd.f32 0.0, %v9283
        %9285 = vmatmul.f32.gmra.mxu0 %v9112
        %v9286 = vpop.f32.mrf.mxu0
        %v9287 = vadd.f32 0.0, %v9286
        %9288 = vmatmul.f32.gmra.mxu0 %v9115
        %v9289 = vpop.f32.mrf.mxu0
        %9290 = vmatmul.f32.gmra.mxu0 %v9118
        %v9291 = vpop.f32.mrf.mxu0
        %v9292 = vadd.f32 0.0, %v9291
        %9293 = vmatmul.f32.gmra.mxu0 %v9121
        %v9294 = vpop.f32.mrf.mxu0
        %v9295 = vadd.f32 0.0, %v9294
        %9296 = vmatmul.f32.gmra.mxu0 %v9124
        %v9297 = vpop.f32.mrf.mxu0
        %9298 = vmatmul.f32.gmra.mxu0 %v9127
        %v9299 = vpop.f32.mrf.mxu0
        %v9300 = vadd.f32 0.0, %v9299
        %9301 = vmatmul.f32.gmra.mxu0 %v9130
        %v9302 = vpop.f32.mrf.mxu0
        %v9303 = vadd.f32 0.0, %v9302
        %9304 = vmatmul.f32.gmra.mxu0 %v9133
        %v9305 = vpop.f32.mrf.mxu0
        %9306 = vmatmul.f32.gmra.mxu0 %v9136
        %v9307 = vpop.f32.mrf.mxu0
        %v9308 = vadd.f32 0.0, %v9307
        %9309 = vmatmul.f32.gmra.mxu0 %v9139
        %v9310 = vpop.f32.mrf.mxu0
        %v9311 = vadd.f32 0.0, %v9310
        %9312 = vmatmul.f32.gmra.mxu0 %v9142
        %v9313 = vpop.f32.mrf.mxu0
        %9314 = vmatmul.f32.gmra.mxu0 %v9145
        %v9315 = vpop.f32.mrf.mxu0
        %v9316 = vadd.f32 0.0, %v9315
        %9317 = vmatmul.f32.gmra.mxu0 %v9148
        %v9318 = vpop.f32.mrf.mxu0
        %v9319 = vadd.f32 0.0, %v9318
        %9320 = vmatmul.f32.gmra.mxu0 %v9151
        %v9321 = vpop.f32.mrf.mxu0
        %9322 = vmatmul.f32.gmra.mxu0 %v9154
        %v9323 = vpop.f32.mrf.mxu0
        %v9324 = vadd.f32 0.0, %v9323
        %9325 = vmatmul.f32.gmra.mxu0 %v9157
        %v9326 = vpop.f32.mrf.mxu0
        %v9327 = vadd.f32 0.0, %v9326
        %9328 = vmatmul.f32.gmra.mxu0 %v9160
        %v9329 = vpop.f32.mrf.mxu0
        %9330 = vmatmul.f32.gmra.mxu0 %v9163
        %v9331 = vpop.f32.mrf.mxu0
        %v9332 = vadd.f32 0.0, %v9331
        %9333 = vmatmul.f32.gmra.mxu0 %v9166
        %v9334 = vpop.f32.mrf.mxu0
        %v9335 = vadd.f32 0.0, %v9334
        %9336 = vmatmul.f32.gmra.mxu0 %v9169
        %v9337 = vpop.f32.mrf.mxu0
        %9338 = vmatmul.f32.gmra.mxu0 %v9172
        %v9339 = vpop.f32.mrf.mxu0
        %v9340 = vadd.f32 0.0, %v9339
        %9341 = vmatmul.f32.gmra.mxu0 %v9175
        %v9342 = vpop.f32.mrf.mxu0
        %v9343 = vadd.f32 0.0, %v9342
        %9344 = vmatmul.f32.gmra.mxu0 %v9178
        %v9345 = vpop.f32.mrf.mxu0
        %9346 = vmatmul.f32.gmra.mxu0 %v9181
        %v9347 = vpop.f32.mrf.mxu0
        %v9348 = vadd.f32 0.0, %v9347
        %9349 = vmatmul.f32.gmra.mxu0 %v9184
        %v9350 = vpop.f32.mrf.mxu0
        %v9351 = vadd.f32 0.0, %v9350
        %9352 = vmatmul.f32.gmra.mxu0 %v9187
        %v9353 = vpop.f32.mrf.mxu0
        %9354 = vmatmul.f32.gmra.mxu0 %v9190
        %v9355 = vpop.f32.mrf.mxu0
        %v9356 = vadd.f32 0.0, %v9355
        %9357 = vmatmul.f32.gmra.mxu0 %v9193
        %v9358 = vpop.f32.mrf.mxu0
        %v9359 = vadd.f32 0.0, %v9358
        %9360 = vmatmul.f32.gmra.mxu0 %v9196
        %v9361 = vpop.f32.mrf.mxu0
        %9362 = vmatmul.f32.gmra.mxu0 %v9199
        %v9363 = vpop.f32.mrf.mxu0
        %v9364 = vadd.f32 0.0, %v9363
        %9365 = vmatmul.f32.gmra.mxu0 %v9202
        %v9366 = vpop.f32.mrf.mxu0
        %v9367 = vadd.f32 0.0, %v9366
        %9368 = vmatmul.f32.gmra.mxu0 %v9205
        %v9369 = vpop.f32.mrf.mxu0
        %9370 = vmatmul.f32.gmra.mxu0 %v9208
        %v9371 = vpop.f32.mrf.mxu0
        %v9372 = vadd.f32 0.0, %v9371
        %9373 = vmatmul.f32.gmra.mxu0 %v9211
        %v9374 = vpop.f32.mrf.mxu0
        %v9375 = vadd.f32 0.0, %v9374
        %9376 = vmatmul.f32.gmra.mxu0 %v9214
        %v9377 = vpop.f32.mrf.mxu0
        %9378 = vmatmul.f32.gmra.mxu0 %v9217
        %v9379 = vpop.f32.mrf.mxu0
        %9380 = vmatmul.f32.gmra.mxu0 %v9220
        %v9381 = vpop.f32.mrf.mxu0
        %9382 = vmatmul.f32.gmra.mxu0 %v9223
        %v9383 = vpop.f32.mrf.mxu0
        %9384 = vmatmul.f32.gmra.mxu0 %v9226
        %v9385 = vpop.f32.mrf.mxu0
        %9386 = vmatmul.f32.gmra.mxu0 %v9229
        %v9387 = vpop.f32.mrf.mxu0
        %9388 = vmatmul.f32.gmra.mxu0 %v9232
        %v9389 = vpop.f32.mrf.mxu0
        %9390 = vdwg.mxu0
        %v9391 = vadd.f32 %v8816, %v9252
        %v9392 = vadd.f32 %v8819, %v9255
        %v9393 = vadd.f32 %v8824, %v9260
        %v9394 = vadd.f32 %v8827, %v9263
        %v9395 = vadd.f32 %v8832, %v9268
        %v9396 = vadd.f32 %v8835, %v9271
        %v9397 = vadd.f32 %v8840, %v9276
        %v9398 = vadd.f32 %v8843, %v9279
        %v9399 = vadd.f32 %v8848, %v9284
        %v9400 = vadd.f32 %v8851, %v9287
        %v9401 = vadd.f32 %v8856, %v9292
        %v9402 = vadd.f32 %v8859, %v9295
        %v9403 = vadd.f32 %v8864, %v9300
        %v9404 = vadd.f32 %v8867, %v9303
        %v9405 = vadd.f32 %v8872, %v9308
        %v9406 = vadd.f32 %v8875, %v9311
        %v9407 = vadd.f32 %v8880, %v9316
        %v9408 = vadd.f32 %v8883, %v9319
        %v9409 = vadd.f32 %v8888, %v9324
        %v9410 = vadd.f32 %v8891, %v9327
        %v9411 = vadd.f32 %v8896, %v9332
        %v9412 = vadd.f32 %v8899, %v9335
        %v9413 = vadd.f32 %v8904, %v9340
        %v9414 = vadd.f32 %v8907, %v9343
        %v9415 = vadd.f32 %v8912, %v9348
        %v9416 = vadd.f32 %v8915, %v9351
        %v9417 = vadd.f32 %v8920, %v9356
        %v9418 = vadd.f32 %v8923, %v9359
        %v9419 = vadd.f32 %v8928, %v9364
        %v9420 = vadd.f32 %v8931, %v9367
        %v9421 = vadd.f32 %v8936, %v9372
        %v9422 = vadd.f32 %v8939, %v9375
        %s9423 = scalar_lea.vmem [#allocation3], 11136
        %v9424 = vld [vmem:[%s9423] sm:$0xff]
        %v9425 = vld [vmem:[%s9423 + $0x8] sm:$0xff]
        %v9426 = vld [vmem:[%s9423 + $0x10] sm:$0xff]
        %v9427 = vld [vmem:[%s9423 + $0x18] sm:$0xff]
        %v9428 = vld [vmem:[%s9423 + $0x20] sm:$0xff]
        %v9429 = vld [vmem:[%s9423 + $0x28] sm:$0xff]
        %v9430 = vld [vmem:[%s9423 + $0x30] sm:$0xff]
        %v9431 = vld [vmem:[%s9423 + $0x38] sm:$0xff]
        %9432 = vmatpush.msra.mxu0 0.0
        %9433 = vmatpush.msra.mxu0 0.0
        %9434 = vmatpush.msra.mxu0 0.0
        %9435 = vmatpush.msra.mxu0 0.0
        %9436 = vmatpush.msra.mxu0 0.0
        %9437 = vmatpush.msra.mxu0 0.0
        %9438 = vmatpush.msra.mxu0 0.0
        %9439 = vmatpush.msra.mxu0 0.0
        %9440 = vmatpush.msra.mxu0 %v9431
        %9441 = vmatpush.msra.mxu0 %v9430
        %9442 = vmatpush.msra.mxu0 %v9429
        %9443 = vmatpush.msra.mxu0 %v9428
        %9444 = vmatpush.msra.mxu0 %v9427
        %9445 = vmatpush.msra.mxu0 %v9426
        %9446 = vmatpush.msra.mxu0 %v9425
        %9447 = vmatpush.msra.mxu0 %v9424
        %9448 = vmatmul.f32.gmra.mxu0 %v8646
        %v9449 = vpop.f32.mrf.mxu0
        %v9450 = vadd.f32 0.0, %v9449
        %9451 = vmatmul.f32.gmra.mxu0 %v8649
        %v9452 = vpop.f32.mrf.mxu0
        %v9453 = vadd.f32 0.0, %v9452
        %9454 = vmatmul.f32.gmra.mxu0 %v8652
        %v9455 = vpop.f32.mrf.mxu0
        %9456 = vmatmul.f32.gmra.mxu0 %v8655
        %v9457 = vpop.f32.mrf.mxu0
        %v9458 = vadd.f32 0.0, %v9457
        %9459 = vmatmul.f32.gmra.mxu0 %v8658
        %v9460 = vpop.f32.mrf.mxu0
        %v9461 = vadd.f32 0.0, %v9460
        %9462 = vmatmul.f32.gmra.mxu0 %v8661
        %v9463 = vpop.f32.mrf.mxu0
        %9464 = vmatmul.f32.gmra.mxu0 %v8664
        %v9465 = vpop.f32.mrf.mxu0
        %v9466 = vadd.f32 0.0, %v9465
        %9467 = vmatmul.f32.gmra.mxu0 %v8667
        %v9468 = vpop.f32.mrf.mxu0
        %v9469 = vadd.f32 0.0, %v9468
        %9470 = vmatmul.f32.gmra.mxu0 %v8670
        %v9471 = vpop.f32.mrf.mxu0
        %9472 = vmatmul.f32.gmra.mxu0 %v8673
        %v9473 = vpop.f32.mrf.mxu0
        %v9474 = vadd.f32 0.0, %v9473
        %9475 = vmatmul.f32.gmra.mxu0 %v8676
        %v9476 = vpop.f32.mrf.mxu0
        %v9477 = vadd.f32 0.0, %v9476
        %9478 = vmatmul.f32.gmra.mxu0 %v8679
        %v9479 = vpop.f32.mrf.mxu0
        %9480 = vmatmul.f32.gmra.mxu0 %v8682
        %v9481 = vpop.f32.mrf.mxu0
        %v9482 = vadd.f32 0.0, %v9481
        %9483 = vmatmul.f32.gmra.mxu0 %v8685
        %v9484 = vpop.f32.mrf.mxu0
        %v9485 = vadd.f32 0.0, %v9484
        %9486 = vmatmul.f32.gmra.mxu0 %v8688
        %v9487 = vpop.f32.mrf.mxu0
        %9488 = vmatmul.f32.gmra.mxu0 %v8691
        %v9489 = vpop.f32.mrf.mxu0
        %v9490 = vadd.f32 0.0, %v9489
        %9491 = vmatmul.f32.gmra.mxu0 %v8694
        %v9492 = vpop.f32.mrf.mxu0
        %v9493 = vadd.f32 0.0, %v9492
        %9494 = vmatmul.f32.gmra.mxu0 %v8697
        %v9495 = vpop.f32.mrf.mxu0
        %9496 = vmatmul.f32.gmra.mxu0 %v8700
        %v9497 = vpop.f32.mrf.mxu0
        %v9498 = vadd.f32 0.0, %v9497
        %9499 = vmatmul.f32.gmra.mxu0 %v8703
        %v9500 = vpop.f32.mrf.mxu0
        %v9501 = vadd.f32 0.0, %v9500
        %9502 = vmatmul.f32.gmra.mxu0 %v8706
        %v9503 = vpop.f32.mrf.mxu0
        %9504 = vmatmul.f32.gmra.mxu0 %v8709
        %v9505 = vpop.f32.mrf.mxu0
        %v9506 = vadd.f32 0.0, %v9505
        %9507 = vmatmul.f32.gmra.mxu0 %v8712
        %v9508 = vpop.f32.mrf.mxu0
        %v9509 = vadd.f32 0.0, %v9508
        %9510 = vmatmul.f32.gmra.mxu0 %v8715
        %v9511 = vpop.f32.mrf.mxu0
        %9512 = vmatmul.f32.gmra.mxu0 %v8718
        %v9513 = vpop.f32.mrf.mxu0
        %v9514 = vadd.f32 0.0, %v9513
        %9515 = vmatmul.f32.gmra.mxu0 %v8721
        %v9516 = vpop.f32.mrf.mxu0
        %v9517 = vadd.f32 0.0, %v9516
        %9518 = vmatmul.f32.gmra.mxu0 %v8724
        %v9519 = vpop.f32.mrf.mxu0
        %9520 = vmatmul.f32.gmra.mxu0 %v8727
        %v9521 = vpop.f32.mrf.mxu0
        %v9522 = vadd.f32 0.0, %v9521
        %9523 = vmatmul.f32.gmra.mxu0 %v8730
        %v9524 = vpop.f32.mrf.mxu0
        %v9525 = vadd.f32 0.0, %v9524
        %9526 = vmatmul.f32.gmra.mxu0 %v8733
        %v9527 = vpop.f32.mrf.mxu0
        %9528 = vmatmul.f32.gmra.mxu0 %v8736
        %v9529 = vpop.f32.mrf.mxu0
        %v9530 = vadd.f32 0.0, %v9529
        %9531 = vmatmul.f32.gmra.mxu0 %v8739
        %v9532 = vpop.f32.mrf.mxu0
        %v9533 = vadd.f32 0.0, %v9532
        %9534 = vmatmul.f32.gmra.mxu0 %v8742
        %v9535 = vpop.f32.mrf.mxu0
        %9536 = vmatmul.f32.gmra.mxu0 %v8745
        %v9537 = vpop.f32.mrf.mxu0
        %v9538 = vadd.f32 0.0, %v9537
        %9539 = vmatmul.f32.gmra.mxu0 %v8748
        %v9540 = vpop.f32.mrf.mxu0
        %v9541 = vadd.f32 0.0, %v9540
        %9542 = vmatmul.f32.gmra.mxu0 %v8751
        %v9543 = vpop.f32.mrf.mxu0
        %9544 = vmatmul.f32.gmra.mxu0 %v8754
        %v9545 = vpop.f32.mrf.mxu0
        %v9546 = vadd.f32 0.0, %v9545
        %9547 = vmatmul.f32.gmra.mxu0 %v8757
        %v9548 = vpop.f32.mrf.mxu0
        %v9549 = vadd.f32 0.0, %v9548
        %9550 = vmatmul.f32.gmra.mxu0 %v8760
        %v9551 = vpop.f32.mrf.mxu0
        %9552 = vmatmul.f32.gmra.mxu0 %v8763
        %v9553 = vpop.f32.mrf.mxu0
        %v9554 = vadd.f32 0.0, %v9553
        %9555 = vmatmul.f32.gmra.mxu0 %v8766
        %v9556 = vpop.f32.mrf.mxu0
        %v9557 = vadd.f32 0.0, %v9556
        %9558 = vmatmul.f32.gmra.mxu0 %v8769
        %v9559 = vpop.f32.mrf.mxu0
        %9560 = vmatmul.f32.gmra.mxu0 %v8772
        %v9561 = vpop.f32.mrf.mxu0
        %v9562 = vadd.f32 0.0, %v9561
        %9563 = vmatmul.f32.gmra.mxu0 %v8775
        %v9564 = vpop.f32.mrf.mxu0
        %v9565 = vadd.f32 0.0, %v9564
        %9566 = vmatmul.f32.gmra.mxu0 %v8778
        %v9567 = vpop.f32.mrf.mxu0
        %9568 = vmatmul.f32.gmra.mxu0 %v8781
        %v9569 = vpop.f32.mrf.mxu0
        %v9570 = vadd.f32 0.0, %v9569
        %9571 = vmatmul.f32.gmra.mxu0 %v8784
        %v9572 = vpop.f32.mrf.mxu0
        %v9573 = vadd.f32 0.0, %v9572
        %9574 = vmatmul.f32.gmra.mxu0 %v8787
        %v9575 = vpop.f32.mrf.mxu0
        %9576 = vmatmul.f32.gmra.mxu0 %v8790
        %v9577 = vpop.f32.mrf.mxu0
        %9578 = vmatmul.f32.gmra.mxu0 %v8793
        %v9579 = vpop.f32.mrf.mxu0
        %9580 = vmatmul.f32.gmra.mxu0 %v8796
        %v9581 = vpop.f32.mrf.mxu0
        %9582 = vmatmul.f32.gmra.mxu0 %v8637
        %v9583 = vpop.f32.mrf.mxu0
        %9584 = vmatmul.f32.gmra.mxu0 %v8640
        %v9585 = vpop.f32.mrf.mxu0
        %9586 = vmatmul.f32.gmra.mxu0 %v8643
        %v9587 = vpop.f32.mrf.mxu0
        %9588 = vdwg.mxu0
        %v9589 = vadd.f32 %v9391, %v9450
        %v9590 = vadd.f32 %v9392, %v9453
        %v9591 = vadd.f32 %v9393, %v9458
        %v9592 = vadd.f32 %v9394, %v9461
        %v9593 = vadd.f32 %v9395, %v9466
        %v9594 = vadd.f32 %v9396, %v9469
        %v9595 = vadd.f32 %v9397, %v9474
        %v9596 = vadd.f32 %v9398, %v9477
        %v9597 = vadd.f32 %v9399, %v9482
        %v9598 = vadd.f32 %v9400, %v9485
        %v9599 = vadd.f32 %v9401, %v9490
        %v9600 = vadd.f32 %v9402, %v9493
        %v9601 = vadd.f32 %v9403, %v9498
        %v9602 = vadd.f32 %v9404, %v9501
        %v9603 = vadd.f32 %v9405, %v9506
        %v9604 = vadd.f32 %v9406, %v9509
        %v9605 = vadd.f32 %v9407, %v9514
        %v9606 = vadd.f32 %v9408, %v9517
        %v9607 = vadd.f32 %v9409, %v9522
        %v9608 = vadd.f32 %v9410, %v9525
        %v9609 = vadd.f32 %v9411, %v9530
        %v9610 = vadd.f32 %v9412, %v9533
        %v9611 = vadd.f32 %v9413, %v9538
        %v9612 = vadd.f32 %v9414, %v9541
        %v9613 = vadd.f32 %v9415, %v9546
        %v9614 = vadd.f32 %v9416, %v9549
        %v9615 = vadd.f32 %v9417, %v9554
        %v9616 = vadd.f32 %v9418, %v9557
        %v9617 = vadd.f32 %v9419, %v9562
        %v9618 = vadd.f32 %v9420, %v9565
        %v9619 = vadd.f32 %v9421, %v9570
        %v9620 = vadd.f32 %v9422, %v9573
        %s9621 = scalar_lea.vmem [#allocation3], 11200
        %v9622 = vld [vmem:[%s9621] sm:$0xff]
        %v9623 = vld [vmem:[%s9621 + $0x8] sm:$0xff]
        %v9624 = vld [vmem:[%s9621 + $0x10] sm:$0xff]
        %v9625 = vld [vmem:[%s9621 + $0x18] sm:$0xff]
        %v9626 = vld [vmem:[%s9621 + $0x20] sm:$0xff]
        %v9627 = vld [vmem:[%s9621 + $0x28] sm:$0xff]
        %v9628 = vld [vmem:[%s9621 + $0x30] sm:$0xff]
        %v9629 = vld [vmem:[%s9621 + $0x38] sm:$0xff]
        %9630 = vmatpush.msra.mxu0 0.0
        %9631 = vmatpush.msra.mxu0 0.0
        %9632 = vmatpush.msra.mxu0 0.0
        %9633 = vmatpush.msra.mxu0 0.0
        %9634 = vmatpush.msra.mxu0 0.0
        %9635 = vmatpush.msra.mxu0 0.0
        %9636 = vmatpush.msra.mxu0 0.0
        %9637 = vmatpush.msra.mxu0 0.0
        %9638 = vmatpush.msra.mxu0 %v9629
        %9639 = vmatpush.msra.mxu0 %v9628
        %9640 = vmatpush.msra.mxu0 %v9627
        %9641 = vmatpush.msra.mxu0 %v9626
        %9642 = vmatpush.msra.mxu0 %v9625
        %9643 = vmatpush.msra.mxu0 %v9624
        %9644 = vmatpush.msra.mxu0 %v9623
        %9645 = vmatpush.msra.mxu0 %v9622
        %9646 = vmatmul.f32.gmra.mxu0 %v8327
        %v9647 = vpop.f32.mrf.mxu0
        %v9648 = vadd.f32 0.0, %v9647
        %9649 = vmatmul.f32.gmra.mxu0 %v8330
        %v9650 = vpop.f32.mrf.mxu0
        %v9651 = vadd.f32 0.0, %v9650
        %9652 = vmatmul.f32.gmra.mxu0 %v8333
        %v9653 = vpop.f32.mrf.mxu0
        %9654 = vmatmul.f32.gmra.mxu0 %v8336
        %v9655 = vpop.f32.mrf.mxu0
        %v9656 = vadd.f32 0.0, %v9655
        %9657 = vmatmul.f32.gmra.mxu0 %v8339
        %v9658 = vpop.f32.mrf.mxu0
        %v9659 = vadd.f32 0.0, %v9658
        %9660 = vmatmul.f32.gmra.mxu0 %v8342
        %v9661 = vpop.f32.mrf.mxu0
        %9662 = vmatmul.f32.gmra.mxu0 %v8345
        %v9663 = vpop.f32.mrf.mxu0
        %v9664 = vadd.f32 0.0, %v9663
        %9665 = vmatmul.f32.gmra.mxu0 %v8348
        %v9666 = vpop.f32.mrf.mxu0
        %v9667 = vadd.f32 0.0, %v9666
        %9668 = vmatmul.f32.gmra.mxu0 %v8351
        %v9669 = vpop.f32.mrf.mxu0
        %9670 = vmatmul.f32.gmra.mxu0 %v8354
        %v9671 = vpop.f32.mrf.mxu0
        %v9672 = vadd.f32 0.0, %v9671
        %9673 = vmatmul.f32.gmra.mxu0 %v8357
        %v9674 = vpop.f32.mrf.mxu0
        %v9675 = vadd.f32 0.0, %v9674
        %9676 = vmatmul.f32.gmra.mxu0 %v8360
        %v9677 = vpop.f32.mrf.mxu0
        %9678 = vmatmul.f32.gmra.mxu0 %v8363
        %v9679 = vpop.f32.mrf.mxu0
        %v9680 = vadd.f32 0.0, %v9679
        %9681 = vmatmul.f32.gmra.mxu0 %v8366
        %v9682 = vpop.f32.mrf.mxu0
        %v9683 = vadd.f32 0.0, %v9682
        %9684 = vmatmul.f32.gmra.mxu0 %v8369
        %v9685 = vpop.f32.mrf.mxu0
        %9686 = vmatmul.f32.gmra.mxu0 %v8372
        %v9687 = vpop.f32.mrf.mxu0
        %v9688 = vadd.f32 0.0, %v9687
        %9689 = vmatmul.f32.gmra.mxu0 %v8375
        %v9690 = vpop.f32.mrf.mxu0
        %v9691 = vadd.f32 0.0, %v9690
        %9692 = vmatmul.f32.gmra.mxu0 %v8378
        %v9693 = vpop.f32.mrf.mxu0
        %9694 = vmatmul.f32.gmra.mxu0 %v8381
        %v9695 = vpop.f32.mrf.mxu0
        %v9696 = vadd.f32 0.0, %v9695
        %9697 = vmatmul.f32.gmra.mxu0 %v8384
        %v9698 = vpop.f32.mrf.mxu0
        %v9699 = vadd.f32 0.0, %v9698
        %9700 = vmatmul.f32.gmra.mxu0 %v8387
        %v9701 = vpop.f32.mrf.mxu0
        %9702 = vmatmul.f32.gmra.mxu0 %v8390
        %v9703 = vpop.f32.mrf.mxu0
        %v9704 = vadd.f32 0.0, %v9703
        %9705 = vmatmul.f32.gmra.mxu0 %v8393
        %v9706 = vpop.f32.mrf.mxu0
        %v9707 = vadd.f32 0.0, %v9706
        %9708 = vmatmul.f32.gmra.mxu0 %v8396
        %v9709 = vpop.f32.mrf.mxu0
        %9710 = vmatmul.f32.gmra.mxu0 %v8399
        %v9711 = vpop.f32.mrf.mxu0
        %v9712 = vadd.f32 0.0, %v9711
        %9713 = vmatmul.f32.gmra.mxu0 %v8402
        %v9714 = vpop.f32.mrf.mxu0
        %v9715 = vadd.f32 0.0, %v9714
        %9716 = vmatmul.f32.gmra.mxu0 %v8405
        %v9717 = vpop.f32.mrf.mxu0
        %9718 = vmatmul.f32.gmra.mxu0 %v8408
        %v9719 = vpop.f32.mrf.mxu0
        %v9720 = vadd.f32 0.0, %v9719
        %9721 = vmatmul.f32.gmra.mxu0 %v8411
        %v9722 = vpop.f32.mrf.mxu0
        %v9723 = vadd.f32 0.0, %v9722
        %9724 = vmatmul.f32.gmra.mxu0 %v8414
        %v9725 = vpop.f32.mrf.mxu0
        %9726 = vmatmul.f32.gmra.mxu0 %v8417
        %v9727 = vpop.f32.mrf.mxu0
        %v9728 = vadd.f32 0.0, %v9727
        %9729 = vmatmul.f32.gmra.mxu0 %v8420
        %v9730 = vpop.f32.mrf.mxu0
        %v9731 = vadd.f32 0.0, %v9730
        %9732 = vmatmul.f32.gmra.mxu0 %v8423
        %v9733 = vpop.f32.mrf.mxu0
        %9734 = vmatmul.f32.gmra.mxu0 %v8426
        %v9735 = vpop.f32.mrf.mxu0
        %v9736 = vadd.f32 0.0, %v9735
        %9737 = vmatmul.f32.gmra.mxu0 %v8429
        %v9738 = vpop.f32.mrf.mxu0
        %v9739 = vadd.f32 0.0, %v9738
        %9740 = vmatmul.f32.gmra.mxu0 %v8432
        %v9741 = vpop.f32.mrf.mxu0
        %9742 = vmatmul.f32.gmra.mxu0 %v8435
        %v9743 = vpop.f32.mrf.mxu0
        %v9744 = vadd.f32 0.0, %v9743
        %9745 = vmatmul.f32.gmra.mxu0 %v8438
        %v9746 = vpop.f32.mrf.mxu0
        %v9747 = vadd.f32 0.0, %v9746
        %9748 = vmatmul.f32.gmra.mxu0 %v8441
        %v9749 = vpop.f32.mrf.mxu0
        %9750 = vmatmul.f32.gmra.mxu0 %v8444
        %v9751 = vpop.f32.mrf.mxu0
        %v9752 = vadd.f32 0.0, %v9751
        %9753 = vmatmul.f32.gmra.mxu0 %v8447
        %v9754 = vpop.f32.mrf.mxu0
        %v9755 = vadd.f32 0.0, %v9754
        %9756 = vmatmul.f32.gmra.mxu0 %v8450
        %v9757 = vpop.f32.mrf.mxu0
        %9758 = vmatmul.f32.gmra.mxu0 %v8453
        %v9759 = vpop.f32.mrf.mxu0
        %v9760 = vadd.f32 0.0, %v9759
        %9761 = vmatmul.f32.gmra.mxu0 %v8456
        %v9762 = vpop.f32.mrf.mxu0
        %v9763 = vadd.f32 0.0, %v9762
        %9764 = vmatmul.f32.gmra.mxu0 %v8459
        %v9765 = vpop.f32.mrf.mxu0
        %9766 = vmatmul.f32.gmra.mxu0 %v8462
        %v9767 = vpop.f32.mrf.mxu0
        %v9768 = vadd.f32 0.0, %v9767
        %9769 = vmatmul.f32.gmra.mxu0 %v8465
        %v9770 = vpop.f32.mrf.mxu0
        %v9771 = vadd.f32 0.0, %v9770
        %9772 = vmatmul.f32.gmra.mxu0 %v8468
        %v9773 = vpop.f32.mrf.mxu0
        %9774 = vmatmul.f32.gmra.mxu0 %v8471
        %v9775 = vpop.f32.mrf.mxu0
        %9776 = vmatmul.f32.gmra.mxu0 %v8474
        %v9777 = vpop.f32.mrf.mxu0
        %9778 = vmatmul.f32.gmra.mxu0 %v8477
        %v9779 = vpop.f32.mrf.mxu0
        %9780 = vmatmul.f32.gmra.mxu0 %v8318
        %v9781 = vpop.f32.mrf.mxu0
        %9782 = vmatmul.f32.gmra.mxu0 %v8321
        %v9783 = vpop.f32.mrf.mxu0
        %9784 = vmatmul.f32.gmra.mxu0 %v8324
        %v9785 = vpop.f32.mrf.mxu0
        %9786 = vdwg.mxu0
        %v9787 = vadd.f32 %v9589, %v9648
        %v9788 = vadd.f32 %v9590, %v9651
        %v9789 = vadd.f32 %v9591, %v9656
        %v9790 = vadd.f32 %v9592, %v9659
        %v9791 = vadd.f32 %v9593, %v9664
        %v9792 = vadd.f32 %v9594, %v9667
        %v9793 = vadd.f32 %v9595, %v9672
        %v9794 = vadd.f32 %v9596, %v9675
        %v9795 = vadd.f32 %v9597, %v9680
        %v9796 = vadd.f32 %v9598, %v9683
        %v9797 = vadd.f32 %v9599, %v9688
        %v9798 = vadd.f32 %v9600, %v9691
        %v9799 = vadd.f32 %v9601, %v9696
        %v9800 = vadd.f32 %v9602, %v9699
        %v9801 = vadd.f32 %v9603, %v9704
        %v9802 = vadd.f32 %v9604, %v9707
        %v9803 = vadd.f32 %v9605, %v9712
        %v9804 = vadd.f32 %v9606, %v9715
        %v9805 = vadd.f32 %v9607, %v9720
        %v9806 = vadd.f32 %v9608, %v9723
        %v9807 = vadd.f32 %v9609, %v9728
        %v9808 = vadd.f32 %v9610, %v9731
        %v9809 = vadd.f32 %v9611, %v9736
        %v9810 = vadd.f32 %v9612, %v9739
        %v9811 = vadd.f32 %v9613, %v9744
        %v9812 = vadd.f32 %v9614, %v9747
        %v9813 = vadd.f32 %v9615, %v9752
        %v9814 = vadd.f32 %v9616, %v9755
        %v9815 = vadd.f32 %v9617, %v9760
        %v9816 = vadd.f32 %v9618, %v9763
        %v9817 = vadd.f32 %v9619, %v9768
        %v9818 = vadd.f32 %v9620, %v9771
        %s9819 = scalar_lea.vmem [#allocation3], 11264
        %v9820 = vld [vmem:[%s9819] sm:$0xff]
        %v9821 = vld [vmem:[%s9819 + $0x8] sm:$0xff]
        %v9822 = vld [vmem:[%s9819 + $0x10] sm:$0xff]
        %v9823 = vld [vmem:[%s9819 + $0x18] sm:$0xff]
        %v9824 = vld [vmem:[%s9819 + $0x20] sm:$0xff]
        %v9825 = vld [vmem:[%s9819 + $0x28] sm:$0xff]
        %v9826 = vld [vmem:[%s9819 + $0x30] sm:$0xff]
        %v9827 = vld [vmem:[%s9819 + $0x38] sm:$0xff]
        %9828 = vmatpush.msra.mxu0 0.0
        %9829 = vmatpush.msra.mxu0 0.0
        %9830 = vmatpush.msra.mxu0 0.0
        %9831 = vmatpush.msra.mxu0 0.0
        %9832 = vmatpush.msra.mxu0 0.0
        %9833 = vmatpush.msra.mxu0 0.0
        %9834 = vmatpush.msra.mxu0 0.0
        %9835 = vmatpush.msra.mxu0 0.0
        %9836 = vmatpush.msra.mxu0 %v9827
        %9837 = vmatpush.msra.mxu0 %v9826
        %9838 = vmatpush.msra.mxu0 %v9825
        %9839 = vmatpush.msra.mxu0 %v9824
        %9840 = vmatpush.msra.mxu0 %v9823
        %9841 = vmatpush.msra.mxu0 %v9822
        %9842 = vmatpush.msra.mxu0 %v9821
        %9843 = vmatpush.msra.mxu0 %v9820
        %9844 = vmatmul.f32.gmra.mxu0 %v9082
        %v9845 = vpop.f32.mrf.mxu0
        %v9846 = vadd.f32 0.0, %v9845
        %9847 = vmatmul.f32.gmra.mxu0 %v9085
        %v9848 = vpop.f32.mrf.mxu0
        %v9849 = vadd.f32 0.0, %v9848
        %9850 = vmatmul.f32.gmra.mxu0 %v9088
        %v9851 = vpop.f32.mrf.mxu0
        %9852 = vmatmul.f32.gmra.mxu0 %v9091
        %v9853 = vpop.f32.mrf.mxu0
        %v9854 = vadd.f32 0.0, %v9853
        %9855 = vmatmul.f32.gmra.mxu0 %v9094
        %v9856 = vpop.f32.mrf.mxu0
        %v9857 = vadd.f32 0.0, %v9856
        %9858 = vmatmul.f32.gmra.mxu0 %v9097
        %v9859 = vpop.f32.mrf.mxu0
        %9860 = vmatmul.f32.gmra.mxu0 %v9100
        %v9861 = vpop.f32.mrf.mxu0
        %v9862 = vadd.f32 0.0, %v9861
        %9863 = vmatmul.f32.gmra.mxu0 %v9103
        %v9864 = vpop.f32.mrf.mxu0
        %v9865 = vadd.f32 0.0, %v9864
        %9866 = vmatmul.f32.gmra.mxu0 %v9106
        %v9867 = vpop.f32.mrf.mxu0
        %9868 = vmatmul.f32.gmra.mxu0 %v9109
        %v9869 = vpop.f32.mrf.mxu0
        %v9870 = vadd.f32 0.0, %v9869
        %9871 = vmatmul.f32.gmra.mxu0 %v9112
        %v9872 = vpop.f32.mrf.mxu0
        %v9873 = vadd.f32 0.0, %v9872
        %9874 = vmatmul.f32.gmra.mxu0 %v9115
        %v9875 = vpop.f32.mrf.mxu0
        %9876 = vmatmul.f32.gmra.mxu0 %v9118
        %v9877 = vpop.f32.mrf.mxu0
        %v9878 = vadd.f32 0.0, %v9877
        %9879 = vmatmul.f32.gmra.mxu0 %v9121
        %v9880 = vpop.f32.mrf.mxu0
        %v9881 = vadd.f32 0.0, %v9880
        %9882 = vmatmul.f32.gmra.mxu0 %v9124
        %v9883 = vpop.f32.mrf.mxu0
        %9884 = vmatmul.f32.gmra.mxu0 %v9127
        %v9885 = vpop.f32.mrf.mxu0
        %v9886 = vadd.f32 0.0, %v9885
        %9887 = vmatmul.f32.gmra.mxu0 %v9130
        %v9888 = vpop.f32.mrf.mxu0
        %v9889 = vadd.f32 0.0, %v9888
        %9890 = vmatmul.f32.gmra.mxu0 %v9133
        %v9891 = vpop.f32.mrf.mxu0
        %9892 = vmatmul.f32.gmra.mxu0 %v9136
        %v9893 = vpop.f32.mrf.mxu0
        %v9894 = vadd.f32 0.0, %v9893
        %9895 = vmatmul.f32.gmra.mxu0 %v9139
        %v9896 = vpop.f32.mrf.mxu0
        %v9897 = vadd.f32 0.0, %v9896
        %9898 = vmatmul.f32.gmra.mxu0 %v9142
        %v9899 = vpop.f32.mrf.mxu0
        %9900 = vmatmul.f32.gmra.mxu0 %v9145
        %v9901 = vpop.f32.mrf.mxu0
        %v9902 = vadd.f32 0.0, %v9901
        %9903 = vmatmul.f32.gmra.mxu0 %v9148
        %v9904 = vpop.f32.mrf.mxu0
        %v9905 = vadd.f32 0.0, %v9904
        %9906 = vmatmul.f32.gmra.mxu0 %v9151
        %v9907 = vpop.f32.mrf.mxu0
        %9908 = vmatmul.f32.gmra.mxu0 %v9154
        %v9909 = vpop.f32.mrf.mxu0
        %v9910 = vadd.f32 0.0, %v9909
        %9911 = vmatmul.f32.gmra.mxu0 %v9157
        %v9912 = vpop.f32.mrf.mxu0
        %v9913 = vadd.f32 0.0, %v9912
        %9914 = vmatmul.f32.gmra.mxu0 %v9160
        %v9915 = vpop.f32.mrf.mxu0
        %9916 = vmatmul.f32.gmra.mxu0 %v9163
        %v9917 = vpop.f32.mrf.mxu0
        %v9918 = vadd.f32 0.0, %v9917
        %9919 = vmatmul.f32.gmra.mxu0 %v9166
        %v9920 = vpop.f32.mrf.mxu0
        %v9921 = vadd.f32 0.0, %v9920
        %9922 = vmatmul.f32.gmra.mxu0 %v9169
        %v9923 = vpop.f32.mrf.mxu0
        %9924 = vmatmul.f32.gmra.mxu0 %v9172
        %v9925 = vpop.f32.mrf.mxu0
        %v9926 = vadd.f32 0.0, %v9925
        %9927 = vmatmul.f32.gmra.mxu0 %v9175
        %v9928 = vpop.f32.mrf.mxu0
        %v9929 = vadd.f32 0.0, %v9928
        %9930 = vmatmul.f32.gmra.mxu0 %v9178
        %v9931 = vpop.f32.mrf.mxu0
        %9932 = vmatmul.f32.gmra.mxu0 %v9181
        %v9933 = vpop.f32.mrf.mxu0
        %v9934 = vadd.f32 0.0, %v9933
        %9935 = vmatmul.f32.gmra.mxu0 %v9184
        %v9936 = vpop.f32.mrf.mxu0
        %v9937 = vadd.f32 0.0, %v9936
        %9938 = vmatmul.f32.gmra.mxu0 %v9187
        %v9939 = vpop.f32.mrf.mxu0
        %9940 = vmatmul.f32.gmra.mxu0 %v9190
        %v9941 = vpop.f32.mrf.mxu0
        %v9942 = vadd.f32 0.0, %v9941
        %9943 = vmatmul.f32.gmra.mxu0 %v9193
        %v9944 = vpop.f32.mrf.mxu0
        %v9945 = vadd.f32 0.0, %v9944
        %9946 = vmatmul.f32.gmra.mxu0 %v9196
        %v9947 = vpop.f32.mrf.mxu0
        %9948 = vmatmul.f32.gmra.mxu0 %v9199
        %v9949 = vpop.f32.mrf.mxu0
        %v9950 = vadd.f32 0.0, %v9949
        %9951 = vmatmul.f32.gmra.mxu0 %v9202
        %v9952 = vpop.f32.mrf.mxu0
        %v9953 = vadd.f32 0.0, %v9952
        %9954 = vmatmul.f32.gmra.mxu0 %v9205
        %v9955 = vpop.f32.mrf.mxu0
        %9956 = vmatmul.f32.gmra.mxu0 %v9208
        %v9957 = vpop.f32.mrf.mxu0
        %v9958 = vadd.f32 0.0, %v9957
        %9959 = vmatmul.f32.gmra.mxu0 %v9211
        %v9960 = vpop.f32.mrf.mxu0
        %v9961 = vadd.f32 0.0, %v9960
        %9962 = vmatmul.f32.gmra.mxu0 %v9214
        %v9963 = vpop.f32.mrf.mxu0
        %9964 = vmatmul.f32.gmra.mxu0 %v9217
        %v9965 = vpop.f32.mrf.mxu0
        %v9966 = vadd.f32 0.0, %v9965
        %9967 = vmatmul.f32.gmra.mxu0 %v9220
        %v9968 = vpop.f32.mrf.mxu0
        %v9969 = vadd.f32 0.0, %v9968
        %9970 = vmatmul.f32.gmra.mxu0 %v9223
        %v9971 = vpop.f32.mrf.mxu0
        %9972 = vmatmul.f32.gmra.mxu0 %v9226
        %v9973 = vpop.f32.mrf.mxu0
        %9974 = vmatmul.f32.gmra.mxu0 %v9229
        %v9975 = vpop.f32.mrf.mxu0
        %9976 = vmatmul.f32.gmra.mxu0 %v9232
        %v9977 = vpop.f32.mrf.mxu0
        %9978 = vmatmul.f32.gmra.mxu0 %v9073
        %v9979 = vpop.f32.mrf.mxu0
        %9980 = vmatmul.f32.gmra.mxu0 %v9076
        %v9981 = vpop.f32.mrf.mxu0
        %9982 = vmatmul.f32.gmra.mxu0 %v9079
        %v9983 = vpop.f32.mrf.mxu0
        %9984 = vdwg.mxu0
        %v9985 = vadd.f32 %v9787, %v9846
        %v9986 = vadd.f32 %v9788, %v9849
        %v9987 = vadd.f32 %v9789, %v9854
        %v9988 = vadd.f32 %v9790, %v9857
        %v9989 = vadd.f32 %v9791, %v9862
        %v9990 = vadd.f32 %v9792, %v9865
        %v9991 = vadd.f32 %v9793, %v9870
        %v9992 = vadd.f32 %v9794, %v9873
        %v9993 = vadd.f32 %v9795, %v9878
        %v9994 = vadd.f32 %v9796, %v9881
        %v9995 = vadd.f32 %v9797, %v9886
        %v9996 = vadd.f32 %v9798, %v9889
        %v9997 = vadd.f32 %v9799, %v9894
        %v9998 = vadd.f32 %v9800, %v9897
        %v9999 = vadd.f32 %v9801, %v9902
        %v10000 = vadd.f32 %v9802, %v9905
        %v10001 = vadd.f32 %v9803, %v9910
        %v10002 = vadd.f32 %v9804, %v9913
        %v10003 = vadd.f32 %v9805, %v9918
        %v10004 = vadd.f32 %v9806, %v9921
        %v10005 = vadd.f32 %v9807, %v9926
        %v10006 = vadd.f32 %v9808, %v9929
        %v10007 = vadd.f32 %v9809, %v9934
        %v10008 = vadd.f32 %v9810, %v9937
        %v10009 = vadd.f32 %v9811, %v9942
        %v10010 = vadd.f32 %v9812, %v9945
        %v10011 = vadd.f32 %v9813, %v9950
        %v10012 = vadd.f32 %v9814, %v9953
        %v10013 = vadd.f32 %v9815, %v9958
        %v10014 = vadd.f32 %v9816, %v9961
        %v10015 = vadd.f32 %v9817, %v9966
        %v10016 = vadd.f32 %v9818, %v9969
        %s10017 = scalar_lea.vmem [#allocation3], 11328
        %v10018 = vld [vmem:[%s10017] sm:$0xff]
        %v10019 = vld [vmem:[%s10017 + $0x8] sm:$0xff]
        %v10020 = vld [vmem:[%s10017 + $0x10] sm:$0xff]
        %v10021 = vld [vmem:[%s10017 + $0x18] sm:$0xff]
        %v10022 = vld [vmem:[%s10017 + $0x20] sm:$0xff]
        %v10023 = vld [vmem:[%s10017 + $0x28] sm:$0xff]
        %v10024 = vld [vmem:[%s10017 + $0x30] sm:$0xff]
        %v10025 = vld [vmem:[%s10017 + $0x38] sm:$0xff]
        %10026 = vmatpush.msra.mxu0 0.0
        %10027 = vmatpush.msra.mxu0 0.0
        %10028 = vmatpush.msra.mxu0 0.0
        %10029 = vmatpush.msra.mxu0 0.0
        %10030 = vmatpush.msra.mxu0 0.0
        %10031 = vmatpush.msra.mxu0 0.0
        %10032 = vmatpush.msra.mxu0 0.0
        %10033 = vmatpush.msra.mxu0 0.0
        %10034 = vmatpush.msra.mxu0 %v10025
        %10035 = vmatpush.msra.mxu0 %v10024
        %10036 = vmatpush.msra.mxu0 %v10023
        %10037 = vmatpush.msra.mxu0 %v10022
        %10038 = vmatpush.msra.mxu0 %v10021
        %10039 = vmatpush.msra.mxu0 %v10020
        %10040 = vmatpush.msra.mxu0 %v10019
        %10041 = vmatpush.msra.mxu0 %v10018
        %10042 = vmatmul.f32.gmra.mxu0 %v8655
        %v10043 = vpop.f32.mrf.mxu0
        %v10044 = vadd.f32 0.0, %v10043
        %10045 = vmatmul.f32.gmra.mxu0 %v8658
        %v10046 = vpop.f32.mrf.mxu0
        %v10047 = vadd.f32 0.0, %v10046
        %10048 = vmatmul.f32.gmra.mxu0 %v8661
        %v10049 = vpop.f32.mrf.mxu0
        %10050 = vmatmul.f32.gmra.mxu0 %v8664
        %v10051 = vpop.f32.mrf.mxu0
        %v10052 = vadd.f32 0.0, %v10051
        %10053 = vmatmul.f32.gmra.mxu0 %v8667
        %v10054 = vpop.f32.mrf.mxu0
        %v10055 = vadd.f32 0.0, %v10054
        %10056 = vmatmul.f32.gmra.mxu0 %v8670
        %v10057 = vpop.f32.mrf.mxu0
        %10058 = vmatmul.f32.gmra.mxu0 %v8673
        %v10059 = vpop.f32.mrf.mxu0
        %v10060 = vadd.f32 0.0, %v10059
        %10061 = vmatmul.f32.gmra.mxu0 %v8676
        %v10062 = vpop.f32.mrf.mxu0
        %v10063 = vadd.f32 0.0, %v10062
        %10064 = vmatmul.f32.gmra.mxu0 %v8679
        %v10065 = vpop.f32.mrf.mxu0
        %10066 = vmatmul.f32.gmra.mxu0 %v8682
        %v10067 = vpop.f32.mrf.mxu0
        %v10068 = vadd.f32 0.0, %v10067
        %10069 = vmatmul.f32.gmra.mxu0 %v8685
        %v10070 = vpop.f32.mrf.mxu0
        %v10071 = vadd.f32 0.0, %v10070
        %10072 = vmatmul.f32.gmra.mxu0 %v8688
        %v10073 = vpop.f32.mrf.mxu0
        %10074 = vmatmul.f32.gmra.mxu0 %v8691
        %v10075 = vpop.f32.mrf.mxu0
        %v10076 = vadd.f32 0.0, %v10075
        %10077 = vmatmul.f32.gmra.mxu0 %v8694
        %v10078 = vpop.f32.mrf.mxu0
        %v10079 = vadd.f32 0.0, %v10078
        %10080 = vmatmul.f32.gmra.mxu0 %v8697
        %v10081 = vpop.f32.mrf.mxu0
        %10082 = vmatmul.f32.gmra.mxu0 %v8700
        %v10083 = vpop.f32.mrf.mxu0
        %v10084 = vadd.f32 0.0, %v10083
        %10085 = vmatmul.f32.gmra.mxu0 %v8703
        %v10086 = vpop.f32.mrf.mxu0
        %v10087 = vadd.f32 0.0, %v10086
        %10088 = vmatmul.f32.gmra.mxu0 %v8706
        %v10089 = vpop.f32.mrf.mxu0
        %10090 = vmatmul.f32.gmra.mxu0 %v8709
        %v10091 = vpop.f32.mrf.mxu0
        %v10092 = vadd.f32 0.0, %v10091
        %10093 = vmatmul.f32.gmra.mxu0 %v8712
        %v10094 = vpop.f32.mrf.mxu0
        %v10095 = vadd.f32 0.0, %v10094
        %10096 = vmatmul.f32.gmra.mxu0 %v8715
        %v10097 = vpop.f32.mrf.mxu0
        %10098 = vmatmul.f32.gmra.mxu0 %v8718
        %v10099 = vpop.f32.mrf.mxu0
        %v10100 = vadd.f32 0.0, %v10099
        %10101 = vmatmul.f32.gmra.mxu0 %v8721
        %v10102 = vpop.f32.mrf.mxu0
        %v10103 = vadd.f32 0.0, %v10102
        %10104 = vmatmul.f32.gmra.mxu0 %v8724
        %v10105 = vpop.f32.mrf.mxu0
        %10106 = vmatmul.f32.gmra.mxu0 %v8727
        %v10107 = vpop.f32.mrf.mxu0
        %v10108 = vadd.f32 0.0, %v10107
        %10109 = vmatmul.f32.gmra.mxu0 %v8730
        %v10110 = vpop.f32.mrf.mxu0
        %v10111 = vadd.f32 0.0, %v10110
        %10112 = vmatmul.f32.gmra.mxu0 %v8733
        %v10113 = vpop.f32.mrf.mxu0
        %10114 = vmatmul.f32.gmra.mxu0 %v8736
        %v10115 = vpop.f32.mrf.mxu0
        %v10116 = vadd.f32 0.0, %v10115
        %10117 = vmatmul.f32.gmra.mxu0 %v8739
        %v10118 = vpop.f32.mrf.mxu0
        %v10119 = vadd.f32 0.0, %v10118
        %10120 = vmatmul.f32.gmra.mxu0 %v8742
        %v10121 = vpop.f32.mrf.mxu0
        %10122 = vmatmul.f32.gmra.mxu0 %v8745
        %v10123 = vpop.f32.mrf.mxu0
        %v10124 = vadd.f32 0.0, %v10123
        %10125 = vmatmul.f32.gmra.mxu0 %v8748
        %v10126 = vpop.f32.mrf.mxu0
        %v10127 = vadd.f32 0.0, %v10126
        %10128 = vmatmul.f32.gmra.mxu0 %v8751
        %v10129 = vpop.f32.mrf.mxu0
        %10130 = vmatmul.f32.gmra.mxu0 %v8754
        %v10131 = vpop.f32.mrf.mxu0
        %v10132 = vadd.f32 0.0, %v10131
        %10133 = vmatmul.f32.gmra.mxu0 %v8757
        %v10134 = vpop.f32.mrf.mxu0
        %v10135 = vadd.f32 0.0, %v10134
        %10136 = vmatmul.f32.gmra.mxu0 %v8760
        %v10137 = vpop.f32.mrf.mxu0
        %10138 = vmatmul.f32.gmra.mxu0 %v8763
        %v10139 = vpop.f32.mrf.mxu0
        %v10140 = vadd.f32 0.0, %v10139
        %10141 = vmatmul.f32.gmra.mxu0 %v8766
        %v10142 = vpop.f32.mrf.mxu0
        %v10143 = vadd.f32 0.0, %v10142
        %10144 = vmatmul.f32.gmra.mxu0 %v8769
        %v10145 = vpop.f32.mrf.mxu0
        %10146 = vmatmul.f32.gmra.mxu0 %v8772
        %v10147 = vpop.f32.mrf.mxu0
        %v10148 = vadd.f32 0.0, %v10147
        %10149 = vmatmul.f32.gmra.mxu0 %v8775
        %v10150 = vpop.f32.mrf.mxu0
        %v10151 = vadd.f32 0.0, %v10150
        %10152 = vmatmul.f32.gmra.mxu0 %v8778
        %v10153 = vpop.f32.mrf.mxu0
        %10154 = vmatmul.f32.gmra.mxu0 %v8781
        %v10155 = vpop.f32.mrf.mxu0
        %v10156 = vadd.f32 0.0, %v10155
        %10157 = vmatmul.f32.gmra.mxu0 %v8784
        %v10158 = vpop.f32.mrf.mxu0
        %v10159 = vadd.f32 0.0, %v10158
        %10160 = vmatmul.f32.gmra.mxu0 %v8787
        %v10161 = vpop.f32.mrf.mxu0
        %10162 = vmatmul.f32.gmra.mxu0 %v8790
        %v10163 = vpop.f32.mrf.mxu0
        %v10164 = vadd.f32 0.0, %v10163
        %10165 = vmatmul.f32.gmra.mxu0 %v8793
        %v10166 = vpop.f32.mrf.mxu0
        %v10167 = vadd.f32 0.0, %v10166
        %10168 = vmatmul.f32.gmra.mxu0 %v8796
        %v10169 = vpop.f32.mrf.mxu0
        %10170 = vmatmul.f32.gmra.mxu0 %v8637
        %v10171 = vpop.f32.mrf.mxu0
        %10172 = vmatmul.f32.gmra.mxu0 %v8640
        %v10173 = vpop.f32.mrf.mxu0
        %10174 = vmatmul.f32.gmra.mxu0 %v8643
        %v10175 = vpop.f32.mrf.mxu0
        %10176 = vmatmul.f32.gmra.mxu0 %v8646
        %v10177 = vpop.f32.mrf.mxu0
        %10178 = vmatmul.f32.gmra.mxu0 %v8649
        %v10179 = vpop.f32.mrf.mxu0
        %10180 = vmatmul.f32.gmra.mxu0 %v8652
        %v10181 = vpop.f32.mrf.mxu0
        %10182 = vdwg.mxu0
        %v10183 = vadd.f32 %v9985, %v10044
        %v10184 = vadd.f32 %v9986, %v10047
        %v10185 = vadd.f32 %v9987, %v10052
        %v10186 = vadd.f32 %v9988, %v10055
        %v10187 = vadd.f32 %v9989, %v10060
        %v10188 = vadd.f32 %v9990, %v10063
        %v10189 = vadd.f32 %v9991, %v10068
        %v10190 = vadd.f32 %v9992, %v10071
        %v10191 = vadd.f32 %v9993, %v10076
        %v10192 = vadd.f32 %v9994, %v10079
        %v10193 = vadd.f32 %v9995, %v10084
        %v10194 = vadd.f32 %v9996, %v10087
        %v10195 = vadd.f32 %v9997, %v10092
        %v10196 = vadd.f32 %v9998, %v10095
        %v10197 = vadd.f32 %v9999, %v10100
        %v10198 = vadd.f32 %v10000, %v10103
        %v10199 = vadd.f32 %v10001, %v10108
        %v10200 = vadd.f32 %v10002, %v10111
        %v10201 = vadd.f32 %v10003, %v10116
        %v10202 = vadd.f32 %v10004, %v10119
        %v10203 = vadd.f32 %v10005, %v10124
        %v10204 = vadd.f32 %v10006, %v10127
        %v10205 = vadd.f32 %v10007, %v10132
        %v10206 = vadd.f32 %v10008, %v10135
        %v10207 = vadd.f32 %v10009, %v10140
        %v10208 = vadd.f32 %v10010, %v10143
        %v10209 = vadd.f32 %v10011, %v10148
        %v10210 = vadd.f32 %v10012, %v10151
        %v10211 = vadd.f32 %v10013, %v10156
        %v10212 = vadd.f32 %v10014, %v10159
        %v10213 = vadd.f32 %v10015, %v10164
        %v10214 = vadd.f32 %v10016, %v10167
        %s10215 = scalar_lea.vmem [#allocation3], 11392
        %v10216 = vld [vmem:[%s10215] sm:$0xff]
        %v10217 = vld [vmem:[%s10215 + $0x8] sm:$0xff]
        %v10218 = vld [vmem:[%s10215 + $0x10] sm:$0xff]
        %v10219 = vld [vmem:[%s10215 + $0x18] sm:$0xff]
        %v10220 = vld [vmem:[%s10215 + $0x20] sm:$0xff]
        %v10221 = vld [vmem:[%s10215 + $0x28] sm:$0xff]
        %v10222 = vld [vmem:[%s10215 + $0x30] sm:$0xff]
        %v10223 = vld [vmem:[%s10215 + $0x38] sm:$0xff]
        %10224 = vmatpush.msra.mxu0 0.0
        %10225 = vmatpush.msra.mxu0 0.0
        %10226 = vmatpush.msra.mxu0 0.0
        %10227 = vmatpush.msra.mxu0 0.0
        %10228 = vmatpush.msra.mxu0 0.0
        %10229 = vmatpush.msra.mxu0 0.0
        %10230 = vmatpush.msra.mxu0 0.0
        %10231 = vmatpush.msra.mxu0 0.0
        %10232 = vmatpush.msra.mxu0 %v10223
        %10233 = vmatpush.msra.mxu0 %v10222
        %10234 = vmatpush.msra.mxu0 %v10221
        %10235 = vmatpush.msra.mxu0 %v10220
        %10236 = vmatpush.msra.mxu0 %v10219
        %10237 = vmatpush.msra.mxu0 %v10218
        %10238 = vmatpush.msra.mxu0 %v10217
        %10239 = vmatpush.msra.mxu0 %v10216
        %10240 = vmatmul.f32.gmra.mxu0 %v8336
        %v10241 = vpop.f32.mrf.mxu0
        %v10242 = vadd.f32 0.0, %v10241
        %10243 = vmatmul.f32.gmra.mxu0 %v8339
        %v10244 = vpop.f32.mrf.mxu0
        %v10245 = vadd.f32 0.0, %v10244
        %10246 = vmatmul.f32.gmra.mxu0 %v8342
        %v10247 = vpop.f32.mrf.mxu0
        %10248 = vmatmul.f32.gmra.mxu0 %v8345
        %v10249 = vpop.f32.mrf.mxu0
        %v10250 = vadd.f32 0.0, %v10249
        %10251 = vmatmul.f32.gmra.mxu0 %v8348
        %v10252 = vpop.f32.mrf.mxu0
        %v10253 = vadd.f32 0.0, %v10252
        %10254 = vmatmul.f32.gmra.mxu0 %v8351
        %v10255 = vpop.f32.mrf.mxu0
        %10256 = vmatmul.f32.gmra.mxu0 %v8354
        %v10257 = vpop.f32.mrf.mxu0
        %v10258 = vadd.f32 0.0, %v10257
        %10259 = vmatmul.f32.gmra.mxu0 %v8357
        %v10260 = vpop.f32.mrf.mxu0
        %v10261 = vadd.f32 0.0, %v10260
        %10262 = vmatmul.f32.gmra.mxu0 %v8360
        %v10263 = vpop.f32.mrf.mxu0
        %10264 = vmatmul.f32.gmra.mxu0 %v8363
        %v10265 = vpop.f32.mrf.mxu0
        %v10266 = vadd.f32 0.0, %v10265
        %10267 = vmatmul.f32.gmra.mxu0 %v8366
        %v10268 = vpop.f32.mrf.mxu0
        %v10269 = vadd.f32 0.0, %v10268
        %10270 = vmatmul.f32.gmra.mxu0 %v8369
        %v10271 = vpop.f32.mrf.mxu0
        %10272 = vmatmul.f32.gmra.mxu0 %v8372
        %v10273 = vpop.f32.mrf.mxu0
        %v10274 = vadd.f32 0.0, %v10273
        %10275 = vmatmul.f32.gmra.mxu0 %v8375
        %v10276 = vpop.f32.mrf.mxu0
        %v10277 = vadd.f32 0.0, %v10276
        %10278 = vmatmul.f32.gmra.mxu0 %v8378
        %v10279 = vpop.f32.mrf.mxu0
        %10280 = vmatmul.f32.gmra.mxu0 %v8381
        %v10281 = vpop.f32.mrf.mxu0
        %v10282 = vadd.f32 0.0, %v10281
        %10283 = vmatmul.f32.gmra.mxu0 %v8384
        %v10284 = vpop.f32.mrf.mxu0
        %v10285 = vadd.f32 0.0, %v10284
        %10286 = vmatmul.f32.gmra.mxu0 %v8387
        %v10287 = vpop.f32.mrf.mxu0
        %10288 = vmatmul.f32.gmra.mxu0 %v8390
        %v10289 = vpop.f32.mrf.mxu0
        %v10290 = vadd.f32 0.0, %v10289
        %10291 = vmatmul.f32.gmra.mxu0 %v8393
        %v10292 = vpop.f32.mrf.mxu0
        %v10293 = vadd.f32 0.0, %v10292
        %10294 = vmatmul.f32.gmra.mxu0 %v8396
        %v10295 = vpop.f32.mrf.mxu0
        %10296 = vmatmul.f32.gmra.mxu0 %v8399
        %v10297 = vpop.f32.mrf.mxu0
        %v10298 = vadd.f32 0.0, %v10297
        %10299 = vmatmul.f32.gmra.mxu0 %v8402
        %v10300 = vpop.f32.mrf.mxu0
        %v10301 = vadd.f32 0.0, %v10300
        %10302 = vmatmul.f32.gmra.mxu0 %v8405
        %v10303 = vpop.f32.mrf.mxu0
        %10304 = vmatmul.f32.gmra.mxu0 %v8408
        %v10305 = vpop.f32.mrf.mxu0
        %v10306 = vadd.f32 0.0, %v10305
        %10307 = vmatmul.f32.gmra.mxu0 %v8411
        %v10308 = vpop.f32.mrf.mxu0
        %v10309 = vadd.f32 0.0, %v10308
        %10310 = vmatmul.f32.gmra.mxu0 %v8414
        %v10311 = vpop.f32.mrf.mxu0
        %10312 = vmatmul.f32.gmra.mxu0 %v8417
        %v10313 = vpop.f32.mrf.mxu0
        %v10314 = vadd.f32 0.0, %v10313
        %10315 = vmatmul.f32.gmra.mxu0 %v8420
        %v10316 = vpop.f32.mrf.mxu0
        %v10317 = vadd.f32 0.0, %v10316
        %10318 = vmatmul.f32.gmra.mxu0 %v8423
        %v10319 = vpop.f32.mrf.mxu0
        %10320 = vmatmul.f32.gmra.mxu0 %v8426
        %v10321 = vpop.f32.mrf.mxu0
        %v10322 = vadd.f32 0.0, %v10321
        %10323 = vmatmul.f32.gmra.mxu0 %v8429
        %v10324 = vpop.f32.mrf.mxu0
        %v10325 = vadd.f32 0.0, %v10324
        %10326 = vmatmul.f32.gmra.mxu0 %v8432
        %v10327 = vpop.f32.mrf.mxu0
        %10328 = vmatmul.f32.gmra.mxu0 %v8435
        %v10329 = vpop.f32.mrf.mxu0
        %v10330 = vadd.f32 0.0, %v10329
        %10331 = vmatmul.f32.gmra.mxu0 %v8438
        %v10332 = vpop.f32.mrf.mxu0
        %v10333 = vadd.f32 0.0, %v10332
        %10334 = vmatmul.f32.gmra.mxu0 %v8441
        %v10335 = vpop.f32.mrf.mxu0
        %10336 = vmatmul.f32.gmra.mxu0 %v8444
        %v10337 = vpop.f32.mrf.mxu0
        %v10338 = vadd.f32 0.0, %v10337
        %10339 = vmatmul.f32.gmra.mxu0 %v8447
        %v10340 = vpop.f32.mrf.mxu0
        %v10341 = vadd.f32 0.0, %v10340
        %10342 = vmatmul.f32.gmra.mxu0 %v8450
        %v10343 = vpop.f32.mrf.mxu0
        %10344 = vmatmul.f32.gmra.mxu0 %v8453
        %v10345 = vpop.f32.mrf.mxu0
        %v10346 = vadd.f32 0.0, %v10345
        %10347 = vmatmul.f32.gmra.mxu0 %v8456
        %v10348 = vpop.f32.mrf.mxu0
        %v10349 = vadd.f32 0.0, %v10348
        %10350 = vmatmul.f32.gmra.mxu0 %v8459
        %v10351 = vpop.f32.mrf.mxu0
        %10352 = vmatmul.f32.gmra.mxu0 %v8462
        %v10353 = vpop.f32.mrf.mxu0
        %v10354 = vadd.f32 0.0, %v10353
        %10355 = vmatmul.f32.gmra.mxu0 %v8465
        %v10356 = vpop.f32.mrf.mxu0
        %v10357 = vadd.f32 0.0, %v10356
        %10358 = vmatmul.f32.gmra.mxu0 %v8468
        %v10359 = vpop.f32.mrf.mxu0
        %10360 = vmatmul.f32.gmra.mxu0 %v8471
        %v10361 = vpop.f32.mrf.mxu0
        %v10362 = vadd.f32 0.0, %v10361
        %10363 = vmatmul.f32.gmra.mxu0 %v8474
        %v10364 = vpop.f32.mrf.mxu0
        %v10365 = vadd.f32 0.0, %v10364
        %10366 = vmatmul.f32.gmra.mxu0 %v8477
        %v10367 = vpop.f32.mrf.mxu0
        %10368 = vmatmul.f32.gmra.mxu0 %v8318
        %v10369 = vpop.f32.mrf.mxu0
        %10370 = vmatmul.f32.gmra.mxu0 %v8321
        %v10371 = vpop.f32.mrf.mxu0
        %10372 = vmatmul.f32.gmra.mxu0 %v8324
        %v10373 = vpop.f32.mrf.mxu0
        %10374 = vmatmul.f32.gmra.mxu0 %v8327
        %v10375 = vpop.f32.mrf.mxu0
        %10376 = vmatmul.f32.gmra.mxu0 %v8330
        %v10377 = vpop.f32.mrf.mxu0
        %10378 = vmatmul.f32.gmra.mxu0 %v8333
        %v10379 = vpop.f32.mrf.mxu0
        %10380 = vdwg.mxu0
        %v10381 = vadd.f32 %v10183, %v10242
        %v10382 = vadd.f32 %v10184, %v10245
        %v10383 = vadd.f32 %v10185, %v10250
        %v10384 = vadd.f32 %v10186, %v10253
        %v10385 = vadd.f32 %v10187, %v10258
        %v10386 = vadd.f32 %v10188, %v10261
        %v10387 = vadd.f32 %v10189, %v10266
        %v10388 = vadd.f32 %v10190, %v10269
        %v10389 = vadd.f32 %v10191, %v10274
        %v10390 = vadd.f32 %v10192, %v10277
        %v10391 = vadd.f32 %v10193, %v10282
        %v10392 = vadd.f32 %v10194, %v10285
        %v10393 = vadd.f32 %v10195, %v10290
        %v10394 = vadd.f32 %v10196, %v10293
        %v10395 = vadd.f32 %v10197, %v10298
        %v10396 = vadd.f32 %v10198, %v10301
        %v10397 = vadd.f32 %v10199, %v10306
        %v10398 = vadd.f32 %v10200, %v10309
        %v10399 = vadd.f32 %v10201, %v10314
        %v10400 = vadd.f32 %v10202, %v10317
        %v10401 = vadd.f32 %v10203, %v10322
        %v10402 = vadd.f32 %v10204, %v10325
        %v10403 = vadd.f32 %v10205, %v10330
        %v10404 = vadd.f32 %v10206, %v10333
        %v10405 = vadd.f32 %v10207, %v10338
        %v10406 = vadd.f32 %v10208, %v10341
        %v10407 = vadd.f32 %v10209, %v10346
        %v10408 = vadd.f32 %v10210, %v10349
        %v10409 = vadd.f32 %v10211, %v10354
        %v10410 = vadd.f32 %v10212, %v10357
        %v10411 = vadd.f32 %v10213, %v10362
        %v10412 = vadd.f32 %v10214, %v10365
        %s10413 = scalar_lea.vmem [#allocation3], 11456
        %v10414 = vld [vmem:[%s10413] sm:$0xff]
        %v10415 = vld [vmem:[%s10413 + $0x8] sm:$0xff]
        %v10416 = vld [vmem:[%s10413 + $0x10] sm:$0xff]
        %v10417 = vld [vmem:[%s10413 + $0x18] sm:$0xff]
        %v10418 = vld [vmem:[%s10413 + $0x20] sm:$0xff]
        %v10419 = vld [vmem:[%s10413 + $0x28] sm:$0xff]
        %v10420 = vld [vmem:[%s10413 + $0x30] sm:$0xff]
        %v10421 = vld [vmem:[%s10413 + $0x38] sm:$0xff]
        %10422 = vmatpush.msra.mxu0 0.0
        %10423 = vmatpush.msra.mxu0 0.0
        %10424 = vmatpush.msra.mxu0 0.0
        %10425 = vmatpush.msra.mxu0 0.0
        %10426 = vmatpush.msra.mxu0 0.0
        %10427 = vmatpush.msra.mxu0 0.0
        %10428 = vmatpush.msra.mxu0 0.0
        %10429 = vmatpush.msra.mxu0 0.0
        %10430 = vmatpush.msra.mxu0 %v10421
        %10431 = vmatpush.msra.mxu0 %v10420
        %10432 = vmatpush.msra.mxu0 %v10419
        %10433 = vmatpush.msra.mxu0 %v10418
        %10434 = vmatpush.msra.mxu0 %v10417
        %10435 = vmatpush.msra.mxu0 %v10416
        %10436 = vmatpush.msra.mxu0 %v10415
        %10437 = vmatpush.msra.mxu0 %v10414
        %10438 = vmatmul.f32.gmra.mxu0 %v9091
        %v10439 = vpop.f32.mrf.mxu0
        %v10440 = vadd.f32 0.0, %v10439
        %10441 = vmatmul.f32.gmra.mxu0 %v9094
        %v10442 = vpop.f32.mrf.mxu0
        %v10443 = vadd.f32 0.0, %v10442
        %10444 = vmatmul.f32.gmra.mxu0 %v9097
        %v10445 = vpop.f32.mrf.mxu0
        %10446 = vmatmul.f32.gmra.mxu0 %v9100
        %v10447 = vpop.f32.mrf.mxu0
        %v10448 = vadd.f32 0.0, %v10447
        %10449 = vmatmul.f32.gmra.mxu0 %v9103
        %v10450 = vpop.f32.mrf.mxu0
        %v10451 = vadd.f32 0.0, %v10450
        %10452 = vmatmul.f32.gmra.mxu0 %v9106
        %v10453 = vpop.f32.mrf.mxu0
        %10454 = vmatmul.f32.gmra.mxu0 %v9109
        %v10455 = vpop.f32.mrf.mxu0
        %v10456 = vadd.f32 0.0, %v10455
        %10457 = vmatmul.f32.gmra.mxu0 %v9112
        %v10458 = vpop.f32.mrf.mxu0
        %v10459 = vadd.f32 0.0, %v10458
        %10460 = vmatmul.f32.gmra.mxu0 %v9115
        %v10461 = vpop.f32.mrf.mxu0
        %10462 = vmatmul.f32.gmra.mxu0 %v9118
        %v10463 = vpop.f32.mrf.mxu0
        %v10464 = vadd.f32 0.0, %v10463
        %10465 = vmatmul.f32.gmra.mxu0 %v9121
        %v10466 = vpop.f32.mrf.mxu0
        %v10467 = vadd.f32 0.0, %v10466
        %10468 = vmatmul.f32.gmra.mxu0 %v9124
        %v10469 = vpop.f32.mrf.mxu0
        %10470 = vmatmul.f32.gmra.mxu0 %v9127
        %v10471 = vpop.f32.mrf.mxu0
        %v10472 = vadd.f32 0.0, %v10471
        %10473 = vmatmul.f32.gmra.mxu0 %v9130
        %v10474 = vpop.f32.mrf.mxu0
        %v10475 = vadd.f32 0.0, %v10474
        %10476 = vmatmul.f32.gmra.mxu0 %v9133
        %v10477 = vpop.f32.mrf.mxu0
        %10478 = vmatmul.f32.gmra.mxu0 %v9136
        %v10479 = vpop.f32.mrf.mxu0
        %v10480 = vadd.f32 0.0, %v10479
        %10481 = vmatmul.f32.gmra.mxu0 %v9139
        %v10482 = vpop.f32.mrf.mxu0
        %v10483 = vadd.f32 0.0, %v10482
        %10484 = vmatmul.f32.gmra.mxu0 %v9142
        %v10485 = vpop.f32.mrf.mxu0
        %10486 = vmatmul.f32.gmra.mxu0 %v9145
        %v10487 = vpop.f32.mrf.mxu0
        %v10488 = vadd.f32 0.0, %v10487
        %10489 = vmatmul.f32.gmra.mxu0 %v9148
        %v10490 = vpop.f32.mrf.mxu0
        %v10491 = vadd.f32 0.0, %v10490
        %10492 = vmatmul.f32.gmra.mxu0 %v9151
        %v10493 = vpop.f32.mrf.mxu0
        %10494 = vmatmul.f32.gmra.mxu0 %v9154
        %v10495 = vpop.f32.mrf.mxu0
        %v10496 = vadd.f32 0.0, %v10495
        %10497 = vmatmul.f32.gmra.mxu0 %v9157
        %v10498 = vpop.f32.mrf.mxu0
        %v10499 = vadd.f32 0.0, %v10498
        %10500 = vmatmul.f32.gmra.mxu0 %v9160
        %v10501 = vpop.f32.mrf.mxu0
        %10502 = vmatmul.f32.gmra.mxu0 %v9163
        %v10503 = vpop.f32.mrf.mxu0
        %v10504 = vadd.f32 0.0, %v10503
        %10505 = vmatmul.f32.gmra.mxu0 %v9166
        %v10506 = vpop.f32.mrf.mxu0
        %v10507 = vadd.f32 0.0, %v10506
        %10508 = vmatmul.f32.gmra.mxu0 %v9169
        %v10509 = vpop.f32.mrf.mxu0
        %10510 = vmatmul.f32.gmra.mxu0 %v9172
        %v10511 = vpop.f32.mrf.mxu0
        %v10512 = vadd.f32 0.0, %v10511
        %10513 = vmatmul.f32.gmra.mxu0 %v9175
        %v10514 = vpop.f32.mrf.mxu0
        %v10515 = vadd.f32 0.0, %v10514
        %10516 = vmatmul.f32.gmra.mxu0 %v9178
        %v10517 = vpop.f32.mrf.mxu0
        %10518 = vmatmul.f32.gmra.mxu0 %v9181
        %v10519 = vpop.f32.mrf.mxu0
        %v10520 = vadd.f32 0.0, %v10519
        %10521 = vmatmul.f32.gmra.mxu0 %v9184
        %v10522 = vpop.f32.mrf.mxu0
        %v10523 = vadd.f32 0.0, %v10522
        %10524 = vmatmul.f32.gmra.mxu0 %v9187
        %v10525 = vpop.f32.mrf.mxu0
        %10526 = vmatmul.f32.gmra.mxu0 %v9190
        %v10527 = vpop.f32.mrf.mxu0
        %v10528 = vadd.f32 0.0, %v10527
        %10529 = vmatmul.f32.gmra.mxu0 %v9193
        %v10530 = vpop.f32.mrf.mxu0
        %v10531 = vadd.f32 0.0, %v10530
        %10532 = vmatmul.f32.gmra.mxu0 %v9196
        %v10533 = vpop.f32.mrf.mxu0
        %10534 = vmatmul.f32.gmra.mxu0 %v9199
        %v10535 = vpop.f32.mrf.mxu0
        %v10536 = vadd.f32 0.0, %v10535
        %10537 = vmatmul.f32.gmra.mxu0 %v9202
        %v10538 = vpop.f32.mrf.mxu0
        %v10539 = vadd.f32 0.0, %v10538
        %10540 = vmatmul.f32.gmra.mxu0 %v9205
        %v10541 = vpop.f32.mrf.mxu0
        %10542 = vmatmul.f32.gmra.mxu0 %v9208
        %v10543 = vpop.f32.mrf.mxu0
        %v10544 = vadd.f32 0.0, %v10543
        %10545 = vmatmul.f32.gmra.mxu0 %v9211
        %v10546 = vpop.f32.mrf.mxu0
        %v10547 = vadd.f32 0.0, %v10546
        %10548 = vmatmul.f32.gmra.mxu0 %v9214
        %v10549 = vpop.f32.mrf.mxu0
        %10550 = vmatmul.f32.gmra.mxu0 %v9217
        %v10551 = vpop.f32.mrf.mxu0
        %v10552 = vadd.f32 0.0, %v10551
        %10553 = vmatmul.f32.gmra.mxu0 %v9220
        %v10554 = vpop.f32.mrf.mxu0
        %v10555 = vadd.f32 0.0, %v10554
        %10556 = vmatmul.f32.gmra.mxu0 %v9223
        %v10557 = vpop.f32.mrf.mxu0
        %10558 = vmatmul.f32.gmra.mxu0 %v9226
        %v10559 = vpop.f32.mrf.mxu0
        %v10560 = vadd.f32 0.0, %v10559
        %10561 = vmatmul.f32.gmra.mxu0 %v9229
        %v10562 = vpop.f32.mrf.mxu0
        %v10563 = vadd.f32 0.0, %v10562
        %10564 = vmatmul.f32.gmra.mxu0 %v9232
        %v10565 = vpop.f32.mrf.mxu0
        %10566 = vmatmul.f32.gmra.mxu0 %v9073
        %v10567 = vpop.f32.mrf.mxu0
        %10568 = vmatmul.f32.gmra.mxu0 %v9076
        %v10569 = vpop.f32.mrf.mxu0
        %10570 = vmatmul.f32.gmra.mxu0 %v9079
        %v10571 = vpop.f32.mrf.mxu0
        %10572 = vmatmul.f32.gmra.mxu0 %v9082
        %v10573 = vpop.f32.mrf.mxu0
        %10574 = vmatmul.f32.gmra.mxu0 %v9085
        %v10575 = vpop.f32.mrf.mxu0
        %10576 = vmatmul.f32.gmra.mxu0 %v9088
        %v10577 = vpop.f32.mrf.mxu0
        %10578 = vdwg.mxu0
        %v10579 = vadd.f32 %v10381, %v10440
        %v10580 = vadd.f32 %v10382, %v10443
        %v10581 = vadd.f32 %v10383, %v10448
        %v10582 = vadd.f32 %v10384, %v10451
        %v10583 = vadd.f32 %v10385, %v10456
        %v10584 = vadd.f32 %v10386, %v10459
        %v10585 = vadd.f32 %v10387, %v10464
        %v10586 = vadd.f32 %v10388, %v10467
        %v10587 = vadd.f32 %v10389, %v10472
        %v10588 = vadd.f32 %v10390, %v10475
        %v10589 = vadd.f32 %v10391, %v10480
        %v10590 = vadd.f32 %v10392, %v10483
        %v10591 = vadd.f32 %v10393, %v10488
        %v10592 = vadd.f32 %v10394, %v10491
        %v10593 = vadd.f32 %v10395, %v10496
        %v10594 = vadd.f32 %v10396, %v10499
        %v10595 = vadd.f32 %v10397, %v10504
        %v10596 = vadd.f32 %v10398, %v10507
        %v10597 = vadd.f32 %v10399, %v10512
        %v10598 = vadd.f32 %v10400, %v10515
        %v10599 = vadd.f32 %v10401, %v10520
        %v10600 = vadd.f32 %v10402, %v10523
        %v10601 = vadd.f32 %v10403, %v10528
        %v10602 = vadd.f32 %v10404, %v10531
        %v10603 = vadd.f32 %v10405, %v10536
        %v10604 = vadd.f32 %v10406, %v10539
        %v10605 = vadd.f32 %v10407, %v10544
        %v10606 = vadd.f32 %v10408, %v10547
        %v10607 = vadd.f32 %v10409, %v10552
        %v10608 = vadd.f32 %v10410, %v10555
        %v10609 = vadd.f32 %v10411, %v10560
        %v10610 = vadd.f32 %v10412, %v10563
        %s10611 = scalar_lea.vmem [#allocation5], 19
        %v10612 = vld [vmem:[%s10611] sm:$0x1]
        %v10614 = vperm.slane %v10612, 0
        %v10616 = vadd.f32 %v10579, %v10614
        %v10617 = vadd.f32 %v10580, %v10614
        %v10618 = vadd.f32 %v10581, %v10614
        %v10619 = vadd.f32 %v10582, %v10614
        %v10620 = vadd.f32 %v10583, %v10614
        %v10621 = vadd.f32 %v10584, %v10614
        %v10622 = vadd.f32 %v10585, %v10614
        %v10623 = vadd.f32 %v10586, %v10614
        %v10624 = vadd.f32 %v10587, %v10614
        %v10625 = vadd.f32 %v10588, %v10614
        %v10626 = vadd.f32 %v10589, %v10614
        %v10627 = vadd.f32 %v10590, %v10614
        %v10628 = vadd.f32 %v10591, %v10614
        %v10629 = vadd.f32 %v10592, %v10614
        %v10630 = vadd.f32 %v10593, %v10614
        %v10631 = vadd.f32 %v10594, %v10614
        %v10632 = vadd.f32 %v10595, %v10614
        %v10633 = vadd.f32 %v10596, %v10614
        %v10634 = vadd.f32 %v10597, %v10614
        %v10635 = vadd.f32 %v10598, %v10614
        %v10636 = vadd.f32 %v10599, %v10614
        %v10637 = vadd.f32 %v10600, %v10614
        %v10638 = vadd.f32 %v10601, %v10614
        %v10639 = vadd.f32 %v10602, %v10614
        %v10640 = vadd.f32 %v10603, %v10614
        %v10641 = vadd.f32 %v10604, %v10614
        %v10642 = vadd.f32 %v10605, %v10614
        %v10643 = vadd.f32 %v10606, %v10614
        %v10644 = vadd.f32 %v10607, %v10614
        %v10645 = vadd.f32 %v10608, %v10614
        %v10646 = vadd.f32 %v10609, %v10614
        %v10647 = vadd.f32 %v10610, %v10614
        %10648 = vst.msk [vmem:[%s204] sm:$0xff] %vm347, %v10616
        %10649 = vst.msk [vmem:[%s204 + $0x8] sm:$0xff] %vm347, %v10617
        %10650 = vst.msk [vmem:[%s204 + $0x10] sm:$0xff] %vm347, %v10618
        %10651 = vst.msk [vmem:[%s204 + $0x18] sm:$0xff] %vm347, %v10619
        %10652 = vst.msk [vmem:[%s204 + $0x20] sm:$0xff] %vm347, %v10620
        %10653 = vst.msk [vmem:[%s204 + $0x28] sm:$0xff] %vm347, %v10621
        %10654 = vst.msk [vmem:[%s204 + $0x30] sm:$0xff] %vm347, %v10622
        %10655 = vst.msk [vmem:[%s204 + $0x38] sm:$0xff] %vm347, %v10623
        %10656 = vst.msk [vmem:[%s204 + $0x40] sm:$0xff] %vm347, %v10624
        %10657 = vst.msk [vmem:[%s204 + $0x48] sm:$0xff] %vm347, %v10625
        %10658 = vst.msk [vmem:[%s204 + $0x50] sm:$0xff] %vm347, %v10626
        %10659 = vst.msk [vmem:[%s204 + $0x58] sm:$0xff] %vm347, %v10627
        %10660 = vst.msk [vmem:[%s204 + $0x60] sm:$0xff] %vm347, %v10628
        %10661 = vst.msk [vmem:[%s204 + $0x68] sm:$0xff] %vm347, %v10629
        %10662 = vst.msk [vmem:[%s204 + $0x70] sm:$0xff] %vm347, %v10630
        %10663 = vst.msk [vmem:[%s204 + $0x78] sm:$0xff] %vm347, %v10631
        %10664 = vst.msk [vmem:[%s204 + $0x80] sm:$0xff] %vm347, %v10632
        %10665 = vst.msk [vmem:[%s204 + $0x88] sm:$0xff] %vm347, %v10633
        %10666 = vst.msk [vmem:[%s204 + $0x90] sm:$0xff] %vm347, %v10634
        %10667 = vst.msk [vmem:[%s204 + $0x98] sm:$0xff] %vm347, %v10635
        %10668 = vst.msk [vmem:[%s204 + $0xa0] sm:$0xff] %vm347, %v10636
        %10669 = vst.msk [vmem:[%s204 + $0xa8] sm:$0xff] %vm347, %v10637
        %10670 = vst.msk [vmem:[%s204 + $0xb0] sm:$0xff] %vm347, %v10638
        %10671 = vst.msk [vmem:[%s204 + $0xb8] sm:$0xff] %vm347, %v10639
        %10672 = vst.msk [vmem:[%s204 + $0xc0] sm:$0xff] %vm347, %v10640
        %10673 = vst.msk [vmem:[%s204 + $0xc8] sm:$0xff] %vm347, %v10641
        %10674 = vst.msk [vmem:[%s204 + $0xd0] sm:$0xff] %vm347, %v10642
        %10675 = vst.msk [vmem:[%s204 + $0xd8] sm:$0xff] %vm347, %v10643
        %10676 = vst.msk [vmem:[%s204 + $0xe0] sm:$0xff] %vm347, %v10644
        %10677 = vst.msk [vmem:[%s204 + $0xe8] sm:$0xff] %vm347, %v10645
        %10678 = vst.msk [vmem:[%s204 + $0xf0] sm:$0xff] %vm347, %v10646
        %10679 = vst.msk [vmem:[%s204 + $0xf8] sm:$0xff] %vm347, %v10647
        %p10680 = scmp.lt.s32.totalorder %s16, 1
        %s10681 = scalar_select %p10680, %s16, 1
        %s10682 = smul.addr %s10681, 32
        %s10683 = smul.addr %s10682, 8
        %s10684 = scalar_lea.vmem %s3, %s10683
        // Predicated region
        $region48: #{vdsr_pallas.1} parent=31 // pred_check
          %p10685 = pneg %p102
        $region49: #{vdsr_pallas.1} parent=31 // pred_check_branch
          %10687 = sbr.rel (%p10685) target = $region51
        $region50: #{vdsr_pallas.1} parent=31 // pred_region
          _
        $region51: #{vdsr_pallas.1} parent=31 // pred_fallthru
          _
      $region32: #{vdsr_pallas.1} parent=5 // pred_fallthru
        _
      %p10688 = scmp.le.s32.totalorder 2, %s11
      // Predicated region
      $region52: #{vdsr_pallas.1} parent=5 // pred_check
        %p10689 = pneg %p10688
      $region53: #{vdsr_pallas.1} parent=5 // pred_check_branch
        %10691 = sbr.rel (%p10689) target = $region55
      $region54: #{vdsr_pallas.1} parent=5 // pred_region
        %s10692 = ssub.s32 %s11, 2
        // Predicated region
        $region56: #{vdsr_pallas.1} parent=54 // pred_check
          %p10693 = pneg %p108
        $region57: #{vdsr_pallas.1} parent=54 // pred_check_branch
          %10695 = sbr.rel (%p10693) target = $region59
        $region58: #{vdsr_pallas.1} parent=54 // pred_region
          %p10696 = scmp.lt.s32.totalorder %s17, 1
          %s10697 = scalar_select %p10696, %s17, 1
          %s10698 = smul.addr %s10697, 32
          %s10699 = smul.addr %s10698, 8
          %s10700 = scalar_lea.vmem %s3, %s10699
        $region59: #{vdsr_pallas.1} parent=54 // pred_fallthru
          _
      $region55: #{vdsr_pallas.1} parent=5 // pred_fallthru
        _
    $region6: #{vdsr_pallas.1} parent=1 // loop_footer
      %s15 = sadd.s32 1, %s11
    $region7: #{vdsr_pallas.1} parent=1 // loop_footer_branch
      %10 = sbr.rel target = $region3
    $region8: #{vdsr_pallas.1} parent=1 // loop_exit
      _
    %10701 = vsyncpa [#allocation4], 1
    %s10702 = scalar_lea.sflag [#allocation4], 1
    %10703 = vsyncpa %s10702, 1
    %10704 = vsyncpa [#allocation6], 1

</llo_original>
